<compile_context>
chip_gen: v7x
topology: tpu7x:2x2x1
jax: 0.10.0
libtpu: 0.0.40
codegen_flags: <defaults>
</compile_context>

<pallas_src>
import functools

import jax
import jax.numpy as jnp
from jax import lax
from jax.experimental import pallas as pl
from jax.experimental.pallas import tpu as pltpu


def _fused_cnn_kernel(xu_ref, w1_ref, w2_ref, w3_ref, b1_ref, b2_ref, b3_ref,
                      mask_ref, alphas_ref, o_ref, p_ref, a_ref,
                      *, H, W, pad, KH, KW):
    # xu_ref:  (1, cin_p, LB)   zero-padded input frame + flat margins
    # w*_ref:  (Cout, KH*KW*Cin) im2col weight matrices
    # b*_ref:  (Cout, 1)
    # mask_ref:(1, L) f32, 1.0 on the interior of the padded frame, 0 on ring
    # alphas_ref: (2,) f32 in SMEM (PReLU slopes)
    # o_ref:   (1, 1, L) lane-dense output frame (conv3 + residual)
    # p_ref:   VMEM scratch (KH*KW*max(Cin), L)  -- im2col patch matrix
    # a_ref:   VMEM scratch (n_filters, LB)      -- fused intermediate (in VMEM)
    Hp, Wp = H + 2 * pad, W + 2 * pad
    L = Hp * Wp
    margin = pad * Wp + pad

    cin = xu_ref.shape[1]
    c1 = w1_ref.shape[0]
    c3 = w3_ref.shape[0]

    interior = mask_ref[...] > 0.5                      # (1, L) bool
    taps = [(ky, kx) for ky in range(KH) for kx in range(KW)]

    # Margins / ring of the intermediate buffer must read as zeros.
    a_ref[...] = jnp.zeros_like(a_ref)

    # ---- layer 1: conv1 (im2col, K = KH*KW*cin) + bias + PReLU -------------
    a0 = xu_ref[0]                                      # (cin, LB)
    for t, (ky, kx) in enumerate(taps):
        s = ky * Wp + kx
        p_ref[t * cin:(t + 1) * cin, :] = a0[:, s:s + L]
    h = jnp.dot(w1_ref[...], p_ref[0:KH * KW * cin, :],
                preferred_element_type=jnp.float32)     # (c1, L)
    h = h + b1_ref[...]
    h = jnp.where(h >= 0.0, h, alphas_ref[0] * h)
    h = jnp.where(interior, h, 0.0)                     # ring -> zero padding
    a_ref[:, margin:margin + L] = h

    # ---- layer 2: conv2 + bias + PReLU -------------------------------------
    for t, (ky, kx) in enumerate(taps):
        s = ky * Wp + kx
        p_ref[t * c1:(t + 1) * c1, :] = a_ref[:, s:s + L]
    h = jnp.dot(w2_ref[...], p_ref[...], preferred_element_type=jnp.float32)
    h = h + b2_ref[...]
    h = jnp.where(h >= 0.0, h, alphas_ref[1] * h)
    h = jnp.where(interior, h, 0.0)
    a_ref[:, margin:margin + L] = h

    # ---- layer 3: conv3 + bias + residual add ------------------------------
    for t, (ky, kx) in enumerate(taps):
        s = ky * Wp + kx
        p_ref[t * c1:(t + 1) * c1, :] = a_ref[:, s:s + L]
    h = jnp.dot(w3_ref[...], p_ref[...], preferred_element_type=jnp.float32)
    h = h + b3_ref[...]                                 # (c3, L)
    x_frame = a0[0:c3, margin:margin + L]               # residual = x (frame)
    out = jnp.where(interior, h + x_frame, 0.0)
    o_ref[...] = out.reshape(1, c3, L).astype(o_ref.dtype)


def init_params(key, n_in_channels=2, n_filters=32, kernel_size=5):
    ks = jax.random.split(key, 6)
    scale = 0.1
    return dict(
        w1=scale * jax.random.normal(
            ks[0], (n_filters, n_in_channels, kernel_size, kernel_size), jnp.float32),
        b1=scale * jax.random.normal(ks[1], (n_filters,), jnp.float32),
        w2=scale * jax.random.normal(
            ks[2], (n_filters, n_filters, kernel_size, kernel_size), jnp.float32),
        b2=scale * jax.random.normal(ks[3], (n_filters,), jnp.float32),
        w3=scale * jax.random.normal(
            ks[4], (1, n_filters, kernel_size, kernel_size), jnp.float32),
        b3=scale * jax.random.normal(ks[5], (1,), jnp.float32),
        alpha1=jnp.array([0.25], jnp.float32),   # PReLU(num_parameters=1, init=0.25)
        alpha2=jnp.array([0.25], jnp.float32),
        pad=(kernel_size - 1) // 2,
    )


def cnn_image_space_forward(params, x, u):
    """x, u: NCHW (N, 1, H, W). Returns x + conv3(prelu(conv2(prelu(conv1(cat(x,u))))))."""
    N, _, H, W = x.shape
    pad = params["pad"]
    KH = KW = params["w1"].shape[-1]
    cin0 = params["w1"].shape[1]               # = x-channels + u-channels (2)
    cin_p = 8                                  # pad channels to one sublane tile
    Hp, Wp = H + 2 * pad, W + 2 * pad
    L = Hp * Wp
    margin = pad * Wp + pad
    LB = L + 2 * margin

    # --- input: concat channels, zero 'same' pad, flatten frame, add margins ---
    xu = jnp.concatenate((x, u), axis=1)                                   # (N,2,H,W)
    xu = jnp.pad(xu, ((0, 0), (0, cin_p - cin0), (pad, pad), (pad, pad)))  # (N,8,Hp,Wp)
    xu_f = jnp.pad(xu.reshape(N, cin_p, L), ((0, 0), (0, 0), (margin, margin)))

    # --- weights -> im2col matrices (Cout, KH*KW*Cin), row order (ky,kx,ci) ---
    def to_mat(w):
        co, ci, kh, kw = w.shape
        return jnp.transpose(w, (0, 2, 3, 1)).reshape(co, kh * kw * ci)

    w1p = jnp.pad(params["w1"], ((0, 0), (0, cin_p - cin0), (0, 0), (0, 0)))
    w1m, w2m, w3m = to_mat(w1p), to_mat(params["w2"]), to_mat(params["w3"])
    b1c = params["b1"].reshape(-1, 1)
    b2c = params["b2"].reshape(-1, 1)
    b3c = params["b3"].reshape(-1, 1)
    alphas = jnp.concatenate((params["alpha1"], params["alpha2"])).astype(jnp.float32)
    c1, c3 = w1m.shape[0], w3m.shape[0]

    # interior (non-ring) mask over the padded frame
    row = jnp.arange(Hp)[:, None]
    col = jnp.arange(Wp)[None, :]
    interior = ((row >= pad) & (row < pad + H) & (col >= pad) & (col < pad + W))
    mask = interior.astype(jnp.float32).reshape(1, L)

    kernel = functools.partial(_fused_cnn_kernel, H=H, W=W, pad=pad, KH=KH, KW=KW)

    out_flat = pl.pallas_call(
        kernel,
        out_shape=jax.ShapeDtypeStruct((N, c3, L), jnp.float32),
        grid=(N,),
        in_specs=[
            pl.BlockSpec((1, cin_p, LB), lambda n: (n, 0, 0)),
            pl.BlockSpec(w1m.shape, lambda n: (0, 0)),
            pl.BlockSpec(w2m.shape, lambda n: (0, 0)),
            pl.BlockSpec(w3m.shape, lambda n: (0, 0)),
            pl.BlockSpec(b1c.shape, lambda n: (0, 0)),
            pl.BlockSpec(b2c.shape, lambda n: (0, 0)),
            pl.BlockSpec(b3c.shape, lambda n: (0, 0)),
            pl.BlockSpec(mask.shape, lambda n: (0, 0)),
            pl.BlockSpec(memory_space=pltpu.MemorySpace.SMEM),
        ],
        out_specs=pl.BlockSpec((1, c3, L), lambda n: (n, 0, 0)),
        scratch_shapes=[
            pltpu.VMEM((KH * KW * max(cin_p, c1), L), jnp.float32),  # im2col P
            pltpu.VMEM((c1, LB), jnp.float32),                       # fused intermediate
        ],
        compiler_params=pltpu.CompilerParams(dimension_semantics=("parallel",)),
    )(xu_f, w1m, w2m, w3m, b1c, b2c, b3c, mask, alphas)

    # lane-dense frame -> NCHW interior (single cheap XLA reshape + slice)
    return out_flat.reshape(N, c3, Hp, Wp)[:, :, pad:pad + H, pad:pad + W]


def _reference_forward(params, x, u):
    """Pure-JAX reference (lax conv, NCHW) for correctness checking."""
    pad = params["pad"]

    def conv(t, w, b):
        return lax.conv_general_dilated(
            t, w, window_strides=(1, 1), padding=[(pad, pad), (pad, pad)],
            dimension_numbers=("NCHW", "OIHW", "NCHW")) + b.reshape(1, -1, 1, 1)

    def prelu(t, a):
        return jnp.where(t >= 0.0, t, a[0] * t)

    dx = jnp.concatenate((x, u), axis=1)
    dx = prelu(conv(dx, params["w1"], params["b1"]), params["alpha1"])
    dx = prelu(conv(dx, params["w2"], params["b2"]), params["alpha2"])
    dx = conv(dx, params["w3"], params["b3"])
    return x + dx


if __name__ == "__main__":
    key = jax.random.PRNGKey(0)
    kp, kx, ku = jax.random.split(key, 3)

    params = init_params(kp)  # n_in_channels=2, n_filters=32, kernel_size=5

    N, H, W = 2, 16, 16
    x = jax.random.normal(kx, (N, 1, H, W), jnp.float32)
    u = jax.random.normal(ku, (N, 1, H, W), jnp.float32)

    out = jax.block_until_ready(cnn_image_space_forward(params, x, u))
    ref = jax.block_until_ready(_reference_forward(params, x, u))

    assert out.shape == (N, 1, H, W)
    assert jnp.allclose(out, ref, atol=1e-3, rtol=1e-3), "mismatch vs reference"

    print("KERNEL_OK")
</pallas_src>

<mosaic_0001>
module attributes {stable_mosaic.version = 11 : i64} {
  func.func @_fused_cnn_kernel(%arg0: i32, %arg1: memref<1x8x484xf32, #tpu.memory_space<vmem>>, %arg2: memref<32x200xf32, #tpu.memory_space<vmem>>, %arg3: memref<32x800xf32, #tpu.memory_space<vmem>>, %arg4: memref<1x800xf32, #tpu.memory_space<vmem>>, %arg5: memref<32x1xf32, #tpu.memory_space<vmem>>, %arg6: memref<32x1xf32, #tpu.memory_space<vmem>>, %arg7: memref<1x1xf32, #tpu.memory_space<vmem>>, %arg8: memref<1x400xf32, #tpu.memory_space<vmem>>, %arg9: memref<2xf32, #tpu.memory_space<smem>>, %arg10: memref<1x1x400xf32, #tpu.memory_space<vmem>>, %arg11: memref<800x400xf32, #tpu.memory_space<vmem>>, %arg12: memref<32x484xf32, #tpu.memory_space<vmem>>) attributes {dimension_semantics = [#tpu.dimension_semantics<parallel>], iteration_bounds = array<i64: 2>, scalar_prefetch = 0 : i64, scratch_operands = 2 : i64, tpu.core_type = #tpu.core_type<tc>, window_params = [{transform_indices = @transform_0, window_bounds = array<i64: 1, 8, 484>}, {pipeline_mode = #tpu.pipeline_mode<synchronous>, transform_indices = @transform_1, window_bounds = array<i64: 32, 200>}, {pipeline_mode = #tpu.pipeline_mode<synchronous>, transform_indices = @transform_2, window_bounds = array<i64: 32, 800>}, {pipeline_mode = #tpu.pipeline_mode<synchronous>, transform_indices = @transform_3, window_bounds = array<i64: 1, 800>}, {pipeline_mode = #tpu.pipeline_mode<synchronous>, transform_indices = @transform_4, window_bounds = array<i64: 32, 1>}, {pipeline_mode = #tpu.pipeline_mode<synchronous>, transform_indices = @transform_5, window_bounds = array<i64: 32, 1>}, {pipeline_mode = #tpu.pipeline_mode<synchronous>, transform_indices = @transform_6, window_bounds = array<i64: 1, 1>}, {pipeline_mode = #tpu.pipeline_mode<synchronous>, transform_indices = @transform_7, window_bounds = array<i64: 1, 400>}, {transform_indices = @transform_8, window_bounds = array<i64: 2>}, {transform_indices = @transform_9, window_bounds = array<i64: 1, 1, 400>}]} {
    %c0 = arith.constant 0 : index
    %c0_0 = arith.constant 0 : index
    %0 = vector.load %arg8[%c0, %c0_0] : memref<1x400xf32, #tpu.memory_space<vmem>>, vector<1x400xf32>
    %cst = arith.constant 5.000000e-01 : f32
    %1 = vector.broadcast %cst : f32 to vector<1x400xf32>
    %2 = arith.cmpf ogt, %0, %1 : vector<1x400xf32>
    %cst_1 = arith.constant 0.000000e+00 : f32
    %3 = vector.broadcast %cst_1 : f32 to vector<32x484xf32>
    %c0_2 = arith.constant 0 : index
    %c0_3 = arith.constant 0 : index
    %4 = vector.load %arg12[%c0_2, %c0_3] : memref<32x484xf32, #tpu.memory_space<vmem>>, vector<32x484xf32>
    tpu.vector_store %arg12[%c0_2, %c0_3], %3 {strides = array<i32>} : memref<32x484xf32, #tpu.memory_space<vmem>>, vector<32x484xf32>,
    %c0_4 = arith.constant 0 : index
    %c0_5 = arith.constant 0 : index
    %c0_6 = arith.constant 0 : index
    %5 = vector.load %arg1[%c0_4, %c0_5, %c0_6] : memref<1x8x484xf32, #tpu.memory_space<vmem>>, vector<1x8x484xf32>
    %6 = vector.shape_cast %5 : vector<1x8x484xf32> to vector<8x484xf32>
    %7 = vector.extract_strided_slice %6 {offsets = [0, 0], sizes = [8, 400], strides = [1, 1]} : vector<8x484xf32> to vector<8x400xf32>
    %c0_7 = arith.constant 0 : index
    %c0_8 = arith.constant 0 : index
    %8 = vector.load %arg11[%c0_7, %c0_8] : memref<800x400xf32, #tpu.memory_space<vmem>>, vector<8x400xf32>
    tpu.vector_store %arg11[%c0_7, %c0_8], %7 {strides = array<i32>} : memref<800x400xf32, #tpu.memory_space<vmem>>, vector<8x400xf32>,
    %9 = vector.extract_strided_slice %6 {offsets = [0, 1], sizes = [8, 400], strides = [1, 1]} : vector<8x484xf32> to vector<8x400xf32>
    %c8 = arith.constant 8 : index
    %c0_9 = arith.constant 0 : index
    %10 = vector.load %arg11[%c8, %c0_9] : memref<800x400xf32, #tpu.memory_space<vmem>>, vector<8x400xf32>
    tpu.vector_store %arg11[%c8, %c0_9], %9 {strides = array<i32>} : memref<800x400xf32, #tpu.memory_space<vmem>>, vector<8x400xf32>,
    %11 = vector.extract_strided_slice %6 {offsets = [0, 2], sizes = [8, 400], strides = [1, 1]} : vector<8x484xf32> to vector<8x400xf32>
    %c16 = arith.constant 16 : index
    %c0_10 = arith.constant 0 : index
    %12 = vector.load %arg11[%c16, %c0_10] : memref<800x400xf32, #tpu.memory_space<vmem>>, vector<8x400xf32>
    tpu.vector_store %arg11[%c16, %c0_10], %11 {strides = array<i32>} : memref<800x400xf32, #tpu.memory_space<vmem>>, vector<8x400xf32>,
    %13 = vector.extract_strided_slice %6 {offsets = [0, 3], sizes = [8, 400], strides = [1, 1]} : vector<8x484xf32> to vector<8x400xf32>
    %c24 = arith.constant 24 : index
    %c0_11 = arith.constant 0 : index
    %14 = vector.load %arg11[%c24, %c0_11] : memref<800x400xf32, #tpu.memory_space<vmem>>, vector<8x400xf32>
    tpu.vector_store %arg11[%c24, %c0_11], %13 {strides = array<i32>} : memref<800x400xf32, #tpu.memory_space<vmem>>, vector<8x400xf32>,
    %15 = vector.extract_strided_slice %6 {offsets = [0, 4], sizes = [8, 400], strides = [1, 1]} : vector<8x484xf32> to vector<8x400xf32>
    %c32 = arith.constant 32 : index
    %c0_12 = arith.constant 0 : index
    %16 = vector.load %arg11[%c32, %c0_12] : memref<800x400xf32, #tpu.memory_space<vmem>>, vector<8x400xf32>
    tpu.vector_store %arg11[%c32, %c0_12], %15 {strides = array<i32>} : memref<800x400xf32, #tpu.memory_space<vmem>>, vector<8x400xf32>,
    %17 = vector.extract_strided_slice %6 {offsets = [0, 20], sizes = [8, 400], strides = [1, 1]} : vector<8x484xf32> to vector<8x400xf32>
    %c40 = arith.constant 40 : index
    %c0_13 = arith.constant 0 : index
    %18 = vector.load %arg11[%c40, %c0_13] : memref<800x400xf32, #tpu.memory_space<vmem>>, vector<8x400xf32>
    tpu.vector_store %arg11[%c40, %c0_13], %17 {strides = array<i32>} : memref<800x400xf32, #tpu.memory_space<vmem>>, vector<8x400xf32>,
    %19 = vector.extract_strided_slice %6 {offsets = [0, 21], sizes = [8, 400], strides = [1, 1]} : vector<8x484xf32> to vector<8x400xf32>
    %c48 = arith.constant 48 : index
    %c0_14 = arith.constant 0 : index
    %20 = vector.load %arg11[%c48, %c0_14] : memref<800x400xf32, #tpu.memory_space<vmem>>, vector<8x400xf32>
    tpu.vector_store %arg11[%c48, %c0_14], %19 {strides = array<i32>} : memref<800x400xf32, #tpu.memory_space<vmem>>, vector<8x400xf32>,
    %21 = vector.extract_strided_slice %6 {offsets = [0, 22], sizes = [8, 400], strides = [1, 1]} : vector<8x484xf32> to vector<8x400xf32>
    %c56 = arith.constant 56 : index
    %c0_15 = arith.constant 0 : index
    %22 = vector.load %arg11[%c56, %c0_15] : memref<800x400xf32, #tpu.memory_space<vmem>>, vector<8x400xf32>
    tpu.vector_store %arg11[%c56, %c0_15], %21 {strides = array<i32>} : memref<800x400xf32, #tpu.memory_space<vmem>>, vector<8x400xf32>,
    %23 = vector.extract_strided_slice %6 {offsets = [0, 23], sizes = [8, 400], strides = [1, 1]} : vector<8x484xf32> to vector<8x400xf32>
    %c64 = arith.constant 64 : index
    %c0_16 = arith.constant 0 : index
    %24 = vector.load %arg11[%c64, %c0_16] : memref<800x400xf32, #tpu.memory_space<vmem>>, vector<8x400xf32>
    tpu.vector_store %arg11[%c64, %c0_16], %23 {strides = array<i32>} : memref<800x400xf32, #tpu.memory_space<vmem>>, vector<8x400xf32>,
    %25 = vector.extract_strided_slice %6 {offsets = [0, 24], sizes = [8, 400], strides = [1, 1]} : vector<8x484xf32> to vector<8x400xf32>
    %c72 = arith.constant 72 : index
    %c0_17 = arith.constant 0 : index
    %26 = vector.load %arg11[%c72, %c0_17] : memref<800x400xf32, #tpu.memory_space<vmem>>, vector<8x400xf32>
    tpu.vector_store %arg11[%c72, %c0_17], %25 {strides = array<i32>} : memref<800x400xf32, #tpu.memory_space<vmem>>, vector<8x400xf32>,
    %27 = vector.extract_strided_slice %6 {offsets = [0, 40], sizes = [8, 400], strides = [1, 1]} : vector<8x484xf32> to vector<8x400xf32>
    %c80 = arith.constant 80 : index
    %c0_18 = arith.constant 0 : index
    %28 = vector.load %arg11[%c80, %c0_18] : memref<800x400xf32, #tpu.memory_space<vmem>>, vector<8x400xf32>
    tpu.vector_store %arg11[%c80, %c0_18], %27 {strides = array<i32>} : memref<800x400xf32, #tpu.memory_space<vmem>>, vector<8x400xf32>,
    %29 = vector.extract_strided_slice %6 {offsets = [0, 41], sizes = [8, 400], strides = [1, 1]} : vector<8x484xf32> to vector<8x400xf32>
    %c88 = arith.constant 88 : index
    %c0_19 = arith.constant 0 : index
    %30 = vector.load %arg11[%c88, %c0_19] : memref<800x400xf32, #tpu.memory_space<vmem>>, vector<8x400xf32>
    tpu.vector_store %arg11[%c88, %c0_19], %29 {strides = array<i32>} : memref<800x400xf32, #tpu.memory_space<vmem>>, vector<8x400xf32>,
    %31 = vector.extract_strided_slice %6 {offsets = [0, 42], sizes = [8, 400], strides = [1, 1]} : vector<8x484xf32> to vector<8x400xf32>
    %c96 = arith.constant 96 : index
    %c0_20 = arith.constant 0 : index
    %32 = vector.load %arg11[%c96, %c0_20] : memref<800x400xf32, #tpu.memory_space<vmem>>, vector<8x400xf32>
    tpu.vector_store %arg11[%c96, %c0_20], %31 {strides = array<i32>} : memref<800x400xf32, #tpu.memory_space<vmem>>, vector<8x400xf32>,
    %33 = vector.extract_strided_slice %6 {offsets = [0, 43], sizes = [8, 400], strides = [1, 1]} : vector<8x484xf32> to vector<8x400xf32>
    %c104 = arith.constant 104 : index
    %c0_21 = arith.constant 0 : index
    %34 = vector.load %arg11[%c104, %c0_21] : memref<800x400xf32, #tpu.memory_space<vmem>>, vector<8x400xf32>
    tpu.vector_store %arg11[%c104, %c0_21], %33 {strides = array<i32>} : memref<800x400xf32, #tpu.memory_space<vmem>>, vector<8x400xf32>,
    %35 = vector.extract_strided_slice %6 {offsets = [0, 44], sizes = [8, 400], strides = [1, 1]} : vector<8x484xf32> to vector<8x400xf32>
    %c112 = arith.constant 112 : index
    %c0_22 = arith.constant 0 : index
    %36 = vector.load %arg11[%c112, %c0_22] : memref<800x400xf32, #tpu.memory_space<vmem>>, vector<8x400xf32>
    tpu.vector_store %arg11[%c112, %c0_22], %35 {strides = array<i32>} : memref<800x400xf32, #tpu.memory_space<vmem>>, vector<8x400xf32>,
    %37 = vector.extract_strided_slice %6 {offsets = [0, 60], sizes = [8, 400], strides = [1, 1]} : vector<8x484xf32> to vector<8x400xf32>
    %c120 = arith.constant 120 : index
    %c0_23 = arith.constant 0 : index
    %38 = vector.load %arg11[%c120, %c0_23] : memref<800x400xf32, #tpu.memory_space<vmem>>, vector<8x400xf32>
    tpu.vector_store %arg11[%c120, %c0_23], %37 {strides = array<i32>} : memref<800x400xf32, #tpu.memory_space<vmem>>, vector<8x400xf32>,
    %39 = vector.extract_strided_slice %6 {offsets = [0, 61], sizes = [8, 400], strides = [1, 1]} : vector<8x484xf32> to vector<8x400xf32>
    %c128 = arith.constant 128 : index
    %c0_24 = arith.constant 0 : index
    %40 = vector.load %arg11[%c128, %c0_24] : memref<800x400xf32, #tpu.memory_space<vmem>>, vector<8x400xf32>
    tpu.vector_store %arg11[%c128, %c0_24], %39 {strides = array<i32>} : memref<800x400xf32, #tpu.memory_space<vmem>>, vector<8x400xf32>,
    %41 = vector.extract_strided_slice %6 {offsets = [0, 62], sizes = [8, 400], strides = [1, 1]} : vector<8x484xf32> to vector<8x400xf32>
    %c136 = arith.constant 136 : index
    %c0_25 = arith.constant 0 : index
    %42 = vector.load %arg11[%c136, %c0_25] : memref<800x400xf32, #tpu.memory_space<vmem>>, vector<8x400xf32>
    tpu.vector_store %arg11[%c136, %c0_25], %41 {strides = array<i32>} : memref<800x400xf32, #tpu.memory_space<vmem>>, vector<8x400xf32>,
    %43 = vector.extract_strided_slice %6 {offsets = [0, 63], sizes = [8, 400], strides = [1, 1]} : vector<8x484xf32> to vector<8x400xf32>
    %c144 = arith.constant 144 : index
    %c0_26 = arith.constant 0 : index
    %44 = vector.load %arg11[%c144, %c0_26] : memref<800x400xf32, #tpu.memory_space<vmem>>, vector<8x400xf32>
    tpu.vector_store %arg11[%c144, %c0_26], %43 {strides = array<i32>} : memref<800x400xf32, #tpu.memory_space<vmem>>, vector<8x400xf32>,
    %45 = vector.extract_strided_slice %6 {offsets = [0, 64], sizes = [8, 400], strides = [1, 1]} : vector<8x484xf32> to vector<8x400xf32>
    %c152 = arith.constant 152 : index
    %c0_27 = arith.constant 0 : index
    %46 = vector.load %arg11[%c152, %c0_27] : memref<800x400xf32, #tpu.memory_space<vmem>>, vector<8x400xf32>
    tpu.vector_store %arg11[%c152, %c0_27], %45 {strides = array<i32>} : memref<800x400xf32, #tpu.memory_space<vmem>>, vector<8x400xf32>,
    %47 = vector.extract_strided_slice %6 {offsets = [0, 80], sizes = [8, 400], strides = [1, 1]} : vector<8x484xf32> to vector<8x400xf32>
    %c160 = arith.constant 160 : index
    %c0_28 = arith.constant 0 : index
    %48 = vector.load %arg11[%c160, %c0_28] : memref<800x400xf32, #tpu.memory_space<vmem>>, vector<8x400xf32>
    tpu.vector_store %arg11[%c160, %c0_28], %47 {strides = array<i32>} : memref<800x400xf32, #tpu.memory_space<vmem>>, vector<8x400xf32>,
    %49 = vector.extract_strided_slice %6 {offsets = [0, 81], sizes = [8, 400], strides = [1, 1]} : vector<8x484xf32> to vector<8x400xf32>
    %c168 = arith.constant 168 : index
    %c0_29 = arith.constant 0 : index
    %50 = vector.load %arg11[%c168, %c0_29] : memref<800x400xf32, #tpu.memory_space<vmem>>, vector<8x400xf32>
    tpu.vector_store %arg11[%c168, %c0_29], %49 {strides = array<i32>} : memref<800x400xf32, #tpu.memory_space<vmem>>, vector<8x400xf32>,
    %51 = vector.extract_strided_slice %6 {offsets = [0, 82], sizes = [8, 400], strides = [1, 1]} : vector<8x484xf32> to vector<8x400xf32>
    %c176 = arith.constant 176 : index
    %c0_30 = arith.constant 0 : index
    %52 = vector.load %arg11[%c176, %c0_30] : memref<800x400xf32, #tpu.memory_space<vmem>>, vector<8x400xf32>
    tpu.vector_store %arg11[%c176, %c0_30], %51 {strides = array<i32>} : memref<800x400xf32, #tpu.memory_space<vmem>>, vector<8x400xf32>,
    %53 = vector.extract_strided_slice %6 {offsets = [0, 83], sizes = [8, 400], strides = [1, 1]} : vector<8x484xf32> to vector<8x400xf32>
    %c184 = arith.constant 184 : index
    %c0_31 = arith.constant 0 : index
    %54 = vector.load %arg11[%c184, %c0_31] : memref<800x400xf32, #tpu.memory_space<vmem>>, vector<8x400xf32>
    tpu.vector_store %arg11[%c184, %c0_31], %53 {strides = array<i32>} : memref<800x400xf32, #tpu.memory_space<vmem>>, vector<8x400xf32>,
    %55 = vector.extract_strided_slice %6 {offsets = [0, 84], sizes = [8, 400], strides = [1, 1]} : vector<8x484xf32> to vector<8x400xf32>
    %c192 = arith.constant 192 : index
    %c0_32 = arith.constant 0 : index
    %56 = vector.load %arg11[%c192, %c0_32] : memref<800x400xf32, #tpu.memory_space<vmem>>, vector<8x400xf32>
    tpu.vector_store %arg11[%c192, %c0_32], %55 {strides = array<i32>} : memref<800x400xf32, #tpu.memory_space<vmem>>, vector<8x400xf32>,
    %c0_33 = arith.constant 0 : index
    %c0_34 = arith.constant 0 : index
    %57 = vector.load %arg2[%c0_33, %c0_34] : memref<32x200xf32, #tpu.memory_space<vmem>>, vector<32x200xf32>
    %c0_35 = arith.constant 0 : index
    %c0_36 = arith.constant 0 : index
    %58 = vector.load %arg11[%c0_35, %c0_36] : memref<800x400xf32, #tpu.memory_space<vmem>>, vector<200x400xf32>
    %cst_37 = arith.constant dense<0.000000e+00> : vector<32x400xf32>
    %59 = tpu.matmul %57, %58, %cst_37 {dimension_numbers = #tpu.dot_dimension_numbers<[1], [0], [0], [1], [0, 0, 1, 1], [], []>} : vector<32x200xf32>, vector<200x400xf32>, vector<32x400xf32> -> vector<32x400xf32>
    %c0_38 = arith.constant 0 : index
    %c0_39 = arith.constant 0 : index
    %60 = vector.load %arg5[%c0_38, %c0_39] : memref<32x1xf32, #tpu.memory_space<vmem>>, vector<32x1xf32>
    %61 = vector.broadcast %60 : vector<32x1xf32> to vector<32x400xf32>
    %62 = arith.addf %59, %61 : vector<32x400xf32>
    %cst_40 = arith.constant 0.000000e+00 : f32
    %63 = vector.broadcast %cst_40 : f32 to vector<32x400xf32>
    %64 = arith.cmpf oge, %62, %63 : vector<32x400xf32>
    %c0_41 = arith.constant 0 : index
    %65 = memref.load %arg9[%c0_41] : memref<2xf32, #tpu.memory_space<smem>>
    %66 = vector.broadcast %65 : f32 to vector<32x400xf32>
    %67 = arith.mulf %66, %62 : vector<32x400xf32>
    %68 = arith.select %64, %62, %67 : vector<32x400xi1>, vector<32x400xf32>
    %cst_42 = arith.constant 0.000000e+00 : f32
    %69 = vector.shape_cast %2 : vector<1x400xi1> to vector<1x400xi1>
    %70 = vector.broadcast %69 : vector<1x400xi1> to vector<32x400xi1>
    %71 = vector.broadcast %cst_42 : f32 to vector<32x400xf32>
    %72 = arith.select %70, %68, %71 : vector<32x400xi1>, vector<32x400xf32>
    %c0_43 = arith.constant 0 : index
    %c42 = arith.constant 42 : index
    %73 = vector.load %arg12[%c0_43, %c42] : memref<32x484xf32, #tpu.memory_space<vmem>>, vector<32x400xf32>
    tpu.vector_store %arg12[%c0_43, %c42], %72 {strides = array<i32>} : memref<32x484xf32, #tpu.memory_space<vmem>>, vector<32x400xf32>,
    %c0_44 = arith.constant 0 : index
    %c0_45 = arith.constant 0 : index
    %74 = vector.load %arg12[%c0_44, %c0_45] : memref<32x484xf32, #tpu.memory_space<vmem>>, vector<32x400xf32>
    %c0_46 = arith.constant 0 : index
    %c0_47 = arith.constant 0 : index
    %75 = vector.load %arg11[%c0_46, %c0_47] : memref<800x400xf32, #tpu.memory_space<vmem>>, vector<32x400xf32>
    tpu.vector_store %arg11[%c0_46, %c0_47], %74 {strides = array<i32>} : memref<800x400xf32, #tpu.memory_space<vmem>>, vector<32x400xf32>,
    %c0_48 = arith.constant 0 : index
    %c1 = arith.constant 1 : index
    %76 = vector.load %arg12[%c0_48, %c1] : memref<32x484xf32, #tpu.memory_space<vmem>>, vector<32x400xf32>
    %c32_49 = arith.constant 32 : index
    %c0_50 = arith.constant 0 : index
    %77 = vector.load %arg11[%c32_49, %c0_50] : memref<800x400xf32, #tpu.memory_space<vmem>>, vector<32x400xf32>
    tpu.vector_store %arg11[%c32_49, %c0_50], %76 {strides = array<i32>} : memref<800x400xf32, #tpu.memory_space<vmem>>, vector<32x400xf32>,
    %c0_51 = arith.constant 0 : index
    %c2 = arith.constant 2 : index
    %78 = vector.load %arg12[%c0_51, %c2] : memref<32x484xf32, #tpu.memory_space<vmem>>, vector<32x400xf32>
    %c64_52 = arith.constant 64 : index
    %c0_53 = arith.constant 0 : index
    %79 = vector.load %arg11[%c64_52, %c0_53] : memref<800x400xf32, #tpu.memory_space<vmem>>, vector<32x400xf32>
    tpu.vector_store %arg11[%c64_52, %c0_53], %78 {strides = array<i32>} : memref<800x400xf32, #tpu.memory_space<vmem>>, vector<32x400xf32>,
    %c0_54 = arith.constant 0 : index
    %c3 = arith.constant 3 : index
    %80 = vector.load %arg12[%c0_54, %c3] : memref<32x484xf32, #tpu.memory_space<vmem>>, vector<32x400xf32>
    %c96_55 = arith.constant 96 : index
    %c0_56 = arith.constant 0 : index
    %81 = vector.load %arg11[%c96_55, %c0_56] : memref<800x400xf32, #tpu.memory_space<vmem>>, vector<32x400xf32>
    tpu.vector_store %arg11[%c96_55, %c0_56], %80 {strides = array<i32>} : memref<800x400xf32, #tpu.memory_space<vmem>>, vector<32x400xf32>,
    %c0_57 = arith.constant 0 : index
    %c4 = arith.constant 4 : index
    %82 = vector.load %arg12[%c0_57, %c4] : memref<32x484xf32, #tpu.memory_space<vmem>>, vector<32x400xf32>
    %c128_58 = arith.constant 128 : index
    %c0_59 = arith.constant 0 : index
    %83 = vector.load %arg11[%c128_58, %c0_59] : memref<800x400xf32, #tpu.memory_space<vmem>>, vector<32x400xf32>
    tpu.vector_store %arg11[%c128_58, %c0_59], %82 {strides = array<i32>} : memref<800x400xf32, #tpu.memory_space<vmem>>, vector<32x400xf32>,
    %c0_60 = arith.constant 0 : index
    %c20 = arith.constant 20 : index
    %84 = vector.load %arg12[%c0_60, %c20] : memref<32x484xf32, #tpu.memory_space<vmem>>, vector<32x400xf32>
    %c160_61 = arith.constant 160 : index
    %c0_62 = arith.constant 0 : index
    %85 = vector.load %arg11[%c160_61, %c0_62] : memref<800x400xf32, #tpu.memory_space<vmem>>, vector<32x400xf32>
    tpu.vector_store %arg11[%c160_61, %c0_62], %84 {strides = array<i32>} : memref<800x400xf32, #tpu.memory_space<vmem>>, vector<32x400xf32>,
    %c0_63 = arith.constant 0 : index
    %c21 = arith.constant 21 : index
    %86 = vector.load %arg12[%c0_63, %c21] : memref<32x484xf32, #tpu.memory_space<vmem>>, vector<32x400xf32>
    %c192_64 = arith.constant 192 : index
    %c0_65 = arith.constant 0 : index
    %87 = vector.load %arg11[%c192_64, %c0_65] : memref<800x400xf32, #tpu.memory_space<vmem>>, vector<32x400xf32>
    tpu.vector_store %arg11[%c192_64, %c0_65], %86 {strides = array<i32>} : memref<800x400xf32, #tpu.memory_space<vmem>>, vector<32x400xf32>,
    %c0_66 = arith.constant 0 : index
    %c22 = arith.constant 22 : index
    %88 = vector.load %arg12[%c0_66, %c22] : memref<32x484xf32, #tpu.memory_space<vmem>>, vector<32x400xf32>
    %c224 = arith.constant 224 : index
    %c0_67 = arith.constant 0 : index
    %89 = vector.load %arg11[%c224, %c0_67] : memref<800x400xf32, #tpu.memory_space<vmem>>, vector<32x400xf32>
    tpu.vector_store %arg11[%c224, %c0_67], %88 {strides = array<i32>} : memref<800x400xf32, #tpu.memory_space<vmem>>, vector<32x400xf32>,
    %c0_68 = arith.constant 0 : index
    %c23 = arith.constant 23 : index
    %90 = vector.load %arg12[%c0_68, %c23] : memref<32x484xf32, #tpu.memory_space<vmem>>, vector<32x400xf32>
    %c256 = arith.constant 256 : index
    %c0_69 = arith.constant 0 : index
    %91 = vector.load %arg11[%c256, %c0_69] : memref<800x400xf32, #tpu.memory_space<vmem>>, vector<32x400xf32>
    tpu.vector_store %arg11[%c256, %c0_69], %90 {strides = array<i32>} : memref<800x400xf32, #tpu.memory_space<vmem>>, vector<32x400xf32>,
    %c0_70 = arith.constant 0 : index
    %c24_71 = arith.constant 24 : index
    %92 = vector.load %arg12[%c0_70, %c24_71] : memref<32x484xf32, #tpu.memory_space<vmem>>, vector<32x400xf32>
    %c288 = arith.constant 288 : index
    %c0_72 = arith.constant 0 : index
    %93 = vector.load %arg11[%c288, %c0_72] : memref<800x400xf32, #tpu.memory_space<vmem>>, vector<32x400xf32>
    tpu.vector_store %arg11[%c288, %c0_72], %92 {strides = array<i32>} : memref<800x400xf32, #tpu.memory_space<vmem>>, vector<32x400xf32>,
    %c0_73 = arith.constant 0 : index
    %c40_74 = arith.constant 40 : index
    %94 = vector.load %arg12[%c0_73, %c40_74] : memref<32x484xf32, #tpu.memory_space<vmem>>, vector<32x400xf32>
    %c320 = arith.constant 320 : index
    %c0_75 = arith.constant 0 : index
    %95 = vector.load %arg11[%c320, %c0_75] : memref<800x400xf32, #tpu.memory_space<vmem>>, vector<32x400xf32>
    tpu.vector_store %arg11[%c320, %c0_75], %94 {strides = array<i32>} : memref<800x400xf32, #tpu.memory_space<vmem>>, vector<32x400xf32>,
    %c0_76 = arith.constant 0 : index
    %c41 = arith.constant 41 : index
    %96 = vector.load %arg12[%c0_76, %c41] : memref<32x484xf32, #tpu.memory_space<vmem>>, vector<32x400xf32>
    %c352 = arith.constant 352 : index
    %c0_77 = arith.constant 0 : index
    %97 = vector.load %arg11[%c352, %c0_77] : memref<800x400xf32, #tpu.memory_space<vmem>>, vector<32x400xf32>
    tpu.vector_store %arg11[%c352, %c0_77], %96 {strides = array<i32>} : memref<800x400xf32, #tpu.memory_space<vmem>>, vector<32x400xf32>,
    %c0_78 = arith.constant 0 : index
    %c42_79 = arith.constant 42 : index
    %98 = vector.load %arg12[%c0_78, %c42_79] : memref<32x484xf32, #tpu.memory_space<vmem>>, vector<32x400xf32>
    %c384 = arith.constant 384 : index
    %c0_80 = arith.constant 0 : index
    %99 = vector.load %arg11[%c384, %c0_80] : memref<800x400xf32, #tpu.memory_space<vmem>>, vector<32x400xf32>
    tpu.vector_store %arg11[%c384, %c0_80], %98 {strides = array<i32>} : memref<800x400xf32, #tpu.memory_space<vmem>>, vector<32x400xf32>,
    %c0_81 = arith.constant 0 : index
    %c43 = arith.constant 43 : index
    %100 = vector.load %arg12[%c0_81, %c43] : memref<32x484xf32, #tpu.memory_space<vmem>>, vector<32x400xf32>
    %c416 = arith.constant 416 : index
    %c0_82 = arith.constant 0 : index
    %101 = vector.load %arg11[%c416, %c0_82] : memref<800x400xf32, #tpu.memory_space<vmem>>, vector<32x400xf32>
    tpu.vector_store %arg11[%c416, %c0_82], %100 {strides = array<i32>} : memref<800x400xf32, #tpu.memory_space<vmem>>, vector<32x400xf32>,
    %c0_83 = arith.constant 0 : index
    %c44 = arith.constant 44 : index
    %102 = vector.load %arg12[%c0_83, %c44] : memref<32x484xf32, #tpu.memory_space<vmem>>, vector<32x400xf32>
    %c448 = arith.constant 448 : index
    %c0_84 = arith.constant 0 : index
    %103 = vector.load %arg11[%c448, %c0_84] : memref<800x400xf32, #tpu.memory_space<vmem>>, vector<32x400xf32>
    tpu.vector_store %arg11[%c448, %c0_84], %102 {strides = array<i32>} : memref<800x400xf32, #tpu.memory_space<vmem>>, vector<32x400xf32>,
    %c0_85 = arith.constant 0 : index
    %c60 = arith.constant 60 : index
    %104 = vector.load %arg12[%c0_85, %c60] : memref<32x484xf32, #tpu.memory_space<vmem>>, vector<32x400xf32>
    %c480 = arith.constant 480 : index
    %c0_86 = arith.constant 0 : index
    %105 = vector.load %arg11[%c480, %c0_86] : memref<800x400xf32, #tpu.memory_space<vmem>>, vector<32x400xf32>
    tpu.vector_store %arg11[%c480, %c0_86], %104 {strides = array<i32>} : memref<800x400xf32, #tpu.memory_space<vmem>>, vector<32x400xf32>,
    %c0_87 = arith.constant 0 : index
    %c61 = arith.constant 61 : index
    %106 = vector.load %arg12[%c0_87, %c61] : memref<32x484xf32, #tpu.memory_space<vmem>>, vector<32x400xf32>
    %c512 = arith.constant 512 : index
    %c0_88 = arith.constant 0 : index
    %107 = vector.load %arg11[%c512, %c0_88] : memref<800x400xf32, #tpu.memory_space<vmem>>, vector<32x400xf32>
    tpu.vector_store %arg11[%c512, %c0_88], %106 {strides = array<i32>} : memref<800x400xf32, #tpu.memory_space<vmem>>, vector<32x400xf32>,
    %c0_89 = arith.constant 0 : index
    %c62 = arith.constant 62 : index
    %108 = vector.load %arg12[%c0_89, %c62] : memref<32x484xf32, #tpu.memory_space<vmem>>, vector<32x400xf32>
    %c544 = arith.constant 544 : index
    %c0_90 = arith.constant 0 : index
    %109 = vector.load %arg11[%c544, %c0_90] : memref<800x400xf32, #tpu.memory_space<vmem>>, vector<32x400xf32>
    tpu.vector_store %arg11[%c544, %c0_90], %108 {strides = array<i32>} : memref<800x400xf32, #tpu.memory_space<vmem>>, vector<32x400xf32>,
    %c0_91 = arith.constant 0 : index
    %c63 = arith.constant 63 : index
    %110 = vector.load %arg12[%c0_91, %c63] : memref<32x484xf32, #tpu.memory_space<vmem>>, vector<32x400xf32>
    %c576 = arith.constant 576 : index
    %c0_92 = arith.constant 0 : index
    %111 = vector.load %arg11[%c576, %c0_92] : memref<800x400xf32, #tpu.memory_space<vmem>>, vector<32x400xf32>
    tpu.vector_store %arg11[%c576, %c0_92], %110 {strides = array<i32>} : memref<800x400xf32, #tpu.memory_space<vmem>>, vector<32x400xf32>,
    %c0_93 = arith.constant 0 : index
    %c64_94 = arith.constant 64 : index
    %112 = vector.load %arg12[%c0_93, %c64_94] : memref<32x484xf32, #tpu.memory_space<vmem>>, vector<32x400xf32>
    %c608 = arith.constant 608 : index
    %c0_95 = arith.constant 0 : index
    %113 = vector.load %arg11[%c608, %c0_95] : memref<800x400xf32, #tpu.memory_space<vmem>>, vector<32x400xf32>
    tpu.vector_store %arg11[%c608, %c0_95], %112 {strides = array<i32>} : memref<800x400xf32, #tpu.memory_space<vmem>>, vector<32x400xf32>,
    %c0_96 = arith.constant 0 : index
    %c80_97 = arith.constant 80 : index
    %114 = vector.load %arg12[%c0_96, %c80_97] : memref<32x484xf32, #tpu.memory_space<vmem>>, vector<32x400xf32>
    %c640 = arith.constant 640 : index
    %c0_98 = arith.constant 0 : index
    %115 = vector.load %arg11[%c640, %c0_98] : memref<800x400xf32, #tpu.memory_space<vmem>>, vector<32x400xf32>
    tpu.vector_store %arg11[%c640, %c0_98], %114 {strides = array<i32>} : memref<800x400xf32, #tpu.memory_space<vmem>>, vector<32x400xf32>,
    %c0_99 = arith.constant 0 : index
    %c81 = arith.constant 81 : index
    %116 = vector.load %arg12[%c0_99, %c81] : memref<32x484xf32, #tpu.memory_space<vmem>>, vector<32x400xf32>
    %c672 = arith.constant 672 : index
    %c0_100 = arith.constant 0 : index
    %117 = vector.load %arg11[%c672, %c0_100] : memref<800x400xf32, #tpu.memory_space<vmem>>, vector<32x400xf32>
    tpu.vector_store %arg11[%c672, %c0_100], %116 {strides = array<i32>} : memref<800x400xf32, #tpu.memory_space<vmem>>, vector<32x400xf32>,
    %c0_101 = arith.constant 0 : index
    %c82 = arith.constant 82 : index
    %118 = vector.load %arg12[%c0_101, %c82] : memref<32x484xf32, #tpu.memory_space<vmem>>, vector<32x400xf32>
    %c704 = arith.constant 704 : index
    %c0_102 = arith.constant 0 : index
    %119 = vector.load %arg11[%c704, %c0_102] : memref<800x400xf32, #tpu.memory_space<vmem>>, vector<32x400xf32>
    tpu.vector_store %arg11[%c704, %c0_102], %118 {strides = array<i32>} : memref<800x400xf32, #tpu.memory_space<vmem>>, vector<32x400xf32>,
    %c0_103 = arith.constant 0 : index
    %c83 = arith.constant 83 : index
    %120 = vector.load %arg12[%c0_103, %c83] : memref<32x484xf32, #tpu.memory_space<vmem>>, vector<32x400xf32>
    %c736 = arith.constant 736 : index
    %c0_104 = arith.constant 0 : index
    %121 = vector.load %arg11[%c736, %c0_104] : memref<800x400xf32, #tpu.memory_space<vmem>>, vector<32x400xf32>
    tpu.vector_store %arg11[%c736, %c0_104], %120 {strides = array<i32>} : memref<800x400xf32, #tpu.memory_space<vmem>>, vector<32x400xf32>,
    %c0_105 = arith.constant 0 : index
    %c84 = arith.constant 84 : index
    %122 = vector.load %arg12[%c0_105, %c84] : memref<32x484xf32, #tpu.memory_space<vmem>>, vector<32x400xf32>
    %c768 = arith.constant 768 : index
    %c0_106 = arith.constant 0 : index
    %123 = vector.load %arg11[%c768, %c0_106] : memref<800x400xf32, #tpu.memory_space<vmem>>, vector<32x400xf32>
    tpu.vector_store %arg11[%c768, %c0_106], %122 {strides = array<i32>} : memref<800x400xf32, #tpu.memory_space<vmem>>, vector<32x400xf32>,
    %c0_107 = arith.constant 0 : index
    %c0_108 = arith.constant 0 : index
    %124 = vector.load %arg3[%c0_107, %c0_108] : memref<32x800xf32, #tpu.memory_space<vmem>>, vector<32x800xf32>
    %c0_109 = arith.constant 0 : index
    %c0_110 = arith.constant 0 : index
    %125 = vector.load %arg11[%c0_109, %c0_110] : memref<800x400xf32, #tpu.memory_space<vmem>>, vector<800x400xf32>
    %cst_111 = arith.constant dense<0.000000e+00> : vector<32x400xf32>
    %126 = tpu.matmul %124, %125, %cst_111 {dimension_numbers = #tpu.dot_dimension_numbers<[1], [0], [0], [1], [0, 0, 1, 1], [], []>} : vector<32x800xf32>, vector<800x400xf32>, vector<32x400xf32> -> vector<32x400xf32>
    %c0_112 = arith.constant 0 : index
    %c0_113 = arith.constant 0 : index
    %127 = vector.load %arg6[%c0_112, %c0_113] : memref<32x1xf32, #tpu.memory_space<vmem>>, vector<32x1xf32>
    %128 = vector.broadcast %127 : vector<32x1xf32> to vector<32x400xf32>
    %129 = arith.addf %126, %128 : vector<32x400xf32>
    %cst_114 = arith.constant 0.000000e+00 : f32
    %130 = vector.broadcast %cst_114 : f32 to vector<32x400xf32>
    %131 = arith.cmpf oge, %129, %130 : vector<32x400xf32>
    %c1_115 = arith.constant 1 : index
    %132 = memref.load %arg9[%c1_115] : memref<2xf32, #tpu.memory_space<smem>>
    %133 = vector.broadcast %132 : f32 to vector<32x400xf32>
    %134 = arith.mulf %133, %129 : vector<32x400xf32>
    %135 = arith.select %131, %129, %134 : vector<32x400xi1>, vector<32x400xf32>
    %cst_116 = arith.constant 0.000000e+00 : f32
    %136 = vector.shape_cast %2 : vector<1x400xi1> to vector<1x400xi1>
    %137 = vector.broadcast %136 : vector<1x400xi1> to vector<32x400xi1>
    %138 = vector.broadcast %cst_116 : f32 to vector<32x400xf32>
    %139 = arith.select %137, %135, %138 : vector<32x400xi1>, vector<32x400xf32>
    %c0_117 = arith.constant 0 : index
    %c42_118 = arith.constant 42 : index
    %140 = vector.load %arg12[%c0_117, %c42_118] : memref<32x484xf32, #tpu.memory_space<vmem>>, vector<32x400xf32>
    tpu.vector_store %arg12[%c0_117, %c42_118], %139 {strides = array<i32>} : memref<32x484xf32, #tpu.memory_space<vmem>>, vector<32x400xf32>,
    %c0_119 = arith.constant 0 : index
    %c0_120 = arith.constant 0 : index
    %141 = vector.load %arg12[%c0_119, %c0_120] : memref<32x484xf32, #tpu.memory_space<vmem>>, vector<32x400xf32>
    %c0_121 = arith.constant 0 : index
    %c0_122 = arith.constant 0 : index
    %142 = vector.load %arg11[%c0_121, %c0_122] : memref<800x400xf32, #tpu.memory_space<vmem>>, vector<32x400xf32>
    tpu.vector_store %arg11[%c0_121, %c0_122], %141 {strides = array<i32>} : memref<800x400xf32, #tpu.memory_space<vmem>>, vector<32x400xf32>,
    %c0_123 = arith.constant 0 : index
    %c1_124 = arith.constant 1 : index
    %143 = vector.load %arg12[%c0_123, %c1_124] : memref<32x484xf32, #tpu.memory_space<vmem>>, vector<32x400xf32>
    %c32_125 = arith.constant 32 : index
    %c0_126 = arith.constant 0 : index
    %144 = vector.load %arg11[%c32_125, %c0_126] : memref<800x400xf32, #tpu.memory_space<vmem>>, vector<32x400xf32>
    tpu.vector_store %arg11[%c32_125, %c0_126], %143 {strides = array<i32>} : memref<800x400xf32, #tpu.memory_space<vmem>>, vector<32x400xf32>,
    %c0_127 = arith.constant 0 : index
    %c2_128 = arith.constant 2 : index
    %145 = vector.load %arg12[%c0_127, %c2_128] : memref<32x484xf32, #tpu.memory_space<vmem>>, vector<32x400xf32>
    %c64_129 = arith.constant 64 : index
    %c0_130 = arith.constant 0 : index
    %146 = vector.load %arg11[%c64_129, %c0_130] : memref<800x400xf32, #tpu.memory_space<vmem>>, vector<32x400xf32>
    tpu.vector_store %arg11[%c64_129, %c0_130], %145 {strides = array<i32>} : memref<800x400xf32, #tpu.memory_space<vmem>>, vector<32x400xf32>,
    %c0_131 = arith.constant 0 : index
    %c3_132 = arith.constant 3 : index
    %147 = vector.load %arg12[%c0_131, %c3_132] : memref<32x484xf32, #tpu.memory_space<vmem>>, vector<32x400xf32>
    %c96_133 = arith.constant 96 : index
    %c0_134 = arith.constant 0 : index
    %148 = vector.load %arg11[%c96_133, %c0_134] : memref<800x400xf32, #tpu.memory_space<vmem>>, vector<32x400xf32>
    tpu.vector_store %arg11[%c96_133, %c0_134], %147 {strides = array<i32>} : memref<800x400xf32, #tpu.memory_space<vmem>>, vector<32x400xf32>,
    %c0_135 = arith.constant 0 : index
    %c4_136 = arith.constant 4 : index
    %149 = vector.load %arg12[%c0_135, %c4_136] : memref<32x484xf32, #tpu.memory_space<vmem>>, vector<32x400xf32>
    %c128_137 = arith.constant 128 : index
    %c0_138 = arith.constant 0 : index
    %150 = vector.load %arg11[%c128_137, %c0_138] : memref<800x400xf32, #tpu.memory_space<vmem>>, vector<32x400xf32>
    tpu.vector_store %arg11[%c128_137, %c0_138], %149 {strides = array<i32>} : memref<800x400xf32, #tpu.memory_space<vmem>>, vector<32x400xf32>,
    %c0_139 = arith.constant 0 : index
    %c20_140 = arith.constant 20 : index
    %151 = vector.load %arg12[%c0_139, %c20_140] : memref<32x484xf32, #tpu.memory_space<vmem>>, vector<32x400xf32>
    %c160_141 = arith.constant 160 : index
    %c0_142 = arith.constant 0 : index
    %152 = vector.load %arg11[%c160_141, %c0_142] : memref<800x400xf32, #tpu.memory_space<vmem>>, vector<32x400xf32>
    tpu.vector_store %arg11[%c160_141, %c0_142], %151 {strides = array<i32>} : memref<800x400xf32, #tpu.memory_space<vmem>>, vector<32x400xf32>,
    %c0_143 = arith.constant 0 : index
    %c21_144 = arith.constant 21 : index
    %153 = vector.load %arg12[%c0_143, %c21_144] : memref<32x484xf32, #tpu.memory_space<vmem>>, vector<32x400xf32>
    %c192_145 = arith.constant 192 : index
    %c0_146 = arith.constant 0 : index
    %154 = vector.load %arg11[%c192_145, %c0_146] : memref<800x400xf32, #tpu.memory_space<vmem>>, vector<32x400xf32>
    tpu.vector_store %arg11[%c192_145, %c0_146], %153 {strides = array<i32>} : memref<800x400xf32, #tpu.memory_space<vmem>>, vector<32x400xf32>,
    %c0_147 = arith.constant 0 : index
    %c22_148 = arith.constant 22 : index
    %155 = vector.load %arg12[%c0_147, %c22_148] : memref<32x484xf32, #tpu.memory_space<vmem>>, vector<32x400xf32>
    %c224_149 = arith.constant 224 : index
    %c0_150 = arith.constant 0 : index
    %156 = vector.load %arg11[%c224_149, %c0_150] : memref<800x400xf32, #tpu.memory_space<vmem>>, vector<32x400xf32>
    tpu.vector_store %arg11[%c224_149, %c0_150], %155 {strides = array<i32>} : memref<800x400xf32, #tpu.memory_space<vmem>>, vector<32x400xf32>,
    %c0_151 = arith.constant 0 : index
    %c23_152 = arith.constant 23 : index
    %157 = vector.load %arg12[%c0_151, %c23_152] : memref<32x484xf32, #tpu.memory_space<vmem>>, vector<32x400xf32>
    %c256_153 = arith.constant 256 : index
    %c0_154 = arith.constant 0 : index
    %158 = vector.load %arg11[%c256_153, %c0_154] : memref<800x400xf32, #tpu.memory_space<vmem>>, vector<32x400xf32>
    tpu.vector_store %arg11[%c256_153, %c0_154], %157 {strides = array<i32>} : memref<800x400xf32, #tpu.memory_space<vmem>>, vector<32x400xf32>,
    %c0_155 = arith.constant 0 : index
    %c24_156 = arith.constant 24 : index
    %159 = vector.load %arg12[%c0_155, %c24_156] : memref<32x484xf32, #tpu.memory_space<vmem>>, vector<32x400xf32>
    %c288_157 = arith.constant 288 : index
    %c0_158 = arith.constant 0 : index
    %160 = vector.load %arg11[%c288_157, %c0_158] : memref<800x400xf32, #tpu.memory_space<vmem>>, vector<32x400xf32>
    tpu.vector_store %arg11[%c288_157, %c0_158], %159 {strides = array<i32>} : memref<800x400xf32, #tpu.memory_space<vmem>>, vector<32x400xf32>,
    %c0_159 = arith.constant 0 : index
    %c40_160 = arith.constant 40 : index
    %161 = vector.load %arg12[%c0_159, %c40_160] : memref<32x484xf32, #tpu.memory_space<vmem>>, vector<32x400xf32>
    %c320_161 = arith.constant 320 : index
    %c0_162 = arith.constant 0 : index
    %162 = vector.load %arg11[%c320_161, %c0_162] : memref<800x400xf32, #tpu.memory_space<vmem>>, vector<32x400xf32>
    tpu.vector_store %arg11[%c320_161, %c0_162], %161 {strides = array<i32>} : memref<800x400xf32, #tpu.memory_space<vmem>>, vector<32x400xf32>,
    %c0_163 = arith.constant 0 : index
    %c41_164 = arith.constant 41 : index
    %163 = vector.load %arg12[%c0_163, %c41_164] : memref<32x484xf32, #tpu.memory_space<vmem>>, vector<32x400xf32>
    %c352_165 = arith.constant 352 : index
    %c0_166 = arith.constant 0 : index
    %164 = vector.load %arg11[%c352_165, %c0_166] : memref<800x400xf32, #tpu.memory_space<vmem>>, vector<32x400xf32>
    tpu.vector_store %arg11[%c352_165, %c0_166], %163 {strides = array<i32>} : memref<800x400xf32, #tpu.memory_space<vmem>>, vector<32x400xf32>,
    %c0_167 = arith.constant 0 : index
    %c42_168 = arith.constant 42 : index
    %165 = vector.load %arg12[%c0_167, %c42_168] : memref<32x484xf32, #tpu.memory_space<vmem>>, vector<32x400xf32>
    %c384_169 = arith.constant 384 : index
    %c0_170 = arith.constant 0 : index
    %166 = vector.load %arg11[%c384_169, %c0_170] : memref<800x400xf32, #tpu.memory_space<vmem>>, vector<32x400xf32>
    tpu.vector_store %arg11[%c384_169, %c0_170], %165 {strides = array<i32>} : memref<800x400xf32, #tpu.memory_space<vmem>>, vector<32x400xf32>,
    %c0_171 = arith.constant 0 : index
    %c43_172 = arith.constant 43 : index
    %167 = vector.load %arg12[%c0_171, %c43_172] : memref<32x484xf32, #tpu.memory_space<vmem>>, vector<32x400xf32>
    %c416_173 = arith.constant 416 : index
    %c0_174 = arith.constant 0 : index
    %168 = vector.load %arg11[%c416_173, %c0_174] : memref<800x400xf32, #tpu.memory_space<vmem>>, vector<32x400xf32>
    tpu.vector_store %arg11[%c416_173, %c0_174], %167 {strides = array<i32>} : memref<800x400xf32, #tpu.memory_space<vmem>>, vector<32x400xf32>,
    %c0_175 = arith.constant 0 : index
    %c44_176 = arith.constant 44 : index
    %169 = vector.load %arg12[%c0_175, %c44_176] : memref<32x484xf32, #tpu.memory_space<vmem>>, vector<32x400xf32>
    %c448_177 = arith.constant 448 : index
    %c0_178 = arith.constant 0 : index
    %170 = vector.load %arg11[%c448_177, %c0_178] : memref<800x400xf32, #tpu.memory_space<vmem>>, vector<32x400xf32>
    tpu.vector_store %arg11[%c448_177, %c0_178], %169 {strides = array<i32>} : memref<800x400xf32, #tpu.memory_space<vmem>>, vector<32x400xf32>,
    %c0_179 = arith.constant 0 : index
    %c60_180 = arith.constant 60 : index
    %171 = vector.load %arg12[%c0_179, %c60_180] : memref<32x484xf32, #tpu.memory_space<vmem>>, vector<32x400xf32>
    %c480_181 = arith.constant 480 : index
    %c0_182 = arith.constant 0 : index
    %172 = vector.load %arg11[%c480_181, %c0_182] : memref<800x400xf32, #tpu.memory_space<vmem>>, vector<32x400xf32>
    tpu.vector_store %arg11[%c480_181, %c0_182], %171 {strides = array<i32>} : memref<800x400xf32, #tpu.memory_space<vmem>>, vector<32x400xf32>,
    %c0_183 = arith.constant 0 : index
    %c61_184 = arith.constant 61 : index
    %173 = vector.load %arg12[%c0_183, %c61_184] : memref<32x484xf32, #tpu.memory_space<vmem>>, vector<32x400xf32>
    %c512_185 = arith.constant 512 : index
    %c0_186 = arith.constant 0 : index
    %174 = vector.load %arg11[%c512_185, %c0_186] : memref<800x400xf32, #tpu.memory_space<vmem>>, vector<32x400xf32>
    tpu.vector_store %arg11[%c512_185, %c0_186], %173 {strides = array<i32>} : memref<800x400xf32, #tpu.memory_space<vmem>>, vector<32x400xf32>,
    %c0_187 = arith.constant 0 : index
    %c62_188 = arith.constant 62 : index
    %175 = vector.load %arg12[%c0_187, %c62_188] : memref<32x484xf32, #tpu.memory_space<vmem>>, vector<32x400xf32>
    %c544_189 = arith.constant 544 : index
    %c0_190 = arith.constant 0 : index
    %176 = vector.load %arg11[%c544_189, %c0_190] : memref<800x400xf32, #tpu.memory_space<vmem>>, vector<32x400xf32>
    tpu.vector_store %arg11[%c544_189, %c0_190], %175 {strides = array<i32>} : memref<800x400xf32, #tpu.memory_space<vmem>>, vector<32x400xf32>,
    %c0_191 = arith.constant 0 : index
    %c63_192 = arith.constant 63 : index
    %177 = vector.load %arg12[%c0_191, %c63_192] : memref<32x484xf32, #tpu.memory_space<vmem>>, vector<32x400xf32>
    %c576_193 = arith.constant 576 : index
    %c0_194 = arith.constant 0 : index
    %178 = vector.load %arg11[%c576_193, %c0_194] : memref<800x400xf32, #tpu.memory_space<vmem>>, vector<32x400xf32>
    tpu.vector_store %arg11[%c576_193, %c0_194], %177 {strides = array<i32>} : memref<800x400xf32, #tpu.memory_space<vmem>>, vector<32x400xf32>,
    %c0_195 = arith.constant 0 : index
    %c64_196 = arith.constant 64 : index
    %179 = vector.load %arg12[%c0_195, %c64_196] : memref<32x484xf32, #tpu.memory_space<vmem>>, vector<32x400xf32>
    %c608_197 = arith.constant 608 : index
    %c0_198 = arith.constant 0 : index
    %180 = vector.load %arg11[%c608_197, %c0_198] : memref<800x400xf32, #tpu.memory_space<vmem>>, vector<32x400xf32>
    tpu.vector_store %arg11[%c608_197, %c0_198], %179 {strides = array<i32>} : memref<800x400xf32, #tpu.memory_space<vmem>>, vector<32x400xf32>,
    %c0_199 = arith.constant 0 : index
    %c80_200 = arith.constant 80 : index
    %181 = vector.load %arg12[%c0_199, %c80_200] : memref<32x484xf32, #tpu.memory_space<vmem>>, vector<32x400xf32>
    %c640_201 = arith.constant 640 : index
    %c0_202 = arith.constant 0 : index
    %182 = vector.load %arg11[%c640_201, %c0_202] : memref<800x400xf32, #tpu.memory_space<vmem>>, vector<32x400xf32>
    tpu.vector_store %arg11[%c640_201, %c0_202], %181 {strides = array<i32>} : memref<800x400xf32, #tpu.memory_space<vmem>>, vector<32x400xf32>,
    %c0_203 = arith.constant 0 : index
    %c81_204 = arith.constant 81 : index
    %183 = vector.load %arg12[%c0_203, %c81_204] : memref<32x484xf32, #tpu.memory_space<vmem>>, vector<32x400xf32>
    %c672_205 = arith.constant 672 : index
    %c0_206 = arith.constant 0 : index
    %184 = vector.load %arg11[%c672_205, %c0_206] : memref<800x400xf32, #tpu.memory_space<vmem>>, vector<32x400xf32>
    tpu.vector_store %arg11[%c672_205, %c0_206], %183 {strides = array<i32>} : memref<800x400xf32, #tpu.memory_space<vmem>>, vector<32x400xf32>,
    %c0_207 = arith.constant 0 : index
    %c82_208 = arith.constant 82 : index
    %185 = vector.load %arg12[%c0_207, %c82_208] : memref<32x484xf32, #tpu.memory_space<vmem>>, vector<32x400xf32>
    %c704_209 = arith.constant 704 : index
    %c0_210 = arith.constant 0 : index
    %186 = vector.load %arg11[%c704_209, %c0_210] : memref<800x400xf32, #tpu.memory_space<vmem>>, vector<32x400xf32>
    tpu.vector_store %arg11[%c704_209, %c0_210], %185 {strides = array<i32>} : memref<800x400xf32, #tpu.memory_space<vmem>>, vector<32x400xf32>,
    %c0_211 = arith.constant 0 : index
    %c83_212 = arith.constant 83 : index
    %187 = vector.load %arg12[%c0_211, %c83_212] : memref<32x484xf32, #tpu.memory_space<vmem>>, vector<32x400xf32>
    %c736_213 = arith.constant 736 : index
    %c0_214 = arith.constant 0 : index
    %188 = vector.load %arg11[%c736_213, %c0_214] : memref<800x400xf32, #tpu.memory_space<vmem>>, vector<32x400xf32>
    tpu.vector_store %arg11[%c736_213, %c0_214], %187 {strides = array<i32>} : memref<800x400xf32, #tpu.memory_space<vmem>>, vector<32x400xf32>,
    %c0_215 = arith.constant 0 : index
    %c84_216 = arith.constant 84 : index
    %189 = vector.load %arg12[%c0_215, %c84_216] : memref<32x484xf32, #tpu.memory_space<vmem>>, vector<32x400xf32>
    %c768_217 = arith.constant 768 : index
    %c0_218 = arith.constant 0 : index
    %190 = vector.load %arg11[%c768_217, %c0_218] : memref<800x400xf32, #tpu.memory_space<vmem>>, vector<32x400xf32>
    tpu.vector_store %arg11[%c768_217, %c0_218], %189 {strides = array<i32>} : memref<800x400xf32, #tpu.memory_space<vmem>>, vector<32x400xf32>,
    %c0_219 = arith.constant 0 : index
    %c0_220 = arith.constant 0 : index
    %191 = vector.load %arg4[%c0_219, %c0_220] : memref<1x800xf32, #tpu.memory_space<vmem>>, vector<1x800xf32>
    %c0_221 = arith.constant 0 : index
    %c0_222 = arith.constant 0 : index
    %192 = vector.load %arg11[%c0_221, %c0_222] : memref<800x400xf32, #tpu.memory_space<vmem>>, vector<800x400xf32>
    %cst_223 = arith.constant dense<0.000000e+00> : vector<1x400xf32>
    %193 = tpu.matmul %191, %192, %cst_223 {dimension_numbers = #tpu.dot_dimension_numbers<[1], [0], [0], [1], [0, 0, 1, 1], [], []>} : vector<1x800xf32>, vector<800x400xf32>, vector<1x400xf32> -> vector<1x400xf32>
    %c0_224 = arith.constant 0 : index
    %c0_225 = arith.constant 0 : index
    %194 = vector.load %arg7[%c0_224, %c0_225] : memref<1x1xf32, #tpu.memory_space<vmem>>, vector<1x1xf32>
    %195 = vector.broadcast %194 : vector<1x1xf32> to vector<1x400xf32>
    %196 = arith.addf %193, %195 : vector<1x400xf32>
    %197 = vector.extract_strided_slice %6 {offsets = [0, 42], sizes = [1, 400], strides = [1, 1]} : vector<8x484xf32> to vector<1x400xf32>
    %198 = arith.addf %196, %197 : vector<1x400xf32>
    %cst_226 = arith.constant 0.000000e+00 : f32
    %199 = vector.broadcast %cst_226 : f32 to vector<1x400xf32>
    %200 = arith.select %2, %198, %199 : vector<1x400xi1>, vector<1x400xf32>
    %201 = vector.shape_cast %200 : vector<1x400xf32> to vector<1x1x400xf32>
    %c0_227 = arith.constant 0 : index
    %c0_228 = arith.constant 0 : index
    %c0_229 = arith.constant 0 : index
    %202 = vector.load %arg10[%c0_227, %c0_228, %c0_229] : memref<1x1x400xf32, #tpu.memory_space<vmem>>, vector<1x1x400xf32>
    tpu.vector_store %arg10[%c0_227, %c0_228, %c0_229], %201 {strides = array<i32>} : memref<1x1x400xf32, #tpu.memory_space<vmem>>, vector<1x1x400xf32>,
    return
  }
  func.func @transform_0(%arg0: i32) -> (i32, i32, i32) {
    %c0_i32 = arith.constant 0 : i32
    %c0_i32_0 = arith.constant 0 : i32
    %c0_i32_1 = arith.constant 0 : i32
    return %arg0, %c0_i32, %c0_i32_0 : i32, i32, i32
  }
  func.func @transform_1(%arg0: i32) -> (i32, i32) {
    %c0_i32 = arith.constant 0 : i32
    %c0_i32_0 = arith.constant 0 : i32
    %c0_i32_1 = arith.constant 0 : i32
    return %c0_i32, %c0_i32_0 : i32, i32
  }
  func.func @transform_2(%arg0: i32) -> (i32, i32) {
    %c0_i32 = arith.constant 0 : i32
    %c0_i32_0 = arith.constant 0 : i32
    %c0_i32_1 = arith.constant 0 : i32
    return %c0_i32, %c0_i32_0 : i32, i32
  }
  func.func @transform_3(%arg0: i32) -> (i32, i32) {
    %c0_i32 = arith.constant 0 : i32
    %c0_i32_0 = arith.constant 0 : i32
    %c0_i32_1 = arith.constant 0 : i32
    return %c0_i32, %c0_i32_0 : i32, i32
  }
  func.func @transform_4(%arg0: i32) -> (i32, i32) {
    %c0_i32 = arith.constant 0 : i32
    %c0_i32_0 = arith.constant 0 : i32
    %c0_i32_1 = arith.constant 0 : i32
    return %c0_i32, %c0_i32_0 : i32, i32
  }
  func.func @transform_5(%arg0: i32) -> (i32, i32) {
    %c0_i32 = arith.constant 0 : i32
    %c0_i32_0 = arith.constant 0 : i32
    %c0_i32_1 = arith.constant 0 : i32
    return %c0_i32, %c0_i32_0 : i32, i32
  }
  func.func @transform_6(%arg0: i32) -> (i32, i32) {
    %c0_i32 = arith.constant 0 : i32
    %c0_i32_0 = arith.constant 0 : i32
    %c0_i32_1 = arith.constant 0 : i32
    return %c0_i32, %c0_i32_0 : i32, i32
  }
  func.func @transform_7(%arg0: i32) -> (i32, i32) {
    %c0_i32 = arith.constant 0 : i32
    %c0_i32_0 = arith.constant 0 : i32
    %c0_i32_1 = arith.constant 0 : i32
    return %c0_i32, %c0_i32_0 : i32, i32
  }
  func.func @transform_8(%arg0: i32) -> i32 {
    %c0_i32 = arith.constant 0 : i32
    %c0_i32_0 = arith.constant 0 : i32
    return %c0_i32 : i32
  }
  func.func @transform_9(%arg0: i32) -> (i32, i32, i32) {
    %c0_i32 = arith.constant 0 : i32
    %c0_i32_0 = arith.constant 0 : i32
    %c0_i32_1 = arith.constant 0 : i32
    return %arg0, %c0_i32, %c0_i32_0 : i32, i32, i32
  }
}

</mosaic_0001>

<llo_original>
// kernel: tpu_custom_call.1
$region0: #{tpu_custom_call.1}
  #allocation0 [shape = 'u32[]', space=smem, size = 0x4, offset = 0x4, fixed_abs, tag = 'smem constant byte address 0x4 - core index']
  #allocation1 [shape = 'u32[144,128]{1,0:T(1,128)}', space=vmem, size = 0x12000, scoped, tag = 'internal scratch']
  #allocation2 [shape = 'f32[800,400]{1,0:T(8,128)}', space=vmem, size = 0x190000, scoped, tag = 'scratch operand']
  #allocation3 [shape = 'f32[32,484]{1,0:T(8,128)}', space=vmem, size = 0x10000, scoped, tag = 'scratch operand']
  #allocation4 [shape = 'f32[1,1]{1,0:T(1,128)S(1)}', space=vmem, size = 0x200, scoped, tag = 'scoped memory for tpu_custom_call.1']
  %s0 = inlined_call_operand.vmem [shape: f32[2,8,484], index: 0, kind: input, shape index: {}]
  %s1 = inlined_call_operand.hbm [shape: f32[32,200], index: 1, kind: input, shape index: {}]
  %s2 = inlined_call_operand.hbm [shape: f32[32,800], index: 2, kind: input, shape index: {}]
  %s3 = inlined_call_operand.vmem [shape: f32[1,800], index: 3, kind: input, shape index: {}]
  %s4 = inlined_call_operand.vmem [shape: f32[32,1], index: 4, kind: input, shape index: {}]
  %s5 = inlined_call_operand.vmem [shape: f32[32,1], index: 5, kind: input, shape index: {}]
  %s6 = inlined_call_operand.<no memory space> [shape: f32[1,1], index: 6, kind: input, shape index: {}]
  %s7 = inlined_call_operand.vmem [shape: f32[1,400], index: 7, kind: input, shape index: {}]
  %s8 = inlined_call_operand.vmem [shape: f32[2], index: 8, kind: input, shape index: {}]
  %s9 = inlined_call_operand.hbm [shape: f32[2,1,400], index: 9, kind: output, shape index: {}]
  %s10 = sld [smem:[#allocation0]]
  $region81: #{tpu_custom_call.1} parent=0
    _
  %s12 = ssub.s32 1, %s10
  %s13 = scalar_select 0, %s12, %s10
  %v14 = vstv %s6
  %15 = vst [vmem:[#allocation4] sm:$0x1] %v14
  $region1: #{tpu_custom_call.1} parent=0
    #allocation5 [shape = 'u8[32768]{0}', space=vmem, size = 0x8000, scoped, tag = 'input window, operand 1, single buffered']
    #allocation6 [shape = 's32[2]{0}', space=sflag, size = 0x8, scoped, tag = 'scoped memory for tpu_custom_call.1']
    #allocation7 [shape = 's32[2]{0}', space=sflag, size = 0x8, scoped, tag = 'scoped memory for tpu_custom_call.1']
    #allocation8 [shape = 's32[2]{0}', space=sflag, size = 0x8, scoped, tag = 'scoped memory for tpu_custom_call.1']
    #allocation9 [shape = 'u8[114688]{0}', space=vmem, size = 0x1c000, scoped, tag = 'input window, operand 2, single buffered']
    #allocation10 [shape = 's32[1]{0}', space=sflag, size = 0x4, scoped, tag = 'scoped memory for tpu_custom_call.1']
    #allocation11 [shape = 'u8[512]{0}', space=smem, size = 0x200, scoped, tag = 'input window, operand 8, single buffered']
    #allocation12 [shape = 'u8[4096]{0}', space=vmem, size = 0x1000, scoped, tag = 'output window, operand 0']
    %16 = vsyncpa [#allocation6], 0
    %17 = vsyncpa [#allocation10], 0
    %18 = vsyncpa [#allocation8], 0
    %19 = vsyncpa [#allocation7], 0
    %s20 = scalar_lea.sflag [#allocation7], 1
    %21 = vsyncpa %s20, 0
    loop: start=0, step=1, limit=4
    $region2: #{tpu_custom_call.1} parent=1 // loop_pre_header
      _
    $region3: #{tpu_custom_call.1} parent=1 // loop_header
      %s23 = sphi 0, %s27
      %p24 = scmp.ge.s32.totalorder %s23, 4
      %s33 = sphi 0, %s35
      %s36 = sphi 0, %s33
      %s37 = sphi 0, %s36
      %s53 = sphi 0, %s37
      %s57 = sphi 0, %s57
      %s59 = sphi 0, %s57
      %s60 = sphi 0, %s59
      %s74 = sphi 0, %s60
      %s78 = sphi 0, %s78
      %s80 = sphi 0, %s78
      %s81 = sphi 0, %s80
      %s95 = sphi 0, %s81
      %s99 = sphi 0, %s99
      %s101 = sphi 0, %s99
      %s102 = sphi 0, %s101
      %s116 = sphi 0, %s102
      %s120 = sphi 0, %s120
      %s122 = sphi 0, %s120
      %s123 = sphi 0, %s122
      %s137 = sphi 0, %s123
      %s141 = sphi 0, %s141
      %s143 = sphi 0, %s141
      %s144 = sphi 0, %s143
      %s158 = sphi 0, %s144
      %s162 = sphi 0, %s162
      %s164 = sphi 0, %s162
      %s165 = sphi 0, %s164
      %s179 = sphi 0, %s165
      %s183 = sphi 0, %s183
      %s185 = sphi 0, %s183
      %s186 = sphi 0, %s185
      %s200 = sphi 0, %s186
      %s204 = sphi 0, %s204
      %s206 = sphi 0, %s204
      %s207 = sphi 0, %s206
      %s221 = sphi 0, %s207
      %s227 = sphi 0, %s229
      %s230 = sphi 0, %s227
      %s231 = sphi 0, %s230
      %s247 = sphi 0, %s231
    $region4: #{tpu_custom_call.1} parent=1 // loop_header_branch
      %26 = sbr.rel (%p24) target = $region8
    $region5: #{tpu_custom_call.1} parent=1 // loop_body
      %s28 = ssub.s32 %s23, 1
      %s29 = ssub.s32 %s23, 2
      %s30 = sadd.s32 %s23, 1
      %s31 = ssub.s32 %s23, %s30
      %p32 = scmp.eq.s32.totalorder %s31, 0
      %s34 = sadd.s32 %s33, 1
      %s35 = scalar_select %p32, %s33, %s34
      %p38 = pneg %p32
      %p39 = scmp.eq.s32.totalorder %s23, 1
      %p40 = por %p38, %p39
      %p41 = scmp.ne.s32.totalorder %s33, %s36
      %p42 = scmp.eq.s32.totalorder %s23, 0
      %p43 = por %p41, %p42
      %p44 = scmp.ne.s32.totalorder %s33, %s36
      %p45 = scmp.eq.s32.totalorder %s28, 1
      %p46 = por %p44, %p45
      %p47 = scmp.ne.s32.totalorder %s36, %s37
      %p48 = scmp.eq.s32.totalorder %s28, 0
      %p49 = por %p47, %p48
      %p50 = scmp.ne.s32.totalorder %s36, %s37
      %p51 = scmp.eq.s32.totalorder %s29, 1
      %p52 = por %p50, %p51
      %p54 = scmp.ne.s32.totalorder %s37, %s53
      %p55 = scmp.eq.s32.totalorder %s29, 0
      %p56 = por %p54, %p55
      %s58 = sadd.s32 %s57, 1
      %p61 = scmp.eq.s32.totalorder %s23, 1
      %p62 = scmp.ne.s32.totalorder %s57, %s59
      %p63 = scmp.eq.s32.totalorder %s23, 0
      %p64 = por %p62, %p63
      %p65 = scmp.ne.s32.totalorder %s57, %s59
      %p66 = scmp.eq.s32.totalorder %s28, 1
      %p67 = por %p65, %p66
      %p68 = scmp.ne.s32.totalorder %s59, %s60
      %p69 = scmp.eq.s32.totalorder %s28, 0
      %p70 = por %p68, %p69
      %p71 = scmp.ne.s32.totalorder %s59, %s60
      %p72 = scmp.eq.s32.totalorder %s29, 1
      %p73 = por %p71, %p72
      %p75 = scmp.ne.s32.totalorder %s60, %s74
      %p76 = scmp.eq.s32.totalorder %s29, 0
      %p77 = por %p75, %p76
      %s79 = sadd.s32 %s78, 1
      %p82 = scmp.eq.s32.totalorder %s23, 1
      %p83 = scmp.ne.s32.totalorder %s78, %s80
      %p84 = scmp.eq.s32.totalorder %s23, 0
      %p85 = por %p83, %p84
      %p86 = scmp.ne.s32.totalorder %s78, %s80
      %p87 = scmp.eq.s32.totalorder %s28, 1
      %p88 = por %p86, %p87
      %p89 = scmp.ne.s32.totalorder %s80, %s81
      %p90 = scmp.eq.s32.totalorder %s28, 0
      %p91 = por %p89, %p90
      %p92 = scmp.ne.s32.totalorder %s80, %s81
      %p93 = scmp.eq.s32.totalorder %s29, 1
      %p94 = por %p92, %p93
      %p96 = scmp.ne.s32.totalorder %s81, %s95
      %p97 = scmp.eq.s32.totalorder %s29, 0
      %p98 = por %p96, %p97
      %s100 = sadd.s32 %s99, 1
      %p103 = scmp.eq.s32.totalorder %s23, 1
      %p104 = scmp.ne.s32.totalorder %s99, %s101
      %p105 = scmp.eq.s32.totalorder %s23, 0
      %p106 = por %p104, %p105
      %p107 = scmp.ne.s32.totalorder %s99, %s101
      %p108 = scmp.eq.s32.totalorder %s28, 1
      %p109 = por %p107, %p108
      %p110 = scmp.ne.s32.totalorder %s101, %s102
      %p111 = scmp.eq.s32.totalorder %s28, 0
      %p112 = por %p110, %p111
      %p113 = scmp.ne.s32.totalorder %s101, %s102
      %p114 = scmp.eq.s32.totalorder %s29, 1
      %p115 = por %p113, %p114
      %p117 = scmp.ne.s32.totalorder %s102, %s116
      %p118 = scmp.eq.s32.totalorder %s29, 0
      %p119 = por %p117, %p118
      %s121 = sadd.s32 %s120, 1
      %p124 = scmp.eq.s32.totalorder %s23, 1
      %p125 = scmp.ne.s32.totalorder %s120, %s122
      %p126 = scmp.eq.s32.totalorder %s23, 0
      %p127 = por %p125, %p126
      %p128 = scmp.ne.s32.totalorder %s120, %s122
      %p129 = scmp.eq.s32.totalorder %s28, 1
      %p130 = por %p128, %p129
      %p131 = scmp.ne.s32.totalorder %s122, %s123
      %p132 = scmp.eq.s32.totalorder %s28, 0
      %p133 = por %p131, %p132
      %p134 = scmp.ne.s32.totalorder %s122, %s123
      %p135 = scmp.eq.s32.totalorder %s29, 1
      %p136 = por %p134, %p135
      %p138 = scmp.ne.s32.totalorder %s123, %s137
      %p139 = scmp.eq.s32.totalorder %s29, 0
      %p140 = por %p138, %p139
      %s142 = sadd.s32 %s141, 1
      %p145 = scmp.eq.s32.totalorder %s23, 1
      %p146 = scmp.ne.s32.totalorder %s141, %s143
      %p147 = scmp.eq.s32.totalorder %s23, 0
      %p148 = por %p146, %p147
      %p149 = scmp.ne.s32.totalorder %s141, %s143
      %p150 = scmp.eq.s32.totalorder %s28, 1
      %p151 = por %p149, %p150
      %p152 = scmp.ne.s32.totalorder %s143, %s144
      %p153 = scmp.eq.s32.totalorder %s28, 0
      %p154 = por %p152, %p153
      %p155 = scmp.ne.s32.totalorder %s143, %s144
      %p156 = scmp.eq.s32.totalorder %s29, 1
      %p157 = por %p155, %p156
      %p159 = scmp.ne.s32.totalorder %s144, %s158
      %p160 = scmp.eq.s32.totalorder %s29, 0
      %p161 = por %p159, %p160
      %s163 = sadd.s32 %s162, 1
      %p166 = scmp.eq.s32.totalorder %s23, 1
      %p167 = scmp.ne.s32.totalorder %s162, %s164
      %p168 = scmp.eq.s32.totalorder %s23, 0
      %p169 = por %p167, %p168
      %p170 = scmp.ne.s32.totalorder %s162, %s164
      %p171 = scmp.eq.s32.totalorder %s28, 1
      %p172 = por %p170, %p171
      %p173 = scmp.ne.s32.totalorder %s164, %s165
      %p174 = scmp.eq.s32.totalorder %s28, 0
      %p175 = por %p173, %p174
      %p176 = scmp.ne.s32.totalorder %s164, %s165
      %p177 = scmp.eq.s32.totalorder %s29, 1
      %p178 = por %p176, %p177
      %p180 = scmp.ne.s32.totalorder %s165, %s179
      %p181 = scmp.eq.s32.totalorder %s29, 0
      %p182 = por %p180, %p181
      %s184 = sadd.s32 %s183, 1
      %p187 = scmp.eq.s32.totalorder %s23, 1
      %p188 = scmp.ne.s32.totalorder %s183, %s185
      %p189 = scmp.eq.s32.totalorder %s23, 0
      %p190 = por %p188, %p189
      %p191 = scmp.ne.s32.totalorder %s183, %s185
      %p192 = scmp.eq.s32.totalorder %s28, 1
      %p193 = por %p191, %p192
      %p194 = scmp.ne.s32.totalorder %s185, %s186
      %p195 = scmp.eq.s32.totalorder %s28, 0
      %p196 = por %p194, %p195
      %p197 = scmp.ne.s32.totalorder %s185, %s186
      %p198 = scmp.eq.s32.totalorder %s29, 1
      %p199 = por %p197, %p198
      %p201 = scmp.ne.s32.totalorder %s186, %s200
      %p202 = scmp.eq.s32.totalorder %s29, 0
      %p203 = por %p201, %p202
      %s205 = sadd.s32 %s204, 1
      %p208 = scmp.eq.s32.totalorder %s23, 1
      %p209 = scmp.ne.s32.totalorder %s204, %s206
      %p210 = scmp.eq.s32.totalorder %s23, 0
      %p211 = por %p209, %p210
      %p212 = scmp.ne.s32.totalorder %s204, %s206
      %p213 = scmp.eq.s32.totalorder %s28, 1
      %p214 = por %p212, %p213
      %p215 = scmp.ne.s32.totalorder %s206, %s207
      %p216 = scmp.eq.s32.totalorder %s28, 0
      %p217 = por %p215, %p216
      %p218 = scmp.ne.s32.totalorder %s206, %s207
      %p219 = scmp.eq.s32.totalorder %s29, 1
      %p220 = por %p218, %p219
      %p222 = scmp.ne.s32.totalorder %s207, %s221
      %p223 = scmp.eq.s32.totalorder %s29, 0
      %p224 = por %p222, %p223
      %s225 = ssub.s32 %s23, %s30
      %p226 = scmp.eq.s32.totalorder %s225, 0
      %s228 = sadd.s32 %s227, 1
      %s229 = scalar_select %p226, %s227, %s228
      %p232 = pneg %p226
      %p233 = scmp.eq.s32.totalorder %s23, 1
      %p234 = por %p232, %p233
      %p235 = scmp.ne.s32.totalorder %s227, %s230
      %p236 = scmp.eq.s32.totalorder %s23, 0
      %p237 = por %p235, %p236
      %p238 = scmp.ne.s32.totalorder %s227, %s230
      %p239 = scmp.eq.s32.totalorder %s28, 1
      %p240 = por %p238, %p239
      %p241 = scmp.ne.s32.totalorder %s230, %s231
      %p242 = scmp.eq.s32.totalorder %s28, 0
      %p243 = por %p241, %p242
      %p244 = scmp.ne.s32.totalorder %s230, %s231
      %p245 = scmp.eq.s32.totalorder %s29, 1
      %p246 = por %p244, %p245
      %p248 = scmp.ne.s32.totalorder %s231, %s247
      %p249 = scmp.eq.s32.totalorder %s29, 0
      %p250 = por %p248, %p249
      %p251 = scmp.le.s32.totalorder 1, %s23
      %p252 = scmp.lt.s32.totalorder %s23, 3
      %p253 = pnand %p251, %p252
      %p254 = pneg %p253
      // Predicated region
      $region9: #{tpu_custom_call.1} parent=5 // pred_check
        _
      $region10: #{tpu_custom_call.1} parent=5 // pred_check_branch
        %256 = sbr.rel (%p253) target = $region12
      $region11: #{tpu_custom_call.1} parent=5 // pred_region
        %s257 = ssub.s32 %s23, 1
        // Predicated region
        $region13: #{tpu_custom_call.1} parent=11 // pred_check
          %p258 = pneg %p70
        $region14: #{tpu_custom_call.1} parent=11 // pred_check_branch
          %260 = sbr.rel (%p258) target = $region16
        $region15: #{tpu_custom_call.1} parent=11 // pred_region
          %s262 = ssub.s32 1024, 1024
          %263 = vsyncadd [#allocation6], %s262
          %s264 = sshll.u32 [#allocation5], 4
          %s265 = int_to_ptr.vmem [resolvable:$true] %s264
          %270 = dma.hbm_to_vmem [thread:$0]  %s1, 1024, %s265, [#allocation6], 256, 256, 16
        $region16: #{tpu_custom_call.1} parent=11 // pred_fallthru
          _
        // Predicated region
        $region17: #{tpu_custom_call.1} parent=11 // pred_check
          %p271 = pneg %p91
        $region18: #{tpu_custom_call.1} parent=11 // pred_check_branch
          %273 = sbr.rel (%p271) target = $region20
        $region19: #{tpu_custom_call.1} parent=11 // pred_region
          %s275 = ssub.s32 3584, 3584
          %276 = vsyncadd [#allocation10], %s275
          %s277 = sshll.u32 [#allocation9], 4
          %s278 = int_to_ptr.vmem [resolvable:$true] %s277
          %283 = dma.hbm_to_vmem [thread:$0]  %s2, 3584, %s278, [#allocation10], 896, 896, 56
        $region20: #{tpu_custom_call.1} parent=11 // pred_fallthru
          _
        // Predicated region
        $region21: #{tpu_custom_call.1} parent=11 // pred_check
          %p284 = pneg %p112
        $region22: #{tpu_custom_call.1} parent=11 // pred_check_branch
          %286 = sbr.rel (%p284) target = $region24
        $region23: #{tpu_custom_call.1} parent=11 // pred_region
          _
        $region24: #{tpu_custom_call.1} parent=11 // pred_fallthru
          _
        // Predicated region
        $region25: #{tpu_custom_call.1} parent=11 // pred_check
          %p287 = pneg %p133
        $region26: #{tpu_custom_call.1} parent=11 // pred_check_branch
          %289 = sbr.rel (%p287) target = $region28
        $region27: #{tpu_custom_call.1} parent=11 // pred_region
          _
        $region28: #{tpu_custom_call.1} parent=11 // pred_fallthru
          _
        // Predicated region
        $region29: #{tpu_custom_call.1} parent=11 // pred_check
          %p290 = pneg %p154
        $region30: #{tpu_custom_call.1} parent=11 // pred_check_branch
          %292 = sbr.rel (%p290) target = $region32
        $region31: #{tpu_custom_call.1} parent=11 // pred_region
          _
        $region32: #{tpu_custom_call.1} parent=11 // pred_fallthru
          _
        // Predicated region
        $region33: #{tpu_custom_call.1} parent=11 // pred_check
          %p293 = pneg %p175
        $region34: #{tpu_custom_call.1} parent=11 // pred_check_branch
          %295 = sbr.rel (%p293) target = $region36
        $region35: #{tpu_custom_call.1} parent=11 // pred_region
          _
        $region36: #{tpu_custom_call.1} parent=11 // pred_fallthru
          _
        // Predicated region
        $region37: #{tpu_custom_call.1} parent=11 // pred_check
          %p296 = pneg %p196
        $region38: #{tpu_custom_call.1} parent=11 // pred_check_branch
          %298 = sbr.rel (%p296) target = $region40
        $region39: #{tpu_custom_call.1} parent=11 // pred_region
          _
        $region40: #{tpu_custom_call.1} parent=11 // pred_fallthru
          _
        // Predicated region
        $region41: #{tpu_custom_call.1} parent=11 // pred_check
          %p299 = pneg %p217
        $region42: #{tpu_custom_call.1} parent=11 // pred_check_branch
          %301 = sbr.rel (%p299) target = $region44
        $region43: #{tpu_custom_call.1} parent=11 // pred_region
          %s303 = ssub.s32 16, 16
          %304 = vsyncadd [#allocation8], %s303
          %s306 = sshll.u32 %s8, 4
          %s307 = int_to_ptr.vmem [resolvable:$true] %s306
          %309 = dma.vmem_to_smem %s307, 16, [#allocation11], [#allocation8]
        $region44: #{tpu_custom_call.1} parent=11 // pred_fallthru
          _
      $region12: #{tpu_custom_call.1} parent=5 // pred_fallthru
        _
      %p310 = scmp.lt.s32.totalorder %s23, 2
      // Predicated region
      $region45: #{tpu_custom_call.1} parent=5 // pred_check
        %p311 = pneg %p310
      $region46: #{tpu_custom_call.1} parent=5 // pred_check_branch
        %313 = sbr.rel (%p311) target = $region48
      $region47: #{tpu_custom_call.1} parent=5 // pred_region
        // Predicated region
        $region49: #{tpu_custom_call.1} parent=47 // pred_check
          %p314 = pneg %p43
        $region50: #{tpu_custom_call.1} parent=47 // pred_check_branch
          %316 = sbr.rel (%p314) target = $region52
        $region51: #{tpu_custom_call.1} parent=47 // pred_region
          %p317 = scmp.lt.s32.totalorder %s23, 1
          %s318 = scalar_select %p317, %s23, 1
          %s319 = smul.addr %s318, 4
          %s320 = smul.addr %s319, 8
          %s321 = scalar_lea.vmem %s0, %s320
        $region52: #{tpu_custom_call.1} parent=47 // pred_fallthru
          _
      $region48: #{tpu_custom_call.1} parent=5 // pred_fallthru
        _
      %p322 = scmp.le.s32.totalorder 1, %s23
      %p323 = scmp.lt.s32.totalorder %s23, 3
      %p324 = pnand %p322, %p323
      %p325 = pneg %p324
      // Predicated region
      $region53: #{tpu_custom_call.1} parent=5 // pred_check
        _
      $region54: #{tpu_custom_call.1} parent=5 // pred_check_branch
        %327 = sbr.rel (%p324) target = $region56
      $region55: #{tpu_custom_call.1} parent=5 // pred_region
        %s328 = ssub.s32 %s23, 1
        // Predicated region
        $region57: #{tpu_custom_call.1} parent=55 // pred_check
          %p329 = pneg %p70
        $region58: #{tpu_custom_call.1} parent=55 // pred_check_branch
          %331 = sbr.rel (%p329) target = $region60
        $region59: #{tpu_custom_call.1} parent=55 // pred_region
          %332 = dma.done [#allocation6], 1024
        $region60: #{tpu_custom_call.1} parent=55 // pred_fallthru
          _
        // Predicated region
        $region61: #{tpu_custom_call.1} parent=55 // pred_check
          %p333 = pneg %p91
        $region62: #{tpu_custom_call.1} parent=55 // pred_check_branch
          %335 = sbr.rel (%p333) target = $region64
        $region63: #{tpu_custom_call.1} parent=55 // pred_region
          %336 = dma.done [#allocation10], 3584
        $region64: #{tpu_custom_call.1} parent=55 // pred_fallthru
          _
        // Predicated region
        $region65: #{tpu_custom_call.1} parent=55 // pred_check
          %p337 = pneg %p217
        $region66: #{tpu_custom_call.1} parent=55 // pred_check_branch
          %339 = sbr.rel (%p337) target = $region68
        $region67: #{tpu_custom_call.1} parent=55 // pred_region
          %340 = dma.done [#allocation8], 16
        $region68: #{tpu_custom_call.1} parent=55 // pred_fallthru
          _
        %341 = sfence
        %p342 = scmp.lt.s32.totalorder %s28, 1
        %s343 = scalar_select %p342, %s28, 1
        %s344 = smul.addr %s343, 4
        %s345 = smul.addr %s344, 8
        %s346 = scalar_lea.vmem %s0, %s345
        %p347 = pneg %p49
        %p348 = pneg %p46
        %p349 = pneg %p70
        %p350 = pneg %p67
        %p351 = pneg %p91
        %p352 = pneg %p88
        %p353 = pneg %p112
        %p354 = pneg %p109
        %p355 = pneg %p133
        %p356 = pneg %p130
        %p357 = pneg %p154
        %p358 = pneg %p151
        %p359 = pneg %p175
        %p360 = pneg %p172
        %p361 = pneg %p196
        %p362 = pneg %p193
        %p363 = pneg %p217
        %p364 = pneg %p214
        %p365 = pneg %p243
        %p366 = pneg %p240
        %s367 = sand.u32 %s230, 1
        %s368 = scalar_lea.sflag [#allocation7], %s367
        %s369 = sand.u32 %s230, 1
        %s370 = smul.addr %s369, 4
        %s371 = scalar_lea.vmem [#allocation12], %s370
        %p372 = scmp.lt.s32.totalorder %s28, 1
        %s373 = scalar_select %p372, %s28, 1
        %s374 = smul.addr %s373, 4
        %s375 = smul.addr %s374, 8
        %s376 = scalar_lea.vmem %s0, %s375
        %v377 = vld [vmem:[%s7] sm:$0xf]
        %vm378 = vcmp.gt.f32.partialorder %v377, 0.5
        %379 = vst [vmem:[#allocation3] sm:$0xff] 0.0
        %380 = vst [vmem:[#allocation3 + $0x8] sm:$0xff] 0.0
        %381 = vst [vmem:[#allocation3 + $0x10] sm:$0xff] 0.0
        %vm382 = vcmask 818176
        %383 = vst.msk [vmem:[#allocation3 + $0x18] sm:$0xff] %vm382, 0.0
        %384 = vst [vmem:[#allocation3 + $0x20] sm:$0xff] 0.0
        %385 = vst [vmem:[#allocation3 + $0x28] sm:$0xff] 0.0
        %386 = vst [vmem:[#allocation3 + $0x30] sm:$0xff] 0.0
        %387 = vst.msk [vmem:[#allocation3 + $0x38] sm:$0xff] %vm382, 0.0
        %388 = vst [vmem:[#allocation3 + $0x40] sm:$0xff] 0.0
        %389 = vst [vmem:[#allocation3 + $0x48] sm:$0xff] 0.0
        %390 = vst [vmem:[#allocation3 + $0x50] sm:$0xff] 0.0
        %391 = vst.msk [vmem:[#allocation3 + $0x58] sm:$0xff] %vm382, 0.0
        %392 = vst [vmem:[#allocation3 + $0x60] sm:$0xff] 0.0
        %393 = vst [vmem:[#allocation3 + $0x68] sm:$0xff] 0.0
        %394 = vst [vmem:[#allocation3 + $0x70] sm:$0xff] 0.0
        %395 = vst.msk [vmem:[#allocation3 + $0x78] sm:$0xff] %vm382, 0.0
        %v396 = vld [vmem:[%s376] sm:$0xff]
        %v397 = vld [vmem:[%s376 + $0x8] sm:$0xff]
        %v398 = vld [vmem:[%s376 + $0x10] sm:$0xff]
        %v399 = vld [vmem:[%s376 + $0x18] sm:$0xff]
        %400 = vst [vmem:[#allocation2] sm:$0xff] %v396
        %401 = vst [vmem:[#allocation2 + $0x8] sm:$0xff] %v397
        %402 = vst [vmem:[#allocation2 + $0x10] sm:$0xff] %v398
        %vm403 = vcmask 130048
        %404 = vst.msk [vmem:[#allocation2 + $0x18] sm:$0xff] %vm403, %v399
        %409 = vrot.lane.b32.xlu0 %v396, 127
        %v410 = vpop.permute.xlu0 %409
        %411 = vrot.lane.b32.xlu0 %v397, 127
        %v412 = vpop.permute.xlu0 %411
        %413 = vrot.lane.b32.xlu0 %v398, 127
        %v414 = vpop.permute.xlu0 %413
        %415 = vrot.lane.b32.xlu0 %v399, 127
        %v416 = vpop.permute.xlu0 %415
        %vm417 = vcmask 1039360
        %v418 = vsel %vm417, %v410, %v412
        %v419 = vsel %vm417, %v412, %v414
        %v420 = vsel %vm417, %v414, %v416
        %425 = vst [vmem:[#allocation2 + $0x20] sm:$0xff] %v418
        %426 = vst [vmem:[#allocation2 + $0x28] sm:$0xff] %v419
        %427 = vst [vmem:[#allocation2 + $0x30] sm:$0xff] %v420
        %428 = vst.msk [vmem:[#allocation2 + $0x38] sm:$0xff] %vm403, %v416
        %429 = vrot.lane.b32.xlu0 %v396, 126
        %v430 = vpop.permute.xlu0 %429
        %431 = vrot.lane.b32.xlu0 %v397, 126
        %v432 = vpop.permute.xlu0 %431
        %433 = vrot.lane.b32.xlu0 %v398, 126
        %v434 = vpop.permute.xlu0 %433
        %435 = vrot.lane.b32.xlu0 %v399, 126
        %v436 = vpop.permute.xlu0 %435
        %vm437 = vcmask 1031168
        %v438 = vsel %vm437, %v430, %v432
        %v439 = vsel %vm437, %v432, %v434
        %v440 = vsel %vm437, %v434, %v436
        %445 = vst [vmem:[#allocation2 + $0x40] sm:$0xff] %v438
        %446 = vst [vmem:[#allocation2 + $0x48] sm:$0xff] %v439
        %447 = vst [vmem:[#allocation2 + $0x50] sm:$0xff] %v440
        %448 = vst.msk [vmem:[#allocation2 + $0x58] sm:$0xff] %vm403, %v436
        %449 = vrot.lane.b32.xlu0 %v396, 125
        %v450 = vpop.permute.xlu0 %449
        %451 = vrot.lane.b32.xlu0 %v397, 125
        %v452 = vpop.permute.xlu0 %451
        %453 = vrot.lane.b32.xlu0 %v398, 125
        %v454 = vpop.permute.xlu0 %453
        %455 = vrot.lane.b32.xlu0 %v399, 125
        %v456 = vpop.permute.xlu0 %455
        %vm457 = vcmask 1022976
        %v458 = vsel %vm457, %v450, %v452
        %v459 = vsel %vm457, %v452, %v454
        %v460 = vsel %vm457, %v454, %v456
        %465 = vst [vmem:[#allocation2 + $0x60] sm:$0xff] %v458
        %466 = vst [vmem:[#allocation2 + $0x68] sm:$0xff] %v459
        %467 = vst [vmem:[#allocation2 + $0x70] sm:$0xff] %v460
        %468 = vst.msk [vmem:[#allocation2 + $0x78] sm:$0xff] %vm403, %v456
        %469 = vrot.lane.b32.xlu0 %v396, 124
        %v470 = vpop.permute.xlu0 %469
        %471 = vrot.lane.b32.xlu0 %v397, 124
        %v472 = vpop.permute.xlu0 %471
        %473 = vrot.lane.b32.xlu0 %v398, 124
        %v474 = vpop.permute.xlu0 %473
        %475 = vrot.lane.b32.xlu0 %v399, 124
        %v476 = vpop.permute.xlu0 %475
        %vm477 = vcmask 1014784
        %v478 = vsel %vm477, %v470, %v472
        %v479 = vsel %vm477, %v472, %v474
        %v480 = vsel %vm477, %v474, %v476
        %485 = vst [vmem:[#allocation2 + $0x80] sm:$0xff] %v478
        %486 = vst [vmem:[#allocation2 + $0x88] sm:$0xff] %v479
        %487 = vst [vmem:[#allocation2 + $0x90] sm:$0xff] %v480
        %488 = vst.msk [vmem:[#allocation2 + $0x98] sm:$0xff] %vm403, %v476
        %489 = vrot.lane.b32.xlu0 %v396, 108
        %v490 = vpop.permute.xlu0 %489
        %491 = vrot.lane.b32.xlu0 %v397, 108
        %v492 = vpop.permute.xlu0 %491
        %493 = vrot.lane.b32.xlu0 %v398, 108
        %v494 = vpop.permute.xlu0 %493
        %495 = vrot.lane.b32.xlu0 %v399, 108
        %v496 = vpop.permute.xlu0 %495
        %vm497 = vcmask 883712
        %v498 = vsel %vm497, %v490, %v492
        %v499 = vsel %vm497, %v492, %v494
        %v500 = vsel %vm497, %v494, %v496
        %505 = vst [vmem:[#allocation2 + $0xa0] sm:$0xff] %v498
        %506 = vst [vmem:[#allocation2 + $0xa8] sm:$0xff] %v499
        %507 = vst [vmem:[#allocation2 + $0xb0] sm:$0xff] %v500
        %508 = vst.msk [vmem:[#allocation2 + $0xb8] sm:$0xff] %vm403, %v496
        %509 = vrot.lane.b32.xlu0 %v396, 107
        %v510 = vpop.permute.xlu0 %509
        %511 = vrot.lane.b32.xlu0 %v397, 107
        %v512 = vpop.permute.xlu0 %511
        %513 = vrot.lane.b32.xlu0 %v398, 107
        %v514 = vpop.permute.xlu0 %513
        %515 = vrot.lane.b32.xlu0 %v399, 107
        %v516 = vpop.permute.xlu0 %515
        %vm517 = vcmask 875520
        %v518 = vsel %vm517, %v510, %v512
        %v519 = vsel %vm517, %v512, %v514
        %v520 = vsel %vm517, %v514, %v516
        %525 = vst [vmem:[#allocation2 + $0xc0] sm:$0xff] %v518
        %526 = vst [vmem:[#allocation2 + $0xc8] sm:$0xff] %v519
        %527 = vst [vmem:[#allocation2 + $0xd0] sm:$0xff] %v520
        %528 = vst.msk [vmem:[#allocation2 + $0xd8] sm:$0xff] %vm403, %v516
        %529 = vrot.lane.b32.xlu0 %v396, 106
        %v530 = vpop.permute.xlu0 %529
        %531 = vrot.lane.b32.xlu0 %v397, 106
        %v532 = vpop.permute.xlu0 %531
        %533 = vrot.lane.b32.xlu0 %v398, 106
        %v534 = vpop.permute.xlu0 %533
        %535 = vrot.lane.b32.xlu0 %v399, 106
        %v536 = vpop.permute.xlu0 %535
        %vm537 = vcmask 867328
        %v538 = vsel %vm537, %v530, %v532
        %v539 = vsel %vm537, %v532, %v534
        %v540 = vsel %vm537, %v534, %v536
        %545 = vst [vmem:[#allocation2 + $0xe0] sm:$0xff] %v538
        %546 = vst [vmem:[#allocation2 + $0xe8] sm:$0xff] %v539
        %547 = vst [vmem:[#allocation2 + $0xf0] sm:$0xff] %v540
        %548 = vst.msk [vmem:[#allocation2 + $0xf8] sm:$0xff] %vm403, %v536
        %549 = vrot.lane.b32.xlu0 %v396, 105
        %v550 = vpop.permute.xlu0 %549
        %551 = vrot.lane.b32.xlu0 %v397, 105
        %v552 = vpop.permute.xlu0 %551
        %553 = vrot.lane.b32.xlu0 %v398, 105
        %v554 = vpop.permute.xlu0 %553
        %555 = vrot.lane.b32.xlu0 %v399, 105
        %v556 = vpop.permute.xlu0 %555
        %vm557 = vcmask 859136
        %v558 = vsel %vm557, %v550, %v552
        %v559 = vsel %vm557, %v552, %v554
        %v560 = vsel %vm557, %v554, %v556
        %565 = vst [vmem:[#allocation2 + $0x100] sm:$0xff] %v558
        %566 = vst [vmem:[#allocation2 + $0x108] sm:$0xff] %v559
        %567 = vst [vmem:[#allocation2 + $0x110] sm:$0xff] %v560
        %568 = vst.msk [vmem:[#allocation2 + $0x118] sm:$0xff] %vm403, %v556
        %569 = vrot.lane.b32.xlu0 %v396, 104
        %v570 = vpop.permute.xlu0 %569
        %571 = vrot.lane.b32.xlu0 %v397, 104
        %v572 = vpop.permute.xlu0 %571
        %573 = vrot.lane.b32.xlu0 %v398, 104
        %v574 = vpop.permute.xlu0 %573
        %575 = vrot.lane.b32.xlu0 %v399, 104
        %v576 = vpop.permute.xlu0 %575
        %vm577 = vcmask 850944
        %v578 = vsel %vm577, %v570, %v572
        %v579 = vsel %vm577, %v572, %v574
        %v580 = vsel %vm577, %v574, %v576
        %585 = vst [vmem:[#allocation2 + $0x120] sm:$0xff] %v578
        %586 = vst [vmem:[#allocation2 + $0x128] sm:$0xff] %v579
        %587 = vst [vmem:[#allocation2 + $0x130] sm:$0xff] %v580
        %588 = vst.msk [vmem:[#allocation2 + $0x138] sm:$0xff] %vm403, %v576
        %589 = vrot.lane.b32.xlu0 %v396, 88
        %v590 = vpop.permute.xlu0 %589
        %591 = vrot.lane.b32.xlu0 %v397, 88
        %v592 = vpop.permute.xlu0 %591
        %593 = vrot.lane.b32.xlu0 %v398, 88
        %v594 = vpop.permute.xlu0 %593
        %595 = vrot.lane.b32.xlu0 %v399, 88
        %v596 = vpop.permute.xlu0 %595
        %vm597 = vcmask 719872
        %v598 = vsel %vm597, %v590, %v592
        %v599 = vsel %vm597, %v592, %v594
        %v600 = vsel %vm597, %v594, %v596
        %605 = vst [vmem:[#allocation2 + $0x140] sm:$0xff] %v598
        %606 = vst [vmem:[#allocation2 + $0x148] sm:$0xff] %v599
        %607 = vst [vmem:[#allocation2 + $0x150] sm:$0xff] %v600
        %608 = vst.msk [vmem:[#allocation2 + $0x158] sm:$0xff] %vm403, %v596
        %609 = vrot.lane.b32.xlu0 %v396, 87
        %v610 = vpop.permute.xlu0 %609
        %611 = vrot.lane.b32.xlu0 %v397, 87
        %v612 = vpop.permute.xlu0 %611
        %613 = vrot.lane.b32.xlu0 %v398, 87
        %v614 = vpop.permute.xlu0 %613
        %615 = vrot.lane.b32.xlu0 %v399, 87
        %v616 = vpop.permute.xlu0 %615
        %vm617 = vcmask 711680
        %v618 = vsel %vm617, %v610, %v612
        %v619 = vsel %vm617, %v612, %v614
        %v620 = vsel %vm617, %v614, %v616
        %625 = vst [vmem:[#allocation2 + $0x160] sm:$0xff] %v618
        %626 = vst [vmem:[#allocation2 + $0x168] sm:$0xff] %v619
        %627 = vst [vmem:[#allocation2 + $0x170] sm:$0xff] %v620
        %628 = vst.msk [vmem:[#allocation2 + $0x178] sm:$0xff] %vm403, %v616
        %629 = vrot.lane.b32.xlu0 %v396, 86
        %v630 = vpop.permute.xlu0 %629
        %631 = vrot.lane.b32.xlu0 %v397, 86
        %v632 = vpop.permute.xlu0 %631
        %633 = vrot.lane.b32.xlu0 %v398, 86
        %v634 = vpop.permute.xlu0 %633
        %635 = vrot.lane.b32.xlu0 %v399, 86
        %v636 = vpop.permute.xlu0 %635
        %vm637 = vcmask 703488
        %v638 = vsel %vm637, %v630, %v632
        %v639 = vsel %vm637, %v632, %v634
        %v640 = vsel %vm637, %v634, %v636
        %645 = vst [vmem:[#allocation2 + $0x180] sm:$0xff] %v638
        %646 = vst [vmem:[#allocation2 + $0x188] sm:$0xff] %v639
        %647 = vst [vmem:[#allocation2 + $0x190] sm:$0xff] %v640
        %648 = vst.msk [vmem:[#allocation2 + $0x198] sm:$0xff] %vm403, %v636
        %649 = vrot.lane.b32.xlu0 %v396, 85
        %v650 = vpop.permute.xlu0 %649
        %651 = vrot.lane.b32.xlu0 %v397, 85
        %v652 = vpop.permute.xlu0 %651
        %653 = vrot.lane.b32.xlu0 %v398, 85
        %v654 = vpop.permute.xlu0 %653
        %655 = vrot.lane.b32.xlu0 %v399, 85
        %v656 = vpop.permute.xlu0 %655
        %vm657 = vcmask 695296
        %v658 = vsel %vm657, %v650, %v652
        %v659 = vsel %vm657, %v652, %v654
        %v660 = vsel %vm657, %v654, %v656
        %665 = vst [vmem:[#allocation2 + $0x1a0] sm:$0xff] %v658
        %666 = vst [vmem:[#allocation2 + $0x1a8] sm:$0xff] %v659
        %667 = vst [vmem:[#allocation2 + $0x1b0] sm:$0xff] %v660
        %668 = vst.msk [vmem:[#allocation2 + $0x1b8] sm:$0xff] %vm403, %v656
        %669 = vrot.lane.b32.xlu0 %v396, 84
        %v670 = vpop.permute.xlu0 %669
        %671 = vrot.lane.b32.xlu0 %v397, 84
        %v672 = vpop.permute.xlu0 %671
        %673 = vrot.lane.b32.xlu0 %v398, 84
        %v674 = vpop.permute.xlu0 %673
        %675 = vrot.lane.b32.xlu0 %v399, 84
        %v676 = vpop.permute.xlu0 %675
        %vm677 = vcmask 687104
        %v678 = vsel %vm677, %v670, %v672
        %v679 = vsel %vm677, %v672, %v674
        %v680 = vsel %vm677, %v674, %v676
        %685 = vst [vmem:[#allocation2 + $0x1c0] sm:$0xff] %v678
        %686 = vst [vmem:[#allocation2 + $0x1c8] sm:$0xff] %v679
        %687 = vst [vmem:[#allocation2 + $0x1d0] sm:$0xff] %v680
        %688 = vst.msk [vmem:[#allocation2 + $0x1d8] sm:$0xff] %vm403, %v676
        %689 = vrot.lane.b32.xlu0 %v396, 68
        %v690 = vpop.permute.xlu0 %689
        %691 = vrot.lane.b32.xlu0 %v397, 68
        %v692 = vpop.permute.xlu0 %691
        %693 = vrot.lane.b32.xlu0 %v398, 68
        %v694 = vpop.permute.xlu0 %693
        %695 = vrot.lane.b32.xlu0 %v399, 68
        %v696 = vpop.permute.xlu0 %695
        %vm697 = vcmask 556032
        %v698 = vsel %vm697, %v690, %v692
        %v699 = vsel %vm697, %v692, %v694
        %v700 = vsel %vm697, %v694, %v696
        %705 = vst [vmem:[#allocation2 + $0x1e0] sm:$0xff] %v698
        %706 = vst [vmem:[#allocation2 + $0x1e8] sm:$0xff] %v699
        %707 = vst [vmem:[#allocation2 + $0x1f0] sm:$0xff] %v700
        %708 = vst.msk [vmem:[#allocation2 + $0x1f8] sm:$0xff] %vm403, %v696
        %709 = vrot.lane.b32.xlu0 %v396, 67
        %v710 = vpop.permute.xlu0 %709
        %711 = vrot.lane.b32.xlu0 %v397, 67
        %v712 = vpop.permute.xlu0 %711
        %713 = vrot.lane.b32.xlu0 %v398, 67
        %v714 = vpop.permute.xlu0 %713
        %715 = vrot.lane.b32.xlu0 %v399, 67
        %v716 = vpop.permute.xlu0 %715
        %vm717 = vcmask 547840
        %v718 = vsel %vm717, %v710, %v712
        %v719 = vsel %vm717, %v712, %v714
        %v720 = vsel %vm717, %v714, %v716
        %725 = vst [vmem:[#allocation2 + $0x200] sm:$0xff] %v718
        %726 = vst [vmem:[#allocation2 + $0x208] sm:$0xff] %v719
        %727 = vst [vmem:[#allocation2 + $0x210] sm:$0xff] %v720
        %728 = vst.msk [vmem:[#allocation2 + $0x218] sm:$0xff] %vm403, %v716
        %729 = vrot.lane.b32.xlu0 %v396, 66
        %v730 = vpop.permute.xlu0 %729
        %731 = vrot.lane.b32.xlu0 %v397, 66
        %v732 = vpop.permute.xlu0 %731
        %733 = vrot.lane.b32.xlu0 %v398, 66
        %v734 = vpop.permute.xlu0 %733
        %735 = vrot.lane.b32.xlu0 %v399, 66
        %v736 = vpop.permute.xlu0 %735
        %vm737 = vcmask 539648
        %v738 = vsel %vm737, %v730, %v732
        %v739 = vsel %vm737, %v732, %v734
        %v740 = vsel %vm737, %v734, %v736
        %745 = vst [vmem:[#allocation2 + $0x220] sm:$0xff] %v738
        %746 = vst [vmem:[#allocation2 + $0x228] sm:$0xff] %v739
        %747 = vst [vmem:[#allocation2 + $0x230] sm:$0xff] %v740
        %748 = vst.msk [vmem:[#allocation2 + $0x238] sm:$0xff] %vm403, %v736
        %749 = vrot.lane.b32.xlu0 %v396, 65
        %v750 = vpop.permute.xlu0 %749
        %751 = vrot.lane.b32.xlu0 %v397, 65
        %v752 = vpop.permute.xlu0 %751
        %753 = vrot.lane.b32.xlu0 %v398, 65
        %v754 = vpop.permute.xlu0 %753
        %755 = vrot.lane.b32.xlu0 %v399, 65
        %v756 = vpop.permute.xlu0 %755
        %vm757 = vcmask 531456
        %v758 = vsel %vm757, %v750, %v752
        %v759 = vsel %vm757, %v752, %v754
        %v760 = vsel %vm757, %v754, %v756
        %765 = vst [vmem:[#allocation2 + $0x240] sm:$0xff] %v758
        %766 = vst [vmem:[#allocation2 + $0x248] sm:$0xff] %v759
        %767 = vst [vmem:[#allocation2 + $0x250] sm:$0xff] %v760
        %768 = vst.msk [vmem:[#allocation2 + $0x258] sm:$0xff] %vm403, %v756
        %769 = vrot.lane.b32.xlu0 %v396, 64
        %v770 = vpop.permute.xlu0 %769
        %771 = vrot.lane.b32.xlu0 %v397, 64
        %v772 = vpop.permute.xlu0 %771
        %773 = vrot.lane.b32.xlu0 %v398, 64
        %v774 = vpop.permute.xlu0 %773
        %775 = vrot.lane.b32.xlu0 %v399, 64
        %v776 = vpop.permute.xlu0 %775
        %vm777 = vcmask 523264
        %v778 = vsel %vm777, %v770, %v772
        %v779 = vsel %vm777, %v772, %v774
        %v780 = vsel %vm777, %v774, %v776
        %785 = vst [vmem:[#allocation2 + $0x260] sm:$0xff] %v778
        %786 = vst [vmem:[#allocation2 + $0x268] sm:$0xff] %v779
        %787 = vst [vmem:[#allocation2 + $0x270] sm:$0xff] %v780
        %788 = vst.msk [vmem:[#allocation2 + $0x278] sm:$0xff] %vm403, %v776
        %789 = vrot.lane.b32.xlu0 %v396, 48
        %v790 = vpop.permute.xlu0 %789
        %791 = vrot.lane.b32.xlu0 %v397, 48
        %v792 = vpop.permute.xlu0 %791
        %793 = vrot.lane.b32.xlu0 %v398, 48
        %v794 = vpop.permute.xlu0 %793
        %795 = vrot.lane.b32.xlu0 %v399, 48
        %v796 = vpop.permute.xlu0 %795
        %vm797 = vcmask 392192
        %v798 = vsel %vm797, %v790, %v792
        %v799 = vsel %vm797, %v792, %v794
        %v800 = vsel %vm797, %v794, %v796
        %805 = vst [vmem:[#allocation2 + $0x280] sm:$0xff] %v798
        %806 = vst [vmem:[#allocation2 + $0x288] sm:$0xff] %v799
        %807 = vst [vmem:[#allocation2 + $0x290] sm:$0xff] %v800
        %808 = vst.msk [vmem:[#allocation2 + $0x298] sm:$0xff] %vm403, %v796
        %809 = vrot.lane.b32.xlu0 %v396, 47
        %v810 = vpop.permute.xlu0 %809
        %811 = vrot.lane.b32.xlu0 %v397, 47
        %v812 = vpop.permute.xlu0 %811
        %813 = vrot.lane.b32.xlu0 %v398, 47
        %v814 = vpop.permute.xlu0 %813
        %815 = vrot.lane.b32.xlu0 %v399, 47
        %v816 = vpop.permute.xlu0 %815
        %vm817 = vcmask 384000
        %v818 = vsel %vm817, %v810, %v812
        %v819 = vsel %vm817, %v812, %v814
        %v820 = vsel %vm817, %v814, %v816
        %825 = vst [vmem:[#allocation2 + $0x2a0] sm:$0xff] %v818
        %826 = vst [vmem:[#allocation2 + $0x2a8] sm:$0xff] %v819
        %827 = vst [vmem:[#allocation2 + $0x2b0] sm:$0xff] %v820
        %828 = vst.msk [vmem:[#allocation2 + $0x2b8] sm:$0xff] %vm403, %v816
        %829 = vrot.lane.b32.xlu0 %v396, 46
        %v830 = vpop.permute.xlu0 %829
        %831 = vrot.lane.b32.xlu0 %v397, 46
        %v832 = vpop.permute.xlu0 %831
        %833 = vrot.lane.b32.xlu0 %v398, 46
        %v834 = vpop.permute.xlu0 %833
        %835 = vrot.lane.b32.xlu0 %v399, 46
        %v836 = vpop.permute.xlu0 %835
        %vm837 = vcmask 375808
        %v838 = vsel %vm837, %v830, %v832
        %v839 = vsel %vm837, %v832, %v834
        %v840 = vsel %vm837, %v834, %v836
        %845 = vst [vmem:[#allocation2 + $0x2c0] sm:$0xff] %v838
        %846 = vst [vmem:[#allocation2 + $0x2c8] sm:$0xff] %v839
        %847 = vst [vmem:[#allocation2 + $0x2d0] sm:$0xff] %v840
        %848 = vst.msk [vmem:[#allocation2 + $0x2d8] sm:$0xff] %vm403, %v836
        %849 = vrot.lane.b32.xlu0 %v396, 45
        %v850 = vpop.permute.xlu0 %849
        %851 = vrot.lane.b32.xlu0 %v397, 45
        %v852 = vpop.permute.xlu0 %851
        %853 = vrot.lane.b32.xlu0 %v398, 45
        %v854 = vpop.permute.xlu0 %853
        %855 = vrot.lane.b32.xlu0 %v399, 45
        %v856 = vpop.permute.xlu0 %855
        %vm857 = vcmask 367616
        %v858 = vsel %vm857, %v850, %v852
        %v859 = vsel %vm857, %v852, %v854
        %v860 = vsel %vm857, %v854, %v856
        %865 = vst [vmem:[#allocation2 + $0x2e0] sm:$0xff] %v858
        %866 = vst [vmem:[#allocation2 + $0x2e8] sm:$0xff] %v859
        %867 = vst [vmem:[#allocation2 + $0x2f0] sm:$0xff] %v860
        %868 = vst.msk [vmem:[#allocation2 + $0x2f8] sm:$0xff] %vm403, %v856
        %869 = vrot.lane.b32.xlu0 %v396, 44
        %v870 = vpop.permute.xlu0 %869
        %871 = vrot.lane.b32.xlu0 %v397, 44
        %v872 = vpop.permute.xlu0 %871
        %873 = vrot.lane.b32.xlu0 %v398, 44
        %v874 = vpop.permute.xlu0 %873
        %875 = vrot.lane.b32.xlu0 %v399, 44
        %v876 = vpop.permute.xlu0 %875
        %vm877 = vcmask 359424
        %v878 = vsel %vm877, %v870, %v872
        %v879 = vsel %vm877, %v872, %v874
        %v880 = vsel %vm877, %v874, %v876
        %885 = vst [vmem:[#allocation2 + $0x300] sm:$0xff] %v878
        %886 = vst [vmem:[#allocation2 + $0x308] sm:$0xff] %v879
        %887 = vst [vmem:[#allocation2 + $0x310] sm:$0xff] %v880
        %888 = vst.msk [vmem:[#allocation2 + $0x318] sm:$0xff] %vm403, %v876
        %v889 = vld [vmem:[#allocation5] sm:$0xff]
        %v890 = vld [vmem:[#allocation5 + $0x8] sm:$0xff]
        %v891 = vld [vmem:[#allocation5 + $0x10] sm:$0xff]
        %v892 = vld [vmem:[#allocation5 + $0x18] sm:$0xff]
        %v893 = vld [vmem:[#allocation5 + $0x20] sm:$0xff]
        %v894 = vld [vmem:[#allocation5 + $0x28] sm:$0xff]
        %v895 = vld [vmem:[#allocation5 + $0x30] sm:$0xff]
        %v896 = vld [vmem:[#allocation5 + $0x38] sm:$0xff]
        %v897 = vld [vmem:[#allocation2] sm:$0xff]
        %v898 = vld [vmem:[#allocation2 + $0x8] sm:$0xff]
        %v899 = vld [vmem:[#allocation2 + $0x10] sm:$0xff]
        %v900 = vld [vmem:[#allocation2 + $0x18] sm:$0xff]
        %v901 = vld [vmem:[#allocation2 + $0x20] sm:$0xff]
        %v902 = vld [vmem:[#allocation2 + $0x28] sm:$0xff]
        %v903 = vld [vmem:[#allocation2 + $0x30] sm:$0xff]
        %v904 = vld [vmem:[#allocation2 + $0x38] sm:$0xff]
        %v905 = vld [vmem:[#allocation2 + $0x40] sm:$0xff]
        %v906 = vld [vmem:[#allocation2 + $0x48] sm:$0xff]
        %v907 = vld [vmem:[#allocation2 + $0x50] sm:$0xff]
        %v908 = vld [vmem:[#allocation2 + $0x58] sm:$0xff]
        %v909 = vld [vmem:[#allocation2 + $0x60] sm:$0xff]
        %v910 = vld [vmem:[#allocation2 + $0x68] sm:$0xff]
        %v911 = vld [vmem:[#allocation2 + $0x70] sm:$0xff]
        %v912 = vld [vmem:[#allocation2 + $0x78] sm:$0xff]
        %v913 = vld [vmem:[#allocation2 + $0x80] sm:$0xff]
        %v914 = vld [vmem:[#allocation2 + $0x88] sm:$0xff]
        %v915 = vld [vmem:[#allocation2 + $0x90] sm:$0xff]
        %v916 = vld [vmem:[#allocation2 + $0x98] sm:$0xff]
        %v917 = vld [vmem:[#allocation2 + $0xa0] sm:$0xff]
        %v918 = vld [vmem:[#allocation2 + $0xa8] sm:$0xff]
        %v919 = vld [vmem:[#allocation2 + $0xb0] sm:$0xff]
        %v920 = vld [vmem:[#allocation2 + $0xb8] sm:$0xff]
        %v921 = vld [vmem:[#allocation2 + $0xc0] sm:$0xff]
        %v922 = vld [vmem:[#allocation2 + $0xc8] sm:$0xff]
        %v923 = vld [vmem:[#allocation2 + $0xd0] sm:$0xff]
        %v924 = vld [vmem:[#allocation2 + $0xd8] sm:$0xff]
        %v925 = vld [vmem:[#allocation2 + $0xe0] sm:$0xff]
        %v926 = vld [vmem:[#allocation2 + $0xe8] sm:$0xff]
        %v927 = vld [vmem:[#allocation2 + $0xf0] sm:$0xff]
        %v928 = vld [vmem:[#allocation2 + $0xf8] sm:$0xff]
        %v929 = vld [vmem:[#allocation2 + $0x100] sm:$0xff]
        %v930 = vld [vmem:[#allocation2 + $0x108] sm:$0xff]
        %v931 = vld [vmem:[#allocation2 + $0x110] sm:$0xff]
        %v932 = vld [vmem:[#allocation2 + $0x118] sm:$0xff]
        %v933 = vld [vmem:[#allocation2 + $0x120] sm:$0xff]
        %v934 = vld [vmem:[#allocation2 + $0x128] sm:$0xff]
        %v935 = vld [vmem:[#allocation2 + $0x130] sm:$0xff]
        %v936 = vld [vmem:[#allocation2 + $0x138] sm:$0xff]
        %v937 = vld [vmem:[#allocation2 + $0x140] sm:$0xff]
        %v938 = vld [vmem:[#allocation2 + $0x148] sm:$0xff]
        %v939 = vld [vmem:[#allocation2 + $0x150] sm:$0xff]
        %v940 = vld [vmem:[#allocation2 + $0x158] sm:$0xff]
        %v941 = vld [vmem:[#allocation2 + $0x160] sm:$0xff]
        %v942 = vld [vmem:[#allocation2 + $0x168] sm:$0xff]
        %v943 = vld [vmem:[#allocation2 + $0x170] sm:$0xff]
        %v944 = vld [vmem:[#allocation2 + $0x178] sm:$0xff]
        %v945 = vld [vmem:[#allocation2 + $0x180] sm:$0xff]
        %v946 = vld [vmem:[#allocation2 + $0x188] sm:$0xff]
        %v947 = vld [vmem:[#allocation2 + $0x190] sm:$0xff]
        %v948 = vld [vmem:[#allocation2 + $0x198] sm:$0xff]
        %v949 = vld [vmem:[#allocation2 + $0x1a0] sm:$0xff]
        %v950 = vld [vmem:[#allocation2 + $0x1a8] sm:$0xff]
        %v951 = vld [vmem:[#allocation2 + $0x1b0] sm:$0xff]
        %v952 = vld [vmem:[#allocation2 + $0x1b8] sm:$0xff]
        %v953 = vld [vmem:[#allocation2 + $0x1c0] sm:$0xff]
        %v954 = vld [vmem:[#allocation2 + $0x1c8] sm:$0xff]
        %v955 = vld [vmem:[#allocation2 + $0x1d0] sm:$0xff]
        %v956 = vld [vmem:[#allocation2 + $0x1d8] sm:$0xff]
        %v957 = vld [vmem:[#allocation2 + $0x1e0] sm:$0xff]
        %v958 = vld [vmem:[#allocation2 + $0x1e8] sm:$0xff]
        %v959 = vld [vmem:[#allocation2 + $0x1f0] sm:$0xff]
        %v960 = vld [vmem:[#allocation2 + $0x1f8] sm:$0xff]
        %v961 = vld [vmem:[#allocation2 + $0x200] sm:$0xff]
        %v962 = vld [vmem:[#allocation2 + $0x208] sm:$0xff]
        %v963 = vld [vmem:[#allocation2 + $0x210] sm:$0xff]
        %v964 = vld [vmem:[#allocation2 + $0x218] sm:$0xff]
        %v965 = vld [vmem:[#allocation2 + $0x220] sm:$0xff]
        %v966 = vld [vmem:[#allocation2 + $0x228] sm:$0xff]
        %v967 = vld [vmem:[#allocation2 + $0x230] sm:$0xff]
        %v968 = vld [vmem:[#allocation2 + $0x238] sm:$0xff]
        %v969 = vld [vmem:[#allocation2 + $0x240] sm:$0xff]
        %v970 = vld [vmem:[#allocation2 + $0x248] sm:$0xff]
        %v971 = vld [vmem:[#allocation2 + $0x250] sm:$0xff]
        %v972 = vld [vmem:[#allocation2 + $0x258] sm:$0xff]
        %v973 = vld [vmem:[#allocation2 + $0x260] sm:$0xff]
        %v974 = vld [vmem:[#allocation2 + $0x268] sm:$0xff]
        %v975 = vld [vmem:[#allocation2 + $0x270] sm:$0xff]
        %v976 = vld [vmem:[#allocation2 + $0x278] sm:$0xff]
        %v977 = vld [vmem:[#allocation2 + $0x280] sm:$0xff]
        %v978 = vld [vmem:[#allocation2 + $0x288] sm:$0xff]
        %v979 = vld [vmem:[#allocation2 + $0x290] sm:$0xff]
        %v980 = vld [vmem:[#allocation2 + $0x298] sm:$0xff]
        %v981 = vld [vmem:[#allocation2 + $0x2a0] sm:$0xff]
        %v982 = vld [vmem:[#allocation2 + $0x2a8] sm:$0xff]
        %v983 = vld [vmem:[#allocation2 + $0x2b0] sm:$0xff]
        %v984 = vld [vmem:[#allocation2 + $0x2b8] sm:$0xff]
        %v985 = vld [vmem:[#allocation2 + $0x2c0] sm:$0xff]
        %v986 = vld [vmem:[#allocation2 + $0x2c8] sm:$0xff]
        %v987 = vld [vmem:[#allocation2 + $0x2d0] sm:$0xff]
        %v988 = vld [vmem:[#allocation2 + $0x2d8] sm:$0xff]
        %v989 = vld [vmem:[#allocation2 + $0x2e0] sm:$0xff]
        %v990 = vld [vmem:[#allocation2 + $0x2e8] sm:$0xff]
        %v991 = vld [vmem:[#allocation2 + $0x2f0] sm:$0xff]
        %v992 = vld [vmem:[#allocation2 + $0x2f8] sm:$0xff]
        %v993 = vld [vmem:[#allocation2 + $0x300] sm:$0xff]
        %v994 = vld [vmem:[#allocation2 + $0x308] sm:$0xff]
        %v995 = vld [vmem:[#allocation2 + $0x310] sm:$0xff]
        %v996 = vld [vmem:[#allocation2 + $0x318] sm:$0xff]
        %v997 = vld [vmem:[%s4] sm:$0xff]
        %v998 = vld [vmem:[%s4 + $0x8] sm:$0xff]
        %v999 = vld [vmem:[%s4 + $0x10] sm:$0xff]
        %v1000 = vld [vmem:[%s4 + $0x18] sm:$0xff]
        %1002 = vset.pattern.permute.xlu0 0
        %1003 = vperm.xlu0 %1002, %v997
        %v1004 = vpop.permute.xlu0 %1003
        %1007 = vset.pattern.permute.xlu0 0
        %1008 = vperm.xlu0 %1007, %v998
        %v1009 = vpop.permute.xlu0 %1008
        %1012 = vset.pattern.permute.xlu0 0
        %1013 = vperm.xlu0 %1012, %v999
        %v1014 = vpop.permute.xlu0 %1013
        %1017 = vset.pattern.permute.xlu0 0
        %1018 = vperm.xlu0 %1017, %v1000
        %v1019 = vpop.permute.xlu0 %1018
        %vm1021 = vcmask 588800
        %v1023 = vsel %vm1021, %v890, 0
        %v1026 = vsel %vm1021, %v892, 0
        %v1029 = vsel %vm1021, %v894, 0
        %v1032 = vsel %vm1021, %v896, 0
        %1034 = vmatprep.subr.mxu0 %v898
        %1035 = vmatpush1.msra.mxu0 %v897
        %1036 = vmatprep.subr.mxu0 %v902
        %1037 = vmatpush1.msra.mxu0 %v901
        %1038 = vmatprep.subr.mxu0 %v906
        %1039 = vmatpush1.msra.mxu0 %v905
        %1040 = vmatprep.subr.mxu0 %v910
        %1041 = vmatpush1.msra.mxu0 %v909
        %1042 = vmatprep.subr.mxu0 %v914
        %1043 = vmatpush1.msra.mxu0 %v913
        %1044 = vmatprep.subr.mxu0 %v918
        %1045 = vmatpush1.msra.mxu0 %v917
        %1046 = vmatprep.subr.mxu0 %v922
        %1047 = vmatpush1.msra.mxu0 %v921
        %1048 = vmatprep.subr.mxu0 %v926
        %1049 = vmatpush1.msra.mxu0 %v925
        %1050 = vmatprep.subr.mxu0 %v930
        %1051 = vmatpush1.msra.mxu0 %v929
        %1052 = vmatprep.subr.mxu0 %v934
        %1053 = vmatpush1.msra.mxu0 %v933
        %1054 = vmatprep.subr.mxu0 %v938
        %1055 = vmatpush1.msra.mxu0 %v937
        %1056 = vmatprep.subr.mxu0 %v942
        %1057 = vmatpush1.msra.mxu0 %v941
        %1058 = vmatprep.subr.mxu0 %v946
        %1059 = vmatpush1.msra.mxu0 %v945
        %1060 = vmatprep.subr.mxu0 %v950
        %1061 = vmatpush1.msra.mxu0 %v949
        %1062 = vmatprep.subr.mxu0 %v954
        %1063 = vmatpush1.msra.mxu0 %v953
        %1064 = vmatprep.subr.mxu0 %v958
        %1065 = vmatpush1.msra.mxu0 %v957
        %1066 = vmatprep.subr.mxu0 %v962
        %1067 = vmatpush1.msra.mxu0 %v961
        %1068 = vmatprep.subr.mxu0 %v966
        %1069 = vmatpush1.msra.mxu0 %v965
        %1070 = vmatprep.subr.mxu0 %v970
        %1071 = vmatpush1.msra.mxu0 %v969
        %1072 = vmatprep.subr.mxu0 %v974
        %1073 = vmatpush1.msra.mxu0 %v973
        %1074 = vmatprep.subr.mxu0 %v978
        %1075 = vmatpush1.msra.mxu0 %v977
        %1076 = vmatprep.subr.mxu0 %v982
        %1077 = vmatpush1.msra.mxu0 %v981
        %1078 = vmatprep.subr.mxu0 %v986
        %1079 = vmatpush1.msra.mxu0 %v985
        %1080 = vmatprep.subr.mxu0 %v990
        %1081 = vmatpush1.msra.mxu0 %v989
        %1082 = vmatprep.subr.mxu0 %v994
        %1083 = vmatpush1.msra.mxu0 %v993
        %1084 = vmatprep.subr.mxu0 0.0
        %1085 = vmatpush1.msra.mxu0 0.0
        %1086 = vmatprep.subr.mxu0 0.0
        %1087 = vmatpush1.msra.mxu0 0.0
        %1088 = vmatprep.subr.mxu0 0.0
        %1089 = vmatpush1.msra.mxu0 0.0
        %1090 = vmatprep.subr.mxu0 0.0
        %1091 = vmatpush1.msra.mxu0 0.0
        %1092 = vmatprep.subr.mxu0 0.0
        %1093 = vmatpush1.msra.mxu0 0.0
        %1094 = vmatprep.subr.mxu0 0.0
        %1095 = vmatpush1.msra.mxu0 0.0
        %1096 = vmatprep.subr.mxu0 0.0
        %1097 = vmatpush1.msra.mxu0 0.0
        %1098 = vmatprep.mubr.f32.mxu0 %v1023
        %1099 = vmatmul.mubr.f32.gmra.mrb[0].mxu0 %v889
        %v1100 = vpop.f32.mrb[0].mxu0
        %v1101 = vadd.f32 %v1004, %v1100
        %v1102 = vpop.f32.mrb[0].mxu0
        %v1103 = vadd.f32 %v1004, %v1102
        %1104 = vmatprep.mubr.f32.mxu0 %v1026
        %1105 = vmatmul.mubr.f32.gmra.mrb[0].mxu0 %v891
        %v1106 = vpop.f32.mrb[0].mxu0
        %v1107 = vadd.f32 %v1009, %v1106
        %v1108 = vpop.f32.mrb[0].mxu0
        %v1109 = vadd.f32 %v1009, %v1108
        %1110 = vmatprep.mubr.f32.mxu0 %v1029
        %1111 = vmatmul.mubr.f32.gmra.mrb[0].mxu0 %v893
        %v1112 = vpop.f32.mrb[0].mxu0
        %v1113 = vadd.f32 %v1014, %v1112
        %v1114 = vpop.f32.mrb[0].mxu0
        %v1115 = vadd.f32 %v1014, %v1114
        %1116 = vmatprep.mubr.f32.mxu0 %v1032
        %1117 = vmatmul.mubr.f32.gmra.mrb[0].mxu0 %v895
        %v1118 = vpop.f32.mrb[0].mxu0
        %v1119 = vadd.f32 %v1019, %v1118
        %v1120 = vpop.f32.mrb[0].mxu0
        %v1121 = vadd.f32 %v1019, %v1120
        %1122 = vdwg.mxu0
        %1123 = vmatprep.subr.mxu0 %v900
        %1124 = vmatpush1.msra.mxu0 %v899
        %1125 = vmatprep.subr.mxu0 %v904
        %1126 = vmatpush1.msra.mxu0 %v903
        %1127 = vmatprep.subr.mxu0 %v908
        %1128 = vmatpush1.msra.mxu0 %v907
        %1129 = vmatprep.subr.mxu0 %v912
        %1130 = vmatpush1.msra.mxu0 %v911
        %1131 = vmatprep.subr.mxu0 %v916
        %1132 = vmatpush1.msra.mxu0 %v915
        %1133 = vmatprep.subr.mxu0 %v920
        %1134 = vmatpush1.msra.mxu0 %v919
        %1135 = vmatprep.subr.mxu0 %v924
        %1136 = vmatpush1.msra.mxu0 %v923
        %1137 = vmatprep.subr.mxu0 %v928
        %1138 = vmatpush1.msra.mxu0 %v927
        %1139 = vmatprep.subr.mxu0 %v932
        %1140 = vmatpush1.msra.mxu0 %v931
        %1141 = vmatprep.subr.mxu0 %v936
        %1142 = vmatpush1.msra.mxu0 %v935
        %1143 = vmatprep.subr.mxu0 %v940
        %1144 = vmatpush1.msra.mxu0 %v939
        %1145 = vmatprep.subr.mxu0 %v944
        %1146 = vmatpush1.msra.mxu0 %v943
        %1147 = vmatprep.subr.mxu0 %v948
        %1148 = vmatpush1.msra.mxu0 %v947
        %1149 = vmatprep.subr.mxu0 %v952
        %1150 = vmatpush1.msra.mxu0 %v951
        %1151 = vmatprep.subr.mxu0 %v956
        %1152 = vmatpush1.msra.mxu0 %v955
        %1153 = vmatprep.subr.mxu0 %v960
        %1154 = vmatpush1.msra.mxu0 %v959
        %1155 = vmatprep.subr.mxu0 %v964
        %1156 = vmatpush1.msra.mxu0 %v963
        %1157 = vmatprep.subr.mxu0 %v968
        %1158 = vmatpush1.msra.mxu0 %v967
        %1159 = vmatprep.subr.mxu0 %v972
        %1160 = vmatpush1.msra.mxu0 %v971
        %1161 = vmatprep.subr.mxu0 %v976
        %1162 = vmatpush1.msra.mxu0 %v975
        %1163 = vmatprep.subr.mxu0 %v980
        %1164 = vmatpush1.msra.mxu0 %v979
        %1165 = vmatprep.subr.mxu0 %v984
        %1166 = vmatpush1.msra.mxu0 %v983
        %1167 = vmatprep.subr.mxu0 %v988
        %1168 = vmatpush1.msra.mxu0 %v987
        %1169 = vmatprep.subr.mxu0 %v992
        %1170 = vmatpush1.msra.mxu0 %v991
        %1171 = vmatprep.subr.mxu0 %v996
        %1172 = vmatpush1.msra.mxu0 %v995
        %1173 = vmatprep.subr.mxu0 0.0
        %1174 = vmatpush1.msra.mxu0 0.0
        %1175 = vmatprep.subr.mxu0 0.0
        %1176 = vmatpush1.msra.mxu0 0.0
        %1177 = vmatprep.subr.mxu0 0.0
        %1178 = vmatpush1.msra.mxu0 0.0
        %1179 = vmatprep.subr.mxu0 0.0
        %1180 = vmatpush1.msra.mxu0 0.0
        %1181 = vmatprep.subr.mxu0 0.0
        %1182 = vmatpush1.msra.mxu0 0.0
        %1183 = vmatprep.subr.mxu0 0.0
        %1184 = vmatpush1.msra.mxu0 0.0
        %1185 = vmatprep.subr.mxu0 0.0
        %1186 = vmatpush1.msra.mxu0 0.0
        %1187 = vmatprep.mubr.f32.mxu0 %v1023
        %1188 = vmatmul.mubr.f32.gmra.mrb[0].mxu0 %v889
        %v1189 = vpop.f32.mrb[0].mxu0
        %v1190 = vadd.f32 %v1004, %v1189
        %v1191 = vpop.f32.mrb[0].mxu0
        %v1192 = vadd.f32 %v1004, %v1191
        %1193 = vmatprep.mubr.f32.mxu0 %v1026
        %1194 = vmatmul.mubr.f32.gmra.mrb[0].mxu0 %v891
        %v1195 = vpop.f32.mrb[0].mxu0
        %v1196 = vadd.f32 %v1009, %v1195
        %v1197 = vpop.f32.mrb[0].mxu0
        %v1198 = vadd.f32 %v1009, %v1197
        %1199 = vmatprep.mubr.f32.mxu0 %v1029
        %1200 = vmatmul.mubr.f32.gmra.mrb[0].mxu0 %v893
        %v1201 = vpop.f32.mrb[0].mxu0
        %v1202 = vadd.f32 %v1014, %v1201
        %v1203 = vpop.f32.mrb[0].mxu0
        %v1204 = vadd.f32 %v1014, %v1203
        %1205 = vmatprep.mubr.f32.mxu0 %v1032
        %1206 = vmatmul.mubr.f32.gmra.mrb[0].mxu0 %v895
        %v1207 = vpop.f32.mrb[0].mxu0
        %v1208 = vadd.f32 %v1019, %v1207
        %v1209 = vpop.f32.mrb[0].mxu0
        %v1210 = vadd.f32 %v1019, %v1209
        %1211 = vdwg.mxu0
        %vm1212 = vcmp.ge.f32.partialorder %v1101, 0.0
        %vm1213 = vcmp.ge.f32.partialorder %v1103, 0.0
        %vm1214 = vcmp.ge.f32.partialorder %v1190, 0.0
        %vm1215 = vcmp.ge.f32.partialorder %v1192, 0.0
        %vm1216 = vcmp.ge.f32.partialorder %v1107, 0.0
        %vm1217 = vcmp.ge.f32.partialorder %v1109, 0.0
        %vm1218 = vcmp.ge.f32.partialorder %v1196, 0.0
        %vm1219 = vcmp.ge.f32.partialorder %v1198, 0.0
        %vm1220 = vcmp.ge.f32.partialorder %v1113, 0.0
        %vm1221 = vcmp.ge.f32.partialorder %v1115, 0.0
        %vm1222 = vcmp.ge.f32.partialorder %v1202, 0.0
        %vm1223 = vcmp.ge.f32.partialorder %v1204, 0.0
        %vm1224 = vcmp.ge.f32.partialorder %v1119, 0.0
        %vm1225 = vcmp.ge.f32.partialorder %v1121, 0.0
        %vm1226 = vcmp.ge.f32.partialorder %v1208, 0.0
        %vm1227 = vcmp.ge.f32.partialorder %v1210, 0.0
        %s1228 = sld [smem:[#allocation11]]
        %v1229 = vstv %s1228
        %v1230 = vmul.f32 %v1229, %v1101
        %v1231 = vmul.f32 %v1229, %v1103
        %v1232 = vmul.f32 %v1229, %v1190
        %v1233 = vmul.f32 %v1229, %v1192
        %v1234 = vmul.f32 %v1229, %v1107
        %v1235 = vmul.f32 %v1229, %v1109
        %v1236 = vmul.f32 %v1229, %v1196
        %v1237 = vmul.f32 %v1229, %v1198
        %v1238 = vmul.f32 %v1229, %v1113
        %v1239 = vmul.f32 %v1229, %v1115
        %v1240 = vmul.f32 %v1229, %v1202
        %v1241 = vmul.f32 %v1229, %v1204
        %v1242 = vmul.f32 %v1229, %v1119
        %v1243 = vmul.f32 %v1229, %v1121
        %v1244 = vmul.f32 %v1229, %v1208
        %v1245 = vmul.f32 %v1229, %v1210
        %v1246 = vsel %vm1212, %v1101, %v1230
        %v1247 = vsel %vm1213, %v1103, %v1231
        %v1248 = vsel %vm1214, %v1190, %v1232
        %v1249 = vsel %vm1215, %v1192, %v1233
        %v1250 = vsel %vm1216, %v1107, %v1234
        %v1251 = vsel %vm1217, %v1109, %v1235
        %v1252 = vsel %vm1218, %v1196, %v1236
        %v1253 = vsel %vm1219, %v1198, %v1237
        %v1254 = vsel %vm1220, %v1113, %v1238
        %v1255 = vsel %vm1221, %v1115, %v1239
        %v1256 = vsel %vm1222, %v1202, %v1240
        %v1257 = vsel %vm1223, %v1204, %v1241
        %v1258 = vsel %vm1224, %v1119, %v1242
        %v1259 = vsel %vm1225, %v1121, %v1243
        %v1260 = vsel %vm1226, %v1208, %v1244
        %v1261 = vsel %vm1227, %v1210, %v1245
        %v1262 = vsel %vm378, 1, 0
        %v1263 = vlaneseq
        %v1264 = vshrl.u32 %v1263, 7
        %v1265 = vsub.s32 0, %v1264
        %v1266 = vrot.slane %v1262, %v1265
        %v1267 = vlaneseq
        %v1268 = vshrl.u32 %v1267, 7
        %v1269 = vsub.s32 1, %v1268
        %v1270 = vrot.slane %v1262, %v1269
        %v1271 = vlaneseq
        %v1272 = vshrl.u32 %v1271, 7
        %v1273 = vsub.s32 2, %v1272
        %v1274 = vrot.slane %v1262, %v1273
        %v1275 = vlaneseq
        %v1276 = vshrl.u32 %v1275, 7
        %v1277 = vsub.s32 3, %v1276
        %v1278 = vrot.slane %v1262, %v1277
        %vm1279 = vcmp.eq.s32.totalorder %v1266, 1
        %vm1280 = vcmp.eq.s32.totalorder %v1270, 1
        %vm1281 = vcmp.eq.s32.totalorder %v1274, 1
        %vm1282 = vcmp.eq.s32.totalorder %v1278, 1
        %v1283 = vsel %vm1279, %v1246, 0.0
        %v1284 = vsel %vm1280, %v1247, 0.0
        %v1285 = vsel %vm1281, %v1248, 0.0
        %v1286 = vsel %vm1282, %v1249, 0.0
        %v1287 = vsel %vm1279, %v1250, 0.0
        %v1288 = vsel %vm1280, %v1251, 0.0
        %v1289 = vsel %vm1281, %v1252, 0.0
        %v1290 = vsel %vm1282, %v1253, 0.0
        %v1291 = vsel %vm1279, %v1254, 0.0
        %v1292 = vsel %vm1280, %v1255, 0.0
        %v1293 = vsel %vm1281, %v1256, 0.0
        %v1294 = vsel %vm1282, %v1257, 0.0
        %v1295 = vsel %vm1279, %v1258, 0.0
        %v1296 = vsel %vm1280, %v1259, 0.0
        %v1297 = vsel %vm1281, %v1260, 0.0
        %v1298 = vsel %vm1282, %v1261, 0.0
        %1315 = vrot.lane.b32.xlu0 %v1283, 42
        %v1316 = vpop.permute.xlu0 %1315
        %1317 = vrot.lane.b32.xlu0 %v1284, 42
        %v1318 = vpop.permute.xlu0 %1317
        %1319 = vrot.lane.b32.xlu0 %v1285, 42
        %v1320 = vpop.permute.xlu0 %1319
        %1321 = vrot.lane.b32.xlu0 %v1286, 42
        %v1322 = vpop.permute.xlu0 %1321
        %1323 = vrot.lane.b32.xlu0 %v1287, 42
        %v1324 = vpop.permute.xlu0 %1323
        %1325 = vrot.lane.b32.xlu0 %v1288, 42
        %v1326 = vpop.permute.xlu0 %1325
        %1327 = vrot.lane.b32.xlu0 %v1289, 42
        %v1328 = vpop.permute.xlu0 %1327
        %1329 = vrot.lane.b32.xlu0 %v1290, 42
        %v1330 = vpop.permute.xlu0 %1329
        %1331 = vrot.lane.b32.xlu0 %v1291, 42
        %v1332 = vpop.permute.xlu0 %1331
        %1333 = vrot.lane.b32.xlu0 %v1292, 42
        %v1334 = vpop.permute.xlu0 %1333
        %1335 = vrot.lane.b32.xlu0 %v1293, 42
        %v1336 = vpop.permute.xlu0 %1335
        %1337 = vrot.lane.b32.xlu0 %v1294, 42
        %v1338 = vpop.permute.xlu0 %1337
        %1339 = vrot.lane.b32.xlu0 %v1295, 42
        %v1340 = vpop.permute.xlu0 %1339
        %1341 = vrot.lane.b32.xlu0 %v1296, 42
        %v1342 = vpop.permute.xlu0 %1341
        %1343 = vrot.lane.b32.xlu0 %v1297, 42
        %v1344 = vpop.permute.xlu0 %1343
        %1345 = vrot.lane.b32.xlu0 %v1298, 42
        %v1346 = vpop.permute.xlu0 %1345
        %vm1347 = vcmask 343040
        %v1348 = vsel %vm1347, %v1316, %v1318
        %v1349 = vsel %vm1347, %v1318, %v1320
        %v1350 = vsel %vm1347, %v1320, %v1322
        %v1351 = vsel %vm1347, %v1324, %v1326
        %v1352 = vsel %vm1347, %v1326, %v1328
        %v1353 = vsel %vm1347, %v1328, %v1330
        %v1354 = vsel %vm1347, %v1332, %v1334
        %v1355 = vsel %vm1347, %v1334, %v1336
        %v1356 = vsel %vm1347, %v1336, %v1338
        %v1357 = vsel %vm1347, %v1340, %v1342
        %v1358 = vsel %vm1347, %v1342, %v1344
        %v1359 = vsel %vm1347, %v1344, %v1346
        %vm1376 = vcmask 1047888
        %1377 = vst.msk [vmem:[#allocation3] sm:$0xff] %vm1376, %v1316
        %1378 = vst [vmem:[#allocation3 + $0x8] sm:$0xff] %v1348
        %1379 = vst [vmem:[#allocation3 + $0x10] sm:$0xff] %v1349
        %vm1380 = vcmask 474112
        %1381 = vst.msk [vmem:[#allocation3 + $0x18] sm:$0xff] %vm1380, %v1350
        %1382 = vst.msk [vmem:[#allocation3 + $0x20] sm:$0xff] %vm1376, %v1324
        %1383 = vst [vmem:[#allocation3 + $0x28] sm:$0xff] %v1351
        %1384 = vst [vmem:[#allocation3 + $0x30] sm:$0xff] %v1352
        %1385 = vst.msk [vmem:[#allocation3 + $0x38] sm:$0xff] %vm1380, %v1353
        %1386 = vst.msk [vmem:[#allocation3 + $0x40] sm:$0xff] %vm1376, %v1332
        %1387 = vst [vmem:[#allocation3 + $0x48] sm:$0xff] %v1354
        %1388 = vst [vmem:[#allocation3 + $0x50] sm:$0xff] %v1355
        %1389 = vst.msk [vmem:[#allocation3 + $0x58] sm:$0xff] %vm1380, %v1356
        %1390 = vst.msk [vmem:[#allocation3 + $0x60] sm:$0xff] %vm1376, %v1340
        %1391 = vst [vmem:[#allocation3 + $0x68] sm:$0xff] %v1357
        %1392 = vst [vmem:[#allocation3 + $0x70] sm:$0xff] %v1358
        %1393 = vst.msk [vmem:[#allocation3 + $0x78] sm:$0xff] %vm1380, %v1359
        %v1394 = vld [vmem:[#allocation3] sm:$0xff]
        %v1395 = vld [vmem:[#allocation3 + $0x8] sm:$0xff]
        %v1396 = vld [vmem:[#allocation3 + $0x10] sm:$0xff]
        %v1397 = vld [vmem:[#allocation3 + $0x18] sm:$0xff]
        %v1398 = vld [vmem:[#allocation3 + $0x20] sm:$0xff]
        %v1399 = vld [vmem:[#allocation3 + $0x28] sm:$0xff]
        %v1400 = vld [vmem:[#allocation3 + $0x30] sm:$0xff]
        %v1401 = vld [vmem:[#allocation3 + $0x38] sm:$0xff]
        %v1402 = vld [vmem:[#allocation3 + $0x40] sm:$0xff]
        %v1403 = vld [vmem:[#allocation3 + $0x48] sm:$0xff]
        %v1404 = vld [vmem:[#allocation3 + $0x50] sm:$0xff]
        %v1405 = vld [vmem:[#allocation3 + $0x58] sm:$0xff]
        %v1406 = vld [vmem:[#allocation3 + $0x60] sm:$0xff]
        %v1407 = vld [vmem:[#allocation3 + $0x68] sm:$0xff]
        %v1408 = vld [vmem:[#allocation3 + $0x70] sm:$0xff]
        %v1409 = vld [vmem:[#allocation3 + $0x78] sm:$0xff]
        %1410 = vst [vmem:[#allocation2] sm:$0xff] %v1394
        %1411 = vst [vmem:[#allocation2 + $0x8] sm:$0xff] %v1395
        %1412 = vst [vmem:[#allocation2 + $0x10] sm:$0xff] %v1396
        %1413 = vst.msk [vmem:[#allocation2 + $0x18] sm:$0xff] %vm403, %v1397
        %1414 = vst [vmem:[#allocation2 + $0x20] sm:$0xff] %v1398
        %1415 = vst [vmem:[#allocation2 + $0x28] sm:$0xff] %v1399
        %1416 = vst [vmem:[#allocation2 + $0x30] sm:$0xff] %v1400
        %1417 = vst.msk [vmem:[#allocation2 + $0x38] sm:$0xff] %vm403, %v1401
        %1418 = vst [vmem:[#allocation2 + $0x40] sm:$0xff] %v1402
        %1419 = vst [vmem:[#allocation2 + $0x48] sm:$0xff] %v1403
        %1420 = vst [vmem:[#allocation2 + $0x50] sm:$0xff] %v1404
        %1421 = vst.msk [vmem:[#allocation2 + $0x58] sm:$0xff] %vm403, %v1405
        %1422 = vst [vmem:[#allocation2 + $0x60] sm:$0xff] %v1406
        %1423 = vst [vmem:[#allocation2 + $0x68] sm:$0xff] %v1407
        %1424 = vst [vmem:[#allocation2 + $0x70] sm:$0xff] %v1408
        %1425 = vst.msk [vmem:[#allocation2 + $0x78] sm:$0xff] %vm403, %v1409
        %v1426 = vld [vmem:[#allocation3] sm:$0xff]
        %v1427 = vld [vmem:[#allocation3 + $0x8] sm:$0xff]
        %v1428 = vld [vmem:[#allocation3 + $0x10] sm:$0xff]
        %v1429 = vld [vmem:[#allocation3 + $0x18] sm:$0xff]
        %v1430 = vld [vmem:[#allocation3 + $0x20] sm:$0xff]
        %v1431 = vld [vmem:[#allocation3 + $0x28] sm:$0xff]
        %v1432 = vld [vmem:[#allocation3 + $0x30] sm:$0xff]
        %v1433 = vld [vmem:[#allocation3 + $0x38] sm:$0xff]
        %v1434 = vld [vmem:[#allocation3 + $0x40] sm:$0xff]
        %v1435 = vld [vmem:[#allocation3 + $0x48] sm:$0xff]
        %v1436 = vld [vmem:[#allocation3 + $0x50] sm:$0xff]
        %v1437 = vld [vmem:[#allocation3 + $0x58] sm:$0xff]
        %v1438 = vld [vmem:[#allocation3 + $0x60] sm:$0xff]
        %v1439 = vld [vmem:[#allocation3 + $0x68] sm:$0xff]
        %v1440 = vld [vmem:[#allocation3 + $0x70] sm:$0xff]
        %v1441 = vld [vmem:[#allocation3 + $0x78] sm:$0xff]
        %1458 = vrot.lane.b32.xlu0 %v1426, 127
        %v1459 = vpop.permute.xlu0 %1458
        %1460 = vrot.lane.b32.xlu0 %v1427, 127
        %v1461 = vpop.permute.xlu0 %1460
        %1462 = vrot.lane.b32.xlu0 %v1428, 127
        %v1463 = vpop.permute.xlu0 %1462
        %1464 = vrot.lane.b32.xlu0 %v1429, 127
        %v1465 = vpop.permute.xlu0 %1464
        %1466 = vrot.lane.b32.xlu0 %v1430, 127
        %v1467 = vpop.permute.xlu0 %1466
        %1468 = vrot.lane.b32.xlu0 %v1431, 127
        %v1469 = vpop.permute.xlu0 %1468
        %1470 = vrot.lane.b32.xlu0 %v1432, 127
        %v1471 = vpop.permute.xlu0 %1470
        %1472 = vrot.lane.b32.xlu0 %v1433, 127
        %v1473 = vpop.permute.xlu0 %1472
        %1474 = vrot.lane.b32.xlu0 %v1434, 127
        %v1475 = vpop.permute.xlu0 %1474
        %1476 = vrot.lane.b32.xlu0 %v1435, 127
        %v1477 = vpop.permute.xlu0 %1476
        %1478 = vrot.lane.b32.xlu0 %v1436, 127
        %v1479 = vpop.permute.xlu0 %1478
        %1480 = vrot.lane.b32.xlu0 %v1437, 127
        %v1481 = vpop.permute.xlu0 %1480
        %1482 = vrot.lane.b32.xlu0 %v1438, 127
        %v1483 = vpop.permute.xlu0 %1482
        %1484 = vrot.lane.b32.xlu0 %v1439, 127
        %v1485 = vpop.permute.xlu0 %1484
        %1486 = vrot.lane.b32.xlu0 %v1440, 127
        %v1487 = vpop.permute.xlu0 %1486
        %1488 = vrot.lane.b32.xlu0 %v1441, 127
        %v1489 = vpop.permute.xlu0 %1488
        %v1490 = vsel %vm417, %v1459, %v1461
        %v1491 = vsel %vm417, %v1461, %v1463
        %v1492 = vsel %vm417, %v1463, %v1465
        %v1493 = vsel %vm417, %v1467, %v1469
        %v1494 = vsel %vm417, %v1469, %v1471
        %v1495 = vsel %vm417, %v1471, %v1473
        %v1496 = vsel %vm417, %v1475, %v1477
        %v1497 = vsel %vm417, %v1477, %v1479
        %v1498 = vsel %vm417, %v1479, %v1481
        %v1499 = vsel %vm417, %v1483, %v1485
        %v1500 = vsel %vm417, %v1485, %v1487
        %v1501 = vsel %vm417, %v1487, %v1489
        %1518 = vst [vmem:[#allocation2 + $0x80] sm:$0xff] %v1490
        %1519 = vst [vmem:[#allocation2 + $0x88] sm:$0xff] %v1491
        %1520 = vst [vmem:[#allocation2 + $0x90] sm:$0xff] %v1492
        %1521 = vst.msk [vmem:[#allocation2 + $0x98] sm:$0xff] %vm403, %v1465
        %1522 = vst [vmem:[#allocation2 + $0xa0] sm:$0xff] %v1493
        %1523 = vst [vmem:[#allocation2 + $0xa8] sm:$0xff] %v1494
        %1524 = vst [vmem:[#allocation2 + $0xb0] sm:$0xff] %v1495
        %1525 = vst.msk [vmem:[#allocation2 + $0xb8] sm:$0xff] %vm403, %v1473
        %1526 = vst [vmem:[#allocation2 + $0xc0] sm:$0xff] %v1496
        %1527 = vst [vmem:[#allocation2 + $0xc8] sm:$0xff] %v1497
        %1528 = vst [vmem:[#allocation2 + $0xd0] sm:$0xff] %v1498
        %1529 = vst.msk [vmem:[#allocation2 + $0xd8] sm:$0xff] %vm403, %v1481
        %1530 = vst [vmem:[#allocation2 + $0xe0] sm:$0xff] %v1499
        %1531 = vst [vmem:[#allocation2 + $0xe8] sm:$0xff] %v1500
        %1532 = vst [vmem:[#allocation2 + $0xf0] sm:$0xff] %v1501
        %1533 = vst.msk [vmem:[#allocation2 + $0xf8] sm:$0xff] %vm403, %v1489
        %v1534 = vld [vmem:[#allocation3] sm:$0xff]
        %v1535 = vld [vmem:[#allocation3 + $0x8] sm:$0xff]
        %v1536 = vld [vmem:[#allocation3 + $0x10] sm:$0xff]
        %v1537 = vld [vmem:[#allocation3 + $0x18] sm:$0xff]
        %v1538 = vld [vmem:[#allocation3 + $0x20] sm:$0xff]
        %v1539 = vld [vmem:[#allocation3 + $0x28] sm:$0xff]
        %v1540 = vld [vmem:[#allocation3 + $0x30] sm:$0xff]
        %v1541 = vld [vmem:[#allocation3 + $0x38] sm:$0xff]
        %v1542 = vld [vmem:[#allocation3 + $0x40] sm:$0xff]
        %v1543 = vld [vmem:[#allocation3 + $0x48] sm:$0xff]
        %v1544 = vld [vmem:[#allocation3 + $0x50] sm:$0xff]
        %v1545 = vld [vmem:[#allocation3 + $0x58] sm:$0xff]
        %v1546 = vld [vmem:[#allocation3 + $0x60] sm:$0xff]
        %v1547 = vld [vmem:[#allocation3 + $0x68] sm:$0xff]
        %v1548 = vld [vmem:[#allocation3 + $0x70] sm:$0xff]
        %v1549 = vld [vmem:[#allocation3 + $0x78] sm:$0xff]
        %1566 = vrot.lane.b32.xlu0 %v1534, 126
        %v1567 = vpop.permute.xlu0 %1566
        %1568 = vrot.lane.b32.xlu0 %v1535, 126
        %v1569 = vpop.permute.xlu0 %1568
        %1570 = vrot.lane.b32.xlu0 %v1536, 126
        %v1571 = vpop.permute.xlu0 %1570
        %1572 = vrot.lane.b32.xlu0 %v1537, 126
        %v1573 = vpop.permute.xlu0 %1572
        %1574 = vrot.lane.b32.xlu0 %v1538, 126
        %v1575 = vpop.permute.xlu0 %1574
        %1576 = vrot.lane.b32.xlu0 %v1539, 126
        %v1577 = vpop.permute.xlu0 %1576
        %1578 = vrot.lane.b32.xlu0 %v1540, 126
        %v1579 = vpop.permute.xlu0 %1578
        %1580 = vrot.lane.b32.xlu0 %v1541, 126
        %v1581 = vpop.permute.xlu0 %1580
        %1582 = vrot.lane.b32.xlu0 %v1542, 126
        %v1583 = vpop.permute.xlu0 %1582
        %1584 = vrot.lane.b32.xlu0 %v1543, 126
        %v1585 = vpop.permute.xlu0 %1584
        %1586 = vrot.lane.b32.xlu0 %v1544, 126
        %v1587 = vpop.permute.xlu0 %1586
        %1588 = vrot.lane.b32.xlu0 %v1545, 126
        %v1589 = vpop.permute.xlu0 %1588
        %1590 = vrot.lane.b32.xlu0 %v1546, 126
        %v1591 = vpop.permute.xlu0 %1590
        %1592 = vrot.lane.b32.xlu0 %v1547, 126
        %v1593 = vpop.permute.xlu0 %1592
        %1594 = vrot.lane.b32.xlu0 %v1548, 126
        %v1595 = vpop.permute.xlu0 %1594
        %1596 = vrot.lane.b32.xlu0 %v1549, 126
        %v1597 = vpop.permute.xlu0 %1596
        %v1598 = vsel %vm437, %v1567, %v1569
        %v1599 = vsel %vm437, %v1569, %v1571
        %v1600 = vsel %vm437, %v1571, %v1573
        %v1601 = vsel %vm437, %v1575, %v1577
        %v1602 = vsel %vm437, %v1577, %v1579
        %v1603 = vsel %vm437, %v1579, %v1581
        %v1604 = vsel %vm437, %v1583, %v1585
        %v1605 = vsel %vm437, %v1585, %v1587
        %v1606 = vsel %vm437, %v1587, %v1589
        %v1607 = vsel %vm437, %v1591, %v1593
        %v1608 = vsel %vm437, %v1593, %v1595
        %v1609 = vsel %vm437, %v1595, %v1597
        %1626 = vst [vmem:[#allocation2 + $0x100] sm:$0xff] %v1598
        %1627 = vst [vmem:[#allocation2 + $0x108] sm:$0xff] %v1599
        %1628 = vst [vmem:[#allocation2 + $0x110] sm:$0xff] %v1600
        %1629 = vst.msk [vmem:[#allocation2 + $0x118] sm:$0xff] %vm403, %v1573
        %1630 = vst [vmem:[#allocation2 + $0x120] sm:$0xff] %v1601
        %1631 = vst [vmem:[#allocation2 + $0x128] sm:$0xff] %v1602
        %1632 = vst [vmem:[#allocation2 + $0x130] sm:$0xff] %v1603
        %1633 = vst.msk [vmem:[#allocation2 + $0x138] sm:$0xff] %vm403, %v1581
        %1634 = vst [vmem:[#allocation2 + $0x140] sm:$0xff] %v1604
        %1635 = vst [vmem:[#allocation2 + $0x148] sm:$0xff] %v1605
        %1636 = vst [vmem:[#allocation2 + $0x150] sm:$0xff] %v1606
        %1637 = vst.msk [vmem:[#allocation2 + $0x158] sm:$0xff] %vm403, %v1589
        %1638 = vst [vmem:[#allocation2 + $0x160] sm:$0xff] %v1607
        %1639 = vst [vmem:[#allocation2 + $0x168] sm:$0xff] %v1608
        %1640 = vst [vmem:[#allocation2 + $0x170] sm:$0xff] %v1609
        %1641 = vst.msk [vmem:[#allocation2 + $0x178] sm:$0xff] %vm403, %v1597
        %v1642 = vld [vmem:[#allocation3] sm:$0xff]
        %v1643 = vld [vmem:[#allocation3 + $0x8] sm:$0xff]
        %v1644 = vld [vmem:[#allocation3 + $0x10] sm:$0xff]
        %v1645 = vld [vmem:[#allocation3 + $0x18] sm:$0xff]
        %v1646 = vld [vmem:[#allocation3 + $0x20] sm:$0xff]
        %v1647 = vld [vmem:[#allocation3 + $0x28] sm:$0xff]
        %v1648 = vld [vmem:[#allocation3 + $0x30] sm:$0xff]
        %v1649 = vld [vmem:[#allocation3 + $0x38] sm:$0xff]
        %v1650 = vld [vmem:[#allocation3 + $0x40] sm:$0xff]
        %v1651 = vld [vmem:[#allocation3 + $0x48] sm:$0xff]
        %v1652 = vld [vmem:[#allocation3 + $0x50] sm:$0xff]
        %v1653 = vld [vmem:[#allocation3 + $0x58] sm:$0xff]
        %v1654 = vld [vmem:[#allocation3 + $0x60] sm:$0xff]
        %v1655 = vld [vmem:[#allocation3 + $0x68] sm:$0xff]
        %v1656 = vld [vmem:[#allocation3 + $0x70] sm:$0xff]
        %v1657 = vld [vmem:[#allocation3 + $0x78] sm:$0xff]
        %1674 = vrot.lane.b32.xlu0 %v1642, 125
        %v1675 = vpop.permute.xlu0 %1674
        %1676 = vrot.lane.b32.xlu0 %v1643, 125
        %v1677 = vpop.permute.xlu0 %1676
        %1678 = vrot.lane.b32.xlu0 %v1644, 125
        %v1679 = vpop.permute.xlu0 %1678
        %1680 = vrot.lane.b32.xlu0 %v1645, 125
        %v1681 = vpop.permute.xlu0 %1680
        %1682 = vrot.lane.b32.xlu0 %v1646, 125
        %v1683 = vpop.permute.xlu0 %1682
        %1684 = vrot.lane.b32.xlu0 %v1647, 125
        %v1685 = vpop.permute.xlu0 %1684
        %1686 = vrot.lane.b32.xlu0 %v1648, 125
        %v1687 = vpop.permute.xlu0 %1686
        %1688 = vrot.lane.b32.xlu0 %v1649, 125
        %v1689 = vpop.permute.xlu0 %1688
        %1690 = vrot.lane.b32.xlu0 %v1650, 125
        %v1691 = vpop.permute.xlu0 %1690
        %1692 = vrot.lane.b32.xlu0 %v1651, 125
        %v1693 = vpop.permute.xlu0 %1692
        %1694 = vrot.lane.b32.xlu0 %v1652, 125
        %v1695 = vpop.permute.xlu0 %1694
        %1696 = vrot.lane.b32.xlu0 %v1653, 125
        %v1697 = vpop.permute.xlu0 %1696
        %1698 = vrot.lane.b32.xlu0 %v1654, 125
        %v1699 = vpop.permute.xlu0 %1698
        %1700 = vrot.lane.b32.xlu0 %v1655, 125
        %v1701 = vpop.permute.xlu0 %1700
        %1702 = vrot.lane.b32.xlu0 %v1656, 125
        %v1703 = vpop.permute.xlu0 %1702
        %1704 = vrot.lane.b32.xlu0 %v1657, 125
        %v1705 = vpop.permute.xlu0 %1704
        %v1706 = vsel %vm457, %v1675, %v1677
        %v1707 = vsel %vm457, %v1677, %v1679
        %v1708 = vsel %vm457, %v1679, %v1681
        %v1709 = vsel %vm457, %v1683, %v1685
        %v1710 = vsel %vm457, %v1685, %v1687
        %v1711 = vsel %vm457, %v1687, %v1689
        %v1712 = vsel %vm457, %v1691, %v1693
        %v1713 = vsel %vm457, %v1693, %v1695
        %v1714 = vsel %vm457, %v1695, %v1697
        %v1715 = vsel %vm457, %v1699, %v1701
        %v1716 = vsel %vm457, %v1701, %v1703
        %v1717 = vsel %vm457, %v1703, %v1705
        %1734 = vst [vmem:[#allocation2 + $0x180] sm:$0xff] %v1706
        %1735 = vst [vmem:[#allocation2 + $0x188] sm:$0xff] %v1707
        %1736 = vst [vmem:[#allocation2 + $0x190] sm:$0xff] %v1708
        %1737 = vst.msk [vmem:[#allocation2 + $0x198] sm:$0xff] %vm403, %v1681
        %1738 = vst [vmem:[#allocation2 + $0x1a0] sm:$0xff] %v1709
        %1739 = vst [vmem:[#allocation2 + $0x1a8] sm:$0xff] %v1710
        %1740 = vst [vmem:[#allocation2 + $0x1b0] sm:$0xff] %v1711
        %1741 = vst.msk [vmem:[#allocation2 + $0x1b8] sm:$0xff] %vm403, %v1689
        %1742 = vst [vmem:[#allocation2 + $0x1c0] sm:$0xff] %v1712
        %1743 = vst [vmem:[#allocation2 + $0x1c8] sm:$0xff] %v1713
        %1744 = vst [vmem:[#allocation2 + $0x1d0] sm:$0xff] %v1714
        %1745 = vst.msk [vmem:[#allocation2 + $0x1d8] sm:$0xff] %vm403, %v1697
        %1746 = vst [vmem:[#allocation2 + $0x1e0] sm:$0xff] %v1715
        %1747 = vst [vmem:[#allocation2 + $0x1e8] sm:$0xff] %v1716
        %1748 = vst [vmem:[#allocation2 + $0x1f0] sm:$0xff] %v1717
        %1749 = vst.msk [vmem:[#allocation2 + $0x1f8] sm:$0xff] %vm403, %v1705
        %v1750 = vld [vmem:[#allocation3] sm:$0xff]
        %v1751 = vld [vmem:[#allocation3 + $0x8] sm:$0xff]
        %v1752 = vld [vmem:[#allocation3 + $0x10] sm:$0xff]
        %v1753 = vld [vmem:[#allocation3 + $0x18] sm:$0xff]
        %v1754 = vld [vmem:[#allocation3 + $0x20] sm:$0xff]
        %v1755 = vld [vmem:[#allocation3 + $0x28] sm:$0xff]
        %v1756 = vld [vmem:[#allocation3 + $0x30] sm:$0xff]
        %v1757 = vld [vmem:[#allocation3 + $0x38] sm:$0xff]
        %v1758 = vld [vmem:[#allocation3 + $0x40] sm:$0xff]
        %v1759 = vld [vmem:[#allocation3 + $0x48] sm:$0xff]
        %v1760 = vld [vmem:[#allocation3 + $0x50] sm:$0xff]
        %v1761 = vld [vmem:[#allocation3 + $0x58] sm:$0xff]
        %v1762 = vld [vmem:[#allocation3 + $0x60] sm:$0xff]
        %v1763 = vld [vmem:[#allocation3 + $0x68] sm:$0xff]
        %v1764 = vld [vmem:[#allocation3 + $0x70] sm:$0xff]
        %v1765 = vld [vmem:[#allocation3 + $0x78] sm:$0xff]
        %1782 = vrot.lane.b32.xlu0 %v1750, 124
        %v1783 = vpop.permute.xlu0 %1782
        %1784 = vrot.lane.b32.xlu0 %v1751, 124
        %v1785 = vpop.permute.xlu0 %1784
        %1786 = vrot.lane.b32.xlu0 %v1752, 124
        %v1787 = vpop.permute.xlu0 %1786
        %1788 = vrot.lane.b32.xlu0 %v1753, 124
        %v1789 = vpop.permute.xlu0 %1788
        %1790 = vrot.lane.b32.xlu0 %v1754, 124
        %v1791 = vpop.permute.xlu0 %1790
        %1792 = vrot.lane.b32.xlu0 %v1755, 124
        %v1793 = vpop.permute.xlu0 %1792
        %1794 = vrot.lane.b32.xlu0 %v1756, 124
        %v1795 = vpop.permute.xlu0 %1794
        %1796 = vrot.lane.b32.xlu0 %v1757, 124
        %v1797 = vpop.permute.xlu0 %1796
        %1798 = vrot.lane.b32.xlu0 %v1758, 124
        %v1799 = vpop.permute.xlu0 %1798
        %1800 = vrot.lane.b32.xlu0 %v1759, 124
        %v1801 = vpop.permute.xlu0 %1800
        %1802 = vrot.lane.b32.xlu0 %v1760, 124
        %v1803 = vpop.permute.xlu0 %1802
        %1804 = vrot.lane.b32.xlu0 %v1761, 124
        %v1805 = vpop.permute.xlu0 %1804
        %1806 = vrot.lane.b32.xlu0 %v1762, 124
        %v1807 = vpop.permute.xlu0 %1806
        %1808 = vrot.lane.b32.xlu0 %v1763, 124
        %v1809 = vpop.permute.xlu0 %1808
        %1810 = vrot.lane.b32.xlu0 %v1764, 124
        %v1811 = vpop.permute.xlu0 %1810
        %1812 = vrot.lane.b32.xlu0 %v1765, 124
        %v1813 = vpop.permute.xlu0 %1812
        %v1814 = vsel %vm477, %v1783, %v1785
        %v1815 = vsel %vm477, %v1785, %v1787
        %v1816 = vsel %vm477, %v1787, %v1789
        %v1817 = vsel %vm477, %v1791, %v1793
        %v1818 = vsel %vm477, %v1793, %v1795
        %v1819 = vsel %vm477, %v1795, %v1797
        %v1820 = vsel %vm477, %v1799, %v1801
        %v1821 = vsel %vm477, %v1801, %v1803
        %v1822 = vsel %vm477, %v1803, %v1805
        %v1823 = vsel %vm477, %v1807, %v1809
        %v1824 = vsel %vm477, %v1809, %v1811
        %v1825 = vsel %vm477, %v1811, %v1813
        %1842 = vst [vmem:[#allocation2 + $0x200] sm:$0xff] %v1814
        %1843 = vst [vmem:[#allocation2 + $0x208] sm:$0xff] %v1815
        %1844 = vst [vmem:[#allocation2 + $0x210] sm:$0xff] %v1816
        %1845 = vst.msk [vmem:[#allocation2 + $0x218] sm:$0xff] %vm403, %v1789
        %1846 = vst [vmem:[#allocation2 + $0x220] sm:$0xff] %v1817
        %1847 = vst [vmem:[#allocation2 + $0x228] sm:$0xff] %v1818
        %1848 = vst [vmem:[#allocation2 + $0x230] sm:$0xff] %v1819
        %1849 = vst.msk [vmem:[#allocation2 + $0x238] sm:$0xff] %vm403, %v1797
        %1850 = vst [vmem:[#allocation2 + $0x240] sm:$0xff] %v1820
        %1851 = vst [vmem:[#allocation2 + $0x248] sm:$0xff] %v1821
        %1852 = vst [vmem:[#allocation2 + $0x250] sm:$0xff] %v1822
        %1853 = vst.msk [vmem:[#allocation2 + $0x258] sm:$0xff] %vm403, %v1805
        %1854 = vst [vmem:[#allocation2 + $0x260] sm:$0xff] %v1823
        %1855 = vst [vmem:[#allocation2 + $0x268] sm:$0xff] %v1824
        %1856 = vst [vmem:[#allocation2 + $0x270] sm:$0xff] %v1825
        %1857 = vst.msk [vmem:[#allocation2 + $0x278] sm:$0xff] %vm403, %v1813
        %v1858 = vld [vmem:[#allocation3] sm:$0xff]
        %v1859 = vld [vmem:[#allocation3 + $0x8] sm:$0xff]
        %v1860 = vld [vmem:[#allocation3 + $0x10] sm:$0xff]
        %v1861 = vld [vmem:[#allocation3 + $0x18] sm:$0xff]
        %v1862 = vld [vmem:[#allocation3 + $0x20] sm:$0xff]
        %v1863 = vld [vmem:[#allocation3 + $0x28] sm:$0xff]
        %v1864 = vld [vmem:[#allocation3 + $0x30] sm:$0xff]
        %v1865 = vld [vmem:[#allocation3 + $0x38] sm:$0xff]
        %v1866 = vld [vmem:[#allocation3 + $0x40] sm:$0xff]
        %v1867 = vld [vmem:[#allocation3 + $0x48] sm:$0xff]
        %v1868 = vld [vmem:[#allocation3 + $0x50] sm:$0xff]
        %v1869 = vld [vmem:[#allocation3 + $0x58] sm:$0xff]
        %v1870 = vld [vmem:[#allocation3 + $0x60] sm:$0xff]
        %v1871 = vld [vmem:[#allocation3 + $0x68] sm:$0xff]
        %v1872 = vld [vmem:[#allocation3 + $0x70] sm:$0xff]
        %v1873 = vld [vmem:[#allocation3 + $0x78] sm:$0xff]
        %1890 = vrot.lane.b32.xlu0 %v1858, 108
        %v1891 = vpop.permute.xlu0 %1890
        %1892 = vrot.lane.b32.xlu0 %v1859, 108
        %v1893 = vpop.permute.xlu0 %1892
        %1894 = vrot.lane.b32.xlu0 %v1860, 108
        %v1895 = vpop.permute.xlu0 %1894
        %1896 = vrot.lane.b32.xlu0 %v1861, 108
        %v1897 = vpop.permute.xlu0 %1896
        %1898 = vrot.lane.b32.xlu0 %v1862, 108
        %v1899 = vpop.permute.xlu0 %1898
        %1900 = vrot.lane.b32.xlu0 %v1863, 108
        %v1901 = vpop.permute.xlu0 %1900
        %1902 = vrot.lane.b32.xlu0 %v1864, 108
        %v1903 = vpop.permute.xlu0 %1902
        %1904 = vrot.lane.b32.xlu0 %v1865, 108
        %v1905 = vpop.permute.xlu0 %1904
        %1906 = vrot.lane.b32.xlu0 %v1866, 108
        %v1907 = vpop.permute.xlu0 %1906
        %1908 = vrot.lane.b32.xlu0 %v1867, 108
        %v1909 = vpop.permute.xlu0 %1908
        %1910 = vrot.lane.b32.xlu0 %v1868, 108
        %v1911 = vpop.permute.xlu0 %1910
        %1912 = vrot.lane.b32.xlu0 %v1869, 108
        %v1913 = vpop.permute.xlu0 %1912
        %1914 = vrot.lane.b32.xlu0 %v1870, 108
        %v1915 = vpop.permute.xlu0 %1914
        %1916 = vrot.lane.b32.xlu0 %v1871, 108
        %v1917 = vpop.permute.xlu0 %1916
        %1918 = vrot.lane.b32.xlu0 %v1872, 108
        %v1919 = vpop.permute.xlu0 %1918
        %1920 = vrot.lane.b32.xlu0 %v1873, 108
        %v1921 = vpop.permute.xlu0 %1920
        %v1922 = vsel %vm497, %v1891, %v1893
        %v1923 = vsel %vm497, %v1893, %v1895
        %v1924 = vsel %vm497, %v1895, %v1897
        %v1925 = vsel %vm497, %v1899, %v1901
        %v1926 = vsel %vm497, %v1901, %v1903
        %v1927 = vsel %vm497, %v1903, %v1905
        %v1928 = vsel %vm497, %v1907, %v1909
        %v1929 = vsel %vm497, %v1909, %v1911
        %v1930 = vsel %vm497, %v1911, %v1913
        %v1931 = vsel %vm497, %v1915, %v1917
        %v1932 = vsel %vm497, %v1917, %v1919
        %v1933 = vsel %vm497, %v1919, %v1921
        %1950 = vst [vmem:[#allocation2 + $0x280] sm:$0xff] %v1922
        %1951 = vst [vmem:[#allocation2 + $0x288] sm:$0xff] %v1923
        %1952 = vst [vmem:[#allocation2 + $0x290] sm:$0xff] %v1924
        %1953 = vst.msk [vmem:[#allocation2 + $0x298] sm:$0xff] %vm403, %v1897
        %1954 = vst [vmem:[#allocation2 + $0x2a0] sm:$0xff] %v1925
        %1955 = vst [vmem:[#allocation2 + $0x2a8] sm:$0xff] %v1926
        %1956 = vst [vmem:[#allocation2 + $0x2b0] sm:$0xff] %v1927
        %1957 = vst.msk [vmem:[#allocation2 + $0x2b8] sm:$0xff] %vm403, %v1905
        %1958 = vst [vmem:[#allocation2 + $0x2c0] sm:$0xff] %v1928
        %1959 = vst [vmem:[#allocation2 + $0x2c8] sm:$0xff] %v1929
        %1960 = vst [vmem:[#allocation2 + $0x2d0] sm:$0xff] %v1930
        %1961 = vst.msk [vmem:[#allocation2 + $0x2d8] sm:$0xff] %vm403, %v1913
        %1962 = vst [vmem:[#allocation2 + $0x2e0] sm:$0xff] %v1931
        %1963 = vst [vmem:[#allocation2 + $0x2e8] sm:$0xff] %v1932
        %1964 = vst [vmem:[#allocation2 + $0x2f0] sm:$0xff] %v1933
        %1965 = vst.msk [vmem:[#allocation2 + $0x2f8] sm:$0xff] %vm403, %v1921
        %v1966 = vld [vmem:[#allocation3] sm:$0xff]
        %v1967 = vld [vmem:[#allocation3 + $0x8] sm:$0xff]
        %v1968 = vld [vmem:[#allocation3 + $0x10] sm:$0xff]
        %v1969 = vld [vmem:[#allocation3 + $0x18] sm:$0xff]
        %v1970 = vld [vmem:[#allocation3 + $0x20] sm:$0xff]
        %v1971 = vld [vmem:[#allocation3 + $0x28] sm:$0xff]
        %v1972 = vld [vmem:[#allocation3 + $0x30] sm:$0xff]
        %v1973 = vld [vmem:[#allocation3 + $0x38] sm:$0xff]
        %v1974 = vld [vmem:[#allocation3 + $0x40] sm:$0xff]
        %v1975 = vld [vmem:[#allocation3 + $0x48] sm:$0xff]
        %v1976 = vld [vmem:[#allocation3 + $0x50] sm:$0xff]
        %v1977 = vld [vmem:[#allocation3 + $0x58] sm:$0xff]
        %v1978 = vld [vmem:[#allocation3 + $0x60] sm:$0xff]
        %v1979 = vld [vmem:[#allocation3 + $0x68] sm:$0xff]
        %v1980 = vld [vmem:[#allocation3 + $0x70] sm:$0xff]
        %v1981 = vld [vmem:[#allocation3 + $0x78] sm:$0xff]
        %1998 = vrot.lane.b32.xlu0 %v1966, 107
        %v1999 = vpop.permute.xlu0 %1998
        %2000 = vrot.lane.b32.xlu0 %v1967, 107
        %v2001 = vpop.permute.xlu0 %2000
        %2002 = vrot.lane.b32.xlu0 %v1968, 107
        %v2003 = vpop.permute.xlu0 %2002
        %2004 = vrot.lane.b32.xlu0 %v1969, 107
        %v2005 = vpop.permute.xlu0 %2004
        %2006 = vrot.lane.b32.xlu0 %v1970, 107
        %v2007 = vpop.permute.xlu0 %2006
        %2008 = vrot.lane.b32.xlu0 %v1971, 107
        %v2009 = vpop.permute.xlu0 %2008
        %2010 = vrot.lane.b32.xlu0 %v1972, 107
        %v2011 = vpop.permute.xlu0 %2010
        %2012 = vrot.lane.b32.xlu0 %v1973, 107
        %v2013 = vpop.permute.xlu0 %2012
        %2014 = vrot.lane.b32.xlu0 %v1974, 107
        %v2015 = vpop.permute.xlu0 %2014
        %2016 = vrot.lane.b32.xlu0 %v1975, 107
        %v2017 = vpop.permute.xlu0 %2016
        %2018 = vrot.lane.b32.xlu0 %v1976, 107
        %v2019 = vpop.permute.xlu0 %2018
        %2020 = vrot.lane.b32.xlu0 %v1977, 107
        %v2021 = vpop.permute.xlu0 %2020
        %2022 = vrot.lane.b32.xlu0 %v1978, 107
        %v2023 = vpop.permute.xlu0 %2022
        %2024 = vrot.lane.b32.xlu0 %v1979, 107
        %v2025 = vpop.permute.xlu0 %2024
        %2026 = vrot.lane.b32.xlu0 %v1980, 107
        %v2027 = vpop.permute.xlu0 %2026
        %2028 = vrot.lane.b32.xlu0 %v1981, 107
        %v2029 = vpop.permute.xlu0 %2028
        %v2030 = vsel %vm517, %v1999, %v2001
        %v2031 = vsel %vm517, %v2001, %v2003
        %v2032 = vsel %vm517, %v2003, %v2005
        %v2033 = vsel %vm517, %v2007, %v2009
        %v2034 = vsel %vm517, %v2009, %v2011
        %v2035 = vsel %vm517, %v2011, %v2013
        %v2036 = vsel %vm517, %v2015, %v2017
        %v2037 = vsel %vm517, %v2017, %v2019
        %v2038 = vsel %vm517, %v2019, %v2021
        %v2039 = vsel %vm517, %v2023, %v2025
        %v2040 = vsel %vm517, %v2025, %v2027
        %v2041 = vsel %vm517, %v2027, %v2029
        %2058 = vst [vmem:[#allocation2 + $0x300] sm:$0xff] %v2030
        %2059 = vst [vmem:[#allocation2 + $0x308] sm:$0xff] %v2031
        %2060 = vst [vmem:[#allocation2 + $0x310] sm:$0xff] %v2032
        %2061 = vst.msk [vmem:[#allocation2 + $0x318] sm:$0xff] %vm403, %v2005
        %2062 = vst [vmem:[#allocation2 + $0x320] sm:$0xff] %v2033
        %2063 = vst [vmem:[#allocation2 + $0x328] sm:$0xff] %v2034
        %2064 = vst [vmem:[#allocation2 + $0x330] sm:$0xff] %v2035
        %2065 = vst.msk [vmem:[#allocation2 + $0x338] sm:$0xff] %vm403, %v2013
        %2066 = vst [vmem:[#allocation2 + $0x340] sm:$0xff] %v2036
        %2067 = vst [vmem:[#allocation2 + $0x348] sm:$0xff] %v2037
        %2068 = vst [vmem:[#allocation2 + $0x350] sm:$0xff] %v2038
        %2069 = vst.msk [vmem:[#allocation2 + $0x358] sm:$0xff] %vm403, %v2021
        %2070 = vst [vmem:[#allocation2 + $0x360] sm:$0xff] %v2039
        %2071 = vst [vmem:[#allocation2 + $0x368] sm:$0xff] %v2040
        %2072 = vst [vmem:[#allocation2 + $0x370] sm:$0xff] %v2041
        %2073 = vst.msk [vmem:[#allocation2 + $0x378] sm:$0xff] %vm403, %v2029
        %v2074 = vld [vmem:[#allocation3] sm:$0xff]
        %v2075 = vld [vmem:[#allocation3 + $0x8] sm:$0xff]
        %v2076 = vld [vmem:[#allocation3 + $0x10] sm:$0xff]
        %v2077 = vld [vmem:[#allocation3 + $0x18] sm:$0xff]
        %v2078 = vld [vmem:[#allocation3 + $0x20] sm:$0xff]
        %v2079 = vld [vmem:[#allocation3 + $0x28] sm:$0xff]
        %v2080 = vld [vmem:[#allocation3 + $0x30] sm:$0xff]
        %v2081 = vld [vmem:[#allocation3 + $0x38] sm:$0xff]
        %v2082 = vld [vmem:[#allocation3 + $0x40] sm:$0xff]
        %v2083 = vld [vmem:[#allocation3 + $0x48] sm:$0xff]
        %v2084 = vld [vmem:[#allocation3 + $0x50] sm:$0xff]
        %v2085 = vld [vmem:[#allocation3 + $0x58] sm:$0xff]
        %v2086 = vld [vmem:[#allocation3 + $0x60] sm:$0xff]
        %v2087 = vld [vmem:[#allocation3 + $0x68] sm:$0xff]
        %v2088 = vld [vmem:[#allocation3 + $0x70] sm:$0xff]
        %v2089 = vld [vmem:[#allocation3 + $0x78] sm:$0xff]
        %2106 = vrot.lane.b32.xlu0 %v2074, 106
        %v2107 = vpop.permute.xlu0 %2106
        %2108 = vrot.lane.b32.xlu0 %v2075, 106
        %v2109 = vpop.permute.xlu0 %2108
        %2110 = vrot.lane.b32.xlu0 %v2076, 106
        %v2111 = vpop.permute.xlu0 %2110
        %2112 = vrot.lane.b32.xlu0 %v2077, 106
        %v2113 = vpop.permute.xlu0 %2112
        %2114 = vrot.lane.b32.xlu0 %v2078, 106
        %v2115 = vpop.permute.xlu0 %2114
        %2116 = vrot.lane.b32.xlu0 %v2079, 106
        %v2117 = vpop.permute.xlu0 %2116
        %2118 = vrot.lane.b32.xlu0 %v2080, 106
        %v2119 = vpop.permute.xlu0 %2118
        %2120 = vrot.lane.b32.xlu0 %v2081, 106
        %v2121 = vpop.permute.xlu0 %2120
        %2122 = vrot.lane.b32.xlu0 %v2082, 106
        %v2123 = vpop.permute.xlu0 %2122
        %2124 = vrot.lane.b32.xlu0 %v2083, 106
        %v2125 = vpop.permute.xlu0 %2124
        %2126 = vrot.lane.b32.xlu0 %v2084, 106
        %v2127 = vpop.permute.xlu0 %2126
        %2128 = vrot.lane.b32.xlu0 %v2085, 106
        %v2129 = vpop.permute.xlu0 %2128
        %2130 = vrot.lane.b32.xlu0 %v2086, 106
        %v2131 = vpop.permute.xlu0 %2130
        %2132 = vrot.lane.b32.xlu0 %v2087, 106
        %v2133 = vpop.permute.xlu0 %2132
        %2134 = vrot.lane.b32.xlu0 %v2088, 106
        %v2135 = vpop.permute.xlu0 %2134
        %2136 = vrot.lane.b32.xlu0 %v2089, 106
        %v2137 = vpop.permute.xlu0 %2136
        %v2138 = vsel %vm537, %v2107, %v2109
        %v2139 = vsel %vm537, %v2109, %v2111
        %v2140 = vsel %vm537, %v2111, %v2113
        %v2141 = vsel %vm537, %v2115, %v2117
        %v2142 = vsel %vm537, %v2117, %v2119
        %v2143 = vsel %vm537, %v2119, %v2121
        %v2144 = vsel %vm537, %v2123, %v2125
        %v2145 = vsel %vm537, %v2125, %v2127
        %v2146 = vsel %vm537, %v2127, %v2129
        %v2147 = vsel %vm537, %v2131, %v2133
        %v2148 = vsel %vm537, %v2133, %v2135
        %v2149 = vsel %vm537, %v2135, %v2137
        %2166 = vst [vmem:[#allocation2 + $0x380] sm:$0xff] %v2138
        %2167 = vst [vmem:[#allocation2 + $0x388] sm:$0xff] %v2139
        %2168 = vst [vmem:[#allocation2 + $0x390] sm:$0xff] %v2140
        %2169 = vst.msk [vmem:[#allocation2 + $0x398] sm:$0xff] %vm403, %v2113
        %2170 = vst [vmem:[#allocation2 + $0x3a0] sm:$0xff] %v2141
        %2171 = vst [vmem:[#allocation2 + $0x3a8] sm:$0xff] %v2142
        %2172 = vst [vmem:[#allocation2 + $0x3b0] sm:$0xff] %v2143
        %2173 = vst.msk [vmem:[#allocation2 + $0x3b8] sm:$0xff] %vm403, %v2121
        %2174 = vst [vmem:[#allocation2 + $0x3c0] sm:$0xff] %v2144
        %2175 = vst [vmem:[#allocation2 + $0x3c8] sm:$0xff] %v2145
        %2176 = vst [vmem:[#allocation2 + $0x3d0] sm:$0xff] %v2146
        %2177 = vst.msk [vmem:[#allocation2 + $0x3d8] sm:$0xff] %vm403, %v2129
        %2178 = vst [vmem:[#allocation2 + $0x3e0] sm:$0xff] %v2147
        %2179 = vst [vmem:[#allocation2 + $0x3e8] sm:$0xff] %v2148
        %2180 = vst [vmem:[#allocation2 + $0x3f0] sm:$0xff] %v2149
        %2181 = vst.msk [vmem:[#allocation2 + $0x3f8] sm:$0xff] %vm403, %v2137
        %v2182 = vld [vmem:[#allocation3] sm:$0xff]
        %v2183 = vld [vmem:[#allocation3 + $0x8] sm:$0xff]
        %v2184 = vld [vmem:[#allocation3 + $0x10] sm:$0xff]
        %v2185 = vld [vmem:[#allocation3 + $0x18] sm:$0xff]
        %v2186 = vld [vmem:[#allocation3 + $0x20] sm:$0xff]
        %v2187 = vld [vmem:[#allocation3 + $0x28] sm:$0xff]
        %v2188 = vld [vmem:[#allocation3 + $0x30] sm:$0xff]
        %v2189 = vld [vmem:[#allocation3 + $0x38] sm:$0xff]
        %v2190 = vld [vmem:[#allocation3 + $0x40] sm:$0xff]
        %v2191 = vld [vmem:[#allocation3 + $0x48] sm:$0xff]
        %v2192 = vld [vmem:[#allocation3 + $0x50] sm:$0xff]
        %v2193 = vld [vmem:[#allocation3 + $0x58] sm:$0xff]
        %v2194 = vld [vmem:[#allocation3 + $0x60] sm:$0xff]
        %v2195 = vld [vmem:[#allocation3 + $0x68] sm:$0xff]
        %v2196 = vld [vmem:[#allocation3 + $0x70] sm:$0xff]
        %v2197 = vld [vmem:[#allocation3 + $0x78] sm:$0xff]
        %2214 = vrot.lane.b32.xlu0 %v2182, 105
        %v2215 = vpop.permute.xlu0 %2214
        %2216 = vrot.lane.b32.xlu0 %v2183, 105
        %v2217 = vpop.permute.xlu0 %2216
        %2218 = vrot.lane.b32.xlu0 %v2184, 105
        %v2219 = vpop.permute.xlu0 %2218
        %2220 = vrot.lane.b32.xlu0 %v2185, 105
        %v2221 = vpop.permute.xlu0 %2220
        %2222 = vrot.lane.b32.xlu0 %v2186, 105
        %v2223 = vpop.permute.xlu0 %2222
        %2224 = vrot.lane.b32.xlu0 %v2187, 105
        %v2225 = vpop.permute.xlu0 %2224
        %2226 = vrot.lane.b32.xlu0 %v2188, 105
        %v2227 = vpop.permute.xlu0 %2226
        %2228 = vrot.lane.b32.xlu0 %v2189, 105
        %v2229 = vpop.permute.xlu0 %2228
        %2230 = vrot.lane.b32.xlu0 %v2190, 105
        %v2231 = vpop.permute.xlu0 %2230
        %2232 = vrot.lane.b32.xlu0 %v2191, 105
        %v2233 = vpop.permute.xlu0 %2232
        %2234 = vrot.lane.b32.xlu0 %v2192, 105
        %v2235 = vpop.permute.xlu0 %2234
        %2236 = vrot.lane.b32.xlu0 %v2193, 105
        %v2237 = vpop.permute.xlu0 %2236
        %2238 = vrot.lane.b32.xlu0 %v2194, 105
        %v2239 = vpop.permute.xlu0 %2238
        %2240 = vrot.lane.b32.xlu0 %v2195, 105
        %v2241 = vpop.permute.xlu0 %2240
        %2242 = vrot.lane.b32.xlu0 %v2196, 105
        %v2243 = vpop.permute.xlu0 %2242
        %2244 = vrot.lane.b32.xlu0 %v2197, 105
        %v2245 = vpop.permute.xlu0 %2244
        %v2246 = vsel %vm557, %v2215, %v2217
        %v2247 = vsel %vm557, %v2217, %v2219
        %v2248 = vsel %vm557, %v2219, %v2221
        %v2249 = vsel %vm557, %v2223, %v2225
        %v2250 = vsel %vm557, %v2225, %v2227
        %v2251 = vsel %vm557, %v2227, %v2229
        %v2252 = vsel %vm557, %v2231, %v2233
        %v2253 = vsel %vm557, %v2233, %v2235
        %v2254 = vsel %vm557, %v2235, %v2237
        %v2255 = vsel %vm557, %v2239, %v2241
        %v2256 = vsel %vm557, %v2241, %v2243
        %v2257 = vsel %vm557, %v2243, %v2245
        %2274 = vst [vmem:[#allocation2 + $0x400] sm:$0xff] %v2246
        %2275 = vst [vmem:[#allocation2 + $0x408] sm:$0xff] %v2247
        %2276 = vst [vmem:[#allocation2 + $0x410] sm:$0xff] %v2248
        %2277 = vst.msk [vmem:[#allocation2 + $0x418] sm:$0xff] %vm403, %v2221
        %2278 = vst [vmem:[#allocation2 + $0x420] sm:$0xff] %v2249
        %2279 = vst [vmem:[#allocation2 + $0x428] sm:$0xff] %v2250
        %2280 = vst [vmem:[#allocation2 + $0x430] sm:$0xff] %v2251
        %2281 = vst.msk [vmem:[#allocation2 + $0x438] sm:$0xff] %vm403, %v2229
        %2282 = vst [vmem:[#allocation2 + $0x440] sm:$0xff] %v2252
        %2283 = vst [vmem:[#allocation2 + $0x448] sm:$0xff] %v2253
        %2284 = vst [vmem:[#allocation2 + $0x450] sm:$0xff] %v2254
        %2285 = vst.msk [vmem:[#allocation2 + $0x458] sm:$0xff] %vm403, %v2237
        %2286 = vst [vmem:[#allocation2 + $0x460] sm:$0xff] %v2255
        %2287 = vst [vmem:[#allocation2 + $0x468] sm:$0xff] %v2256
        %2288 = vst [vmem:[#allocation2 + $0x470] sm:$0xff] %v2257
        %2289 = vst.msk [vmem:[#allocation2 + $0x478] sm:$0xff] %vm403, %v2245
        %v2290 = vld [vmem:[#allocation3] sm:$0xff]
        %v2291 = vld [vmem:[#allocation3 + $0x8] sm:$0xff]
        %v2292 = vld [vmem:[#allocation3 + $0x10] sm:$0xff]
        %v2293 = vld [vmem:[#allocation3 + $0x18] sm:$0xff]
        %v2294 = vld [vmem:[#allocation3 + $0x20] sm:$0xff]
        %v2295 = vld [vmem:[#allocation3 + $0x28] sm:$0xff]
        %v2296 = vld [vmem:[#allocation3 + $0x30] sm:$0xff]
        %v2297 = vld [vmem:[#allocation3 + $0x38] sm:$0xff]
        %v2298 = vld [vmem:[#allocation3 + $0x40] sm:$0xff]
        %v2299 = vld [vmem:[#allocation3 + $0x48] sm:$0xff]
        %v2300 = vld [vmem:[#allocation3 + $0x50] sm:$0xff]
        %v2301 = vld [vmem:[#allocation3 + $0x58] sm:$0xff]
        %v2302 = vld [vmem:[#allocation3 + $0x60] sm:$0xff]
        %v2303 = vld [vmem:[#allocation3 + $0x68] sm:$0xff]
        %v2304 = vld [vmem:[#allocation3 + $0x70] sm:$0xff]
        %v2305 = vld [vmem:[#allocation3 + $0x78] sm:$0xff]
        %2322 = vrot.lane.b32.xlu0 %v2290, 104
        %v2323 = vpop.permute.xlu0 %2322
        %2324 = vrot.lane.b32.xlu0 %v2291, 104
        %v2325 = vpop.permute.xlu0 %2324
        %2326 = vrot.lane.b32.xlu0 %v2292, 104
        %v2327 = vpop.permute.xlu0 %2326
        %2328 = vrot.lane.b32.xlu0 %v2293, 104
        %v2329 = vpop.permute.xlu0 %2328
        %2330 = vrot.lane.b32.xlu0 %v2294, 104
        %v2331 = vpop.permute.xlu0 %2330
        %2332 = vrot.lane.b32.xlu0 %v2295, 104
        %v2333 = vpop.permute.xlu0 %2332
        %2334 = vrot.lane.b32.xlu0 %v2296, 104
        %v2335 = vpop.permute.xlu0 %2334
        %2336 = vrot.lane.b32.xlu0 %v2297, 104
        %v2337 = vpop.permute.xlu0 %2336
        %2338 = vrot.lane.b32.xlu0 %v2298, 104
        %v2339 = vpop.permute.xlu0 %2338
        %2340 = vrot.lane.b32.xlu0 %v2299, 104
        %v2341 = vpop.permute.xlu0 %2340
        %2342 = vrot.lane.b32.xlu0 %v2300, 104
        %v2343 = vpop.permute.xlu0 %2342
        %2344 = vrot.lane.b32.xlu0 %v2301, 104
        %v2345 = vpop.permute.xlu0 %2344
        %2346 = vrot.lane.b32.xlu0 %v2302, 104
        %v2347 = vpop.permute.xlu0 %2346
        %2348 = vrot.lane.b32.xlu0 %v2303, 104
        %v2349 = vpop.permute.xlu0 %2348
        %2350 = vrot.lane.b32.xlu0 %v2304, 104
        %v2351 = vpop.permute.xlu0 %2350
        %2352 = vrot.lane.b32.xlu0 %v2305, 104
        %v2353 = vpop.permute.xlu0 %2352
        %v2354 = vsel %vm577, %v2323, %v2325
        %v2355 = vsel %vm577, %v2325, %v2327
        %v2356 = vsel %vm577, %v2327, %v2329
        %v2357 = vsel %vm577, %v2331, %v2333
        %v2358 = vsel %vm577, %v2333, %v2335
        %v2359 = vsel %vm577, %v2335, %v2337
        %v2360 = vsel %vm577, %v2339, %v2341
        %v2361 = vsel %vm577, %v2341, %v2343
        %v2362 = vsel %vm577, %v2343, %v2345
        %v2363 = vsel %vm577, %v2347, %v2349
        %v2364 = vsel %vm577, %v2349, %v2351
        %v2365 = vsel %vm577, %v2351, %v2353
        %2382 = vst [vmem:[#allocation2 + $0x480] sm:$0xff] %v2354
        %2383 = vst [vmem:[#allocation2 + $0x488] sm:$0xff] %v2355
        %2384 = vst [vmem:[#allocation2 + $0x490] sm:$0xff] %v2356
        %2385 = vst.msk [vmem:[#allocation2 + $0x498] sm:$0xff] %vm403, %v2329
        %2386 = vst [vmem:[#allocation2 + $0x4a0] sm:$0xff] %v2357
        %2387 = vst [vmem:[#allocation2 + $0x4a8] sm:$0xff] %v2358
        %2388 = vst [vmem:[#allocation2 + $0x4b0] sm:$0xff] %v2359
        %2389 = vst.msk [vmem:[#allocation2 + $0x4b8] sm:$0xff] %vm403, %v2337
        %2390 = vst [vmem:[#allocation2 + $0x4c0] sm:$0xff] %v2360
        %2391 = vst [vmem:[#allocation2 + $0x4c8] sm:$0xff] %v2361
        %2392 = vst [vmem:[#allocation2 + $0x4d0] sm:$0xff] %v2362
        %2393 = vst.msk [vmem:[#allocation2 + $0x4d8] sm:$0xff] %vm403, %v2345
        %2394 = vst [vmem:[#allocation2 + $0x4e0] sm:$0xff] %v2363
        %2395 = vst [vmem:[#allocation2 + $0x4e8] sm:$0xff] %v2364
        %2396 = vst [vmem:[#allocation2 + $0x4f0] sm:$0xff] %v2365
        %2397 = vst.msk [vmem:[#allocation2 + $0x4f8] sm:$0xff] %vm403, %v2353
        %v2398 = vld [vmem:[#allocation3] sm:$0xff]
        %v2399 = vld [vmem:[#allocation3 + $0x8] sm:$0xff]
        %v2400 = vld [vmem:[#allocation3 + $0x10] sm:$0xff]
        %v2401 = vld [vmem:[#allocation3 + $0x18] sm:$0xff]
        %v2402 = vld [vmem:[#allocation3 + $0x20] sm:$0xff]
        %v2403 = vld [vmem:[#allocation3 + $0x28] sm:$0xff]
        %v2404 = vld [vmem:[#allocation3 + $0x30] sm:$0xff]
        %v2405 = vld [vmem:[#allocation3 + $0x38] sm:$0xff]
        %v2406 = vld [vmem:[#allocation3 + $0x40] sm:$0xff]
        %v2407 = vld [vmem:[#allocation3 + $0x48] sm:$0xff]
        %v2408 = vld [vmem:[#allocation3 + $0x50] sm:$0xff]
        %v2409 = vld [vmem:[#allocation3 + $0x58] sm:$0xff]
        %v2410 = vld [vmem:[#allocation3 + $0x60] sm:$0xff]
        %v2411 = vld [vmem:[#allocation3 + $0x68] sm:$0xff]
        %v2412 = vld [vmem:[#allocation3 + $0x70] sm:$0xff]
        %v2413 = vld [vmem:[#allocation3 + $0x78] sm:$0xff]
        %2430 = vrot.lane.b32.xlu0 %v2398, 88
        %v2431 = vpop.permute.xlu0 %2430
        %2432 = vrot.lane.b32.xlu0 %v2399, 88
        %v2433 = vpop.permute.xlu0 %2432
        %2434 = vrot.lane.b32.xlu0 %v2400, 88
        %v2435 = vpop.permute.xlu0 %2434
        %2436 = vrot.lane.b32.xlu0 %v2401, 88
        %v2437 = vpop.permute.xlu0 %2436
        %2438 = vrot.lane.b32.xlu0 %v2402, 88
        %v2439 = vpop.permute.xlu0 %2438
        %2440 = vrot.lane.b32.xlu0 %v2403, 88
        %v2441 = vpop.permute.xlu0 %2440
        %2442 = vrot.lane.b32.xlu0 %v2404, 88
        %v2443 = vpop.permute.xlu0 %2442
        %2444 = vrot.lane.b32.xlu0 %v2405, 88
        %v2445 = vpop.permute.xlu0 %2444
        %2446 = vrot.lane.b32.xlu0 %v2406, 88
        %v2447 = vpop.permute.xlu0 %2446
        %2448 = vrot.lane.b32.xlu0 %v2407, 88
        %v2449 = vpop.permute.xlu0 %2448
        %2450 = vrot.lane.b32.xlu0 %v2408, 88
        %v2451 = vpop.permute.xlu0 %2450
        %2452 = vrot.lane.b32.xlu0 %v2409, 88
        %v2453 = vpop.permute.xlu0 %2452
        %2454 = vrot.lane.b32.xlu0 %v2410, 88
        %v2455 = vpop.permute.xlu0 %2454
        %2456 = vrot.lane.b32.xlu0 %v2411, 88
        %v2457 = vpop.permute.xlu0 %2456
        %2458 = vrot.lane.b32.xlu0 %v2412, 88
        %v2459 = vpop.permute.xlu0 %2458
        %2460 = vrot.lane.b32.xlu0 %v2413, 88
        %v2461 = vpop.permute.xlu0 %2460
        %v2462 = vsel %vm597, %v2431, %v2433
        %v2463 = vsel %vm597, %v2433, %v2435
        %v2464 = vsel %vm597, %v2435, %v2437
        %v2465 = vsel %vm597, %v2439, %v2441
        %v2466 = vsel %vm597, %v2441, %v2443
        %v2467 = vsel %vm597, %v2443, %v2445
        %v2468 = vsel %vm597, %v2447, %v2449
        %v2469 = vsel %vm597, %v2449, %v2451
        %v2470 = vsel %vm597, %v2451, %v2453
        %v2471 = vsel %vm597, %v2455, %v2457
        %v2472 = vsel %vm597, %v2457, %v2459
        %v2473 = vsel %vm597, %v2459, %v2461
        %2490 = vst [vmem:[#allocation2 + $0x500] sm:$0xff] %v2462
        %2491 = vst [vmem:[#allocation2 + $0x508] sm:$0xff] %v2463
        %2492 = vst [vmem:[#allocation2 + $0x510] sm:$0xff] %v2464
        %2493 = vst.msk [vmem:[#allocation2 + $0x518] sm:$0xff] %vm403, %v2437
        %2494 = vst [vmem:[#allocation2 + $0x520] sm:$0xff] %v2465
        %2495 = vst [vmem:[#allocation2 + $0x528] sm:$0xff] %v2466
        %2496 = vst [vmem:[#allocation2 + $0x530] sm:$0xff] %v2467
        %2497 = vst.msk [vmem:[#allocation2 + $0x538] sm:$0xff] %vm403, %v2445
        %2498 = vst [vmem:[#allocation2 + $0x540] sm:$0xff] %v2468
        %2499 = vst [vmem:[#allocation2 + $0x548] sm:$0xff] %v2469
        %2500 = vst [vmem:[#allocation2 + $0x550] sm:$0xff] %v2470
        %2501 = vst.msk [vmem:[#allocation2 + $0x558] sm:$0xff] %vm403, %v2453
        %2502 = vst [vmem:[#allocation2 + $0x560] sm:$0xff] %v2471
        %2503 = vst [vmem:[#allocation2 + $0x568] sm:$0xff] %v2472
        %2504 = vst [vmem:[#allocation2 + $0x570] sm:$0xff] %v2473
        %2505 = vst.msk [vmem:[#allocation2 + $0x578] sm:$0xff] %vm403, %v2461
        %v2506 = vld [vmem:[#allocation3] sm:$0xff]
        %v2507 = vld [vmem:[#allocation3 + $0x8] sm:$0xff]
        %v2508 = vld [vmem:[#allocation3 + $0x10] sm:$0xff]
        %v2509 = vld [vmem:[#allocation3 + $0x18] sm:$0xff]
        %v2510 = vld [vmem:[#allocation3 + $0x20] sm:$0xff]
        %v2511 = vld [vmem:[#allocation3 + $0x28] sm:$0xff]
        %v2512 = vld [vmem:[#allocation3 + $0x30] sm:$0xff]
        %v2513 = vld [vmem:[#allocation3 + $0x38] sm:$0xff]
        %v2514 = vld [vmem:[#allocation3 + $0x40] sm:$0xff]
        %v2515 = vld [vmem:[#allocation3 + $0x48] sm:$0xff]
        %v2516 = vld [vmem:[#allocation3 + $0x50] sm:$0xff]
        %v2517 = vld [vmem:[#allocation3 + $0x58] sm:$0xff]
        %v2518 = vld [vmem:[#allocation3 + $0x60] sm:$0xff]
        %v2519 = vld [vmem:[#allocation3 + $0x68] sm:$0xff]
        %v2520 = vld [vmem:[#allocation3 + $0x70] sm:$0xff]
        %v2521 = vld [vmem:[#allocation3 + $0x78] sm:$0xff]
        %2538 = vrot.lane.b32.xlu0 %v2506, 87
        %v2539 = vpop.permute.xlu0 %2538
        %2540 = vrot.lane.b32.xlu0 %v2507, 87
        %v2541 = vpop.permute.xlu0 %2540
        %2542 = vrot.lane.b32.xlu0 %v2508, 87
        %v2543 = vpop.permute.xlu0 %2542
        %2544 = vrot.lane.b32.xlu0 %v2509, 87
        %v2545 = vpop.permute.xlu0 %2544
        %2546 = vrot.lane.b32.xlu0 %v2510, 87
        %v2547 = vpop.permute.xlu0 %2546
        %2548 = vrot.lane.b32.xlu0 %v2511, 87
        %v2549 = vpop.permute.xlu0 %2548
        %2550 = vrot.lane.b32.xlu0 %v2512, 87
        %v2551 = vpop.permute.xlu0 %2550
        %2552 = vrot.lane.b32.xlu0 %v2513, 87
        %v2553 = vpop.permute.xlu0 %2552
        %2554 = vrot.lane.b32.xlu0 %v2514, 87
        %v2555 = vpop.permute.xlu0 %2554
        %2556 = vrot.lane.b32.xlu0 %v2515, 87
        %v2557 = vpop.permute.xlu0 %2556
        %2558 = vrot.lane.b32.xlu0 %v2516, 87
        %v2559 = vpop.permute.xlu0 %2558
        %2560 = vrot.lane.b32.xlu0 %v2517, 87
        %v2561 = vpop.permute.xlu0 %2560
        %2562 = vrot.lane.b32.xlu0 %v2518, 87
        %v2563 = vpop.permute.xlu0 %2562
        %2564 = vrot.lane.b32.xlu0 %v2519, 87
        %v2565 = vpop.permute.xlu0 %2564
        %2566 = vrot.lane.b32.xlu0 %v2520, 87
        %v2567 = vpop.permute.xlu0 %2566
        %2568 = vrot.lane.b32.xlu0 %v2521, 87
        %v2569 = vpop.permute.xlu0 %2568
        %v2570 = vsel %vm617, %v2539, %v2541
        %v2571 = vsel %vm617, %v2541, %v2543
        %v2572 = vsel %vm617, %v2543, %v2545
        %v2573 = vsel %vm617, %v2547, %v2549
        %v2574 = vsel %vm617, %v2549, %v2551
        %v2575 = vsel %vm617, %v2551, %v2553
        %v2576 = vsel %vm617, %v2555, %v2557
        %v2577 = vsel %vm617, %v2557, %v2559
        %v2578 = vsel %vm617, %v2559, %v2561
        %v2579 = vsel %vm617, %v2563, %v2565
        %v2580 = vsel %vm617, %v2565, %v2567
        %v2581 = vsel %vm617, %v2567, %v2569
        %2598 = vst [vmem:[#allocation2 + $0x580] sm:$0xff] %v2570
        %2599 = vst [vmem:[#allocation2 + $0x588] sm:$0xff] %v2571
        %2600 = vst [vmem:[#allocation2 + $0x590] sm:$0xff] %v2572
        %2601 = vst.msk [vmem:[#allocation2 + $0x598] sm:$0xff] %vm403, %v2545
        %2602 = vst [vmem:[#allocation2 + $0x5a0] sm:$0xff] %v2573
        %2603 = vst [vmem:[#allocation2 + $0x5a8] sm:$0xff] %v2574
        %2604 = vst [vmem:[#allocation2 + $0x5b0] sm:$0xff] %v2575
        %2605 = vst.msk [vmem:[#allocation2 + $0x5b8] sm:$0xff] %vm403, %v2553
        %2606 = vst [vmem:[#allocation2 + $0x5c0] sm:$0xff] %v2576
        %2607 = vst [vmem:[#allocation2 + $0x5c8] sm:$0xff] %v2577
        %2608 = vst [vmem:[#allocation2 + $0x5d0] sm:$0xff] %v2578
        %2609 = vst.msk [vmem:[#allocation2 + $0x5d8] sm:$0xff] %vm403, %v2561
        %2610 = vst [vmem:[#allocation2 + $0x5e0] sm:$0xff] %v2579
        %2611 = vst [vmem:[#allocation2 + $0x5e8] sm:$0xff] %v2580
        %2612 = vst [vmem:[#allocation2 + $0x5f0] sm:$0xff] %v2581
        %2613 = vst.msk [vmem:[#allocation2 + $0x5f8] sm:$0xff] %vm403, %v2569
        %v2614 = vld [vmem:[#allocation3] sm:$0xff]
        %v2615 = vld [vmem:[#allocation3 + $0x8] sm:$0xff]
        %v2616 = vld [vmem:[#allocation3 + $0x10] sm:$0xff]
        %v2617 = vld [vmem:[#allocation3 + $0x18] sm:$0xff]
        %v2618 = vld [vmem:[#allocation3 + $0x20] sm:$0xff]
        %v2619 = vld [vmem:[#allocation3 + $0x28] sm:$0xff]
        %v2620 = vld [vmem:[#allocation3 + $0x30] sm:$0xff]
        %v2621 = vld [vmem:[#allocation3 + $0x38] sm:$0xff]
        %v2622 = vld [vmem:[#allocation3 + $0x40] sm:$0xff]
        %v2623 = vld [vmem:[#allocation3 + $0x48] sm:$0xff]
        %v2624 = vld [vmem:[#allocation3 + $0x50] sm:$0xff]
        %v2625 = vld [vmem:[#allocation3 + $0x58] sm:$0xff]
        %v2626 = vld [vmem:[#allocation3 + $0x60] sm:$0xff]
        %v2627 = vld [vmem:[#allocation3 + $0x68] sm:$0xff]
        %v2628 = vld [vmem:[#allocation3 + $0x70] sm:$0xff]
        %v2629 = vld [vmem:[#allocation3 + $0x78] sm:$0xff]
        %2646 = vrot.lane.b32.xlu0 %v2614, 86
        %v2647 = vpop.permute.xlu0 %2646
        %2648 = vrot.lane.b32.xlu0 %v2615, 86
        %v2649 = vpop.permute.xlu0 %2648
        %2650 = vrot.lane.b32.xlu0 %v2616, 86
        %v2651 = vpop.permute.xlu0 %2650
        %2652 = vrot.lane.b32.xlu0 %v2617, 86
        %v2653 = vpop.permute.xlu0 %2652
        %2654 = vrot.lane.b32.xlu0 %v2618, 86
        %v2655 = vpop.permute.xlu0 %2654
        %2656 = vrot.lane.b32.xlu0 %v2619, 86
        %v2657 = vpop.permute.xlu0 %2656
        %2658 = vrot.lane.b32.xlu0 %v2620, 86
        %v2659 = vpop.permute.xlu0 %2658
        %2660 = vrot.lane.b32.xlu0 %v2621, 86
        %v2661 = vpop.permute.xlu0 %2660
        %2662 = vrot.lane.b32.xlu0 %v2622, 86
        %v2663 = vpop.permute.xlu0 %2662
        %2664 = vrot.lane.b32.xlu0 %v2623, 86
        %v2665 = vpop.permute.xlu0 %2664
        %2666 = vrot.lane.b32.xlu0 %v2624, 86
        %v2667 = vpop.permute.xlu0 %2666
        %2668 = vrot.lane.b32.xlu0 %v2625, 86
        %v2669 = vpop.permute.xlu0 %2668
        %2670 = vrot.lane.b32.xlu0 %v2626, 86
        %v2671 = vpop.permute.xlu0 %2670
        %2672 = vrot.lane.b32.xlu0 %v2627, 86
        %v2673 = vpop.permute.xlu0 %2672
        %2674 = vrot.lane.b32.xlu0 %v2628, 86
        %v2675 = vpop.permute.xlu0 %2674
        %2676 = vrot.lane.b32.xlu0 %v2629, 86
        %v2677 = vpop.permute.xlu0 %2676
        %v2678 = vsel %vm637, %v2647, %v2649
        %v2679 = vsel %vm637, %v2649, %v2651
        %v2680 = vsel %vm637, %v2651, %v2653
        %v2681 = vsel %vm637, %v2655, %v2657
        %v2682 = vsel %vm637, %v2657, %v2659
        %v2683 = vsel %vm637, %v2659, %v2661
        %v2684 = vsel %vm637, %v2663, %v2665
        %v2685 = vsel %vm637, %v2665, %v2667
        %v2686 = vsel %vm637, %v2667, %v2669
        %v2687 = vsel %vm637, %v2671, %v2673
        %v2688 = vsel %vm637, %v2673, %v2675
        %v2689 = vsel %vm637, %v2675, %v2677
        %2706 = vst [vmem:[#allocation2 + $0x600] sm:$0xff] %v2678
        %2707 = vst [vmem:[#allocation2 + $0x608] sm:$0xff] %v2679
        %2708 = vst [vmem:[#allocation2 + $0x610] sm:$0xff] %v2680
        %2709 = vst.msk [vmem:[#allocation2 + $0x618] sm:$0xff] %vm403, %v2653
        %2710 = vst [vmem:[#allocation2 + $0x620] sm:$0xff] %v2681
        %2711 = vst [vmem:[#allocation2 + $0x628] sm:$0xff] %v2682
        %2712 = vst [vmem:[#allocation2 + $0x630] sm:$0xff] %v2683
        %2713 = vst.msk [vmem:[#allocation2 + $0x638] sm:$0xff] %vm403, %v2661
        %2714 = vst [vmem:[#allocation2 + $0x640] sm:$0xff] %v2684
        %2715 = vst [vmem:[#allocation2 + $0x648] sm:$0xff] %v2685
        %2716 = vst [vmem:[#allocation2 + $0x650] sm:$0xff] %v2686
        %2717 = vst.msk [vmem:[#allocation2 + $0x658] sm:$0xff] %vm403, %v2669
        %2718 = vst [vmem:[#allocation2 + $0x660] sm:$0xff] %v2687
        %2719 = vst [vmem:[#allocation2 + $0x668] sm:$0xff] %v2688
        %2720 = vst [vmem:[#allocation2 + $0x670] sm:$0xff] %v2689
        %2721 = vst.msk [vmem:[#allocation2 + $0x678] sm:$0xff] %vm403, %v2677
        %v2722 = vld [vmem:[#allocation3] sm:$0xff]
        %v2723 = vld [vmem:[#allocation3 + $0x8] sm:$0xff]
        %v2724 = vld [vmem:[#allocation3 + $0x10] sm:$0xff]
        %v2725 = vld [vmem:[#allocation3 + $0x18] sm:$0xff]
        %v2726 = vld [vmem:[#allocation3 + $0x20] sm:$0xff]
        %v2727 = vld [vmem:[#allocation3 + $0x28] sm:$0xff]
        %v2728 = vld [vmem:[#allocation3 + $0x30] sm:$0xff]
        %v2729 = vld [vmem:[#allocation3 + $0x38] sm:$0xff]
        %v2730 = vld [vmem:[#allocation3 + $0x40] sm:$0xff]
        %v2731 = vld [vmem:[#allocation3 + $0x48] sm:$0xff]
        %v2732 = vld [vmem:[#allocation3 + $0x50] sm:$0xff]
        %v2733 = vld [vmem:[#allocation3 + $0x58] sm:$0xff]
        %v2734 = vld [vmem:[#allocation3 + $0x60] sm:$0xff]
        %v2735 = vld [vmem:[#allocation3 + $0x68] sm:$0xff]
        %v2736 = vld [vmem:[#allocation3 + $0x70] sm:$0xff]
        %v2737 = vld [vmem:[#allocation3 + $0x78] sm:$0xff]
        %2754 = vrot.lane.b32.xlu0 %v2722, 85
        %v2755 = vpop.permute.xlu0 %2754
        %2756 = vrot.lane.b32.xlu0 %v2723, 85
        %v2757 = vpop.permute.xlu0 %2756
        %2758 = vrot.lane.b32.xlu0 %v2724, 85
        %v2759 = vpop.permute.xlu0 %2758
        %2760 = vrot.lane.b32.xlu0 %v2725, 85
        %v2761 = vpop.permute.xlu0 %2760
        %2762 = vrot.lane.b32.xlu0 %v2726, 85
        %v2763 = vpop.permute.xlu0 %2762
        %2764 = vrot.lane.b32.xlu0 %v2727, 85
        %v2765 = vpop.permute.xlu0 %2764
        %2766 = vrot.lane.b32.xlu0 %v2728, 85
        %v2767 = vpop.permute.xlu0 %2766
        %2768 = vrot.lane.b32.xlu0 %v2729, 85
        %v2769 = vpop.permute.xlu0 %2768
        %2770 = vrot.lane.b32.xlu0 %v2730, 85
        %v2771 = vpop.permute.xlu0 %2770
        %2772 = vrot.lane.b32.xlu0 %v2731, 85
        %v2773 = vpop.permute.xlu0 %2772
        %2774 = vrot.lane.b32.xlu0 %v2732, 85
        %v2775 = vpop.permute.xlu0 %2774
        %2776 = vrot.lane.b32.xlu0 %v2733, 85
        %v2777 = vpop.permute.xlu0 %2776
        %2778 = vrot.lane.b32.xlu0 %v2734, 85
        %v2779 = vpop.permute.xlu0 %2778
        %2780 = vrot.lane.b32.xlu0 %v2735, 85
        %v2781 = vpop.permute.xlu0 %2780
        %2782 = vrot.lane.b32.xlu0 %v2736, 85
        %v2783 = vpop.permute.xlu0 %2782
        %2784 = vrot.lane.b32.xlu0 %v2737, 85
        %v2785 = vpop.permute.xlu0 %2784
        %v2786 = vsel %vm657, %v2755, %v2757
        %v2787 = vsel %vm657, %v2757, %v2759
        %v2788 = vsel %vm657, %v2759, %v2761
        %v2789 = vsel %vm657, %v2763, %v2765
        %v2790 = vsel %vm657, %v2765, %v2767
        %v2791 = vsel %vm657, %v2767, %v2769
        %v2792 = vsel %vm657, %v2771, %v2773
        %v2793 = vsel %vm657, %v2773, %v2775
        %v2794 = vsel %vm657, %v2775, %v2777
        %v2795 = vsel %vm657, %v2779, %v2781
        %v2796 = vsel %vm657, %v2781, %v2783
        %v2797 = vsel %vm657, %v2783, %v2785
        %2814 = vst [vmem:[#allocation2 + $0x680] sm:$0xff] %v2786
        %2815 = vst [vmem:[#allocation2 + $0x688] sm:$0xff] %v2787
        %2816 = vst [vmem:[#allocation2 + $0x690] sm:$0xff] %v2788
        %2817 = vst.msk [vmem:[#allocation2 + $0x698] sm:$0xff] %vm403, %v2761
        %2818 = vst [vmem:[#allocation2 + $0x6a0] sm:$0xff] %v2789
        %2819 = vst [vmem:[#allocation2 + $0x6a8] sm:$0xff] %v2790
        %2820 = vst [vmem:[#allocation2 + $0x6b0] sm:$0xff] %v2791
        %2821 = vst.msk [vmem:[#allocation2 + $0x6b8] sm:$0xff] %vm403, %v2769
        %2822 = vst [vmem:[#allocation2 + $0x6c0] sm:$0xff] %v2792
        %2823 = vst [vmem:[#allocation2 + $0x6c8] sm:$0xff] %v2793
        %2824 = vst [vmem:[#allocation2 + $0x6d0] sm:$0xff] %v2794
        %2825 = vst.msk [vmem:[#allocation2 + $0x6d8] sm:$0xff] %vm403, %v2777
        %2826 = vst [vmem:[#allocation2 + $0x6e0] sm:$0xff] %v2795
        %2827 = vst [vmem:[#allocation2 + $0x6e8] sm:$0xff] %v2796
        %2828 = vst [vmem:[#allocation2 + $0x6f0] sm:$0xff] %v2797
        %2829 = vst.msk [vmem:[#allocation2 + $0x6f8] sm:$0xff] %vm403, %v2785
        %v2830 = vld [vmem:[#allocation3] sm:$0xff]
        %v2831 = vld [vmem:[#allocation3 + $0x8] sm:$0xff]
        %v2832 = vld [vmem:[#allocation3 + $0x10] sm:$0xff]
        %v2833 = vld [vmem:[#allocation3 + $0x18] sm:$0xff]
        %v2834 = vld [vmem:[#allocation3 + $0x20] sm:$0xff]
        %v2835 = vld [vmem:[#allocation3 + $0x28] sm:$0xff]
        %v2836 = vld [vmem:[#allocation3 + $0x30] sm:$0xff]
        %v2837 = vld [vmem:[#allocation3 + $0x38] sm:$0xff]
        %v2838 = vld [vmem:[#allocation3 + $0x40] sm:$0xff]
        %v2839 = vld [vmem:[#allocation3 + $0x48] sm:$0xff]
        %v2840 = vld [vmem:[#allocation3 + $0x50] sm:$0xff]
        %v2841 = vld [vmem:[#allocation3 + $0x58] sm:$0xff]
        %v2842 = vld [vmem:[#allocation3 + $0x60] sm:$0xff]
        %v2843 = vld [vmem:[#allocation3 + $0x68] sm:$0xff]
        %v2844 = vld [vmem:[#allocation3 + $0x70] sm:$0xff]
        %v2845 = vld [vmem:[#allocation3 + $0x78] sm:$0xff]
        %2862 = vrot.lane.b32.xlu0 %v2830, 84
        %v2863 = vpop.permute.xlu0 %2862
        %2864 = vrot.lane.b32.xlu0 %v2831, 84
        %v2865 = vpop.permute.xlu0 %2864
        %2866 = vrot.lane.b32.xlu0 %v2832, 84
        %v2867 = vpop.permute.xlu0 %2866
        %2868 = vrot.lane.b32.xlu0 %v2833, 84
        %v2869 = vpop.permute.xlu0 %2868
        %2870 = vrot.lane.b32.xlu0 %v2834, 84
        %v2871 = vpop.permute.xlu0 %2870
        %2872 = vrot.lane.b32.xlu0 %v2835, 84
        %v2873 = vpop.permute.xlu0 %2872
        %2874 = vrot.lane.b32.xlu0 %v2836, 84
        %v2875 = vpop.permute.xlu0 %2874
        %2876 = vrot.lane.b32.xlu0 %v2837, 84
        %v2877 = vpop.permute.xlu0 %2876
        %2878 = vrot.lane.b32.xlu0 %v2838, 84
        %v2879 = vpop.permute.xlu0 %2878
        %2880 = vrot.lane.b32.xlu0 %v2839, 84
        %v2881 = vpop.permute.xlu0 %2880
        %2882 = vrot.lane.b32.xlu0 %v2840, 84
        %v2883 = vpop.permute.xlu0 %2882
        %2884 = vrot.lane.b32.xlu0 %v2841, 84
        %v2885 = vpop.permute.xlu0 %2884
        %2886 = vrot.lane.b32.xlu0 %v2842, 84
        %v2887 = vpop.permute.xlu0 %2886
        %2888 = vrot.lane.b32.xlu0 %v2843, 84
        %v2889 = vpop.permute.xlu0 %2888
        %2890 = vrot.lane.b32.xlu0 %v2844, 84
        %v2891 = vpop.permute.xlu0 %2890
        %2892 = vrot.lane.b32.xlu0 %v2845, 84
        %v2893 = vpop.permute.xlu0 %2892
        %v2894 = vsel %vm677, %v2863, %v2865
        %v2895 = vsel %vm677, %v2865, %v2867
        %v2896 = vsel %vm677, %v2867, %v2869
        %v2897 = vsel %vm677, %v2871, %v2873
        %v2898 = vsel %vm677, %v2873, %v2875
        %v2899 = vsel %vm677, %v2875, %v2877
        %v2900 = vsel %vm677, %v2879, %v2881
        %v2901 = vsel %vm677, %v2881, %v2883
        %v2902 = vsel %vm677, %v2883, %v2885
        %v2903 = vsel %vm677, %v2887, %v2889
        %v2904 = vsel %vm677, %v2889, %v2891
        %v2905 = vsel %vm677, %v2891, %v2893
        %2922 = vst [vmem:[#allocation2 + $0x700] sm:$0xff] %v2894
        %2923 = vst [vmem:[#allocation2 + $0x708] sm:$0xff] %v2895
        %2924 = vst [vmem:[#allocation2 + $0x710] sm:$0xff] %v2896
        %2925 = vst.msk [vmem:[#allocation2 + $0x718] sm:$0xff] %vm403, %v2869
        %2926 = vst [vmem:[#allocation2 + $0x720] sm:$0xff] %v2897
        %2927 = vst [vmem:[#allocation2 + $0x728] sm:$0xff] %v2898
        %2928 = vst [vmem:[#allocation2 + $0x730] sm:$0xff] %v2899
        %2929 = vst.msk [vmem:[#allocation2 + $0x738] sm:$0xff] %vm403, %v2877
        %2930 = vst [vmem:[#allocation2 + $0x740] sm:$0xff] %v2900
        %2931 = vst [vmem:[#allocation2 + $0x748] sm:$0xff] %v2901
        %2932 = vst [vmem:[#allocation2 + $0x750] sm:$0xff] %v2902
        %2933 = vst.msk [vmem:[#allocation2 + $0x758] sm:$0xff] %vm403, %v2885
        %2934 = vst [vmem:[#allocation2 + $0x760] sm:$0xff] %v2903
        %2935 = vst [vmem:[#allocation2 + $0x768] sm:$0xff] %v2904
        %2936 = vst [vmem:[#allocation2 + $0x770] sm:$0xff] %v2905
        %2937 = vst.msk [vmem:[#allocation2 + $0x778] sm:$0xff] %vm403, %v2893
        %v2938 = vld [vmem:[#allocation3] sm:$0xff]
        %v2939 = vld [vmem:[#allocation3 + $0x8] sm:$0xff]
        %v2940 = vld [vmem:[#allocation3 + $0x10] sm:$0xff]
        %v2941 = vld [vmem:[#allocation3 + $0x18] sm:$0xff]
        %v2942 = vld [vmem:[#allocation3 + $0x20] sm:$0xff]
        %v2943 = vld [vmem:[#allocation3 + $0x28] sm:$0xff]
        %v2944 = vld [vmem:[#allocation3 + $0x30] sm:$0xff]
        %v2945 = vld [vmem:[#allocation3 + $0x38] sm:$0xff]
        %v2946 = vld [vmem:[#allocation3 + $0x40] sm:$0xff]
        %v2947 = vld [vmem:[#allocation3 + $0x48] sm:$0xff]
        %v2948 = vld [vmem:[#allocation3 + $0x50] sm:$0xff]
        %v2949 = vld [vmem:[#allocation3 + $0x58] sm:$0xff]
        %v2950 = vld [vmem:[#allocation3 + $0x60] sm:$0xff]
        %v2951 = vld [vmem:[#allocation3 + $0x68] sm:$0xff]
        %v2952 = vld [vmem:[#allocation3 + $0x70] sm:$0xff]
        %v2953 = vld [vmem:[#allocation3 + $0x78] sm:$0xff]
        %2970 = vrot.lane.b32.xlu0 %v2938, 68
        %v2971 = vpop.permute.xlu0 %2970
        %2972 = vrot.lane.b32.xlu0 %v2939, 68
        %v2973 = vpop.permute.xlu0 %2972
        %2974 = vrot.lane.b32.xlu0 %v2940, 68
        %v2975 = vpop.permute.xlu0 %2974
        %2976 = vrot.lane.b32.xlu0 %v2941, 68
        %v2977 = vpop.permute.xlu0 %2976
        %2978 = vrot.lane.b32.xlu0 %v2942, 68
        %v2979 = vpop.permute.xlu0 %2978
        %2980 = vrot.lane.b32.xlu0 %v2943, 68
        %v2981 = vpop.permute.xlu0 %2980
        %2982 = vrot.lane.b32.xlu0 %v2944, 68
        %v2983 = vpop.permute.xlu0 %2982
        %2984 = vrot.lane.b32.xlu0 %v2945, 68
        %v2985 = vpop.permute.xlu0 %2984
        %2986 = vrot.lane.b32.xlu0 %v2946, 68
        %v2987 = vpop.permute.xlu0 %2986
        %2988 = vrot.lane.b32.xlu0 %v2947, 68
        %v2989 = vpop.permute.xlu0 %2988
        %2990 = vrot.lane.b32.xlu0 %v2948, 68
        %v2991 = vpop.permute.xlu0 %2990
        %2992 = vrot.lane.b32.xlu0 %v2949, 68
        %v2993 = vpop.permute.xlu0 %2992
        %2994 = vrot.lane.b32.xlu0 %v2950, 68
        %v2995 = vpop.permute.xlu0 %2994
        %2996 = vrot.lane.b32.xlu0 %v2951, 68
        %v2997 = vpop.permute.xlu0 %2996
        %2998 = vrot.lane.b32.xlu0 %v2952, 68
        %v2999 = vpop.permute.xlu0 %2998
        %3000 = vrot.lane.b32.xlu0 %v2953, 68
        %v3001 = vpop.permute.xlu0 %3000
        %v3002 = vsel %vm697, %v2971, %v2973
        %v3003 = vsel %vm697, %v2973, %v2975
        %v3004 = vsel %vm697, %v2975, %v2977
        %v3005 = vsel %vm697, %v2979, %v2981
        %v3006 = vsel %vm697, %v2981, %v2983
        %v3007 = vsel %vm697, %v2983, %v2985
        %v3008 = vsel %vm697, %v2987, %v2989
        %v3009 = vsel %vm697, %v2989, %v2991
        %v3010 = vsel %vm697, %v2991, %v2993
        %v3011 = vsel %vm697, %v2995, %v2997
        %v3012 = vsel %vm697, %v2997, %v2999
        %v3013 = vsel %vm697, %v2999, %v3001
        %3030 = vst [vmem:[#allocation2 + $0x780] sm:$0xff] %v3002
        %3031 = vst [vmem:[#allocation2 + $0x788] sm:$0xff] %v3003
        %3032 = vst [vmem:[#allocation2 + $0x790] sm:$0xff] %v3004
        %3033 = vst.msk [vmem:[#allocation2 + $0x798] sm:$0xff] %vm403, %v2977
        %3034 = vst [vmem:[#allocation2 + $0x7a0] sm:$0xff] %v3005
        %3035 = vst [vmem:[#allocation2 + $0x7a8] sm:$0xff] %v3006
        %3036 = vst [vmem:[#allocation2 + $0x7b0] sm:$0xff] %v3007
        %3037 = vst.msk [vmem:[#allocation2 + $0x7b8] sm:$0xff] %vm403, %v2985
        %3038 = vst [vmem:[#allocation2 + $0x7c0] sm:$0xff] %v3008
        %3039 = vst [vmem:[#allocation2 + $0x7c8] sm:$0xff] %v3009
        %3040 = vst [vmem:[#allocation2 + $0x7d0] sm:$0xff] %v3010
        %3041 = vst.msk [vmem:[#allocation2 + $0x7d8] sm:$0xff] %vm403, %v2993
        %3042 = vst [vmem:[#allocation2 + $0x7e0] sm:$0xff] %v3011
        %3043 = vst [vmem:[#allocation2 + $0x7e8] sm:$0xff] %v3012
        %3044 = vst [vmem:[#allocation2 + $0x7f0] sm:$0xff] %v3013
        %3045 = vst.msk [vmem:[#allocation2 + $0x7f8] sm:$0xff] %vm403, %v3001
        %v3046 = vld [vmem:[#allocation3] sm:$0xff]
        %v3047 = vld [vmem:[#allocation3 + $0x8] sm:$0xff]
        %v3048 = vld [vmem:[#allocation3 + $0x10] sm:$0xff]
        %v3049 = vld [vmem:[#allocation3 + $0x18] sm:$0xff]
        %v3050 = vld [vmem:[#allocation3 + $0x20] sm:$0xff]
        %v3051 = vld [vmem:[#allocation3 + $0x28] sm:$0xff]
        %v3052 = vld [vmem:[#allocation3 + $0x30] sm:$0xff]
        %v3053 = vld [vmem:[#allocation3 + $0x38] sm:$0xff]
        %v3054 = vld [vmem:[#allocation3 + $0x40] sm:$0xff]
        %v3055 = vld [vmem:[#allocation3 + $0x48] sm:$0xff]
        %v3056 = vld [vmem:[#allocation3 + $0x50] sm:$0xff]
        %v3057 = vld [vmem:[#allocation3 + $0x58] sm:$0xff]
        %v3058 = vld [vmem:[#allocation3 + $0x60] sm:$0xff]
        %v3059 = vld [vmem:[#allocation3 + $0x68] sm:$0xff]
        %v3060 = vld [vmem:[#allocation3 + $0x70] sm:$0xff]
        %v3061 = vld [vmem:[#allocation3 + $0x78] sm:$0xff]
        %3078 = vrot.lane.b32.xlu0 %v3046, 67
        %v3079 = vpop.permute.xlu0 %3078
        %3080 = vrot.lane.b32.xlu0 %v3047, 67
        %v3081 = vpop.permute.xlu0 %3080
        %3082 = vrot.lane.b32.xlu0 %v3048, 67
        %v3083 = vpop.permute.xlu0 %3082
        %3084 = vrot.lane.b32.xlu0 %v3049, 67
        %v3085 = vpop.permute.xlu0 %3084
        %3086 = vrot.lane.b32.xlu0 %v3050, 67
        %v3087 = vpop.permute.xlu0 %3086
        %3088 = vrot.lane.b32.xlu0 %v3051, 67
        %v3089 = vpop.permute.xlu0 %3088
        %3090 = vrot.lane.b32.xlu0 %v3052, 67
        %v3091 = vpop.permute.xlu0 %3090
        %3092 = vrot.lane.b32.xlu0 %v3053, 67
        %v3093 = vpop.permute.xlu0 %3092
        %3094 = vrot.lane.b32.xlu0 %v3054, 67
        %v3095 = vpop.permute.xlu0 %3094
        %3096 = vrot.lane.b32.xlu0 %v3055, 67
        %v3097 = vpop.permute.xlu0 %3096
        %3098 = vrot.lane.b32.xlu0 %v3056, 67
        %v3099 = vpop.permute.xlu0 %3098
        %3100 = vrot.lane.b32.xlu0 %v3057, 67
        %v3101 = vpop.permute.xlu0 %3100
        %3102 = vrot.lane.b32.xlu0 %v3058, 67
        %v3103 = vpop.permute.xlu0 %3102
        %3104 = vrot.lane.b32.xlu0 %v3059, 67
        %v3105 = vpop.permute.xlu0 %3104
        %3106 = vrot.lane.b32.xlu0 %v3060, 67
        %v3107 = vpop.permute.xlu0 %3106
        %3108 = vrot.lane.b32.xlu0 %v3061, 67
        %v3109 = vpop.permute.xlu0 %3108
        %v3110 = vsel %vm717, %v3079, %v3081
        %v3111 = vsel %vm717, %v3081, %v3083
        %v3112 = vsel %vm717, %v3083, %v3085
        %v3113 = vsel %vm717, %v3087, %v3089
        %v3114 = vsel %vm717, %v3089, %v3091
        %v3115 = vsel %vm717, %v3091, %v3093
        %v3116 = vsel %vm717, %v3095, %v3097
        %v3117 = vsel %vm717, %v3097, %v3099
        %v3118 = vsel %vm717, %v3099, %v3101
        %v3119 = vsel %vm717, %v3103, %v3105
        %v3120 = vsel %vm717, %v3105, %v3107
        %v3121 = vsel %vm717, %v3107, %v3109
        %3138 = vst [vmem:[#allocation2 + $0x800] sm:$0xff] %v3110
        %3139 = vst [vmem:[#allocation2 + $0x808] sm:$0xff] %v3111
        %3140 = vst [vmem:[#allocation2 + $0x810] sm:$0xff] %v3112
        %3141 = vst.msk [vmem:[#allocation2 + $0x818] sm:$0xff] %vm403, %v3085
        %3142 = vst [vmem:[#allocation2 + $0x820] sm:$0xff] %v3113
        %3143 = vst [vmem:[#allocation2 + $0x828] sm:$0xff] %v3114
        %3144 = vst [vmem:[#allocation2 + $0x830] sm:$0xff] %v3115
        %3145 = vst.msk [vmem:[#allocation2 + $0x838] sm:$0xff] %vm403, %v3093
        %3146 = vst [vmem:[#allocation2 + $0x840] sm:$0xff] %v3116
        %3147 = vst [vmem:[#allocation2 + $0x848] sm:$0xff] %v3117
        %3148 = vst [vmem:[#allocation2 + $0x850] sm:$0xff] %v3118
        %3149 = vst.msk [vmem:[#allocation2 + $0x858] sm:$0xff] %vm403, %v3101
        %3150 = vst [vmem:[#allocation2 + $0x860] sm:$0xff] %v3119
        %3151 = vst [vmem:[#allocation2 + $0x868] sm:$0xff] %v3120
        %3152 = vst [vmem:[#allocation2 + $0x870] sm:$0xff] %v3121
        %3153 = vst.msk [vmem:[#allocation2 + $0x878] sm:$0xff] %vm403, %v3109
        %v3154 = vld [vmem:[#allocation3] sm:$0xff]
        %v3155 = vld [vmem:[#allocation3 + $0x8] sm:$0xff]
        %v3156 = vld [vmem:[#allocation3 + $0x10] sm:$0xff]
        %v3157 = vld [vmem:[#allocation3 + $0x18] sm:$0xff]
        %v3158 = vld [vmem:[#allocation3 + $0x20] sm:$0xff]
        %v3159 = vld [vmem:[#allocation3 + $0x28] sm:$0xff]
        %v3160 = vld [vmem:[#allocation3 + $0x30] sm:$0xff]
        %v3161 = vld [vmem:[#allocation3 + $0x38] sm:$0xff]
        %v3162 = vld [vmem:[#allocation3 + $0x40] sm:$0xff]
        %v3163 = vld [vmem:[#allocation3 + $0x48] sm:$0xff]
        %v3164 = vld [vmem:[#allocation3 + $0x50] sm:$0xff]
        %v3165 = vld [vmem:[#allocation3 + $0x58] sm:$0xff]
        %v3166 = vld [vmem:[#allocation3 + $0x60] sm:$0xff]
        %v3167 = vld [vmem:[#allocation3 + $0x68] sm:$0xff]
        %v3168 = vld [vmem:[#allocation3 + $0x70] sm:$0xff]
        %v3169 = vld [vmem:[#allocation3 + $0x78] sm:$0xff]
        %3186 = vrot.lane.b32.xlu0 %v3154, 66
        %v3187 = vpop.permute.xlu0 %3186
        %3188 = vrot.lane.b32.xlu0 %v3155, 66
        %v3189 = vpop.permute.xlu0 %3188
        %3190 = vrot.lane.b32.xlu0 %v3156, 66
        %v3191 = vpop.permute.xlu0 %3190
        %3192 = vrot.lane.b32.xlu0 %v3157, 66
        %v3193 = vpop.permute.xlu0 %3192
        %3194 = vrot.lane.b32.xlu0 %v3158, 66
        %v3195 = vpop.permute.xlu0 %3194
        %3196 = vrot.lane.b32.xlu0 %v3159, 66
        %v3197 = vpop.permute.xlu0 %3196
        %3198 = vrot.lane.b32.xlu0 %v3160, 66
        %v3199 = vpop.permute.xlu0 %3198
        %3200 = vrot.lane.b32.xlu0 %v3161, 66
        %v3201 = vpop.permute.xlu0 %3200
        %3202 = vrot.lane.b32.xlu0 %v3162, 66
        %v3203 = vpop.permute.xlu0 %3202
        %3204 = vrot.lane.b32.xlu0 %v3163, 66
        %v3205 = vpop.permute.xlu0 %3204
        %3206 = vrot.lane.b32.xlu0 %v3164, 66
        %v3207 = vpop.permute.xlu0 %3206
        %3208 = vrot.lane.b32.xlu0 %v3165, 66
        %v3209 = vpop.permute.xlu0 %3208
        %3210 = vrot.lane.b32.xlu0 %v3166, 66
        %v3211 = vpop.permute.xlu0 %3210
        %3212 = vrot.lane.b32.xlu0 %v3167, 66
        %v3213 = vpop.permute.xlu0 %3212
        %3214 = vrot.lane.b32.xlu0 %v3168, 66
        %v3215 = vpop.permute.xlu0 %3214
        %3216 = vrot.lane.b32.xlu0 %v3169, 66
        %v3217 = vpop.permute.xlu0 %3216
        %v3218 = vsel %vm737, %v3187, %v3189
        %v3219 = vsel %vm737, %v3189, %v3191
        %v3220 = vsel %vm737, %v3191, %v3193
        %v3221 = vsel %vm737, %v3195, %v3197
        %v3222 = vsel %vm737, %v3197, %v3199
        %v3223 = vsel %vm737, %v3199, %v3201
        %v3224 = vsel %vm737, %v3203, %v3205
        %v3225 = vsel %vm737, %v3205, %v3207
        %v3226 = vsel %vm737, %v3207, %v3209
        %v3227 = vsel %vm737, %v3211, %v3213
        %v3228 = vsel %vm737, %v3213, %v3215
        %v3229 = vsel %vm737, %v3215, %v3217
        %3246 = vst [vmem:[#allocation2 + $0x880] sm:$0xff] %v3218
        %3247 = vst [vmem:[#allocation2 + $0x888] sm:$0xff] %v3219
        %3248 = vst [vmem:[#allocation2 + $0x890] sm:$0xff] %v3220
        %3249 = vst.msk [vmem:[#allocation2 + $0x898] sm:$0xff] %vm403, %v3193
        %3250 = vst [vmem:[#allocation2 + $0x8a0] sm:$0xff] %v3221
        %3251 = vst [vmem:[#allocation2 + $0x8a8] sm:$0xff] %v3222
        %3252 = vst [vmem:[#allocation2 + $0x8b0] sm:$0xff] %v3223
        %3253 = vst.msk [vmem:[#allocation2 + $0x8b8] sm:$0xff] %vm403, %v3201
        %3254 = vst [vmem:[#allocation2 + $0x8c0] sm:$0xff] %v3224
        %3255 = vst [vmem:[#allocation2 + $0x8c8] sm:$0xff] %v3225
        %3256 = vst [vmem:[#allocation2 + $0x8d0] sm:$0xff] %v3226
        %3257 = vst.msk [vmem:[#allocation2 + $0x8d8] sm:$0xff] %vm403, %v3209
        %3258 = vst [vmem:[#allocation2 + $0x8e0] sm:$0xff] %v3227
        %3259 = vst [vmem:[#allocation2 + $0x8e8] sm:$0xff] %v3228
        %3260 = vst [vmem:[#allocation2 + $0x8f0] sm:$0xff] %v3229
        %3261 = vst.msk [vmem:[#allocation2 + $0x8f8] sm:$0xff] %vm403, %v3217
        %v3262 = vld [vmem:[#allocation3] sm:$0xff]
        %v3263 = vld [vmem:[#allocation3 + $0x8] sm:$0xff]
        %v3264 = vld [vmem:[#allocation3 + $0x10] sm:$0xff]
        %v3265 = vld [vmem:[#allocation3 + $0x18] sm:$0xff]
        %v3266 = vld [vmem:[#allocation3 + $0x20] sm:$0xff]
        %v3267 = vld [vmem:[#allocation3 + $0x28] sm:$0xff]
        %v3268 = vld [vmem:[#allocation3 + $0x30] sm:$0xff]
        %v3269 = vld [vmem:[#allocation3 + $0x38] sm:$0xff]
        %v3270 = vld [vmem:[#allocation3 + $0x40] sm:$0xff]
        %v3271 = vld [vmem:[#allocation3 + $0x48] sm:$0xff]
        %v3272 = vld [vmem:[#allocation3 + $0x50] sm:$0xff]
        %v3273 = vld [vmem:[#allocation3 + $0x58] sm:$0xff]
        %v3274 = vld [vmem:[#allocation3 + $0x60] sm:$0xff]
        %v3275 = vld [vmem:[#allocation3 + $0x68] sm:$0xff]
        %v3276 = vld [vmem:[#allocation3 + $0x70] sm:$0xff]
        %v3277 = vld [vmem:[#allocation3 + $0x78] sm:$0xff]
        %3294 = vrot.lane.b32.xlu0 %v3262, 65
        %v3295 = vpop.permute.xlu0 %3294
        %3296 = vrot.lane.b32.xlu0 %v3263, 65
        %v3297 = vpop.permute.xlu0 %3296
        %3298 = vrot.lane.b32.xlu0 %v3264, 65
        %v3299 = vpop.permute.xlu0 %3298
        %3300 = vrot.lane.b32.xlu0 %v3265, 65
        %v3301 = vpop.permute.xlu0 %3300
        %3302 = vrot.lane.b32.xlu0 %v3266, 65
        %v3303 = vpop.permute.xlu0 %3302
        %3304 = vrot.lane.b32.xlu0 %v3267, 65
        %v3305 = vpop.permute.xlu0 %3304
        %3306 = vrot.lane.b32.xlu0 %v3268, 65
        %v3307 = vpop.permute.xlu0 %3306
        %3308 = vrot.lane.b32.xlu0 %v3269, 65
        %v3309 = vpop.permute.xlu0 %3308
        %3310 = vrot.lane.b32.xlu0 %v3270, 65
        %v3311 = vpop.permute.xlu0 %3310
        %3312 = vrot.lane.b32.xlu0 %v3271, 65
        %v3313 = vpop.permute.xlu0 %3312
        %3314 = vrot.lane.b32.xlu0 %v3272, 65
        %v3315 = vpop.permute.xlu0 %3314
        %3316 = vrot.lane.b32.xlu0 %v3273, 65
        %v3317 = vpop.permute.xlu0 %3316
        %3318 = vrot.lane.b32.xlu0 %v3274, 65
        %v3319 = vpop.permute.xlu0 %3318
        %3320 = vrot.lane.b32.xlu0 %v3275, 65
        %v3321 = vpop.permute.xlu0 %3320
        %3322 = vrot.lane.b32.xlu0 %v3276, 65
        %v3323 = vpop.permute.xlu0 %3322
        %3324 = vrot.lane.b32.xlu0 %v3277, 65
        %v3325 = vpop.permute.xlu0 %3324
        %v3326 = vsel %vm757, %v3295, %v3297
        %v3327 = vsel %vm757, %v3297, %v3299
        %v3328 = vsel %vm757, %v3299, %v3301
        %v3329 = vsel %vm757, %v3303, %v3305
        %v3330 = vsel %vm757, %v3305, %v3307
        %v3331 = vsel %vm757, %v3307, %v3309
        %v3332 = vsel %vm757, %v3311, %v3313
        %v3333 = vsel %vm757, %v3313, %v3315
        %v3334 = vsel %vm757, %v3315, %v3317
        %v3335 = vsel %vm757, %v3319, %v3321
        %v3336 = vsel %vm757, %v3321, %v3323
        %v3337 = vsel %vm757, %v3323, %v3325
        %3354 = vst [vmem:[#allocation2 + $0x900] sm:$0xff] %v3326
        %3355 = vst [vmem:[#allocation2 + $0x908] sm:$0xff] %v3327
        %3356 = vst [vmem:[#allocation2 + $0x910] sm:$0xff] %v3328
        %3357 = vst.msk [vmem:[#allocation2 + $0x918] sm:$0xff] %vm403, %v3301
        %3358 = vst [vmem:[#allocation2 + $0x920] sm:$0xff] %v3329
        %3359 = vst [vmem:[#allocation2 + $0x928] sm:$0xff] %v3330
        %3360 = vst [vmem:[#allocation2 + $0x930] sm:$0xff] %v3331
        %3361 = vst.msk [vmem:[#allocation2 + $0x938] sm:$0xff] %vm403, %v3309
        %3362 = vst [vmem:[#allocation2 + $0x940] sm:$0xff] %v3332
        %3363 = vst [vmem:[#allocation2 + $0x948] sm:$0xff] %v3333
        %3364 = vst [vmem:[#allocation2 + $0x950] sm:$0xff] %v3334
        %3365 = vst.msk [vmem:[#allocation2 + $0x958] sm:$0xff] %vm403, %v3317
        %3366 = vst [vmem:[#allocation2 + $0x960] sm:$0xff] %v3335
        %3367 = vst [vmem:[#allocation2 + $0x968] sm:$0xff] %v3336
        %3368 = vst [vmem:[#allocation2 + $0x970] sm:$0xff] %v3337
        %3369 = vst.msk [vmem:[#allocation2 + $0x978] sm:$0xff] %vm403, %v3325
        %v3370 = vld [vmem:[#allocation3] sm:$0xff]
        %v3371 = vld [vmem:[#allocation3 + $0x8] sm:$0xff]
        %v3372 = vld [vmem:[#allocation3 + $0x10] sm:$0xff]
        %v3373 = vld [vmem:[#allocation3 + $0x18] sm:$0xff]
        %v3374 = vld [vmem:[#allocation3 + $0x20] sm:$0xff]
        %v3375 = vld [vmem:[#allocation3 + $0x28] sm:$0xff]
        %v3376 = vld [vmem:[#allocation3 + $0x30] sm:$0xff]
        %v3377 = vld [vmem:[#allocation3 + $0x38] sm:$0xff]
        %v3378 = vld [vmem:[#allocation3 + $0x40] sm:$0xff]
        %v3379 = vld [vmem:[#allocation3 + $0x48] sm:$0xff]
        %v3380 = vld [vmem:[#allocation3 + $0x50] sm:$0xff]
        %v3381 = vld [vmem:[#allocation3 + $0x58] sm:$0xff]
        %v3382 = vld [vmem:[#allocation3 + $0x60] sm:$0xff]
        %v3383 = vld [vmem:[#allocation3 + $0x68] sm:$0xff]
        %v3384 = vld [vmem:[#allocation3 + $0x70] sm:$0xff]
        %v3385 = vld [vmem:[#allocation3 + $0x78] sm:$0xff]
        %3402 = vrot.lane.b32.xlu0 %v3370, 64
        %v3403 = vpop.permute.xlu0 %3402
        %3404 = vrot.lane.b32.xlu0 %v3371, 64
        %v3405 = vpop.permute.xlu0 %3404
        %3406 = vrot.lane.b32.xlu0 %v3372, 64
        %v3407 = vpop.permute.xlu0 %3406
        %3408 = vrot.lane.b32.xlu0 %v3373, 64
        %v3409 = vpop.permute.xlu0 %3408
        %3410 = vrot.lane.b32.xlu0 %v3374, 64
        %v3411 = vpop.permute.xlu0 %3410
        %3412 = vrot.lane.b32.xlu0 %v3375, 64
        %v3413 = vpop.permute.xlu0 %3412
        %3414 = vrot.lane.b32.xlu0 %v3376, 64
        %v3415 = vpop.permute.xlu0 %3414
        %3416 = vrot.lane.b32.xlu0 %v3377, 64
        %v3417 = vpop.permute.xlu0 %3416
        %3418 = vrot.lane.b32.xlu0 %v3378, 64
        %v3419 = vpop.permute.xlu0 %3418
        %3420 = vrot.lane.b32.xlu0 %v3379, 64
        %v3421 = vpop.permute.xlu0 %3420
        %3422 = vrot.lane.b32.xlu0 %v3380, 64
        %v3423 = vpop.permute.xlu0 %3422
        %3424 = vrot.lane.b32.xlu0 %v3381, 64
        %v3425 = vpop.permute.xlu0 %3424
        %3426 = vrot.lane.b32.xlu0 %v3382, 64
        %v3427 = vpop.permute.xlu0 %3426
        %3428 = vrot.lane.b32.xlu0 %v3383, 64
        %v3429 = vpop.permute.xlu0 %3428
        %3430 = vrot.lane.b32.xlu0 %v3384, 64
        %v3431 = vpop.permute.xlu0 %3430
        %3432 = vrot.lane.b32.xlu0 %v3385, 64
        %v3433 = vpop.permute.xlu0 %3432
        %v3434 = vsel %vm777, %v3403, %v3405
        %v3435 = vsel %vm777, %v3405, %v3407
        %v3436 = vsel %vm777, %v3407, %v3409
        %v3437 = vsel %vm777, %v3411, %v3413
        %v3438 = vsel %vm777, %v3413, %v3415
        %v3439 = vsel %vm777, %v3415, %v3417
        %v3440 = vsel %vm777, %v3419, %v3421
        %v3441 = vsel %vm777, %v3421, %v3423
        %v3442 = vsel %vm777, %v3423, %v3425
        %v3443 = vsel %vm777, %v3427, %v3429
        %v3444 = vsel %vm777, %v3429, %v3431
        %v3445 = vsel %vm777, %v3431, %v3433
        %3462 = vst [vmem:[#allocation2 + $0x980] sm:$0xff] %v3434
        %3463 = vst [vmem:[#allocation2 + $0x988] sm:$0xff] %v3435
        %3464 = vst [vmem:[#allocation2 + $0x990] sm:$0xff] %v3436
        %3465 = vst.msk [vmem:[#allocation2 + $0x998] sm:$0xff] %vm403, %v3409
        %3466 = vst [vmem:[#allocation2 + $0x9a0] sm:$0xff] %v3437
        %3467 = vst [vmem:[#allocation2 + $0x9a8] sm:$0xff] %v3438
        %3468 = vst [vmem:[#allocation2 + $0x9b0] sm:$0xff] %v3439
        %3469 = vst.msk [vmem:[#allocation2 + $0x9b8] sm:$0xff] %vm403, %v3417
        %3470 = vst [vmem:[#allocation2 + $0x9c0] sm:$0xff] %v3440
        %3471 = vst [vmem:[#allocation2 + $0x9c8] sm:$0xff] %v3441
        %3472 = vst [vmem:[#allocation2 + $0x9d0] sm:$0xff] %v3442
        %3473 = vst.msk [vmem:[#allocation2 + $0x9d8] sm:$0xff] %vm403, %v3425
        %3474 = vst [vmem:[#allocation2 + $0x9e0] sm:$0xff] %v3443
        %3475 = vst [vmem:[#allocation2 + $0x9e8] sm:$0xff] %v3444
        %3476 = vst [vmem:[#allocation2 + $0x9f0] sm:$0xff] %v3445
        %3477 = vst.msk [vmem:[#allocation2 + $0x9f8] sm:$0xff] %vm403, %v3433
        %v3478 = vld [vmem:[#allocation3] sm:$0xff]
        %v3479 = vld [vmem:[#allocation3 + $0x8] sm:$0xff]
        %v3480 = vld [vmem:[#allocation3 + $0x10] sm:$0xff]
        %v3481 = vld [vmem:[#allocation3 + $0x18] sm:$0xff]
        %v3482 = vld [vmem:[#allocation3 + $0x20] sm:$0xff]
        %v3483 = vld [vmem:[#allocation3 + $0x28] sm:$0xff]
        %v3484 = vld [vmem:[#allocation3 + $0x30] sm:$0xff]
        %v3485 = vld [vmem:[#allocation3 + $0x38] sm:$0xff]
        %v3486 = vld [vmem:[#allocation3 + $0x40] sm:$0xff]
        %v3487 = vld [vmem:[#allocation3 + $0x48] sm:$0xff]
        %v3488 = vld [vmem:[#allocation3 + $0x50] sm:$0xff]
        %v3489 = vld [vmem:[#allocation3 + $0x58] sm:$0xff]
        %v3490 = vld [vmem:[#allocation3 + $0x60] sm:$0xff]
        %v3491 = vld [vmem:[#allocation3 + $0x68] sm:$0xff]
        %v3492 = vld [vmem:[#allocation3 + $0x70] sm:$0xff]
        %v3493 = vld [vmem:[#allocation3 + $0x78] sm:$0xff]
        %3510 = vrot.lane.b32.xlu0 %v3478, 48
        %v3511 = vpop.permute.xlu0 %3510
        %3512 = vrot.lane.b32.xlu0 %v3479, 48
        %v3513 = vpop.permute.xlu0 %3512
        %3514 = vrot.lane.b32.xlu0 %v3480, 48
        %v3515 = vpop.permute.xlu0 %3514
        %3516 = vrot.lane.b32.xlu0 %v3481, 48
        %v3517 = vpop.permute.xlu0 %3516
        %3518 = vrot.lane.b32.xlu0 %v3482, 48
        %v3519 = vpop.permute.xlu0 %3518
        %3520 = vrot.lane.b32.xlu0 %v3483, 48
        %v3521 = vpop.permute.xlu0 %3520
        %3522 = vrot.lane.b32.xlu0 %v3484, 48
        %v3523 = vpop.permute.xlu0 %3522
        %3524 = vrot.lane.b32.xlu0 %v3485, 48
        %v3525 = vpop.permute.xlu0 %3524
        %3526 = vrot.lane.b32.xlu0 %v3486, 48
        %v3527 = vpop.permute.xlu0 %3526
        %3528 = vrot.lane.b32.xlu0 %v3487, 48
        %v3529 = vpop.permute.xlu0 %3528
        %3530 = vrot.lane.b32.xlu0 %v3488, 48
        %v3531 = vpop.permute.xlu0 %3530
        %3532 = vrot.lane.b32.xlu0 %v3489, 48
        %v3533 = vpop.permute.xlu0 %3532
        %3534 = vrot.lane.b32.xlu0 %v3490, 48
        %v3535 = vpop.permute.xlu0 %3534
        %3536 = vrot.lane.b32.xlu0 %v3491, 48
        %v3537 = vpop.permute.xlu0 %3536
        %3538 = vrot.lane.b32.xlu0 %v3492, 48
        %v3539 = vpop.permute.xlu0 %3538
        %3540 = vrot.lane.b32.xlu0 %v3493, 48
        %v3541 = vpop.permute.xlu0 %3540
        %v3542 = vsel %vm797, %v3511, %v3513
        %v3543 = vsel %vm797, %v3513, %v3515
        %v3544 = vsel %vm797, %v3515, %v3517
        %v3545 = vsel %vm797, %v3519, %v3521
        %v3546 = vsel %vm797, %v3521, %v3523
        %v3547 = vsel %vm797, %v3523, %v3525
        %v3548 = vsel %vm797, %v3527, %v3529
        %v3549 = vsel %vm797, %v3529, %v3531
        %v3550 = vsel %vm797, %v3531, %v3533
        %v3551 = vsel %vm797, %v3535, %v3537
        %v3552 = vsel %vm797, %v3537, %v3539
        %v3553 = vsel %vm797, %v3539, %v3541
        %3570 = vst [vmem:[#allocation2 + $0xa00] sm:$0xff] %v3542
        %3571 = vst [vmem:[#allocation2 + $0xa08] sm:$0xff] %v3543
        %3572 = vst [vmem:[#allocation2 + $0xa10] sm:$0xff] %v3544
        %3573 = vst.msk [vmem:[#allocation2 + $0xa18] sm:$0xff] %vm403, %v3517
        %3574 = vst [vmem:[#allocation2 + $0xa20] sm:$0xff] %v3545
        %3575 = vst [vmem:[#allocation2 + $0xa28] sm:$0xff] %v3546
        %3576 = vst [vmem:[#allocation2 + $0xa30] sm:$0xff] %v3547
        %3577 = vst.msk [vmem:[#allocation2 + $0xa38] sm:$0xff] %vm403, %v3525
        %3578 = vst [vmem:[#allocation2 + $0xa40] sm:$0xff] %v3548
        %3579 = vst [vmem:[#allocation2 + $0xa48] sm:$0xff] %v3549
        %3580 = vst [vmem:[#allocation2 + $0xa50] sm:$0xff] %v3550
        %3581 = vst.msk [vmem:[#allocation2 + $0xa58] sm:$0xff] %vm403, %v3533
        %3582 = vst [vmem:[#allocation2 + $0xa60] sm:$0xff] %v3551
        %3583 = vst [vmem:[#allocation2 + $0xa68] sm:$0xff] %v3552
        %3584 = vst [vmem:[#allocation2 + $0xa70] sm:$0xff] %v3553
        %3585 = vst.msk [vmem:[#allocation2 + $0xa78] sm:$0xff] %vm403, %v3541
        %v3586 = vld [vmem:[#allocation3] sm:$0xff]
        %v3587 = vld [vmem:[#allocation3 + $0x8] sm:$0xff]
        %v3588 = vld [vmem:[#allocation3 + $0x10] sm:$0xff]
        %v3589 = vld [vmem:[#allocation3 + $0x18] sm:$0xff]
        %v3590 = vld [vmem:[#allocation3 + $0x20] sm:$0xff]
        %v3591 = vld [vmem:[#allocation3 + $0x28] sm:$0xff]
        %v3592 = vld [vmem:[#allocation3 + $0x30] sm:$0xff]
        %v3593 = vld [vmem:[#allocation3 + $0x38] sm:$0xff]
        %v3594 = vld [vmem:[#allocation3 + $0x40] sm:$0xff]
        %v3595 = vld [vmem:[#allocation3 + $0x48] sm:$0xff]
        %v3596 = vld [vmem:[#allocation3 + $0x50] sm:$0xff]
        %v3597 = vld [vmem:[#allocation3 + $0x58] sm:$0xff]
        %v3598 = vld [vmem:[#allocation3 + $0x60] sm:$0xff]
        %v3599 = vld [vmem:[#allocation3 + $0x68] sm:$0xff]
        %v3600 = vld [vmem:[#allocation3 + $0x70] sm:$0xff]
        %v3601 = vld [vmem:[#allocation3 + $0x78] sm:$0xff]
        %3618 = vrot.lane.b32.xlu0 %v3586, 47
        %v3619 = vpop.permute.xlu0 %3618
        %3620 = vrot.lane.b32.xlu0 %v3587, 47
        %v3621 = vpop.permute.xlu0 %3620
        %3622 = vrot.lane.b32.xlu0 %v3588, 47
        %v3623 = vpop.permute.xlu0 %3622
        %3624 = vrot.lane.b32.xlu0 %v3589, 47
        %v3625 = vpop.permute.xlu0 %3624
        %3626 = vrot.lane.b32.xlu0 %v3590, 47
        %v3627 = vpop.permute.xlu0 %3626
        %3628 = vrot.lane.b32.xlu0 %v3591, 47
        %v3629 = vpop.permute.xlu0 %3628
        %3630 = vrot.lane.b32.xlu0 %v3592, 47
        %v3631 = vpop.permute.xlu0 %3630
        %3632 = vrot.lane.b32.xlu0 %v3593, 47
        %v3633 = vpop.permute.xlu0 %3632
        %3634 = vrot.lane.b32.xlu0 %v3594, 47
        %v3635 = vpop.permute.xlu0 %3634
        %3636 = vrot.lane.b32.xlu0 %v3595, 47
        %v3637 = vpop.permute.xlu0 %3636
        %3638 = vrot.lane.b32.xlu0 %v3596, 47
        %v3639 = vpop.permute.xlu0 %3638
        %3640 = vrot.lane.b32.xlu0 %v3597, 47
        %v3641 = vpop.permute.xlu0 %3640
        %3642 = vrot.lane.b32.xlu0 %v3598, 47
        %v3643 = vpop.permute.xlu0 %3642
        %3644 = vrot.lane.b32.xlu0 %v3599, 47
        %v3645 = vpop.permute.xlu0 %3644
        %3646 = vrot.lane.b32.xlu0 %v3600, 47
        %v3647 = vpop.permute.xlu0 %3646
        %3648 = vrot.lane.b32.xlu0 %v3601, 47
        %v3649 = vpop.permute.xlu0 %3648
        %v3650 = vsel %vm817, %v3619, %v3621
        %v3651 = vsel %vm817, %v3621, %v3623
        %v3652 = vsel %vm817, %v3623, %v3625
        %v3653 = vsel %vm817, %v3627, %v3629
        %v3654 = vsel %vm817, %v3629, %v3631
        %v3655 = vsel %vm817, %v3631, %v3633
        %v3656 = vsel %vm817, %v3635, %v3637
        %v3657 = vsel %vm817, %v3637, %v3639
        %v3658 = vsel %vm817, %v3639, %v3641
        %v3659 = vsel %vm817, %v3643, %v3645
        %v3660 = vsel %vm817, %v3645, %v3647
        %v3661 = vsel %vm817, %v3647, %v3649
        %3678 = vst [vmem:[#allocation2 + $0xa80] sm:$0xff] %v3650
        %3679 = vst [vmem:[#allocation2 + $0xa88] sm:$0xff] %v3651
        %3680 = vst [vmem:[#allocation2 + $0xa90] sm:$0xff] %v3652
        %3681 = vst.msk [vmem:[#allocation2 + $0xa98] sm:$0xff] %vm403, %v3625
        %3682 = vst [vmem:[#allocation2 + $0xaa0] sm:$0xff] %v3653
        %3683 = vst [vmem:[#allocation2 + $0xaa8] sm:$0xff] %v3654
        %3684 = vst [vmem:[#allocation2 + $0xab0] sm:$0xff] %v3655
        %3685 = vst.msk [vmem:[#allocation2 + $0xab8] sm:$0xff] %vm403, %v3633
        %3686 = vst [vmem:[#allocation2 + $0xac0] sm:$0xff] %v3656
        %3687 = vst [vmem:[#allocation2 + $0xac8] sm:$0xff] %v3657
        %3688 = vst [vmem:[#allocation2 + $0xad0] sm:$0xff] %v3658
        %3689 = vst.msk [vmem:[#allocation2 + $0xad8] sm:$0xff] %vm403, %v3641
        %3690 = vst [vmem:[#allocation2 + $0xae0] sm:$0xff] %v3659
        %3691 = vst [vmem:[#allocation2 + $0xae8] sm:$0xff] %v3660
        %3692 = vst [vmem:[#allocation2 + $0xaf0] sm:$0xff] %v3661
        %3693 = vst.msk [vmem:[#allocation2 + $0xaf8] sm:$0xff] %vm403, %v3649
        %v3694 = vld [vmem:[#allocation3] sm:$0xff]
        %v3695 = vld [vmem:[#allocation3 + $0x8] sm:$0xff]
        %v3696 = vld [vmem:[#allocation3 + $0x10] sm:$0xff]
        %v3697 = vld [vmem:[#allocation3 + $0x18] sm:$0xff]
        %v3698 = vld [vmem:[#allocation3 + $0x20] sm:$0xff]
        %v3699 = vld [vmem:[#allocation3 + $0x28] sm:$0xff]
        %v3700 = vld [vmem:[#allocation3 + $0x30] sm:$0xff]
        %v3701 = vld [vmem:[#allocation3 + $0x38] sm:$0xff]
        %v3702 = vld [vmem:[#allocation3 + $0x40] sm:$0xff]
        %v3703 = vld [vmem:[#allocation3 + $0x48] sm:$0xff]
        %v3704 = vld [vmem:[#allocation3 + $0x50] sm:$0xff]
        %v3705 = vld [vmem:[#allocation3 + $0x58] sm:$0xff]
        %v3706 = vld [vmem:[#allocation3 + $0x60] sm:$0xff]
        %v3707 = vld [vmem:[#allocation3 + $0x68] sm:$0xff]
        %v3708 = vld [vmem:[#allocation3 + $0x70] sm:$0xff]
        %v3709 = vld [vmem:[#allocation3 + $0x78] sm:$0xff]
        %3726 = vrot.lane.b32.xlu0 %v3694, 46
        %v3727 = vpop.permute.xlu0 %3726
        %3728 = vrot.lane.b32.xlu0 %v3695, 46
        %v3729 = vpop.permute.xlu0 %3728
        %3730 = vrot.lane.b32.xlu0 %v3696, 46
        %v3731 = vpop.permute.xlu0 %3730
        %3732 = vrot.lane.b32.xlu0 %v3697, 46
        %v3733 = vpop.permute.xlu0 %3732
        %3734 = vrot.lane.b32.xlu0 %v3698, 46
        %v3735 = vpop.permute.xlu0 %3734
        %3736 = vrot.lane.b32.xlu0 %v3699, 46
        %v3737 = vpop.permute.xlu0 %3736
        %3738 = vrot.lane.b32.xlu0 %v3700, 46
        %v3739 = vpop.permute.xlu0 %3738
        %3740 = vrot.lane.b32.xlu0 %v3701, 46
        %v3741 = vpop.permute.xlu0 %3740
        %3742 = vrot.lane.b32.xlu0 %v3702, 46
        %v3743 = vpop.permute.xlu0 %3742
        %3744 = vrot.lane.b32.xlu0 %v3703, 46
        %v3745 = vpop.permute.xlu0 %3744
        %3746 = vrot.lane.b32.xlu0 %v3704, 46
        %v3747 = vpop.permute.xlu0 %3746
        %3748 = vrot.lane.b32.xlu0 %v3705, 46
        %v3749 = vpop.permute.xlu0 %3748
        %3750 = vrot.lane.b32.xlu0 %v3706, 46
        %v3751 = vpop.permute.xlu0 %3750
        %3752 = vrot.lane.b32.xlu0 %v3707, 46
        %v3753 = vpop.permute.xlu0 %3752
        %3754 = vrot.lane.b32.xlu0 %v3708, 46
        %v3755 = vpop.permute.xlu0 %3754
        %3756 = vrot.lane.b32.xlu0 %v3709, 46
        %v3757 = vpop.permute.xlu0 %3756
        %v3758 = vsel %vm837, %v3727, %v3729
        %v3759 = vsel %vm837, %v3729, %v3731
        %v3760 = vsel %vm837, %v3731, %v3733
        %v3761 = vsel %vm837, %v3735, %v3737
        %v3762 = vsel %vm837, %v3737, %v3739
        %v3763 = vsel %vm837, %v3739, %v3741
        %v3764 = vsel %vm837, %v3743, %v3745
        %v3765 = vsel %vm837, %v3745, %v3747
        %v3766 = vsel %vm837, %v3747, %v3749
        %v3767 = vsel %vm837, %v3751, %v3753
        %v3768 = vsel %vm837, %v3753, %v3755
        %v3769 = vsel %vm837, %v3755, %v3757
        %3786 = vst [vmem:[#allocation2 + $0xb00] sm:$0xff] %v3758
        %3787 = vst [vmem:[#allocation2 + $0xb08] sm:$0xff] %v3759
        %3788 = vst [vmem:[#allocation2 + $0xb10] sm:$0xff] %v3760
        %3789 = vst.msk [vmem:[#allocation2 + $0xb18] sm:$0xff] %vm403, %v3733
        %3790 = vst [vmem:[#allocation2 + $0xb20] sm:$0xff] %v3761
        %3791 = vst [vmem:[#allocation2 + $0xb28] sm:$0xff] %v3762
        %3792 = vst [vmem:[#allocation2 + $0xb30] sm:$0xff] %v3763
        %3793 = vst.msk [vmem:[#allocation2 + $0xb38] sm:$0xff] %vm403, %v3741
        %3794 = vst [vmem:[#allocation2 + $0xb40] sm:$0xff] %v3764
        %3795 = vst [vmem:[#allocation2 + $0xb48] sm:$0xff] %v3765
        %3796 = vst [vmem:[#allocation2 + $0xb50] sm:$0xff] %v3766
        %3797 = vst.msk [vmem:[#allocation2 + $0xb58] sm:$0xff] %vm403, %v3749
        %3798 = vst [vmem:[#allocation2 + $0xb60] sm:$0xff] %v3767
        %3799 = vst [vmem:[#allocation2 + $0xb68] sm:$0xff] %v3768
        %3800 = vst [vmem:[#allocation2 + $0xb70] sm:$0xff] %v3769
        %3801 = vst.msk [vmem:[#allocation2 + $0xb78] sm:$0xff] %vm403, %v3757
        %v3802 = vld [vmem:[#allocation3] sm:$0xff]
        %v3803 = vld [vmem:[#allocation3 + $0x8] sm:$0xff]
        %v3804 = vld [vmem:[#allocation3 + $0x10] sm:$0xff]
        %v3805 = vld [vmem:[#allocation3 + $0x18] sm:$0xff]
        %v3806 = vld [vmem:[#allocation3 + $0x20] sm:$0xff]
        %v3807 = vld [vmem:[#allocation3 + $0x28] sm:$0xff]
        %v3808 = vld [vmem:[#allocation3 + $0x30] sm:$0xff]
        %v3809 = vld [vmem:[#allocation3 + $0x38] sm:$0xff]
        %v3810 = vld [vmem:[#allocation3 + $0x40] sm:$0xff]
        %v3811 = vld [vmem:[#allocation3 + $0x48] sm:$0xff]
        %v3812 = vld [vmem:[#allocation3 + $0x50] sm:$0xff]
        %v3813 = vld [vmem:[#allocation3 + $0x58] sm:$0xff]
        %v3814 = vld [vmem:[#allocation3 + $0x60] sm:$0xff]
        %v3815 = vld [vmem:[#allocation3 + $0x68] sm:$0xff]
        %v3816 = vld [vmem:[#allocation3 + $0x70] sm:$0xff]
        %v3817 = vld [vmem:[#allocation3 + $0x78] sm:$0xff]
        %3834 = vrot.lane.b32.xlu0 %v3802, 45
        %v3835 = vpop.permute.xlu0 %3834
        %3836 = vrot.lane.b32.xlu0 %v3803, 45
        %v3837 = vpop.permute.xlu0 %3836
        %3838 = vrot.lane.b32.xlu0 %v3804, 45
        %v3839 = vpop.permute.xlu0 %3838
        %3840 = vrot.lane.b32.xlu0 %v3805, 45
        %v3841 = vpop.permute.xlu0 %3840
        %3842 = vrot.lane.b32.xlu0 %v3806, 45
        %v3843 = vpop.permute.xlu0 %3842
        %3844 = vrot.lane.b32.xlu0 %v3807, 45
        %v3845 = vpop.permute.xlu0 %3844
        %3846 = vrot.lane.b32.xlu0 %v3808, 45
        %v3847 = vpop.permute.xlu0 %3846
        %3848 = vrot.lane.b32.xlu0 %v3809, 45
        %v3849 = vpop.permute.xlu0 %3848
        %3850 = vrot.lane.b32.xlu0 %v3810, 45
        %v3851 = vpop.permute.xlu0 %3850
        %3852 = vrot.lane.b32.xlu0 %v3811, 45
        %v3853 = vpop.permute.xlu0 %3852
        %3854 = vrot.lane.b32.xlu0 %v3812, 45
        %v3855 = vpop.permute.xlu0 %3854
        %3856 = vrot.lane.b32.xlu0 %v3813, 45
        %v3857 = vpop.permute.xlu0 %3856
        %3858 = vrot.lane.b32.xlu0 %v3814, 45
        %v3859 = vpop.permute.xlu0 %3858
        %3860 = vrot.lane.b32.xlu0 %v3815, 45
        %v3861 = vpop.permute.xlu0 %3860
        %3862 = vrot.lane.b32.xlu0 %v3816, 45
        %v3863 = vpop.permute.xlu0 %3862
        %3864 = vrot.lane.b32.xlu0 %v3817, 45
        %v3865 = vpop.permute.xlu0 %3864
        %v3866 = vsel %vm857, %v3835, %v3837
        %v3867 = vsel %vm857, %v3837, %v3839
        %v3868 = vsel %vm857, %v3839, %v3841
        %v3869 = vsel %vm857, %v3843, %v3845
        %v3870 = vsel %vm857, %v3845, %v3847
        %v3871 = vsel %vm857, %v3847, %v3849
        %v3872 = vsel %vm857, %v3851, %v3853
        %v3873 = vsel %vm857, %v3853, %v3855
        %v3874 = vsel %vm857, %v3855, %v3857
        %v3875 = vsel %vm857, %v3859, %v3861
        %v3876 = vsel %vm857, %v3861, %v3863
        %v3877 = vsel %vm857, %v3863, %v3865
        %3894 = vst [vmem:[#allocation2 + $0xb80] sm:$0xff] %v3866
        %3895 = vst [vmem:[#allocation2 + $0xb88] sm:$0xff] %v3867
        %3896 = vst [vmem:[#allocation2 + $0xb90] sm:$0xff] %v3868
        %3897 = vst.msk [vmem:[#allocation2 + $0xb98] sm:$0xff] %vm403, %v3841
        %3898 = vst [vmem:[#allocation2 + $0xba0] sm:$0xff] %v3869
        %3899 = vst [vmem:[#allocation2 + $0xba8] sm:$0xff] %v3870
        %3900 = vst [vmem:[#allocation2 + $0xbb0] sm:$0xff] %v3871
        %3901 = vst.msk [vmem:[#allocation2 + $0xbb8] sm:$0xff] %vm403, %v3849
        %3902 = vst [vmem:[#allocation2 + $0xbc0] sm:$0xff] %v3872
        %3903 = vst [vmem:[#allocation2 + $0xbc8] sm:$0xff] %v3873
        %3904 = vst [vmem:[#allocation2 + $0xbd0] sm:$0xff] %v3874
        %3905 = vst.msk [vmem:[#allocation2 + $0xbd8] sm:$0xff] %vm403, %v3857
        %3906 = vst [vmem:[#allocation2 + $0xbe0] sm:$0xff] %v3875
        %3907 = vst [vmem:[#allocation2 + $0xbe8] sm:$0xff] %v3876
        %3908 = vst [vmem:[#allocation2 + $0xbf0] sm:$0xff] %v3877
        %3909 = vst.msk [vmem:[#allocation2 + $0xbf8] sm:$0xff] %vm403, %v3865
        %v3910 = vld [vmem:[#allocation3] sm:$0xff]
        %v3911 = vld [vmem:[#allocation3 + $0x8] sm:$0xff]
        %v3912 = vld [vmem:[#allocation3 + $0x10] sm:$0xff]
        %v3913 = vld [vmem:[#allocation3 + $0x18] sm:$0xff]
        %v3914 = vld [vmem:[#allocation3 + $0x20] sm:$0xff]
        %v3915 = vld [vmem:[#allocation3 + $0x28] sm:$0xff]
        %v3916 = vld [vmem:[#allocation3 + $0x30] sm:$0xff]
        %v3917 = vld [vmem:[#allocation3 + $0x38] sm:$0xff]
        %v3918 = vld [vmem:[#allocation3 + $0x40] sm:$0xff]
        %v3919 = vld [vmem:[#allocation3 + $0x48] sm:$0xff]
        %v3920 = vld [vmem:[#allocation3 + $0x50] sm:$0xff]
        %v3921 = vld [vmem:[#allocation3 + $0x58] sm:$0xff]
        %v3922 = vld [vmem:[#allocation3 + $0x60] sm:$0xff]
        %v3923 = vld [vmem:[#allocation3 + $0x68] sm:$0xff]
        %v3924 = vld [vmem:[#allocation3 + $0x70] sm:$0xff]
        %v3925 = vld [vmem:[#allocation3 + $0x78] sm:$0xff]
        %3942 = vrot.lane.b32.xlu0 %v3910, 44
        %v3943 = vpop.permute.xlu0 %3942
        %3944 = vrot.lane.b32.xlu0 %v3911, 44
        %v3945 = vpop.permute.xlu0 %3944
        %3946 = vrot.lane.b32.xlu0 %v3912, 44
        %v3947 = vpop.permute.xlu0 %3946
        %3948 = vrot.lane.b32.xlu0 %v3913, 44
        %v3949 = vpop.permute.xlu0 %3948
        %3950 = vrot.lane.b32.xlu0 %v3914, 44
        %v3951 = vpop.permute.xlu0 %3950
        %3952 = vrot.lane.b32.xlu0 %v3915, 44
        %v3953 = vpop.permute.xlu0 %3952
        %3954 = vrot.lane.b32.xlu0 %v3916, 44
        %v3955 = vpop.permute.xlu0 %3954
        %3956 = vrot.lane.b32.xlu0 %v3917, 44
        %v3957 = vpop.permute.xlu0 %3956
        %3958 = vrot.lane.b32.xlu0 %v3918, 44
        %v3959 = vpop.permute.xlu0 %3958
        %3960 = vrot.lane.b32.xlu0 %v3919, 44
        %v3961 = vpop.permute.xlu0 %3960
        %3962 = vrot.lane.b32.xlu0 %v3920, 44
        %v3963 = vpop.permute.xlu0 %3962
        %3964 = vrot.lane.b32.xlu0 %v3921, 44
        %v3965 = vpop.permute.xlu0 %3964
        %3966 = vrot.lane.b32.xlu0 %v3922, 44
        %v3967 = vpop.permute.xlu0 %3966
        %3968 = vrot.lane.b32.xlu0 %v3923, 44
        %v3969 = vpop.permute.xlu0 %3968
        %3970 = vrot.lane.b32.xlu0 %v3924, 44
        %v3971 = vpop.permute.xlu0 %3970
        %3972 = vrot.lane.b32.xlu0 %v3925, 44
        %v3973 = vpop.permute.xlu0 %3972
        %v3974 = vsel %vm877, %v3943, %v3945
        %v3975 = vsel %vm877, %v3945, %v3947
        %v3976 = vsel %vm877, %v3947, %v3949
        %v3977 = vsel %vm877, %v3951, %v3953
        %v3978 = vsel %vm877, %v3953, %v3955
        %v3979 = vsel %vm877, %v3955, %v3957
        %v3980 = vsel %vm877, %v3959, %v3961
        %v3981 = vsel %vm877, %v3961, %v3963
        %v3982 = vsel %vm877, %v3963, %v3965
        %v3983 = vsel %vm877, %v3967, %v3969
        %v3984 = vsel %vm877, %v3969, %v3971
        %v3985 = vsel %vm877, %v3971, %v3973
        %4002 = vst [vmem:[#allocation2 + $0xc00] sm:$0xff] %v3974
        %4003 = vst [vmem:[#allocation2 + $0xc08] sm:$0xff] %v3975
        %4004 = vst [vmem:[#allocation2 + $0xc10] sm:$0xff] %v3976
        %4005 = vst.msk [vmem:[#allocation2 + $0xc18] sm:$0xff] %vm403, %v3949
        %4006 = vst [vmem:[#allocation2 + $0xc20] sm:$0xff] %v3977
        %4007 = vst [vmem:[#allocation2 + $0xc28] sm:$0xff] %v3978
        %4008 = vst [vmem:[#allocation2 + $0xc30] sm:$0xff] %v3979
        %4009 = vst.msk [vmem:[#allocation2 + $0xc38] sm:$0xff] %vm403, %v3957
        %4010 = vst [vmem:[#allocation2 + $0xc40] sm:$0xff] %v3980
        %4011 = vst [vmem:[#allocation2 + $0xc48] sm:$0xff] %v3981
        %4012 = vst [vmem:[#allocation2 + $0xc50] sm:$0xff] %v3982
        %4013 = vst.msk [vmem:[#allocation2 + $0xc58] sm:$0xff] %vm403, %v3965
        %4014 = vst [vmem:[#allocation2 + $0xc60] sm:$0xff] %v3983
        %4015 = vst [vmem:[#allocation2 + $0xc68] sm:$0xff] %v3984
        %4016 = vst [vmem:[#allocation2 + $0xc70] sm:$0xff] %v3985
        %4017 = vst.msk [vmem:[#allocation2 + $0xc78] sm:$0xff] %vm403, %v3973
        %v4018 = vld [vmem:[#allocation9] sm:$0xff]
        %v4019 = vld [vmem:[#allocation9 + $0x8] sm:$0xff]
        %v4020 = vld [vmem:[#allocation9 + $0x10] sm:$0xff]
        %v4021 = vld [vmem:[#allocation9 + $0x18] sm:$0xff]
        %v4022 = vld [vmem:[#allocation9 + $0x20] sm:$0xff]
        %v4023 = vld [vmem:[#allocation9 + $0x28] sm:$0xff]
        %v4024 = vld [vmem:[#allocation9 + $0x30] sm:$0xff]
        %v4025 = vld [vmem:[#allocation9 + $0x38] sm:$0xff]
        %v4026 = vld [vmem:[#allocation9 + $0x40] sm:$0xff]
        %v4027 = vld [vmem:[#allocation9 + $0x48] sm:$0xff]
        %v4028 = vld [vmem:[#allocation9 + $0x50] sm:$0xff]
        %v4029 = vld [vmem:[#allocation9 + $0x58] sm:$0xff]
        %v4030 = vld [vmem:[#allocation9 + $0x60] sm:$0xff]
        %v4031 = vld [vmem:[#allocation9 + $0x68] sm:$0xff]
        %v4032 = vld [vmem:[#allocation9 + $0x70] sm:$0xff]
        %v4033 = vld [vmem:[#allocation9 + $0x78] sm:$0xff]
        %v4034 = vld [vmem:[#allocation9 + $0x80] sm:$0xff]
        %v4035 = vld [vmem:[#allocation9 + $0x88] sm:$0xff]
        %v4036 = vld [vmem:[#allocation9 + $0x90] sm:$0xff]
        %v4037 = vld [vmem:[#allocation9 + $0x98] sm:$0xff]
        %v4038 = vld [vmem:[#allocation9 + $0xa0] sm:$0xff]
        %v4039 = vld [vmem:[#allocation9 + $0xa8] sm:$0xff]
        %v4040 = vld [vmem:[#allocation9 + $0xb0] sm:$0xff]
        %v4041 = vld [vmem:[#allocation9 + $0xb8] sm:$0xff]
        %v4042 = vld [vmem:[#allocation9 + $0xc0] sm:$0xff]
        %v4043 = vld [vmem:[#allocation9 + $0xc8] sm:$0xff]
        %v4044 = vld [vmem:[#allocation9 + $0xd0] sm:$0xff]
        %v4045 = vld [vmem:[#allocation9 + $0xd8] sm:$0xff]
        %v4046 = vld [vmem:[#allocation2] sm:$0xff]
        %v4047 = vld [vmem:[#allocation2 + $0x8] sm:$0xff]
        %v4048 = vld [vmem:[#allocation2 + $0x10] sm:$0xff]
        %v4049 = vld [vmem:[#allocation2 + $0x18] sm:$0xff]
        %v4050 = vld [vmem:[#allocation2 + $0x20] sm:$0xff]
        %v4051 = vld [vmem:[#allocation2 + $0x28] sm:$0xff]
        %v4052 = vld [vmem:[#allocation2 + $0x30] sm:$0xff]
        %v4053 = vld [vmem:[#allocation2 + $0x38] sm:$0xff]
        %v4054 = vld [vmem:[#allocation2 + $0x40] sm:$0xff]
        %v4055 = vld [vmem:[#allocation2 + $0x48] sm:$0xff]
        %v4056 = vld [vmem:[#allocation2 + $0x50] sm:$0xff]
        %v4057 = vld [vmem:[#allocation2 + $0x58] sm:$0xff]
        %v4058 = vld [vmem:[#allocation2 + $0x60] sm:$0xff]
        %v4059 = vld [vmem:[#allocation2 + $0x68] sm:$0xff]
        %v4060 = vld [vmem:[#allocation2 + $0x70] sm:$0xff]
        %v4061 = vld [vmem:[#allocation2 + $0x78] sm:$0xff]
        %v4062 = vld [vmem:[#allocation2 + $0x80] sm:$0xff]
        %v4063 = vld [vmem:[#allocation2 + $0x88] sm:$0xff]
        %v4064 = vld [vmem:[#allocation2 + $0x90] sm:$0xff]
        %v4065 = vld [vmem:[#allocation2 + $0x98] sm:$0xff]
        %v4066 = vld [vmem:[#allocation2 + $0xa0] sm:$0xff]
        %v4067 = vld [vmem:[#allocation2 + $0xa8] sm:$0xff]
        %v4068 = vld [vmem:[#allocation2 + $0xb0] sm:$0xff]
        %v4069 = vld [vmem:[#allocation2 + $0xb8] sm:$0xff]
        %v4070 = vld [vmem:[#allocation2 + $0xc0] sm:$0xff]
        %v4071 = vld [vmem:[#allocation2 + $0xc8] sm:$0xff]
        %v4072 = vld [vmem:[#allocation2 + $0xd0] sm:$0xff]
        %v4073 = vld [vmem:[#allocation2 + $0xd8] sm:$0xff]
        %v4074 = vld [vmem:[#allocation2 + $0xe0] sm:$0xff]
        %v4075 = vld [vmem:[#allocation2 + $0xe8] sm:$0xff]
        %v4076 = vld [vmem:[#allocation2 + $0xf0] sm:$0xff]
        %v4077 = vld [vmem:[#allocation2 + $0xf8] sm:$0xff]
        %v4078 = vld [vmem:[#allocation2 + $0x100] sm:$0xff]
        %v4079 = vld [vmem:[#allocation2 + $0x108] sm:$0xff]
        %v4080 = vld [vmem:[#allocation2 + $0x110] sm:$0xff]
        %v4081 = vld [vmem:[#allocation2 + $0x118] sm:$0xff]
        %v4082 = vld [vmem:[#allocation2 + $0x120] sm:$0xff]
        %v4083 = vld [vmem:[#allocation2 + $0x128] sm:$0xff]
        %v4084 = vld [vmem:[#allocation2 + $0x130] sm:$0xff]
        %v4085 = vld [vmem:[#allocation2 + $0x138] sm:$0xff]
        %v4086 = vld [vmem:[#allocation2 + $0x140] sm:$0xff]
        %v4087 = vld [vmem:[#allocation2 + $0x148] sm:$0xff]
        %v4088 = vld [vmem:[#allocation2 + $0x150] sm:$0xff]
        %v4089 = vld [vmem:[#allocation2 + $0x158] sm:$0xff]
        %v4090 = vld [vmem:[#allocation2 + $0x160] sm:$0xff]
        %v4091 = vld [vmem:[#allocation2 + $0x168] sm:$0xff]
        %v4092 = vld [vmem:[#allocation2 + $0x170] sm:$0xff]
        %v4093 = vld [vmem:[#allocation2 + $0x178] sm:$0xff]
        %v4094 = vld [vmem:[#allocation2 + $0x180] sm:$0xff]
        %v4095 = vld [vmem:[#allocation2 + $0x188] sm:$0xff]
        %v4096 = vld [vmem:[#allocation2 + $0x190] sm:$0xff]
        %v4097 = vld [vmem:[#allocation2 + $0x198] sm:$0xff]
        %v4098 = vld [vmem:[#allocation2 + $0x1a0] sm:$0xff]
        %v4099 = vld [vmem:[#allocation2 + $0x1a8] sm:$0xff]
        %v4100 = vld [vmem:[#allocation2 + $0x1b0] sm:$0xff]
        %v4101 = vld [vmem:[#allocation2 + $0x1b8] sm:$0xff]
        %v4102 = vld [vmem:[#allocation2 + $0x1c0] sm:$0xff]
        %v4103 = vld [vmem:[#allocation2 + $0x1c8] sm:$0xff]
        %v4104 = vld [vmem:[#allocation2 + $0x1d0] sm:$0xff]
        %v4105 = vld [vmem:[#allocation2 + $0x1d8] sm:$0xff]
        %v4106 = vld [vmem:[#allocation2 + $0x1e0] sm:$0xff]
        %v4107 = vld [vmem:[#allocation2 + $0x1e8] sm:$0xff]
        %v4108 = vld [vmem:[#allocation2 + $0x1f0] sm:$0xff]
        %v4109 = vld [vmem:[#allocation2 + $0x1f8] sm:$0xff]
        %v4110 = vld [vmem:[#allocation2 + $0x200] sm:$0xff]
        %v4111 = vld [vmem:[#allocation2 + $0x208] sm:$0xff]
        %v4112 = vld [vmem:[#allocation2 + $0x210] sm:$0xff]
        %v4113 = vld [vmem:[#allocation2 + $0x218] sm:$0xff]
        %v4114 = vld [vmem:[#allocation2 + $0x220] sm:$0xff]
        %v4115 = vld [vmem:[#allocation2 + $0x228] sm:$0xff]
        %v4116 = vld [vmem:[#allocation2 + $0x230] sm:$0xff]
        %v4117 = vld [vmem:[#allocation2 + $0x238] sm:$0xff]
        %v4118 = vld [vmem:[#allocation2 + $0x240] sm:$0xff]
        %v4119 = vld [vmem:[#allocation2 + $0x248] sm:$0xff]
        %v4120 = vld [vmem:[#allocation2 + $0x250] sm:$0xff]
        %v4121 = vld [vmem:[#allocation2 + $0x258] sm:$0xff]
        %v4122 = vld [vmem:[#allocation2 + $0x260] sm:$0xff]
        %v4123 = vld [vmem:[#allocation2 + $0x268] sm:$0xff]
        %v4124 = vld [vmem:[#allocation2 + $0x270] sm:$0xff]
        %v4125 = vld [vmem:[#allocation2 + $0x278] sm:$0xff]
        %v4126 = vld [vmem:[#allocation2 + $0x280] sm:$0xff]
        %v4127 = vld [vmem:[#allocation2 + $0x288] sm:$0xff]
        %v4128 = vld [vmem:[#allocation2 + $0x290] sm:$0xff]
        %v4129 = vld [vmem:[#allocation2 + $0x298] sm:$0xff]
        %v4130 = vld [vmem:[#allocation2 + $0x2a0] sm:$0xff]
        %v4131 = vld [vmem:[#allocation2 + $0x2a8] sm:$0xff]
        %v4132 = vld [vmem:[#allocation2 + $0x2b0] sm:$0xff]
        %v4133 = vld [vmem:[#allocation2 + $0x2b8] sm:$0xff]
        %v4134 = vld [vmem:[#allocation2 + $0x2c0] sm:$0xff]
        %v4135 = vld [vmem:[#allocation2 + $0x2c8] sm:$0xff]
        %v4136 = vld [vmem:[#allocation2 + $0x2d0] sm:$0xff]
        %v4137 = vld [vmem:[#allocation2 + $0x2d8] sm:$0xff]
        %v4138 = vld [vmem:[#allocation2 + $0x2e0] sm:$0xff]
        %v4139 = vld [vmem:[#allocation2 + $0x2e8] sm:$0xff]
        %v4140 = vld [vmem:[#allocation2 + $0x2f0] sm:$0xff]
        %v4141 = vld [vmem:[#allocation2 + $0x2f8] sm:$0xff]
        %v4142 = vld [vmem:[#allocation2 + $0x300] sm:$0xff]
        %v4143 = vld [vmem:[#allocation2 + $0x308] sm:$0xff]
        %v4144 = vld [vmem:[#allocation2 + $0x310] sm:$0xff]
        %v4145 = vld [vmem:[#allocation2 + $0x318] sm:$0xff]
        %v4146 = vld [vmem:[#allocation2 + $0x320] sm:$0xff]
        %v4147 = vld [vmem:[#allocation2 + $0x328] sm:$0xff]
        %v4148 = vld [vmem:[#allocation2 + $0x330] sm:$0xff]
        %v4149 = vld [vmem:[#allocation2 + $0x338] sm:$0xff]
        %v4150 = vld [vmem:[#allocation2 + $0x340] sm:$0xff]
        %v4151 = vld [vmem:[#allocation2 + $0x348] sm:$0xff]
        %v4152 = vld [vmem:[#allocation2 + $0x350] sm:$0xff]
        %v4153 = vld [vmem:[#allocation2 + $0x358] sm:$0xff]
        %v4154 = vld [vmem:[#allocation2 + $0x360] sm:$0xff]
        %v4155 = vld [vmem:[#allocation2 + $0x368] sm:$0xff]
        %v4156 = vld [vmem:[#allocation2 + $0x370] sm:$0xff]
        %v4157 = vld [vmem:[#allocation2 + $0x378] sm:$0xff]
        %v4158 = vld [vmem:[#allocation2 + $0x380] sm:$0xff]
        %v4159 = vld [vmem:[#allocation2 + $0x388] sm:$0xff]
        %v4160 = vld [vmem:[#allocation2 + $0x390] sm:$0xff]
        %v4161 = vld [vmem:[#allocation2 + $0x398] sm:$0xff]
        %v4162 = vld [vmem:[#allocation2 + $0x3a0] sm:$0xff]
        %v4163 = vld [vmem:[#allocation2 + $0x3a8] sm:$0xff]
        %v4164 = vld [vmem:[#allocation2 + $0x3b0] sm:$0xff]
        %v4165 = vld [vmem:[#allocation2 + $0x3b8] sm:$0xff]
        %v4166 = vld [vmem:[#allocation2 + $0x3c0] sm:$0xff]
        %v4167 = vld [vmem:[#allocation2 + $0x3c8] sm:$0xff]
        %v4168 = vld [vmem:[#allocation2 + $0x3d0] sm:$0xff]
        %v4169 = vld [vmem:[#allocation2 + $0x3d8] sm:$0xff]
        %v4170 = vld [vmem:[#allocation2 + $0x3e0] sm:$0xff]
        %v4171 = vld [vmem:[#allocation2 + $0x3e8] sm:$0xff]
        %v4172 = vld [vmem:[#allocation2 + $0x3f0] sm:$0xff]
        %v4173 = vld [vmem:[#allocation2 + $0x3f8] sm:$0xff]
        %v4174 = vld [vmem:[#allocation2 + $0x400] sm:$0xff]
        %v4175 = vld [vmem:[#allocation2 + $0x408] sm:$0xff]
        %v4176 = vld [vmem:[#allocation2 + $0x410] sm:$0xff]
        %v4177 = vld [vmem:[#allocation2 + $0x418] sm:$0xff]
        %v4178 = vld [vmem:[#allocation2 + $0x420] sm:$0xff]
        %v4179 = vld [vmem:[#allocation2 + $0x428] sm:$0xff]
        %v4180 = vld [vmem:[#allocation2 + $0x430] sm:$0xff]
        %v4181 = vld [vmem:[#allocation2 + $0x438] sm:$0xff]
        %v4182 = vld [vmem:[#allocation2 + $0x440] sm:$0xff]
        %v4183 = vld [vmem:[#allocation2 + $0x448] sm:$0xff]
        %v4184 = vld [vmem:[#allocation2 + $0x450] sm:$0xff]
        %v4185 = vld [vmem:[#allocation2 + $0x458] sm:$0xff]
        %v4186 = vld [vmem:[#allocation2 + $0x460] sm:$0xff]
        %v4187 = vld [vmem:[#allocation2 + $0x468] sm:$0xff]
        %v4188 = vld [vmem:[#allocation2 + $0x470] sm:$0xff]
        %v4189 = vld [vmem:[#allocation2 + $0x478] sm:$0xff]
        %v4190 = vld [vmem:[#allocation2 + $0x480] sm:$0xff]
        %v4191 = vld [vmem:[#allocation2 + $0x488] sm:$0xff]
        %v4192 = vld [vmem:[#allocation2 + $0x490] sm:$0xff]
        %v4193 = vld [vmem:[#allocation2 + $0x498] sm:$0xff]
        %v4194 = vld [vmem:[#allocation2 + $0x4a0] sm:$0xff]
        %v4195 = vld [vmem:[#allocation2 + $0x4a8] sm:$0xff]
        %v4196 = vld [vmem:[#allocation2 + $0x4b0] sm:$0xff]
        %v4197 = vld [vmem:[#allocation2 + $0x4b8] sm:$0xff]
        %v4198 = vld [vmem:[#allocation2 + $0x4c0] sm:$0xff]
        %v4199 = vld [vmem:[#allocation2 + $0x4c8] sm:$0xff]
        %v4200 = vld [vmem:[#allocation2 + $0x4d0] sm:$0xff]
        %v4201 = vld [vmem:[#allocation2 + $0x4d8] sm:$0xff]
        %v4202 = vld [vmem:[#allocation2 + $0x4e0] sm:$0xff]
        %v4203 = vld [vmem:[#allocation2 + $0x4e8] sm:$0xff]
        %v4204 = vld [vmem:[#allocation2 + $0x4f0] sm:$0xff]
        %v4205 = vld [vmem:[#allocation2 + $0x4f8] sm:$0xff]
        %v4206 = vld [vmem:[#allocation2 + $0x500] sm:$0xff]
        %v4207 = vld [vmem:[#allocation2 + $0x508] sm:$0xff]
        %v4208 = vld [vmem:[#allocation2 + $0x510] sm:$0xff]
        %v4209 = vld [vmem:[#allocation2 + $0x518] sm:$0xff]
        %v4210 = vld [vmem:[#allocation2 + $0x520] sm:$0xff]
        %v4211 = vld [vmem:[#allocation2 + $0x528] sm:$0xff]
        %v4212 = vld [vmem:[#allocation2 + $0x530] sm:$0xff]
        %v4213 = vld [vmem:[#allocation2 + $0x538] sm:$0xff]
        %v4214 = vld [vmem:[#allocation2 + $0x540] sm:$0xff]
        %v4215 = vld [vmem:[#allocation2 + $0x548] sm:$0xff]
        %v4216 = vld [vmem:[#allocation2 + $0x550] sm:$0xff]
        %v4217 = vld [vmem:[#allocation2 + $0x558] sm:$0xff]
        %v4218 = vld [vmem:[#allocation2 + $0x560] sm:$0xff]
        %v4219 = vld [vmem:[#allocation2 + $0x568] sm:$0xff]
        %v4220 = vld [vmem:[#allocation2 + $0x570] sm:$0xff]
        %v4221 = vld [vmem:[#allocation2 + $0x578] sm:$0xff]
        %v4222 = vld [vmem:[#allocation2 + $0x580] sm:$0xff]
        %v4223 = vld [vmem:[#allocation2 + $0x588] sm:$0xff]
        %v4224 = vld [vmem:[#allocation2 + $0x590] sm:$0xff]
        %v4225 = vld [vmem:[#allocation2 + $0x598] sm:$0xff]
        %v4226 = vld [vmem:[#allocation2 + $0x5a0] sm:$0xff]
        %v4227 = vld [vmem:[#allocation2 + $0x5a8] sm:$0xff]
        %v4228 = vld [vmem:[#allocation2 + $0x5b0] sm:$0xff]
        %v4229 = vld [vmem:[#allocation2 + $0x5b8] sm:$0xff]
        %v4230 = vld [vmem:[#allocation2 + $0x5c0] sm:$0xff]
        %v4231 = vld [vmem:[#allocation2 + $0x5c8] sm:$0xff]
        %v4232 = vld [vmem:[#allocation2 + $0x5d0] sm:$0xff]
        %v4233 = vld [vmem:[#allocation2 + $0x5d8] sm:$0xff]
        %v4234 = vld [vmem:[#allocation2 + $0x5e0] sm:$0xff]
        %v4235 = vld [vmem:[#allocation2 + $0x5e8] sm:$0xff]
        %v4236 = vld [vmem:[#allocation2 + $0x5f0] sm:$0xff]
        %v4237 = vld [vmem:[#allocation2 + $0x5f8] sm:$0xff]
        %v4238 = vld [vmem:[#allocation2 + $0x600] sm:$0xff]
        %v4239 = vld [vmem:[#allocation2 + $0x608] sm:$0xff]
        %v4240 = vld [vmem:[#allocation2 + $0x610] sm:$0xff]
        %v4241 = vld [vmem:[#allocation2 + $0x618] sm:$0xff]
        %v4242 = vld [vmem:[#allocation2 + $0x620] sm:$0xff]
        %v4243 = vld [vmem:[#allocation2 + $0x628] sm:$0xff]
        %v4244 = vld [vmem:[#allocation2 + $0x630] sm:$0xff]
        %v4245 = vld [vmem:[#allocation2 + $0x638] sm:$0xff]
        %v4246 = vld [vmem:[#allocation2 + $0x640] sm:$0xff]
        %v4247 = vld [vmem:[#allocation2 + $0x648] sm:$0xff]
        %v4248 = vld [vmem:[#allocation2 + $0x650] sm:$0xff]
        %v4249 = vld [vmem:[#allocation2 + $0x658] sm:$0xff]
        %v4250 = vld [vmem:[#allocation2 + $0x660] sm:$0xff]
        %v4251 = vld [vmem:[#allocation2 + $0x668] sm:$0xff]
        %v4252 = vld [vmem:[#allocation2 + $0x670] sm:$0xff]
        %v4253 = vld [vmem:[#allocation2 + $0x678] sm:$0xff]
        %v4254 = vld [vmem:[#allocation2 + $0x680] sm:$0xff]
        %v4255 = vld [vmem:[#allocation2 + $0x688] sm:$0xff]
        %v4256 = vld [vmem:[#allocation2 + $0x690] sm:$0xff]
        %v4257 = vld [vmem:[#allocation2 + $0x698] sm:$0xff]
        %v4258 = vld [vmem:[#allocation2 + $0x6a0] sm:$0xff]
        %v4259 = vld [vmem:[#allocation2 + $0x6a8] sm:$0xff]
        %v4260 = vld [vmem:[#allocation2 + $0x6b0] sm:$0xff]
        %v4261 = vld [vmem:[#allocation2 + $0x6b8] sm:$0xff]
        %v4262 = vld [vmem:[#allocation2 + $0x6c0] sm:$0xff]
        %v4263 = vld [vmem:[#allocation2 + $0x6c8] sm:$0xff]
        %v4264 = vld [vmem:[#allocation2 + $0x6d0] sm:$0xff]
        %v4265 = vld [vmem:[#allocation2 + $0x6d8] sm:$0xff]
        %v4266 = vld [vmem:[#allocation2 + $0x6e0] sm:$0xff]
        %v4267 = vld [vmem:[#allocation2 + $0x6e8] sm:$0xff]
        %v4268 = vld [vmem:[#allocation2 + $0x6f0] sm:$0xff]
        %v4269 = vld [vmem:[#allocation2 + $0x6f8] sm:$0xff]
        %v4270 = vld [vmem:[#allocation2 + $0x700] sm:$0xff]
        %v4271 = vld [vmem:[#allocation2 + $0x708] sm:$0xff]
        %v4272 = vld [vmem:[#allocation2 + $0x710] sm:$0xff]
        %v4273 = vld [vmem:[#allocation2 + $0x718] sm:$0xff]
        %v4274 = vld [vmem:[#allocation2 + $0x720] sm:$0xff]
        %v4275 = vld [vmem:[#allocation2 + $0x728] sm:$0xff]
        %v4276 = vld [vmem:[#allocation2 + $0x730] sm:$0xff]
        %v4277 = vld [vmem:[#allocation2 + $0x738] sm:$0xff]
        %v4278 = vld [vmem:[#allocation2 + $0x740] sm:$0xff]
        %v4279 = vld [vmem:[#allocation2 + $0x748] sm:$0xff]
        %v4280 = vld [vmem:[#allocation2 + $0x750] sm:$0xff]
        %v4281 = vld [vmem:[#allocation2 + $0x758] sm:$0xff]
        %v4282 = vld [vmem:[#allocation2 + $0x760] sm:$0xff]
        %v4283 = vld [vmem:[#allocation2 + $0x768] sm:$0xff]
        %v4284 = vld [vmem:[#allocation2 + $0x770] sm:$0xff]
        %v4285 = vld [vmem:[#allocation2 + $0x778] sm:$0xff]
        %v4286 = vld [vmem:[#allocation2 + $0x780] sm:$0xff]
        %v4287 = vld [vmem:[#allocation2 + $0x788] sm:$0xff]
        %v4288 = vld [vmem:[#allocation2 + $0x790] sm:$0xff]
        %v4289 = vld [vmem:[#allocation2 + $0x798] sm:$0xff]
        %v4290 = vld [vmem:[#allocation2 + $0x7a0] sm:$0xff]
        %v4291 = vld [vmem:[#allocation2 + $0x7a8] sm:$0xff]
        %v4292 = vld [vmem:[#allocation2 + $0x7b0] sm:$0xff]
        %v4293 = vld [vmem:[#allocation2 + $0x7b8] sm:$0xff]
        %v4294 = vld [vmem:[#allocation2 + $0x7c0] sm:$0xff]
        %v4295 = vld [vmem:[#allocation2 + $0x7c8] sm:$0xff]
        %v4296 = vld [vmem:[#allocation2 + $0x7d0] sm:$0xff]
        %v4297 = vld [vmem:[#allocation2 + $0x7d8] sm:$0xff]
        %v4298 = vld [vmem:[#allocation2 + $0x7e0] sm:$0xff]
        %v4299 = vld [vmem:[#allocation2 + $0x7e8] sm:$0xff]
        %v4300 = vld [vmem:[#allocation2 + $0x7f0] sm:$0xff]
        %v4301 = vld [vmem:[#allocation2 + $0x7f8] sm:$0xff]
        %v4302 = vld [vmem:[#allocation2 + $0x800] sm:$0xff]
        %v4303 = vld [vmem:[#allocation2 + $0x808] sm:$0xff]
        %v4304 = vld [vmem:[#allocation2 + $0x810] sm:$0xff]
        %v4305 = vld [vmem:[#allocation2 + $0x818] sm:$0xff]
        %v4306 = vld [vmem:[#allocation2 + $0x820] sm:$0xff]
        %v4307 = vld [vmem:[#allocation2 + $0x828] sm:$0xff]
        %v4308 = vld [vmem:[#allocation2 + $0x830] sm:$0xff]
        %v4309 = vld [vmem:[#allocation2 + $0x838] sm:$0xff]
        %v4310 = vld [vmem:[#allocation2 + $0x840] sm:$0xff]
        %v4311 = vld [vmem:[#allocation2 + $0x848] sm:$0xff]
        %v4312 = vld [vmem:[#allocation2 + $0x850] sm:$0xff]
        %v4313 = vld [vmem:[#allocation2 + $0x858] sm:$0xff]
        %v4314 = vld [vmem:[#allocation2 + $0x860] sm:$0xff]
        %v4315 = vld [vmem:[#allocation2 + $0x868] sm:$0xff]
        %v4316 = vld [vmem:[#allocation2 + $0x870] sm:$0xff]
        %v4317 = vld [vmem:[#allocation2 + $0x878] sm:$0xff]
        %v4318 = vld [vmem:[#allocation2 + $0x880] sm:$0xff]
        %v4319 = vld [vmem:[#allocation2 + $0x888] sm:$0xff]
        %v4320 = vld [vmem:[#allocation2 + $0x890] sm:$0xff]
        %v4321 = vld [vmem:[#allocation2 + $0x898] sm:$0xff]
        %v4322 = vld [vmem:[#allocation2 + $0x8a0] sm:$0xff]
        %v4323 = vld [vmem:[#allocation2 + $0x8a8] sm:$0xff]
        %v4324 = vld [vmem:[#allocation2 + $0x8b0] sm:$0xff]
        %v4325 = vld [vmem:[#allocation2 + $0x8b8] sm:$0xff]
        %v4326 = vld [vmem:[#allocation2 + $0x8c0] sm:$0xff]
        %v4327 = vld [vmem:[#allocation2 + $0x8c8] sm:$0xff]
        %v4328 = vld [vmem:[#allocation2 + $0x8d0] sm:$0xff]
        %v4329 = vld [vmem:[#allocation2 + $0x8d8] sm:$0xff]
        %v4330 = vld [vmem:[#allocation2 + $0x8e0] sm:$0xff]
        %v4331 = vld [vmem:[#allocation2 + $0x8e8] sm:$0xff]
        %v4332 = vld [vmem:[#allocation2 + $0x8f0] sm:$0xff]
        %v4333 = vld [vmem:[#allocation2 + $0x8f8] sm:$0xff]
        %v4334 = vld [vmem:[#allocation2 + $0x900] sm:$0xff]
        %v4335 = vld [vmem:[#allocation2 + $0x908] sm:$0xff]
        %v4336 = vld [vmem:[#allocation2 + $0x910] sm:$0xff]
        %v4337 = vld [vmem:[#allocation2 + $0x918] sm:$0xff]
        %v4338 = vld [vmem:[#allocation2 + $0x920] sm:$0xff]
        %v4339 = vld [vmem:[#allocation2 + $0x928] sm:$0xff]
        %v4340 = vld [vmem:[#allocation2 + $0x930] sm:$0xff]
        %v4341 = vld [vmem:[#allocation2 + $0x938] sm:$0xff]
        %v4342 = vld [vmem:[#allocation2 + $0x940] sm:$0xff]
        %v4343 = vld [vmem:[#allocation2 + $0x948] sm:$0xff]
        %v4344 = vld [vmem:[#allocation2 + $0x950] sm:$0xff]
        %v4345 = vld [vmem:[#allocation2 + $0x958] sm:$0xff]
        %v4346 = vld [vmem:[#allocation2 + $0x960] sm:$0xff]
        %v4347 = vld [vmem:[#allocation2 + $0x968] sm:$0xff]
        %v4348 = vld [vmem:[#allocation2 + $0x970] sm:$0xff]
        %v4349 = vld [vmem:[#allocation2 + $0x978] sm:$0xff]
        %v4350 = vld [vmem:[#allocation2 + $0x980] sm:$0xff]
        %v4351 = vld [vmem:[#allocation2 + $0x988] sm:$0xff]
        %v4352 = vld [vmem:[#allocation2 + $0x990] sm:$0xff]
        %v4353 = vld [vmem:[#allocation2 + $0x998] sm:$0xff]
        %v4354 = vld [vmem:[#allocation2 + $0x9a0] sm:$0xff]
        %v4355 = vld [vmem:[#allocation2 + $0x9a8] sm:$0xff]
        %v4356 = vld [vmem:[#allocation2 + $0x9b0] sm:$0xff]
        %v4357 = vld [vmem:[#allocation2 + $0x9b8] sm:$0xff]
        %v4358 = vld [vmem:[#allocation2 + $0x9c0] sm:$0xff]
        %v4359 = vld [vmem:[#allocation2 + $0x9c8] sm:$0xff]
        %v4360 = vld [vmem:[#allocation2 + $0x9d0] sm:$0xff]
        %v4361 = vld [vmem:[#allocation2 + $0x9d8] sm:$0xff]
        %v4362 = vld [vmem:[#allocation2 + $0x9e0] sm:$0xff]
        %v4363 = vld [vmem:[#allocation2 + $0x9e8] sm:$0xff]
        %v4364 = vld [vmem:[#allocation2 + $0x9f0] sm:$0xff]
        %v4365 = vld [vmem:[#allocation2 + $0x9f8] sm:$0xff]
        %v4366 = vld [vmem:[#allocation2 + $0xa00] sm:$0xff]
        %v4367 = vld [vmem:[#allocation2 + $0xa08] sm:$0xff]
        %v4368 = vld [vmem:[#allocation2 + $0xa10] sm:$0xff]
        %v4369 = vld [vmem:[#allocation2 + $0xa18] sm:$0xff]
        %v4370 = vld [vmem:[#allocation2 + $0xa20] sm:$0xff]
        %v4371 = vld [vmem:[#allocation2 + $0xa28] sm:$0xff]
        %v4372 = vld [vmem:[#allocation2 + $0xa30] sm:$0xff]
        %v4373 = vld [vmem:[#allocation2 + $0xa38] sm:$0xff]
        %v4374 = vld [vmem:[#allocation2 + $0xa40] sm:$0xff]
        %v4375 = vld [vmem:[#allocation2 + $0xa48] sm:$0xff]
        %v4376 = vld [vmem:[#allocation2 + $0xa50] sm:$0xff]
        %v4377 = vld [vmem:[#allocation2 + $0xa58] sm:$0xff]
        %v4378 = vld [vmem:[#allocation2 + $0xa60] sm:$0xff]
        %v4379 = vld [vmem:[#allocation2 + $0xa68] sm:$0xff]
        %v4380 = vld [vmem:[#allocation2 + $0xa70] sm:$0xff]
        %v4381 = vld [vmem:[#allocation2 + $0xa78] sm:$0xff]
        %v4382 = vld [vmem:[#allocation2 + $0xa80] sm:$0xff]
        %v4383 = vld [vmem:[#allocation2 + $0xa88] sm:$0xff]
        %v4384 = vld [vmem:[#allocation2 + $0xa90] sm:$0xff]
        %v4385 = vld [vmem:[#allocation2 + $0xa98] sm:$0xff]
        %v4386 = vld [vmem:[#allocation2 + $0xaa0] sm:$0xff]
        %v4387 = vld [vmem:[#allocation2 + $0xaa8] sm:$0xff]
        %v4388 = vld [vmem:[#allocation2 + $0xab0] sm:$0xff]
        %v4389 = vld [vmem:[#allocation2 + $0xab8] sm:$0xff]
        %v4390 = vld [vmem:[#allocation2 + $0xac0] sm:$0xff]
        %v4391 = vld [vmem:[#allocation2 + $0xac8] sm:$0xff]
        %v4392 = vld [vmem:[#allocation2 + $0xad0] sm:$0xff]
        %v4393 = vld [vmem:[#allocation2 + $0xad8] sm:$0xff]
        %v4394 = vld [vmem:[#allocation2 + $0xae0] sm:$0xff]
        %v4395 = vld [vmem:[#allocation2 + $0xae8] sm:$0xff]
        %v4396 = vld [vmem:[#allocation2 + $0xaf0] sm:$0xff]
        %v4397 = vld [vmem:[#allocation2 + $0xaf8] sm:$0xff]
        %v4398 = vld [vmem:[#allocation2 + $0xb00] sm:$0xff]
        %v4399 = vld [vmem:[#allocation2 + $0xb08] sm:$0xff]
        %v4400 = vld [vmem:[#allocation2 + $0xb10] sm:$0xff]
        %v4401 = vld [vmem:[#allocation2 + $0xb18] sm:$0xff]
        %v4402 = vld [vmem:[#allocation2 + $0xb20] sm:$0xff]
        %v4403 = vld [vmem:[#allocation2 + $0xb28] sm:$0xff]
        %v4404 = vld [vmem:[#allocation2 + $0xb30] sm:$0xff]
        %v4405 = vld [vmem:[#allocation2 + $0xb38] sm:$0xff]
        %v4406 = vld [vmem:[#allocation2 + $0xb40] sm:$0xff]
        %v4407 = vld [vmem:[#allocation2 + $0xb48] sm:$0xff]
        %v4408 = vld [vmem:[#allocation2 + $0xb50] sm:$0xff]
        %v4409 = vld [vmem:[#allocation2 + $0xb58] sm:$0xff]
        %v4410 = vld [vmem:[#allocation2 + $0xb60] sm:$0xff]
        %v4411 = vld [vmem:[#allocation2 + $0xb68] sm:$0xff]
        %v4412 = vld [vmem:[#allocation2 + $0xb70] sm:$0xff]
        %v4413 = vld [vmem:[#allocation2 + $0xb78] sm:$0xff]
        %v4414 = vld [vmem:[#allocation2 + $0xb80] sm:$0xff]
        %v4415 = vld [vmem:[#allocation2 + $0xb88] sm:$0xff]
        %v4416 = vld [vmem:[#allocation2 + $0xb90] sm:$0xff]
        %v4417 = vld [vmem:[#allocation2 + $0xb98] sm:$0xff]
        %v4418 = vld [vmem:[#allocation2 + $0xba0] sm:$0xff]
        %v4419 = vld [vmem:[#allocation2 + $0xba8] sm:$0xff]
        %v4420 = vld [vmem:[#allocation2 + $0xbb0] sm:$0xff]
        %v4421 = vld [vmem:[#allocation2 + $0xbb8] sm:$0xff]
        %v4422 = vld [vmem:[#allocation2 + $0xbc0] sm:$0xff]
        %v4423 = vld [vmem:[#allocation2 + $0xbc8] sm:$0xff]
        %v4424 = vld [vmem:[#allocation2 + $0xbd0] sm:$0xff]
        %v4425 = vld [vmem:[#allocation2 + $0xbd8] sm:$0xff]
        %v4426 = vld [vmem:[#allocation2 + $0xbe0] sm:$0xff]
        %v4427 = vld [vmem:[#allocation2 + $0xbe8] sm:$0xff]
        %v4428 = vld [vmem:[#allocation2 + $0xbf0] sm:$0xff]
        %v4429 = vld [vmem:[#allocation2 + $0xbf8] sm:$0xff]
        %v4430 = vld [vmem:[#allocation2 + $0xc00] sm:$0xff]
        %v4431 = vld [vmem:[#allocation2 + $0xc08] sm:$0xff]
        %v4432 = vld [vmem:[#allocation2 + $0xc10] sm:$0xff]
        %v4433 = vld [vmem:[#allocation2 + $0xc18] sm:$0xff]
        %v4434 = vld [vmem:[#allocation2 + $0xc20] sm:$0xff]
        %v4435 = vld [vmem:[#allocation2 + $0xc28] sm:$0xff]
        %v4436 = vld [vmem:[#allocation2 + $0xc30] sm:$0xff]
        %v4437 = vld [vmem:[#allocation2 + $0xc38] sm:$0xff]
        %v4438 = vld [vmem:[#allocation2 + $0xc40] sm:$0xff]
        %v4439 = vld [vmem:[#allocation2 + $0xc48] sm:$0xff]
        %v4440 = vld [vmem:[#allocation2 + $0xc50] sm:$0xff]
        %v4441 = vld [vmem:[#allocation2 + $0xc58] sm:$0xff]
        %v4442 = vld [vmem:[#allocation2 + $0xc60] sm:$0xff]
        %v4443 = vld [vmem:[#allocation2 + $0xc68] sm:$0xff]
        %v4444 = vld [vmem:[#allocation2 + $0xc70] sm:$0xff]
        %v4445 = vld [vmem:[#allocation2 + $0xc78] sm:$0xff]
        %v4446 = vld [vmem:[%s5] sm:$0xff]
        %v4447 = vld [vmem:[%s5 + $0x8] sm:$0xff]
        %v4448 = vld [vmem:[%s5 + $0x10] sm:$0xff]
        %v4449 = vld [vmem:[%s5 + $0x18] sm:$0xff]
        %4451 = vset.pattern.permute.xlu0 0
        %4452 = vperm.xlu0 %4451, %v4446
        %v4453 = vpop.permute.xlu0 %4452
        %4456 = vset.pattern.permute.xlu0 0
        %4457 = vperm.xlu0 %4456, %v4447
        %v4458 = vpop.permute.xlu0 %4457
        %4461 = vset.pattern.permute.xlu0 0
        %4462 = vperm.xlu0 %4461, %v4448
        %v4463 = vpop.permute.xlu0 %4462
        %4466 = vset.pattern.permute.xlu0 0
        %4467 = vperm.xlu0 %4466, %v4449
        %v4468 = vpop.permute.xlu0 %4467
        %vm4470 = vcmask 261120
        %v4472 = vsel %vm4470, %v4024, 0
        %v4475 = vsel %vm4470, %v4031, 0
        %v4478 = vsel %vm4470, %v4038, 0
        %v4481 = vsel %vm4470, %v4045, 0
        %4483 = vmatprep.subr.mxu0 %v4047
        %4484 = vmatpush1.msra.mxu0 %v4046
        %4485 = vmatprep.subr.mxu0 %v4051
        %4486 = vmatpush1.msra.mxu0 %v4050
        %4487 = vmatprep.subr.mxu0 %v4055
        %4488 = vmatpush1.msra.mxu0 %v4054
        %4489 = vmatprep.subr.mxu0 %v4059
        %4490 = vmatpush1.msra.mxu0 %v4058
        %4491 = vmatprep.subr.mxu0 %v4063
        %4492 = vmatpush1.msra.mxu0 %v4062
        %4493 = vmatprep.subr.mxu0 %v4067
        %4494 = vmatpush1.msra.mxu0 %v4066
        %4495 = vmatprep.subr.mxu0 %v4071
        %4496 = vmatpush1.msra.mxu0 %v4070
        %4497 = vmatprep.subr.mxu0 %v4075
        %4498 = vmatpush1.msra.mxu0 %v4074
        %4499 = vmatprep.subr.mxu0 %v4079
        %4500 = vmatpush1.msra.mxu0 %v4078
        %4501 = vmatprep.subr.mxu0 %v4083
        %4502 = vmatpush1.msra.mxu0 %v4082
        %4503 = vmatprep.subr.mxu0 %v4087
        %4504 = vmatpush1.msra.mxu0 %v4086
        %4505 = vmatprep.subr.mxu0 %v4091
        %4506 = vmatpush1.msra.mxu0 %v4090
        %4507 = vmatprep.subr.mxu0 %v4095
        %4508 = vmatpush1.msra.mxu0 %v4094
        %4509 = vmatprep.subr.mxu0 %v4099
        %4510 = vmatpush1.msra.mxu0 %v4098
        %4511 = vmatprep.subr.mxu0 %v4103
        %4512 = vmatpush1.msra.mxu0 %v4102
        %4513 = vmatprep.subr.mxu0 %v4107
        %4514 = vmatpush1.msra.mxu0 %v4106
        %4515 = vmatprep.subr.mxu0 %v4111
        %4516 = vmatpush1.msra.mxu0 %v4110
        %4517 = vmatprep.subr.mxu0 %v4115
        %4518 = vmatpush1.msra.mxu0 %v4114
        %4519 = vmatprep.subr.mxu0 %v4119
        %4520 = vmatpush1.msra.mxu0 %v4118
        %4521 = vmatprep.subr.mxu0 %v4123
        %4522 = vmatpush1.msra.mxu0 %v4122
        %4523 = vmatprep.subr.mxu0 %v4127
        %4524 = vmatpush1.msra.mxu0 %v4126
        %4525 = vmatprep.subr.mxu0 %v4131
        %4526 = vmatpush1.msra.mxu0 %v4130
        %4527 = vmatprep.subr.mxu0 %v4135
        %4528 = vmatpush1.msra.mxu0 %v4134
        %4529 = vmatprep.subr.mxu0 %v4139
        %4530 = vmatpush1.msra.mxu0 %v4138
        %4531 = vmatprep.subr.mxu0 %v4143
        %4532 = vmatpush1.msra.mxu0 %v4142
        %4533 = vmatprep.subr.mxu0 %v4147
        %4534 = vmatpush1.msra.mxu0 %v4146
        %4535 = vmatprep.subr.mxu0 %v4151
        %4536 = vmatpush1.msra.mxu0 %v4150
        %4537 = vmatprep.subr.mxu0 %v4155
        %4538 = vmatpush1.msra.mxu0 %v4154
        %4539 = vmatprep.subr.mxu0 %v4159
        %4540 = vmatpush1.msra.mxu0 %v4158
        %4541 = vmatprep.subr.mxu0 %v4163
        %4542 = vmatpush1.msra.mxu0 %v4162
        %4543 = vmatprep.subr.mxu0 %v4167
        %4544 = vmatpush1.msra.mxu0 %v4166
        %4545 = vmatprep.subr.mxu0 %v4171
        %4546 = vmatpush1.msra.mxu0 %v4170
        %4547 = vmatprep.mubr.f32.mxu0 %v4019
        %4548 = vmatmul.mubr.f32.gmra.mrb[0].mxu0 %v4018
        %v4549 = vpop.f32.mrb[0].mxu0
        %v4550 = vadd.f32 %v4453, %v4549
        %v4551 = vpop.f32.mrb[0].mxu0
        %v4552 = vadd.f32 %v4453, %v4551
        %4553 = vmatprep.mubr.f32.mxu0 %v4026
        %4554 = vmatmul.mubr.f32.gmra.mrb[0].mxu0 %v4025
        %v4555 = vpop.f32.mrb[0].mxu0
        %v4556 = vadd.f32 %v4458, %v4555
        %v4557 = vpop.f32.mrb[0].mxu0
        %v4558 = vadd.f32 %v4458, %v4557
        %4559 = vmatprep.mubr.f32.mxu0 %v4033
        %4560 = vmatmul.mubr.f32.gmra.mrb[0].mxu0 %v4032
        %v4561 = vpop.f32.mrb[0].mxu0
        %v4562 = vadd.f32 %v4463, %v4561
        %v4563 = vpop.f32.mrb[0].mxu0
        %v4564 = vadd.f32 %v4463, %v4563
        %4565 = vmatprep.mubr.f32.mxu0 %v4040
        %4566 = vmatmul.mubr.f32.gmra.mrb[0].mxu0 %v4039
        %v4567 = vpop.f32.mrb[0].mxu0
        %v4568 = vadd.f32 %v4468, %v4567
        %v4569 = vpop.f32.mrb[0].mxu0
        %v4570 = vadd.f32 %v4468, %v4569
        %4571 = vdwg.mxu0
        %4572 = vmatprep.subr.mxu0 %v4175
        %4573 = vmatpush1.msra.mxu0 %v4174
        %4574 = vmatprep.subr.mxu0 %v4179
        %4575 = vmatpush1.msra.mxu0 %v4178
        %4576 = vmatprep.subr.mxu0 %v4183
        %4577 = vmatpush1.msra.mxu0 %v4182
        %4578 = vmatprep.subr.mxu0 %v4187
        %4579 = vmatpush1.msra.mxu0 %v4186
        %4580 = vmatprep.subr.mxu0 %v4191
        %4581 = vmatpush1.msra.mxu0 %v4190
        %4582 = vmatprep.subr.mxu0 %v4195
        %4583 = vmatpush1.msra.mxu0 %v4194
        %4584 = vmatprep.subr.mxu0 %v4199
        %4585 = vmatpush1.msra.mxu0 %v4198
        %4586 = vmatprep.subr.mxu0 %v4203
        %4587 = vmatpush1.msra.mxu0 %v4202
        %4588 = vmatprep.subr.mxu0 %v4207
        %4589 = vmatpush1.msra.mxu0 %v4206
        %4590 = vmatprep.subr.mxu0 %v4211
        %4591 = vmatpush1.msra.mxu0 %v4210
        %4592 = vmatprep.subr.mxu0 %v4215
        %4593 = vmatpush1.msra.mxu0 %v4214
        %4594 = vmatprep.subr.mxu0 %v4219
        %4595 = vmatpush1.msra.mxu0 %v4218
        %4596 = vmatprep.subr.mxu0 %v4223
        %4597 = vmatpush1.msra.mxu0 %v4222
        %4598 = vmatprep.subr.mxu0 %v4227
        %4599 = vmatpush1.msra.mxu0 %v4226
        %4600 = vmatprep.subr.mxu0 %v4231
        %4601 = vmatpush1.msra.mxu0 %v4230
        %4602 = vmatprep.subr.mxu0 %v4235
        %4603 = vmatpush1.msra.mxu0 %v4234
        %4604 = vmatprep.subr.mxu0 %v4239
        %4605 = vmatpush1.msra.mxu0 %v4238
        %4606 = vmatprep.subr.mxu0 %v4243
        %4607 = vmatpush1.msra.mxu0 %v4242
        %4608 = vmatprep.subr.mxu0 %v4247
        %4609 = vmatpush1.msra.mxu0 %v4246
        %4610 = vmatprep.subr.mxu0 %v4251
        %4611 = vmatpush1.msra.mxu0 %v4250
        %4612 = vmatprep.subr.mxu0 %v4255
        %4613 = vmatpush1.msra.mxu0 %v4254
        %4614 = vmatprep.subr.mxu0 %v4259
        %4615 = vmatpush1.msra.mxu0 %v4258
        %4616 = vmatprep.subr.mxu0 %v4263
        %4617 = vmatpush1.msra.mxu0 %v4262
        %4618 = vmatprep.subr.mxu0 %v4267
        %4619 = vmatpush1.msra.mxu0 %v4266
        %4620 = vmatprep.subr.mxu0 %v4271
        %4621 = vmatpush1.msra.mxu0 %v4270
        %4622 = vmatprep.subr.mxu0 %v4275
        %4623 = vmatpush1.msra.mxu0 %v4274
        %4624 = vmatprep.subr.mxu0 %v4279
        %4625 = vmatpush1.msra.mxu0 %v4278
        %4626 = vmatprep.subr.mxu0 %v4283
        %4627 = vmatpush1.msra.mxu0 %v4282
        %4628 = vmatprep.subr.mxu0 %v4287
        %4629 = vmatpush1.msra.mxu0 %v4286
        %4630 = vmatprep.subr.mxu0 %v4291
        %4631 = vmatpush1.msra.mxu0 %v4290
        %4632 = vmatprep.subr.mxu0 %v4295
        %4633 = vmatpush1.msra.mxu0 %v4294
        %4634 = vmatprep.subr.mxu0 %v4299
        %4635 = vmatpush1.msra.mxu0 %v4298
        %4636 = vmatprep.mubr.f32.mxu0 %v4021
        %4637 = vmatmul.mubr.f32.gmra.mrb[0].mxu0 %v4020
        %v4638 = vpop.f32.mrb[0].mxu0
        %v4639 = vadd.f32 %v4550, %v4638
        %v4640 = vpop.f32.mrb[0].mxu0
        %v4641 = vadd.f32 %v4552, %v4640
        %4642 = vmatprep.mubr.f32.mxu0 %v4028
        %4643 = vmatmul.mubr.f32.gmra.mrb[0].mxu0 %v4027
        %v4644 = vpop.f32.mrb[0].mxu0
        %v4645 = vadd.f32 %v4556, %v4644
        %v4646 = vpop.f32.mrb[0].mxu0
        %v4647 = vadd.f32 %v4558, %v4646
        %4648 = vmatprep.mubr.f32.mxu0 %v4035
        %4649 = vmatmul.mubr.f32.gmra.mrb[0].mxu0 %v4034
        %v4650 = vpop.f32.mrb[0].mxu0
        %v4651 = vadd.f32 %v4562, %v4650
        %v4652 = vpop.f32.mrb[0].mxu0
        %v4653 = vadd.f32 %v4564, %v4652
        %4654 = vmatprep.mubr.f32.mxu0 %v4042
        %4655 = vmatmul.mubr.f32.gmra.mrb[0].mxu0 %v4041
        %v4656 = vpop.f32.mrb[0].mxu0
        %v4657 = vadd.f32 %v4568, %v4656
        %v4658 = vpop.f32.mrb[0].mxu0
        %v4659 = vadd.f32 %v4570, %v4658
        %4660 = vdwg.mxu0
        %4661 = vmatprep.subr.mxu0 %v4303
        %4662 = vmatpush1.msra.mxu0 %v4302
        %4663 = vmatprep.subr.mxu0 %v4307
        %4664 = vmatpush1.msra.mxu0 %v4306
        %4665 = vmatprep.subr.mxu0 %v4311
        %4666 = vmatpush1.msra.mxu0 %v4310
        %4667 = vmatprep.subr.mxu0 %v4315
        %4668 = vmatpush1.msra.mxu0 %v4314
        %4669 = vmatprep.subr.mxu0 %v4319
        %4670 = vmatpush1.msra.mxu0 %v4318
        %4671 = vmatprep.subr.mxu0 %v4323
        %4672 = vmatpush1.msra.mxu0 %v4322
        %4673 = vmatprep.subr.mxu0 %v4327
        %4674 = vmatpush1.msra.mxu0 %v4326
        %4675 = vmatprep.subr.mxu0 %v4331
        %4676 = vmatpush1.msra.mxu0 %v4330
        %4677 = vmatprep.subr.mxu0 %v4335
        %4678 = vmatpush1.msra.mxu0 %v4334
        %4679 = vmatprep.subr.mxu0 %v4339
        %4680 = vmatpush1.msra.mxu0 %v4338
        %4681 = vmatprep.subr.mxu0 %v4343
        %4682 = vmatpush1.msra.mxu0 %v4342
        %4683 = vmatprep.subr.mxu0 %v4347
        %4684 = vmatpush1.msra.mxu0 %v4346
        %4685 = vmatprep.subr.mxu0 %v4351
        %4686 = vmatpush1.msra.mxu0 %v4350
        %4687 = vmatprep.subr.mxu0 %v4355
        %4688 = vmatpush1.msra.mxu0 %v4354
        %4689 = vmatprep.subr.mxu0 %v4359
        %4690 = vmatpush1.msra.mxu0 %v4358
        %4691 = vmatprep.subr.mxu0 %v4363
        %4692 = vmatpush1.msra.mxu0 %v4362
        %4693 = vmatprep.subr.mxu0 %v4367
        %4694 = vmatpush1.msra.mxu0 %v4366
        %4695 = vmatprep.subr.mxu0 %v4371
        %4696 = vmatpush1.msra.mxu0 %v4370
        %4697 = vmatprep.subr.mxu0 %v4375
        %4698 = vmatpush1.msra.mxu0 %v4374
        %4699 = vmatprep.subr.mxu0 %v4379
        %4700 = vmatpush1.msra.mxu0 %v4378
        %4701 = vmatprep.subr.mxu0 %v4383
        %4702 = vmatpush1.msra.mxu0 %v4382
        %4703 = vmatprep.subr.mxu0 %v4387
        %4704 = vmatpush1.msra.mxu0 %v4386
        %4705 = vmatprep.subr.mxu0 %v4391
        %4706 = vmatpush1.msra.mxu0 %v4390
        %4707 = vmatprep.subr.mxu0 %v4395
        %4708 = vmatpush1.msra.mxu0 %v4394
        %4709 = vmatprep.subr.mxu0 %v4399
        %4710 = vmatpush1.msra.mxu0 %v4398
        %4711 = vmatprep.subr.mxu0 %v4403
        %4712 = vmatpush1.msra.mxu0 %v4402
        %4713 = vmatprep.subr.mxu0 %v4407
        %4714 = vmatpush1.msra.mxu0 %v4406
        %4715 = vmatprep.subr.mxu0 %v4411
        %4716 = vmatpush1.msra.mxu0 %v4410
        %4717 = vmatprep.subr.mxu0 %v4415
        %4718 = vmatpush1.msra.mxu0 %v4414
        %4719 = vmatprep.subr.mxu0 %v4419
        %4720 = vmatpush1.msra.mxu0 %v4418
        %4721 = vmatprep.subr.mxu0 %v4423
        %4722 = vmatpush1.msra.mxu0 %v4422
        %4723 = vmatprep.subr.mxu0 %v4427
        %4724 = vmatpush1.msra.mxu0 %v4426
        %4725 = vmatprep.mubr.f32.mxu0 %v4023
        %4726 = vmatmul.mubr.f32.gmra.mrb[0].mxu0 %v4022
        %v4727 = vpop.f32.mrb[0].mxu0
        %v4728 = vadd.f32 %v4639, %v4727
        %v4729 = vpop.f32.mrb[0].mxu0
        %v4730 = vadd.f32 %v4641, %v4729
        %4731 = vmatprep.mubr.f32.mxu0 %v4030
        %4732 = vmatmul.mubr.f32.gmra.mrb[0].mxu0 %v4029
        %v4733 = vpop.f32.mrb[0].mxu0
        %v4734 = vadd.f32 %v4645, %v4733
        %v4735 = vpop.f32.mrb[0].mxu0
        %v4736 = vadd.f32 %v4647, %v4735
        %4737 = vmatprep.mubr.f32.mxu0 %v4037
        %4738 = vmatmul.mubr.f32.gmra.mrb[0].mxu0 %v4036
        %v4739 = vpop.f32.mrb[0].mxu0
        %v4740 = vadd.f32 %v4651, %v4739
        %v4741 = vpop.f32.mrb[0].mxu0
        %v4742 = vadd.f32 %v4653, %v4741
        %4743 = vmatprep.mubr.f32.mxu0 %v4044
        %4744 = vmatmul.mubr.f32.gmra.mrb[0].mxu0 %v4043
        %v4745 = vpop.f32.mrb[0].mxu0
        %v4746 = vadd.f32 %v4657, %v4745
        %v4747 = vpop.f32.mrb[0].mxu0
        %v4748 = vadd.f32 %v4659, %v4747
        %4749 = vdwg.mxu0
        %4750 = vmatprep.subr.mxu0 %v4431
        %4751 = vmatpush1.msra.mxu0 %v4430
        %4752 = vmatprep.subr.mxu0 %v4435
        %4753 = vmatpush1.msra.mxu0 %v4434
        %4754 = vmatprep.subr.mxu0 %v4439
        %4755 = vmatpush1.msra.mxu0 %v4438
        %4756 = vmatprep.subr.mxu0 %v4443
        %4757 = vmatpush1.msra.mxu0 %v4442
        %4758 = vmatprep.subr.mxu0 0.0
        %4759 = vmatpush1.msra.mxu0 0.0
        %4760 = vmatprep.subr.mxu0 0.0
        %4761 = vmatpush1.msra.mxu0 0.0
        %4762 = vmatprep.subr.mxu0 0.0
        %4763 = vmatpush1.msra.mxu0 0.0
        %4764 = vmatprep.subr.mxu0 0.0
        %4765 = vmatpush1.msra.mxu0 0.0
        %4766 = vmatprep.subr.mxu0 0.0
        %4767 = vmatpush1.msra.mxu0 0.0
        %4768 = vmatprep.subr.mxu0 0.0
        %4769 = vmatpush1.msra.mxu0 0.0
        %4770 = vmatprep.subr.mxu0 0.0
        %4771 = vmatpush1.msra.mxu0 0.0
        %4772 = vmatprep.subr.mxu0 0.0
        %4773 = vmatpush1.msra.mxu0 0.0
        %4774 = vmatprep.subr.mxu0 0.0
        %4775 = vmatpush1.msra.mxu0 0.0
        %4776 = vmatprep.subr.mxu0 0.0
        %4777 = vmatpush1.msra.mxu0 0.0
        %4778 = vmatprep.subr.mxu0 0.0
        %4779 = vmatpush1.msra.mxu0 0.0
        %4780 = vmatprep.subr.mxu0 0.0
        %4781 = vmatpush1.msra.mxu0 0.0
        %4782 = vmatprep.subr.mxu0 0.0
        %4783 = vmatpush1.msra.mxu0 0.0
        %4784 = vmatprep.subr.mxu0 0.0
        %4785 = vmatpush1.msra.mxu0 0.0
        %4786 = vmatprep.subr.mxu0 0.0
        %4787 = vmatpush1.msra.mxu0 0.0
        %4788 = vmatprep.subr.mxu0 0.0
        %4789 = vmatpush1.msra.mxu0 0.0
        %4790 = vmatprep.subr.mxu0 0.0
        %4791 = vmatpush1.msra.mxu0 0.0
        %4792 = vmatprep.subr.mxu0 0.0
        %4793 = vmatpush1.msra.mxu0 0.0
        %4794 = vmatprep.subr.mxu0 0.0
        %4795 = vmatpush1.msra.mxu0 0.0
        %4796 = vmatprep.subr.mxu0 0.0
        %4797 = vmatpush1.msra.mxu0 0.0
        %4798 = vmatprep.subr.mxu0 0.0
        %4799 = vmatpush1.msra.mxu0 0.0
        %4800 = vmatprep.subr.mxu0 0.0
        %4801 = vmatpush1.msra.mxu0 0.0
        %4802 = vmatprep.subr.mxu0 0.0
        %4803 = vmatpush1.msra.mxu0 0.0
        %4804 = vmatprep.subr.mxu0 0.0
        %4805 = vmatpush1.msra.mxu0 0.0
        %4806 = vmatprep.subr.mxu0 0.0
        %4807 = vmatpush1.msra.mxu0 0.0
        %4808 = vmatprep.subr.mxu0 0.0
        %4809 = vmatpush1.msra.mxu0 0.0
        %4810 = vmatprep.subr.mxu0 0.0
        %4811 = vmatpush1.msra.mxu0 0.0
        %4812 = vmatprep.subr.mxu0 0.0
        %4813 = vmatpush1.msra.mxu0 0.0
        %4814 = vmatprep.mubr.f32.mxu0 0.0
        %4815 = vmatmul.mubr.f32.gmra.mrb[0].mxu0 %v4472
        %v4816 = vpop.f32.mrb[0].mxu0
        %v4817 = vadd.f32 %v4728, %v4816
        %v4818 = vpop.f32.mrb[0].mxu0
        %v4819 = vadd.f32 %v4730, %v4818
        %4820 = vmatprep.mubr.f32.mxu0 0.0
        %4821 = vmatmul.mubr.f32.gmra.mrb[0].mxu0 %v4475
        %v4822 = vpop.f32.mrb[0].mxu0
        %v4823 = vadd.f32 %v4734, %v4822
        %v4824 = vpop.f32.mrb[0].mxu0
        %v4825 = vadd.f32 %v4736, %v4824
        %4826 = vmatprep.mubr.f32.mxu0 0.0
        %4827 = vmatmul.mubr.f32.gmra.mrb[0].mxu0 %v4478
        %v4828 = vpop.f32.mrb[0].mxu0
        %v4829 = vadd.f32 %v4740, %v4828
        %v4830 = vpop.f32.mrb[0].mxu0
        %v4831 = vadd.f32 %v4742, %v4830
        %4832 = vmatprep.mubr.f32.mxu0 0.0
        %4833 = vmatmul.mubr.f32.gmra.mrb[0].mxu0 %v4481
        %v4834 = vpop.f32.mrb[0].mxu0
        %v4835 = vadd.f32 %v4746, %v4834
        %v4836 = vpop.f32.mrb[0].mxu0
        %v4837 = vadd.f32 %v4748, %v4836
        %4838 = vdwg.mxu0
        %4839 = vmatprep.subr.mxu0 %v4049
        %4840 = vmatpush1.msra.mxu0 %v4048
        %4841 = vmatprep.subr.mxu0 %v4053
        %4842 = vmatpush1.msra.mxu0 %v4052
        %4843 = vmatprep.subr.mxu0 %v4057
        %4844 = vmatpush1.msra.mxu0 %v4056
        %4845 = vmatprep.subr.mxu0 %v4061
        %4846 = vmatpush1.msra.mxu0 %v4060
        %4847 = vmatprep.subr.mxu0 %v4065
        %4848 = vmatpush1.msra.mxu0 %v4064
        %4849 = vmatprep.subr.mxu0 %v4069
        %4850 = vmatpush1.msra.mxu0 %v4068
        %4851 = vmatprep.subr.mxu0 %v4073
        %4852 = vmatpush1.msra.mxu0 %v4072
        %4853 = vmatprep.subr.mxu0 %v4077
        %4854 = vmatpush1.msra.mxu0 %v4076
        %4855 = vmatprep.subr.mxu0 %v4081
        %4856 = vmatpush1.msra.mxu0 %v4080
        %4857 = vmatprep.subr.mxu0 %v4085
        %4858 = vmatpush1.msra.mxu0 %v4084
        %4859 = vmatprep.subr.mxu0 %v4089
        %4860 = vmatpush1.msra.mxu0 %v4088
        %4861 = vmatprep.subr.mxu0 %v4093
        %4862 = vmatpush1.msra.mxu0 %v4092
        %4863 = vmatprep.subr.mxu0 %v4097
        %4864 = vmatpush1.msra.mxu0 %v4096
        %4865 = vmatprep.subr.mxu0 %v4101
        %4866 = vmatpush1.msra.mxu0 %v4100
        %4867 = vmatprep.subr.mxu0 %v4105
        %4868 = vmatpush1.msra.mxu0 %v4104
        %4869 = vmatprep.subr.mxu0 %v4109
        %4870 = vmatpush1.msra.mxu0 %v4108
        %4871 = vmatprep.subr.mxu0 %v4113
        %4872 = vmatpush1.msra.mxu0 %v4112
        %4873 = vmatprep.subr.mxu0 %v4117
        %4874 = vmatpush1.msra.mxu0 %v4116
        %4875 = vmatprep.subr.mxu0 %v4121
        %4876 = vmatpush1.msra.mxu0 %v4120
        %4877 = vmatprep.subr.mxu0 %v4125
        %4878 = vmatpush1.msra.mxu0 %v4124
        %4879 = vmatprep.subr.mxu0 %v4129
        %4880 = vmatpush1.msra.mxu0 %v4128
        %4881 = vmatprep.subr.mxu0 %v4133
        %4882 = vmatpush1.msra.mxu0 %v4132
        %4883 = vmatprep.subr.mxu0 %v4137
        %4884 = vmatpush1.msra.mxu0 %v4136
        %4885 = vmatprep.subr.mxu0 %v4141
        %4886 = vmatpush1.msra.mxu0 %v4140
        %4887 = vmatprep.subr.mxu0 %v4145
        %4888 = vmatpush1.msra.mxu0 %v4144
        %4889 = vmatprep.subr.mxu0 %v4149
        %4890 = vmatpush1.msra.mxu0 %v4148
        %4891 = vmatprep.subr.mxu0 %v4153
        %4892 = vmatpush1.msra.mxu0 %v4152
        %4893 = vmatprep.subr.mxu0 %v4157
        %4894 = vmatpush1.msra.mxu0 %v4156
        %4895 = vmatprep.subr.mxu0 %v4161
        %4896 = vmatpush1.msra.mxu0 %v4160
        %4897 = vmatprep.subr.mxu0 %v4165
        %4898 = vmatpush1.msra.mxu0 %v4164
        %4899 = vmatprep.subr.mxu0 %v4169
        %4900 = vmatpush1.msra.mxu0 %v4168
        %4901 = vmatprep.subr.mxu0 %v4173
        %4902 = vmatpush1.msra.mxu0 %v4172
        %4903 = vmatprep.mubr.f32.mxu0 %v4019
        %4904 = vmatmul.mubr.f32.gmra.mrb[0].mxu0 %v4018
        %v4905 = vpop.f32.mrb[0].mxu0
        %v4906 = vadd.f32 %v4453, %v4905
        %v4907 = vpop.f32.mrb[0].mxu0
        %v4908 = vadd.f32 %v4453, %v4907
        %4909 = vmatprep.mubr.f32.mxu0 %v4026
        %4910 = vmatmul.mubr.f32.gmra.mrb[0].mxu0 %v4025
        %v4911 = vpop.f32.mrb[0].mxu0
        %v4912 = vadd.f32 %v4458, %v4911
        %v4913 = vpop.f32.mrb[0].mxu0
        %v4914 = vadd.f32 %v4458, %v4913
        %4915 = vmatprep.mubr.f32.mxu0 %v4033
        %4916 = vmatmul.mubr.f32.gmra.mrb[0].mxu0 %v4032
        %v4917 = vpop.f32.mrb[0].mxu0
        %v4918 = vadd.f32 %v4463, %v4917
        %v4919 = vpop.f32.mrb[0].mxu0
        %v4920 = vadd.f32 %v4463, %v4919
        %4921 = vmatprep.mubr.f32.mxu0 %v4040
        %4922 = vmatmul.mubr.f32.gmra.mrb[0].mxu0 %v4039
        %v4923 = vpop.f32.mrb[0].mxu0
        %v4924 = vadd.f32 %v4468, %v4923
        %v4925 = vpop.f32.mrb[0].mxu0
        %v4926 = vadd.f32 %v4468, %v4925
        %4927 = vdwg.mxu0
        %4928 = vmatprep.subr.mxu0 %v4177
        %4929 = vmatpush1.msra.mxu0 %v4176
        %4930 = vmatprep.subr.mxu0 %v4181
        %4931 = vmatpush1.msra.mxu0 %v4180
        %4932 = vmatprep.subr.mxu0 %v4185
        %4933 = vmatpush1.msra.mxu0 %v4184
        %4934 = vmatprep.subr.mxu0 %v4189
        %4935 = vmatpush1.msra.mxu0 %v4188
        %4936 = vmatprep.subr.mxu0 %v4193
        %4937 = vmatpush1.msra.mxu0 %v4192
        %4938 = vmatprep.subr.mxu0 %v4197
        %4939 = vmatpush1.msra.mxu0 %v4196
        %4940 = vmatprep.subr.mxu0 %v4201
        %4941 = vmatpush1.msra.mxu0 %v4200
        %4942 = vmatprep.subr.mxu0 %v4205
        %4943 = vmatpush1.msra.mxu0 %v4204
        %4944 = vmatprep.subr.mxu0 %v4209
        %4945 = vmatpush1.msra.mxu0 %v4208
        %4946 = vmatprep.subr.mxu0 %v4213
        %4947 = vmatpush1.msra.mxu0 %v4212
        %4948 = vmatprep.subr.mxu0 %v4217
        %4949 = vmatpush1.msra.mxu0 %v4216
        %4950 = vmatprep.subr.mxu0 %v4221
        %4951 = vmatpush1.msra.mxu0 %v4220
        %4952 = vmatprep.subr.mxu0 %v4225
        %4953 = vmatpush1.msra.mxu0 %v4224
        %4954 = vmatprep.subr.mxu0 %v4229
        %4955 = vmatpush1.msra.mxu0 %v4228
        %4956 = vmatprep.subr.mxu0 %v4233
        %4957 = vmatpush1.msra.mxu0 %v4232
        %4958 = vmatprep.subr.mxu0 %v4237
        %4959 = vmatpush1.msra.mxu0 %v4236
        %4960 = vmatprep.subr.mxu0 %v4241
        %4961 = vmatpush1.msra.mxu0 %v4240
        %4962 = vmatprep.subr.mxu0 %v4245
        %4963 = vmatpush1.msra.mxu0 %v4244
        %4964 = vmatprep.subr.mxu0 %v4249
        %4965 = vmatpush1.msra.mxu0 %v4248
        %4966 = vmatprep.subr.mxu0 %v4253
        %4967 = vmatpush1.msra.mxu0 %v4252
        %4968 = vmatprep.subr.mxu0 %v4257
        %4969 = vmatpush1.msra.mxu0 %v4256
        %4970 = vmatprep.subr.mxu0 %v4261
        %4971 = vmatpush1.msra.mxu0 %v4260
        %4972 = vmatprep.subr.mxu0 %v4265
        %4973 = vmatpush1.msra.mxu0 %v4264
        %4974 = vmatprep.subr.mxu0 %v4269
        %4975 = vmatpush1.msra.mxu0 %v4268
        %4976 = vmatprep.subr.mxu0 %v4273
        %4977 = vmatpush1.msra.mxu0 %v4272
        %4978 = vmatprep.subr.mxu0 %v4277
        %4979 = vmatpush1.msra.mxu0 %v4276
        %4980 = vmatprep.subr.mxu0 %v4281
        %4981 = vmatpush1.msra.mxu0 %v4280
        %4982 = vmatprep.subr.mxu0 %v4285
        %4983 = vmatpush1.msra.mxu0 %v4284
        %4984 = vmatprep.subr.mxu0 %v4289
        %4985 = vmatpush1.msra.mxu0 %v4288
        %4986 = vmatprep.subr.mxu0 %v4293
        %4987 = vmatpush1.msra.mxu0 %v4292
        %4988 = vmatprep.subr.mxu0 %v4297
        %4989 = vmatpush1.msra.mxu0 %v4296
        %4990 = vmatprep.subr.mxu0 %v4301
        %4991 = vmatpush1.msra.mxu0 %v4300
        %4992 = vmatprep.mubr.f32.mxu0 %v4021
        %4993 = vmatmul.mubr.f32.gmra.mrb[0].mxu0 %v4020
        %v4994 = vpop.f32.mrb[0].mxu0
        %v4995 = vadd.f32 %v4906, %v4994
        %v4996 = vpop.f32.mrb[0].mxu0
        %v4997 = vadd.f32 %v4908, %v4996
        %4998 = vmatprep.mubr.f32.mxu0 %v4028
        %4999 = vmatmul.mubr.f32.gmra.mrb[0].mxu0 %v4027
        %v5000 = vpop.f32.mrb[0].mxu0
        %v5001 = vadd.f32 %v4912, %v5000
        %v5002 = vpop.f32.mrb[0].mxu0
        %v5003 = vadd.f32 %v4914, %v5002
        %5004 = vmatprep.mubr.f32.mxu0 %v4035
        %5005 = vmatmul.mubr.f32.gmra.mrb[0].mxu0 %v4034
        %v5006 = vpop.f32.mrb[0].mxu0
        %v5007 = vadd.f32 %v4918, %v5006
        %v5008 = vpop.f32.mrb[0].mxu0
        %v5009 = vadd.f32 %v4920, %v5008
        %5010 = vmatprep.mubr.f32.mxu0 %v4042
        %5011 = vmatmul.mubr.f32.gmra.mrb[0].mxu0 %v4041
        %v5012 = vpop.f32.mrb[0].mxu0
        %v5013 = vadd.f32 %v4924, %v5012
        %v5014 = vpop.f32.mrb[0].mxu0
        %v5015 = vadd.f32 %v4926, %v5014
        %5016 = vdwg.mxu0
        %5017 = vmatprep.subr.mxu0 %v4305
        %5018 = vmatpush1.msra.mxu0 %v4304
        %5019 = vmatprep.subr.mxu0 %v4309
        %5020 = vmatpush1.msra.mxu0 %v4308
        %5021 = vmatprep.subr.mxu0 %v4313
        %5022 = vmatpush1.msra.mxu0 %v4312
        %5023 = vmatprep.subr.mxu0 %v4317
        %5024 = vmatpush1.msra.mxu0 %v4316
        %5025 = vmatprep.subr.mxu0 %v4321
        %5026 = vmatpush1.msra.mxu0 %v4320
        %5027 = vmatprep.subr.mxu0 %v4325
        %5028 = vmatpush1.msra.mxu0 %v4324
        %5029 = vmatprep.subr.mxu0 %v4329
        %5030 = vmatpush1.msra.mxu0 %v4328
        %5031 = vmatprep.subr.mxu0 %v4333
        %5032 = vmatpush1.msra.mxu0 %v4332
        %5033 = vmatprep.subr.mxu0 %v4337
        %5034 = vmatpush1.msra.mxu0 %v4336
        %5035 = vmatprep.subr.mxu0 %v4341
        %5036 = vmatpush1.msra.mxu0 %v4340
        %5037 = vmatprep.subr.mxu0 %v4345
        %5038 = vmatpush1.msra.mxu0 %v4344
        %5039 = vmatprep.subr.mxu0 %v4349
        %5040 = vmatpush1.msra.mxu0 %v4348
        %5041 = vmatprep.subr.mxu0 %v4353
        %5042 = vmatpush1.msra.mxu0 %v4352
        %5043 = vmatprep.subr.mxu0 %v4357
        %5044 = vmatpush1.msra.mxu0 %v4356
        %5045 = vmatprep.subr.mxu0 %v4361
        %5046 = vmatpush1.msra.mxu0 %v4360
        %5047 = vmatprep.subr.mxu0 %v4365
        %5048 = vmatpush1.msra.mxu0 %v4364
        %5049 = vmatprep.subr.mxu0 %v4369
        %5050 = vmatpush1.msra.mxu0 %v4368
        %5051 = vmatprep.subr.mxu0 %v4373
        %5052 = vmatpush1.msra.mxu0 %v4372
        %5053 = vmatprep.subr.mxu0 %v4377
        %5054 = vmatpush1.msra.mxu0 %v4376
        %5055 = vmatprep.subr.mxu0 %v4381
        %5056 = vmatpush1.msra.mxu0 %v4380
        %5057 = vmatprep.subr.mxu0 %v4385
        %5058 = vmatpush1.msra.mxu0 %v4384
        %5059 = vmatprep.subr.mxu0 %v4389
        %5060 = vmatpush1.msra.mxu0 %v4388
        %5061 = vmatprep.subr.mxu0 %v4393
        %5062 = vmatpush1.msra.mxu0 %v4392
        %5063 = vmatprep.subr.mxu0 %v4397
        %5064 = vmatpush1.msra.mxu0 %v4396
        %5065 = vmatprep.subr.mxu0 %v4401
        %5066 = vmatpush1.msra.mxu0 %v4400
        %5067 = vmatprep.subr.mxu0 %v4405
        %5068 = vmatpush1.msra.mxu0 %v4404
        %5069 = vmatprep.subr.mxu0 %v4409
        %5070 = vmatpush1.msra.mxu0 %v4408
        %5071 = vmatprep.subr.mxu0 %v4413
        %5072 = vmatpush1.msra.mxu0 %v4412
        %5073 = vmatprep.subr.mxu0 %v4417
        %5074 = vmatpush1.msra.mxu0 %v4416
        %5075 = vmatprep.subr.mxu0 %v4421
        %5076 = vmatpush1.msra.mxu0 %v4420
        %5077 = vmatprep.subr.mxu0 %v4425
        %5078 = vmatpush1.msra.mxu0 %v4424
        %5079 = vmatprep.subr.mxu0 %v4429
        %5080 = vmatpush1.msra.mxu0 %v4428
        %5081 = vmatprep.mubr.f32.mxu0 %v4023
        %5082 = vmatmul.mubr.f32.gmra.mrb[0].mxu0 %v4022
        %v5083 = vpop.f32.mrb[0].mxu0
        %v5084 = vadd.f32 %v4995, %v5083
        %v5085 = vpop.f32.mrb[0].mxu0
        %v5086 = vadd.f32 %v4997, %v5085
        %5087 = vmatprep.mubr.f32.mxu0 %v4030
        %5088 = vmatmul.mubr.f32.gmra.mrb[0].mxu0 %v4029
        %v5089 = vpop.f32.mrb[0].mxu0
        %v5090 = vadd.f32 %v5001, %v5089
        %v5091 = vpop.f32.mrb[0].mxu0
        %v5092 = vadd.f32 %v5003, %v5091
        %5093 = vmatprep.mubr.f32.mxu0 %v4037
        %5094 = vmatmul.mubr.f32.gmra.mrb[0].mxu0 %v4036
        %v5095 = vpop.f32.mrb[0].mxu0
        %v5096 = vadd.f32 %v5007, %v5095
        %v5097 = vpop.f32.mrb[0].mxu0
        %v5098 = vadd.f32 %v5009, %v5097
        %5099 = vmatprep.mubr.f32.mxu0 %v4044
        %5100 = vmatmul.mubr.f32.gmra.mrb[0].mxu0 %v4043
        %v5101 = vpop.f32.mrb[0].mxu0
        %v5102 = vadd.f32 %v5013, %v5101
        %v5103 = vpop.f32.mrb[0].mxu0
        %v5104 = vadd.f32 %v5015, %v5103
        %5105 = vdwg.mxu0
        %5106 = vmatprep.subr.mxu0 %v4433
        %5107 = vmatpush1.msra.mxu0 %v4432
        %5108 = vmatprep.subr.mxu0 %v4437
        %5109 = vmatpush1.msra.mxu0 %v4436
        %5110 = vmatprep.subr.mxu0 %v4441
        %5111 = vmatpush1.msra.mxu0 %v4440
        %5112 = vmatprep.subr.mxu0 %v4445
        %5113 = vmatpush1.msra.mxu0 %v4444
        %5114 = vmatprep.subr.mxu0 0.0
        %5115 = vmatpush1.msra.mxu0 0.0
        %5116 = vmatprep.subr.mxu0 0.0
        %5117 = vmatpush1.msra.mxu0 0.0
        %5118 = vmatprep.subr.mxu0 0.0
        %5119 = vmatpush1.msra.mxu0 0.0
        %5120 = vmatprep.subr.mxu0 0.0
        %5121 = vmatpush1.msra.mxu0 0.0
        %5122 = vmatprep.subr.mxu0 0.0
        %5123 = vmatpush1.msra.mxu0 0.0
        %5124 = vmatprep.subr.mxu0 0.0
        %5125 = vmatpush1.msra.mxu0 0.0
        %5126 = vmatprep.subr.mxu0 0.0
        %5127 = vmatpush1.msra.mxu0 0.0
        %5128 = vmatprep.subr.mxu0 0.0
        %5129 = vmatpush1.msra.mxu0 0.0
        %5130 = vmatprep.subr.mxu0 0.0
        %5131 = vmatpush1.msra.mxu0 0.0
        %5132 = vmatprep.subr.mxu0 0.0
        %5133 = vmatpush1.msra.mxu0 0.0
        %5134 = vmatprep.subr.mxu0 0.0
        %5135 = vmatpush1.msra.mxu0 0.0
        %5136 = vmatprep.subr.mxu0 0.0
        %5137 = vmatpush1.msra.mxu0 0.0
        %5138 = vmatprep.subr.mxu0 0.0
        %5139 = vmatpush1.msra.mxu0 0.0
        %5140 = vmatprep.subr.mxu0 0.0
        %5141 = vmatpush1.msra.mxu0 0.0
        %5142 = vmatprep.subr.mxu0 0.0
        %5143 = vmatpush1.msra.mxu0 0.0
        %5144 = vmatprep.subr.mxu0 0.0
        %5145 = vmatpush1.msra.mxu0 0.0
        %5146 = vmatprep.subr.mxu0 0.0
        %5147 = vmatpush1.msra.mxu0 0.0
        %5148 = vmatprep.subr.mxu0 0.0
        %5149 = vmatpush1.msra.mxu0 0.0
        %5150 = vmatprep.subr.mxu0 0.0
        %5151 = vmatpush1.msra.mxu0 0.0
        %5152 = vmatprep.subr.mxu0 0.0
        %5153 = vmatpush1.msra.mxu0 0.0
        %5154 = vmatprep.subr.mxu0 0.0
        %5155 = vmatpush1.msra.mxu0 0.0
        %5156 = vmatprep.subr.mxu0 0.0
        %5157 = vmatpush1.msra.mxu0 0.0
        %5158 = vmatprep.subr.mxu0 0.0
        %5159 = vmatpush1.msra.mxu0 0.0
        %5160 = vmatprep.subr.mxu0 0.0
        %5161 = vmatpush1.msra.mxu0 0.0
        %5162 = vmatprep.subr.mxu0 0.0
        %5163 = vmatpush1.msra.mxu0 0.0
        %5164 = vmatprep.subr.mxu0 0.0
        %5165 = vmatpush1.msra.mxu0 0.0
        %5166 = vmatprep.subr.mxu0 0.0
        %5167 = vmatpush1.msra.mxu0 0.0
        %5168 = vmatprep.subr.mxu0 0.0
        %5169 = vmatpush1.msra.mxu0 0.0
        %5170 = vmatprep.mubr.f32.mxu0 0.0
        %5171 = vmatmul.mubr.f32.gmra.mrb[0].mxu0 %v4472
        %v5172 = vpop.f32.mrb[0].mxu0
        %v5173 = vadd.f32 %v5084, %v5172
        %v5174 = vpop.f32.mrb[0].mxu0
        %v5175 = vadd.f32 %v5086, %v5174
        %5176 = vmatprep.mubr.f32.mxu0 0.0
        %5177 = vmatmul.mubr.f32.gmra.mrb[0].mxu0 %v4475
        %v5178 = vpop.f32.mrb[0].mxu0
        %v5179 = vadd.f32 %v5090, %v5178
        %v5180 = vpop.f32.mrb[0].mxu0
        %v5181 = vadd.f32 %v5092, %v5180
        %5182 = vmatprep.mubr.f32.mxu0 0.0
        %5183 = vmatmul.mubr.f32.gmra.mrb[0].mxu0 %v4478
        %v5184 = vpop.f32.mrb[0].mxu0
        %v5185 = vadd.f32 %v5096, %v5184
        %v5186 = vpop.f32.mrb[0].mxu0
        %v5187 = vadd.f32 %v5098, %v5186
        %5188 = vmatprep.mubr.f32.mxu0 0.0
        %5189 = vmatmul.mubr.f32.gmra.mrb[0].mxu0 %v4481
        %v5190 = vpop.f32.mrb[0].mxu0
        %v5191 = vadd.f32 %v5102, %v5190
        %v5192 = vpop.f32.mrb[0].mxu0
        %v5193 = vadd.f32 %v5104, %v5192
        %5194 = vdwg.mxu0
        %vm5195 = vcmp.ge.f32.partialorder %v4817, 0.0
        %vm5196 = vcmp.ge.f32.partialorder %v4819, 0.0
        %vm5197 = vcmp.ge.f32.partialorder %v5173, 0.0
        %vm5198 = vcmp.ge.f32.partialorder %v5175, 0.0
        %vm5199 = vcmp.ge.f32.partialorder %v4823, 0.0
        %vm5200 = vcmp.ge.f32.partialorder %v4825, 0.0
        %vm5201 = vcmp.ge.f32.partialorder %v5179, 0.0
        %vm5202 = vcmp.ge.f32.partialorder %v5181, 0.0
        %vm5203 = vcmp.ge.f32.partialorder %v4829, 0.0
        %vm5204 = vcmp.ge.f32.partialorder %v4831, 0.0
        %vm5205 = vcmp.ge.f32.partialorder %v5185, 0.0
        %vm5206 = vcmp.ge.f32.partialorder %v5187, 0.0
        %vm5207 = vcmp.ge.f32.partialorder %v4835, 0.0
        %vm5208 = vcmp.ge.f32.partialorder %v4837, 0.0
        %vm5209 = vcmp.ge.f32.partialorder %v5191, 0.0
        %vm5210 = vcmp.ge.f32.partialorder %v5193, 0.0
        %s5211 = sld [smem:[#allocation11 + $0x1]]
        %v5212 = vstv %s5211
        %v5213 = vmul.f32 %v5212, %v4817
        %v5214 = vmul.f32 %v5212, %v4819
        %v5215 = vmul.f32 %v5212, %v5173
        %v5216 = vmul.f32 %v5212, %v5175
        %v5217 = vmul.f32 %v5212, %v4823
        %v5218 = vmul.f32 %v5212, %v4825
        %v5219 = vmul.f32 %v5212, %v5179
        %v5220 = vmul.f32 %v5212, %v5181
        %v5221 = vmul.f32 %v5212, %v4829
        %v5222 = vmul.f32 %v5212, %v4831
        %v5223 = vmul.f32 %v5212, %v5185
        %v5224 = vmul.f32 %v5212, %v5187
        %v5225 = vmul.f32 %v5212, %v4835
        %v5226 = vmul.f32 %v5212, %v4837
        %v5227 = vmul.f32 %v5212, %v5191
        %v5228 = vmul.f32 %v5212, %v5193
        %v5229 = vsel %vm5195, %v4817, %v5213
        %v5230 = vsel %vm5196, %v4819, %v5214
        %v5231 = vsel %vm5197, %v5173, %v5215
        %v5232 = vsel %vm5198, %v5175, %v5216
        %v5233 = vsel %vm5199, %v4823, %v5217
        %v5234 = vsel %vm5200, %v4825, %v5218
        %v5235 = vsel %vm5201, %v5179, %v5219
        %v5236 = vsel %vm5202, %v5181, %v5220
        %v5237 = vsel %vm5203, %v4829, %v5221
        %v5238 = vsel %vm5204, %v4831, %v5222
        %v5239 = vsel %vm5205, %v5185, %v5223
        %v5240 = vsel %vm5206, %v5187, %v5224
        %v5241 = vsel %vm5207, %v4835, %v5225
        %v5242 = vsel %vm5208, %v4837, %v5226
        %v5243 = vsel %vm5209, %v5191, %v5227
        %v5244 = vsel %vm5210, %v5193, %v5228
        %v5245 = vsel %vm1279, %v5229, 0.0
        %v5246 = vsel %vm1280, %v5230, 0.0
        %v5247 = vsel %vm1281, %v5231, 0.0
        %v5248 = vsel %vm1282, %v5232, 0.0
        %v5249 = vsel %vm1279, %v5233, 0.0
        %v5250 = vsel %vm1280, %v5234, 0.0
        %v5251 = vsel %vm1281, %v5235, 0.0
        %v5252 = vsel %vm1282, %v5236, 0.0
        %v5253 = vsel %vm1279, %v5237, 0.0
        %v5254 = vsel %vm1280, %v5238, 0.0
        %v5255 = vsel %vm1281, %v5239, 0.0
        %v5256 = vsel %vm1282, %v5240, 0.0
        %v5257 = vsel %vm1279, %v5241, 0.0
        %v5258 = vsel %vm1280, %v5242, 0.0
        %v5259 = vsel %vm1281, %v5243, 0.0
        %v5260 = vsel %vm1282, %v5244, 0.0
        %5277 = vrot.lane.b32.xlu0 %v5245, 42
        %v5278 = vpop.permute.xlu0 %5277
        %5279 = vrot.lane.b32.xlu0 %v5246, 42
        %v5280 = vpop.permute.xlu0 %5279
        %5281 = vrot.lane.b32.xlu0 %v5247, 42
        %v5282 = vpop.permute.xlu0 %5281
        %5283 = vrot.lane.b32.xlu0 %v5248, 42
        %v5284 = vpop.permute.xlu0 %5283
        %5285 = vrot.lane.b32.xlu0 %v5249, 42
        %v5286 = vpop.permute.xlu0 %5285
        %5287 = vrot.lane.b32.xlu0 %v5250, 42
        %v5288 = vpop.permute.xlu0 %5287
        %5289 = vrot.lane.b32.xlu0 %v5251, 42
        %v5290 = vpop.permute.xlu0 %5289
        %5291 = vrot.lane.b32.xlu0 %v5252, 42
        %v5292 = vpop.permute.xlu0 %5291
        %5293 = vrot.lane.b32.xlu0 %v5253, 42
        %v5294 = vpop.permute.xlu0 %5293
        %5295 = vrot.lane.b32.xlu0 %v5254, 42
        %v5296 = vpop.permute.xlu0 %5295
        %5297 = vrot.lane.b32.xlu0 %v5255, 42
        %v5298 = vpop.permute.xlu0 %5297
        %5299 = vrot.lane.b32.xlu0 %v5256, 42
        %v5300 = vpop.permute.xlu0 %5299
        %5301 = vrot.lane.b32.xlu0 %v5257, 42
        %v5302 = vpop.permute.xlu0 %5301
        %5303 = vrot.lane.b32.xlu0 %v5258, 42
        %v5304 = vpop.permute.xlu0 %5303
        %5305 = vrot.lane.b32.xlu0 %v5259, 42
        %v5306 = vpop.permute.xlu0 %5305
        %5307 = vrot.lane.b32.xlu0 %v5260, 42
        %v5308 = vpop.permute.xlu0 %5307
        %v5309 = vsel %vm1347, %v5278, %v5280
        %v5310 = vsel %vm1347, %v5280, %v5282
        %v5311 = vsel %vm1347, %v5282, %v5284
        %v5312 = vsel %vm1347, %v5286, %v5288
        %v5313 = vsel %vm1347, %v5288, %v5290
        %v5314 = vsel %vm1347, %v5290, %v5292
        %v5315 = vsel %vm1347, %v5294, %v5296
        %v5316 = vsel %vm1347, %v5296, %v5298
        %v5317 = vsel %vm1347, %v5298, %v5300
        %v5318 = vsel %vm1347, %v5302, %v5304
        %v5319 = vsel %vm1347, %v5304, %v5306
        %v5320 = vsel %vm1347, %v5306, %v5308
        %5337 = vst.msk [vmem:[#allocation3] sm:$0xff] %vm1376, %v5278
        %5338 = vst [vmem:[#allocation3 + $0x8] sm:$0xff] %v5309
        %5339 = vst [vmem:[#allocation3 + $0x10] sm:$0xff] %v5310
        %5340 = vst.msk [vmem:[#allocation3 + $0x18] sm:$0xff] %vm1380, %v5311
        %5341 = vst.msk [vmem:[#allocation3 + $0x20] sm:$0xff] %vm1376, %v5286
        %5342 = vst [vmem:[#allocation3 + $0x28] sm:$0xff] %v5312
        %5343 = vst [vmem:[#allocation3 + $0x30] sm:$0xff] %v5313
        %5344 = vst.msk [vmem:[#allocation3 + $0x38] sm:$0xff] %vm1380, %v5314
        %5345 = vst.msk [vmem:[#allocation3 + $0x40] sm:$0xff] %vm1376, %v5294
        %5346 = vst [vmem:[#allocation3 + $0x48] sm:$0xff] %v5315
        %5347 = vst [vmem:[#allocation3 + $0x50] sm:$0xff] %v5316
        %5348 = vst.msk [vmem:[#allocation3 + $0x58] sm:$0xff] %vm1380, %v5317
        %5349 = vst.msk [vmem:[#allocation3 + $0x60] sm:$0xff] %vm1376, %v5302
        %5350 = vst [vmem:[#allocation3 + $0x68] sm:$0xff] %v5318
        %5351 = vst [vmem:[#allocation3 + $0x70] sm:$0xff] %v5319
        %5352 = vst.msk [vmem:[#allocation3 + $0x78] sm:$0xff] %vm1380, %v5320
        %v5353 = vld [vmem:[#allocation3] sm:$0xff]
        %v5354 = vld [vmem:[#allocation3 + $0x8] sm:$0xff]
        %v5355 = vld [vmem:[#allocation3 + $0x10] sm:$0xff]
        %v5356 = vld [vmem:[#allocation3 + $0x18] sm:$0xff]
        %v5357 = vld [vmem:[#allocation3 + $0x20] sm:$0xff]
        %v5358 = vld [vmem:[#allocation3 + $0x28] sm:$0xff]
        %v5359 = vld [vmem:[#allocation3 + $0x30] sm:$0xff]
        %v5360 = vld [vmem:[#allocation3 + $0x38] sm:$0xff]
        %v5361 = vld [vmem:[#allocation3 + $0x40] sm:$0xff]
        %v5362 = vld [vmem:[#allocation3 + $0x48] sm:$0xff]
        %v5363 = vld [vmem:[#allocation3 + $0x50] sm:$0xff]
        %v5364 = vld [vmem:[#allocation3 + $0x58] sm:$0xff]
        %v5365 = vld [vmem:[#allocation3 + $0x60] sm:$0xff]
        %v5366 = vld [vmem:[#allocation3 + $0x68] sm:$0xff]
        %v5367 = vld [vmem:[#allocation3 + $0x70] sm:$0xff]
        %v5368 = vld [vmem:[#allocation3 + $0x78] sm:$0xff]
        %5369 = vst [vmem:[#allocation2] sm:$0xff] %v5353
        %5370 = vst [vmem:[#allocation2 + $0x8] sm:$0xff] %v5354
        %5371 = vst [vmem:[#allocation2 + $0x10] sm:$0xff] %v5355
        %5372 = vst.msk [vmem:[#allocation2 + $0x18] sm:$0xff] %vm403, %v5356
        %5373 = vst [vmem:[#allocation2 + $0x20] sm:$0xff] %v5357
        %5374 = vst [vmem:[#allocation2 + $0x28] sm:$0xff] %v5358
        %5375 = vst [vmem:[#allocation2 + $0x30] sm:$0xff] %v5359
        %5376 = vst.msk [vmem:[#allocation2 + $0x38] sm:$0xff] %vm403, %v5360
        %5377 = vst [vmem:[#allocation2 + $0x40] sm:$0xff] %v5361
        %5378 = vst [vmem:[#allocation2 + $0x48] sm:$0xff] %v5362
        %5379 = vst [vmem:[#allocation2 + $0x50] sm:$0xff] %v5363
        %5380 = vst.msk [vmem:[#allocation2 + $0x58] sm:$0xff] %vm403, %v5364
        %5381 = vst [vmem:[#allocation2 + $0x60] sm:$0xff] %v5365
        %5382 = vst [vmem:[#allocation2 + $0x68] sm:$0xff] %v5366
        %5383 = vst [vmem:[#allocation2 + $0x70] sm:$0xff] %v5367
        %5384 = vst.msk [vmem:[#allocation2 + $0x78] sm:$0xff] %vm403, %v5368
        %v5385 = vld [vmem:[#allocation3] sm:$0xff]
        %v5386 = vld [vmem:[#allocation3 + $0x8] sm:$0xff]
        %v5387 = vld [vmem:[#allocation3 + $0x10] sm:$0xff]
        %v5388 = vld [vmem:[#allocation3 + $0x18] sm:$0xff]
        %v5389 = vld [vmem:[#allocation3 + $0x20] sm:$0xff]
        %v5390 = vld [vmem:[#allocation3 + $0x28] sm:$0xff]
        %v5391 = vld [vmem:[#allocation3 + $0x30] sm:$0xff]
        %v5392 = vld [vmem:[#allocation3 + $0x38] sm:$0xff]
        %v5393 = vld [vmem:[#allocation3 + $0x40] sm:$0xff]
        %v5394 = vld [vmem:[#allocation3 + $0x48] sm:$0xff]
        %v5395 = vld [vmem:[#allocation3 + $0x50] sm:$0xff]
        %v5396 = vld [vmem:[#allocation3 + $0x58] sm:$0xff]
        %v5397 = vld [vmem:[#allocation3 + $0x60] sm:$0xff]
        %v5398 = vld [vmem:[#allocation3 + $0x68] sm:$0xff]
        %v5399 = vld [vmem:[#allocation3 + $0x70] sm:$0xff]
        %v5400 = vld [vmem:[#allocation3 + $0x78] sm:$0xff]
        %5417 = vrot.lane.b32.xlu0 %v5385, 127
        %v5418 = vpop.permute.xlu0 %5417
        %5419 = vrot.lane.b32.xlu0 %v5386, 127
        %v5420 = vpop.permute.xlu0 %5419
        %5421 = vrot.lane.b32.xlu0 %v5387, 127
        %v5422 = vpop.permute.xlu0 %5421
        %5423 = vrot.lane.b32.xlu0 %v5388, 127
        %v5424 = vpop.permute.xlu0 %5423
        %5425 = vrot.lane.b32.xlu0 %v5389, 127
        %v5426 = vpop.permute.xlu0 %5425
        %5427 = vrot.lane.b32.xlu0 %v5390, 127
        %v5428 = vpop.permute.xlu0 %5427
        %5429 = vrot.lane.b32.xlu0 %v5391, 127
        %v5430 = vpop.permute.xlu0 %5429
        %5431 = vrot.lane.b32.xlu0 %v5392, 127
        %v5432 = vpop.permute.xlu0 %5431
        %5433 = vrot.lane.b32.xlu0 %v5393, 127
        %v5434 = vpop.permute.xlu0 %5433
        %5435 = vrot.lane.b32.xlu0 %v5394, 127
        %v5436 = vpop.permute.xlu0 %5435
        %5437 = vrot.lane.b32.xlu0 %v5395, 127
        %v5438 = vpop.permute.xlu0 %5437
        %5439 = vrot.lane.b32.xlu0 %v5396, 127
        %v5440 = vpop.permute.xlu0 %5439
        %5441 = vrot.lane.b32.xlu0 %v5397, 127
        %v5442 = vpop.permute.xlu0 %5441
        %5443 = vrot.lane.b32.xlu0 %v5398, 127
        %v5444 = vpop.permute.xlu0 %5443
        %5445 = vrot.lane.b32.xlu0 %v5399, 127
        %v5446 = vpop.permute.xlu0 %5445
        %5447 = vrot.lane.b32.xlu0 %v5400, 127
        %v5448 = vpop.permute.xlu0 %5447
        %v5449 = vsel %vm417, %v5418, %v5420
        %v5450 = vsel %vm417, %v5420, %v5422
        %v5451 = vsel %vm417, %v5422, %v5424
        %v5452 = vsel %vm417, %v5426, %v5428
        %v5453 = vsel %vm417, %v5428, %v5430
        %v5454 = vsel %vm417, %v5430, %v5432
        %v5455 = vsel %vm417, %v5434, %v5436
        %v5456 = vsel %vm417, %v5436, %v5438
        %v5457 = vsel %vm417, %v5438, %v5440
        %v5458 = vsel %vm417, %v5442, %v5444
        %v5459 = vsel %vm417, %v5444, %v5446
        %v5460 = vsel %vm417, %v5446, %v5448
        %5477 = vst [vmem:[#allocation2 + $0x80] sm:$0xff] %v5449
        %5478 = vst [vmem:[#allocation2 + $0x88] sm:$0xff] %v5450
        %5479 = vst [vmem:[#allocation2 + $0x90] sm:$0xff] %v5451
        %5480 = vst.msk [vmem:[#allocation2 + $0x98] sm:$0xff] %vm403, %v5424
        %5481 = vst [vmem:[#allocation2 + $0xa0] sm:$0xff] %v5452
        %5482 = vst [vmem:[#allocation2 + $0xa8] sm:$0xff] %v5453
        %5483 = vst [vmem:[#allocation2 + $0xb0] sm:$0xff] %v5454
        %5484 = vst.msk [vmem:[#allocation2 + $0xb8] sm:$0xff] %vm403, %v5432
        %5485 = vst [vmem:[#allocation2 + $0xc0] sm:$0xff] %v5455
        %5486 = vst [vmem:[#allocation2 + $0xc8] sm:$0xff] %v5456
        %5487 = vst [vmem:[#allocation2 + $0xd0] sm:$0xff] %v5457
        %5488 = vst.msk [vmem:[#allocation2 + $0xd8] sm:$0xff] %vm403, %v5440
        %5489 = vst [vmem:[#allocation2 + $0xe0] sm:$0xff] %v5458
        %5490 = vst [vmem:[#allocation2 + $0xe8] sm:$0xff] %v5459
        %5491 = vst [vmem:[#allocation2 + $0xf0] sm:$0xff] %v5460
        %5492 = vst.msk [vmem:[#allocation2 + $0xf8] sm:$0xff] %vm403, %v5448
        %v5493 = vld [vmem:[#allocation3] sm:$0xff]
        %v5494 = vld [vmem:[#allocation3 + $0x8] sm:$0xff]
        %v5495 = vld [vmem:[#allocation3 + $0x10] sm:$0xff]
        %v5496 = vld [vmem:[#allocation3 + $0x18] sm:$0xff]
        %v5497 = vld [vmem:[#allocation3 + $0x20] sm:$0xff]
        %v5498 = vld [vmem:[#allocation3 + $0x28] sm:$0xff]
        %v5499 = vld [vmem:[#allocation3 + $0x30] sm:$0xff]
        %v5500 = vld [vmem:[#allocation3 + $0x38] sm:$0xff]
        %v5501 = vld [vmem:[#allocation3 + $0x40] sm:$0xff]
        %v5502 = vld [vmem:[#allocation3 + $0x48] sm:$0xff]
        %v5503 = vld [vmem:[#allocation3 + $0x50] sm:$0xff]
        %v5504 = vld [vmem:[#allocation3 + $0x58] sm:$0xff]
        %v5505 = vld [vmem:[#allocation3 + $0x60] sm:$0xff]
        %v5506 = vld [vmem:[#allocation3 + $0x68] sm:$0xff]
        %v5507 = vld [vmem:[#allocation3 + $0x70] sm:$0xff]
        %v5508 = vld [vmem:[#allocation3 + $0x78] sm:$0xff]
        %5525 = vrot.lane.b32.xlu0 %v5493, 126
        %v5526 = vpop.permute.xlu0 %5525
        %5527 = vrot.lane.b32.xlu0 %v5494, 126
        %v5528 = vpop.permute.xlu0 %5527
        %5529 = vrot.lane.b32.xlu0 %v5495, 126
        %v5530 = vpop.permute.xlu0 %5529
        %5531 = vrot.lane.b32.xlu0 %v5496, 126
        %v5532 = vpop.permute.xlu0 %5531
        %5533 = vrot.lane.b32.xlu0 %v5497, 126
        %v5534 = vpop.permute.xlu0 %5533
        %5535 = vrot.lane.b32.xlu0 %v5498, 126
        %v5536 = vpop.permute.xlu0 %5535
        %5537 = vrot.lane.b32.xlu0 %v5499, 126
        %v5538 = vpop.permute.xlu0 %5537
        %5539 = vrot.lane.b32.xlu0 %v5500, 126
        %v5540 = vpop.permute.xlu0 %5539
        %5541 = vrot.lane.b32.xlu0 %v5501, 126
        %v5542 = vpop.permute.xlu0 %5541
        %5543 = vrot.lane.b32.xlu0 %v5502, 126
        %v5544 = vpop.permute.xlu0 %5543
        %5545 = vrot.lane.b32.xlu0 %v5503, 126
        %v5546 = vpop.permute.xlu0 %5545
        %5547 = vrot.lane.b32.xlu0 %v5504, 126
        %v5548 = vpop.permute.xlu0 %5547
        %5549 = vrot.lane.b32.xlu0 %v5505, 126
        %v5550 = vpop.permute.xlu0 %5549
        %5551 = vrot.lane.b32.xlu0 %v5506, 126
        %v5552 = vpop.permute.xlu0 %5551
        %5553 = vrot.lane.b32.xlu0 %v5507, 126
        %v5554 = vpop.permute.xlu0 %5553
        %5555 = vrot.lane.b32.xlu0 %v5508, 126
        %v5556 = vpop.permute.xlu0 %5555
        %v5557 = vsel %vm437, %v5526, %v5528
        %v5558 = vsel %vm437, %v5528, %v5530
        %v5559 = vsel %vm437, %v5530, %v5532
        %v5560 = vsel %vm437, %v5534, %v5536
        %v5561 = vsel %vm437, %v5536, %v5538
        %v5562 = vsel %vm437, %v5538, %v5540
        %v5563 = vsel %vm437, %v5542, %v5544
        %v5564 = vsel %vm437, %v5544, %v5546
        %v5565 = vsel %vm437, %v5546, %v5548
        %v5566 = vsel %vm437, %v5550, %v5552
        %v5567 = vsel %vm437, %v5552, %v5554
        %v5568 = vsel %vm437, %v5554, %v5556
        %5585 = vst [vmem:[#allocation2 + $0x100] sm:$0xff] %v5557
        %5586 = vst [vmem:[#allocation2 + $0x108] sm:$0xff] %v5558
        %5587 = vst [vmem:[#allocation2 + $0x110] sm:$0xff] %v5559
        %5588 = vst.msk [vmem:[#allocation2 + $0x118] sm:$0xff] %vm403, %v5532
        %5589 = vst [vmem:[#allocation2 + $0x120] sm:$0xff] %v5560
        %5590 = vst [vmem:[#allocation2 + $0x128] sm:$0xff] %v5561
        %5591 = vst [vmem:[#allocation2 + $0x130] sm:$0xff] %v5562
        %5592 = vst.msk [vmem:[#allocation2 + $0x138] sm:$0xff] %vm403, %v5540
        %5593 = vst [vmem:[#allocation2 + $0x140] sm:$0xff] %v5563
        %5594 = vst [vmem:[#allocation2 + $0x148] sm:$0xff] %v5564
        %5595 = vst [vmem:[#allocation2 + $0x150] sm:$0xff] %v5565
        %5596 = vst.msk [vmem:[#allocation2 + $0x158] sm:$0xff] %vm403, %v5548
        %5597 = vst [vmem:[#allocation2 + $0x160] sm:$0xff] %v5566
        %5598 = vst [vmem:[#allocation2 + $0x168] sm:$0xff] %v5567
        %5599 = vst [vmem:[#allocation2 + $0x170] sm:$0xff] %v5568
        %5600 = vst.msk [vmem:[#allocation2 + $0x178] sm:$0xff] %vm403, %v5556
        %v5601 = vld [vmem:[#allocation3] sm:$0xff]
        %v5602 = vld [vmem:[#allocation3 + $0x8] sm:$0xff]
        %v5603 = vld [vmem:[#allocation3 + $0x10] sm:$0xff]
        %v5604 = vld [vmem:[#allocation3 + $0x18] sm:$0xff]
        %v5605 = vld [vmem:[#allocation3 + $0x20] sm:$0xff]
        %v5606 = vld [vmem:[#allocation3 + $0x28] sm:$0xff]
        %v5607 = vld [vmem:[#allocation3 + $0x30] sm:$0xff]
        %v5608 = vld [vmem:[#allocation3 + $0x38] sm:$0xff]
        %v5609 = vld [vmem:[#allocation3 + $0x40] sm:$0xff]
        %v5610 = vld [vmem:[#allocation3 + $0x48] sm:$0xff]
        %v5611 = vld [vmem:[#allocation3 + $0x50] sm:$0xff]
        %v5612 = vld [vmem:[#allocation3 + $0x58] sm:$0xff]
        %v5613 = vld [vmem:[#allocation3 + $0x60] sm:$0xff]
        %v5614 = vld [vmem:[#allocation3 + $0x68] sm:$0xff]
        %v5615 = vld [vmem:[#allocation3 + $0x70] sm:$0xff]
        %v5616 = vld [vmem:[#allocation3 + $0x78] sm:$0xff]
        %5633 = vrot.lane.b32.xlu0 %v5601, 125
        %v5634 = vpop.permute.xlu0 %5633
        %5635 = vrot.lane.b32.xlu0 %v5602, 125
        %v5636 = vpop.permute.xlu0 %5635
        %5637 = vrot.lane.b32.xlu0 %v5603, 125
        %v5638 = vpop.permute.xlu0 %5637
        %5639 = vrot.lane.b32.xlu0 %v5604, 125
        %v5640 = vpop.permute.xlu0 %5639
        %5641 = vrot.lane.b32.xlu0 %v5605, 125
        %v5642 = vpop.permute.xlu0 %5641
        %5643 = vrot.lane.b32.xlu0 %v5606, 125
        %v5644 = vpop.permute.xlu0 %5643
        %5645 = vrot.lane.b32.xlu0 %v5607, 125
        %v5646 = vpop.permute.xlu0 %5645
        %5647 = vrot.lane.b32.xlu0 %v5608, 125
        %v5648 = vpop.permute.xlu0 %5647
        %5649 = vrot.lane.b32.xlu0 %v5609, 125
        %v5650 = vpop.permute.xlu0 %5649
        %5651 = vrot.lane.b32.xlu0 %v5610, 125
        %v5652 = vpop.permute.xlu0 %5651
        %5653 = vrot.lane.b32.xlu0 %v5611, 125
        %v5654 = vpop.permute.xlu0 %5653
        %5655 = vrot.lane.b32.xlu0 %v5612, 125
        %v5656 = vpop.permute.xlu0 %5655
        %5657 = vrot.lane.b32.xlu0 %v5613, 125
        %v5658 = vpop.permute.xlu0 %5657
        %5659 = vrot.lane.b32.xlu0 %v5614, 125
        %v5660 = vpop.permute.xlu0 %5659
        %5661 = vrot.lane.b32.xlu0 %v5615, 125
        %v5662 = vpop.permute.xlu0 %5661
        %5663 = vrot.lane.b32.xlu0 %v5616, 125
        %v5664 = vpop.permute.xlu0 %5663
        %v5665 = vsel %vm457, %v5634, %v5636
        %v5666 = vsel %vm457, %v5636, %v5638
        %v5667 = vsel %vm457, %v5638, %v5640
        %v5668 = vsel %vm457, %v5642, %v5644
        %v5669 = vsel %vm457, %v5644, %v5646
        %v5670 = vsel %vm457, %v5646, %v5648
        %v5671 = vsel %vm457, %v5650, %v5652
        %v5672 = vsel %vm457, %v5652, %v5654
        %v5673 = vsel %vm457, %v5654, %v5656
        %v5674 = vsel %vm457, %v5658, %v5660
        %v5675 = vsel %vm457, %v5660, %v5662
        %v5676 = vsel %vm457, %v5662, %v5664
        %5693 = vst [vmem:[#allocation2 + $0x180] sm:$0xff] %v5665
        %5694 = vst [vmem:[#allocation2 + $0x188] sm:$0xff] %v5666
        %5695 = vst [vmem:[#allocation2 + $0x190] sm:$0xff] %v5667
        %5696 = vst.msk [vmem:[#allocation2 + $0x198] sm:$0xff] %vm403, %v5640
        %5697 = vst [vmem:[#allocation2 + $0x1a0] sm:$0xff] %v5668
        %5698 = vst [vmem:[#allocation2 + $0x1a8] sm:$0xff] %v5669
        %5699 = vst [vmem:[#allocation2 + $0x1b0] sm:$0xff] %v5670
        %5700 = vst.msk [vmem:[#allocation2 + $0x1b8] sm:$0xff] %vm403, %v5648
        %5701 = vst [vmem:[#allocation2 + $0x1c0] sm:$0xff] %v5671
        %5702 = vst [vmem:[#allocation2 + $0x1c8] sm:$0xff] %v5672
        %5703 = vst [vmem:[#allocation2 + $0x1d0] sm:$0xff] %v5673
        %5704 = vst.msk [vmem:[#allocation2 + $0x1d8] sm:$0xff] %vm403, %v5656
        %5705 = vst [vmem:[#allocation2 + $0x1e0] sm:$0xff] %v5674
        %5706 = vst [vmem:[#allocation2 + $0x1e8] sm:$0xff] %v5675
        %5707 = vst [vmem:[#allocation2 + $0x1f0] sm:$0xff] %v5676
        %5708 = vst.msk [vmem:[#allocation2 + $0x1f8] sm:$0xff] %vm403, %v5664
        %v5709 = vld [vmem:[#allocation3] sm:$0xff]
        %v5710 = vld [vmem:[#allocation3 + $0x8] sm:$0xff]
        %v5711 = vld [vmem:[#allocation3 + $0x10] sm:$0xff]
        %v5712 = vld [vmem:[#allocation3 + $0x18] sm:$0xff]
        %v5713 = vld [vmem:[#allocation3 + $0x20] sm:$0xff]
        %v5714 = vld [vmem:[#allocation3 + $0x28] sm:$0xff]
        %v5715 = vld [vmem:[#allocation3 + $0x30] sm:$0xff]
        %v5716 = vld [vmem:[#allocation3 + $0x38] sm:$0xff]
        %v5717 = vld [vmem:[#allocation3 + $0x40] sm:$0xff]
        %v5718 = vld [vmem:[#allocation3 + $0x48] sm:$0xff]
        %v5719 = vld [vmem:[#allocation3 + $0x50] sm:$0xff]
        %v5720 = vld [vmem:[#allocation3 + $0x58] sm:$0xff]
        %v5721 = vld [vmem:[#allocation3 + $0x60] sm:$0xff]
        %v5722 = vld [vmem:[#allocation3 + $0x68] sm:$0xff]
        %v5723 = vld [vmem:[#allocation3 + $0x70] sm:$0xff]
        %v5724 = vld [vmem:[#allocation3 + $0x78] sm:$0xff]
        %5741 = vrot.lane.b32.xlu0 %v5709, 124
        %v5742 = vpop.permute.xlu0 %5741
        %5743 = vrot.lane.b32.xlu0 %v5710, 124
        %v5744 = vpop.permute.xlu0 %5743
        %5745 = vrot.lane.b32.xlu0 %v5711, 124
        %v5746 = vpop.permute.xlu0 %5745
        %5747 = vrot.lane.b32.xlu0 %v5712, 124
        %v5748 = vpop.permute.xlu0 %5747
        %5749 = vrot.lane.b32.xlu0 %v5713, 124
        %v5750 = vpop.permute.xlu0 %5749
        %5751 = vrot.lane.b32.xlu0 %v5714, 124
        %v5752 = vpop.permute.xlu0 %5751
        %5753 = vrot.lane.b32.xlu0 %v5715, 124
        %v5754 = vpop.permute.xlu0 %5753
        %5755 = vrot.lane.b32.xlu0 %v5716, 124
        %v5756 = vpop.permute.xlu0 %5755
        %5757 = vrot.lane.b32.xlu0 %v5717, 124
        %v5758 = vpop.permute.xlu0 %5757
        %5759 = vrot.lane.b32.xlu0 %v5718, 124
        %v5760 = vpop.permute.xlu0 %5759
        %5761 = vrot.lane.b32.xlu0 %v5719, 124
        %v5762 = vpop.permute.xlu0 %5761
        %5763 = vrot.lane.b32.xlu0 %v5720, 124
        %v5764 = vpop.permute.xlu0 %5763
        %5765 = vrot.lane.b32.xlu0 %v5721, 124
        %v5766 = vpop.permute.xlu0 %5765
        %5767 = vrot.lane.b32.xlu0 %v5722, 124
        %v5768 = vpop.permute.xlu0 %5767
        %5769 = vrot.lane.b32.xlu0 %v5723, 124
        %v5770 = vpop.permute.xlu0 %5769
        %5771 = vrot.lane.b32.xlu0 %v5724, 124
        %v5772 = vpop.permute.xlu0 %5771
        %v5773 = vsel %vm477, %v5742, %v5744
        %v5774 = vsel %vm477, %v5744, %v5746
        %v5775 = vsel %vm477, %v5746, %v5748
        %v5776 = vsel %vm477, %v5750, %v5752
        %v5777 = vsel %vm477, %v5752, %v5754
        %v5778 = vsel %vm477, %v5754, %v5756
        %v5779 = vsel %vm477, %v5758, %v5760
        %v5780 = vsel %vm477, %v5760, %v5762
        %v5781 = vsel %vm477, %v5762, %v5764
        %v5782 = vsel %vm477, %v5766, %v5768
        %v5783 = vsel %vm477, %v5768, %v5770
        %v5784 = vsel %vm477, %v5770, %v5772
        %5801 = vst [vmem:[#allocation2 + $0x200] sm:$0xff] %v5773
        %5802 = vst [vmem:[#allocation2 + $0x208] sm:$0xff] %v5774
        %5803 = vst [vmem:[#allocation2 + $0x210] sm:$0xff] %v5775
        %5804 = vst.msk [vmem:[#allocation2 + $0x218] sm:$0xff] %vm403, %v5748
        %5805 = vst [vmem:[#allocation2 + $0x220] sm:$0xff] %v5776
        %5806 = vst [vmem:[#allocation2 + $0x228] sm:$0xff] %v5777
        %5807 = vst [vmem:[#allocation2 + $0x230] sm:$0xff] %v5778
        %5808 = vst.msk [vmem:[#allocation2 + $0x238] sm:$0xff] %vm403, %v5756
        %5809 = vst [vmem:[#allocation2 + $0x240] sm:$0xff] %v5779
        %5810 = vst [vmem:[#allocation2 + $0x248] sm:$0xff] %v5780
        %5811 = vst [vmem:[#allocation2 + $0x250] sm:$0xff] %v5781
        %5812 = vst.msk [vmem:[#allocation2 + $0x258] sm:$0xff] %vm403, %v5764
        %5813 = vst [vmem:[#allocation2 + $0x260] sm:$0xff] %v5782
        %5814 = vst [vmem:[#allocation2 + $0x268] sm:$0xff] %v5783
        %5815 = vst [vmem:[#allocation2 + $0x270] sm:$0xff] %v5784
        %5816 = vst.msk [vmem:[#allocation2 + $0x278] sm:$0xff] %vm403, %v5772
        %v5817 = vld [vmem:[#allocation3] sm:$0xff]
        %v5818 = vld [vmem:[#allocation3 + $0x8] sm:$0xff]
        %v5819 = vld [vmem:[#allocation3 + $0x10] sm:$0xff]
        %v5820 = vld [vmem:[#allocation3 + $0x18] sm:$0xff]
        %v5821 = vld [vmem:[#allocation3 + $0x20] sm:$0xff]
        %v5822 = vld [vmem:[#allocation3 + $0x28] sm:$0xff]
        %v5823 = vld [vmem:[#allocation3 + $0x30] sm:$0xff]
        %v5824 = vld [vmem:[#allocation3 + $0x38] sm:$0xff]
        %v5825 = vld [vmem:[#allocation3 + $0x40] sm:$0xff]
        %v5826 = vld [vmem:[#allocation3 + $0x48] sm:$0xff]
        %v5827 = vld [vmem:[#allocation3 + $0x50] sm:$0xff]
        %v5828 = vld [vmem:[#allocation3 + $0x58] sm:$0xff]
        %v5829 = vld [vmem:[#allocation3 + $0x60] sm:$0xff]
        %v5830 = vld [vmem:[#allocation3 + $0x68] sm:$0xff]
        %v5831 = vld [vmem:[#allocation3 + $0x70] sm:$0xff]
        %v5832 = vld [vmem:[#allocation3 + $0x78] sm:$0xff]
        %5849 = vrot.lane.b32.xlu0 %v5817, 108
        %v5850 = vpop.permute.xlu0 %5849
        %5851 = vrot.lane.b32.xlu0 %v5818, 108
        %v5852 = vpop.permute.xlu0 %5851
        %5853 = vrot.lane.b32.xlu0 %v5819, 108
        %v5854 = vpop.permute.xlu0 %5853
        %5855 = vrot.lane.b32.xlu0 %v5820, 108
        %v5856 = vpop.permute.xlu0 %5855
        %5857 = vrot.lane.b32.xlu0 %v5821, 108
        %v5858 = vpop.permute.xlu0 %5857
        %5859 = vrot.lane.b32.xlu0 %v5822, 108
        %v5860 = vpop.permute.xlu0 %5859
        %5861 = vrot.lane.b32.xlu0 %v5823, 108
        %v5862 = vpop.permute.xlu0 %5861
        %5863 = vrot.lane.b32.xlu0 %v5824, 108
        %v5864 = vpop.permute.xlu0 %5863
        %5865 = vrot.lane.b32.xlu0 %v5825, 108
        %v5866 = vpop.permute.xlu0 %5865
        %5867 = vrot.lane.b32.xlu0 %v5826, 108
        %v5868 = vpop.permute.xlu0 %5867
        %5869 = vrot.lane.b32.xlu0 %v5827, 108
        %v5870 = vpop.permute.xlu0 %5869
        %5871 = vrot.lane.b32.xlu0 %v5828, 108
        %v5872 = vpop.permute.xlu0 %5871
        %5873 = vrot.lane.b32.xlu0 %v5829, 108
        %v5874 = vpop.permute.xlu0 %5873
        %5875 = vrot.lane.b32.xlu0 %v5830, 108
        %v5876 = vpop.permute.xlu0 %5875
        %5877 = vrot.lane.b32.xlu0 %v5831, 108
        %v5878 = vpop.permute.xlu0 %5877
        %5879 = vrot.lane.b32.xlu0 %v5832, 108
        %v5880 = vpop.permute.xlu0 %5879
        %v5881 = vsel %vm497, %v5850, %v5852
        %v5882 = vsel %vm497, %v5852, %v5854
        %v5883 = vsel %vm497, %v5854, %v5856
        %v5884 = vsel %vm497, %v5858, %v5860
        %v5885 = vsel %vm497, %v5860, %v5862
        %v5886 = vsel %vm497, %v5862, %v5864
        %v5887 = vsel %vm497, %v5866, %v5868
        %v5888 = vsel %vm497, %v5868, %v5870
        %v5889 = vsel %vm497, %v5870, %v5872
        %v5890 = vsel %vm497, %v5874, %v5876
        %v5891 = vsel %vm497, %v5876, %v5878
        %v5892 = vsel %vm497, %v5878, %v5880
        %5909 = vst [vmem:[#allocation2 + $0x280] sm:$0xff] %v5881
        %5910 = vst [vmem:[#allocation2 + $0x288] sm:$0xff] %v5882
        %5911 = vst [vmem:[#allocation2 + $0x290] sm:$0xff] %v5883
        %5912 = vst.msk [vmem:[#allocation2 + $0x298] sm:$0xff] %vm403, %v5856
        %5913 = vst [vmem:[#allocation2 + $0x2a0] sm:$0xff] %v5884
        %5914 = vst [vmem:[#allocation2 + $0x2a8] sm:$0xff] %v5885
        %5915 = vst [vmem:[#allocation2 + $0x2b0] sm:$0xff] %v5886
        %5916 = vst.msk [vmem:[#allocation2 + $0x2b8] sm:$0xff] %vm403, %v5864
        %5917 = vst [vmem:[#allocation2 + $0x2c0] sm:$0xff] %v5887
        %5918 = vst [vmem:[#allocation2 + $0x2c8] sm:$0xff] %v5888
        %5919 = vst [vmem:[#allocation2 + $0x2d0] sm:$0xff] %v5889
        %5920 = vst.msk [vmem:[#allocation2 + $0x2d8] sm:$0xff] %vm403, %v5872
        %5921 = vst [vmem:[#allocation2 + $0x2e0] sm:$0xff] %v5890
        %5922 = vst [vmem:[#allocation2 + $0x2e8] sm:$0xff] %v5891
        %5923 = vst [vmem:[#allocation2 + $0x2f0] sm:$0xff] %v5892
        %5924 = vst.msk [vmem:[#allocation2 + $0x2f8] sm:$0xff] %vm403, %v5880
        %v5925 = vld [vmem:[#allocation3] sm:$0xff]
        %v5926 = vld [vmem:[#allocation3 + $0x8] sm:$0xff]
        %v5927 = vld [vmem:[#allocation3 + $0x10] sm:$0xff]
        %v5928 = vld [vmem:[#allocation3 + $0x18] sm:$0xff]
        %v5929 = vld [vmem:[#allocation3 + $0x20] sm:$0xff]
        %v5930 = vld [vmem:[#allocation3 + $0x28] sm:$0xff]
        %v5931 = vld [vmem:[#allocation3 + $0x30] sm:$0xff]
        %v5932 = vld [vmem:[#allocation3 + $0x38] sm:$0xff]
        %v5933 = vld [vmem:[#allocation3 + $0x40] sm:$0xff]
        %v5934 = vld [vmem:[#allocation3 + $0x48] sm:$0xff]
        %v5935 = vld [vmem:[#allocation3 + $0x50] sm:$0xff]
        %v5936 = vld [vmem:[#allocation3 + $0x58] sm:$0xff]
        %v5937 = vld [vmem:[#allocation3 + $0x60] sm:$0xff]
        %v5938 = vld [vmem:[#allocation3 + $0x68] sm:$0xff]
        %v5939 = vld [vmem:[#allocation3 + $0x70] sm:$0xff]
        %v5940 = vld [vmem:[#allocation3 + $0x78] sm:$0xff]
        %5957 = vrot.lane.b32.xlu0 %v5925, 107
        %v5958 = vpop.permute.xlu0 %5957
        %5959 = vrot.lane.b32.xlu0 %v5926, 107
        %v5960 = vpop.permute.xlu0 %5959
        %5961 = vrot.lane.b32.xlu0 %v5927, 107
        %v5962 = vpop.permute.xlu0 %5961
        %5963 = vrot.lane.b32.xlu0 %v5928, 107
        %v5964 = vpop.permute.xlu0 %5963
        %5965 = vrot.lane.b32.xlu0 %v5929, 107
        %v5966 = vpop.permute.xlu0 %5965
        %5967 = vrot.lane.b32.xlu0 %v5930, 107
        %v5968 = vpop.permute.xlu0 %5967
        %5969 = vrot.lane.b32.xlu0 %v5931, 107
        %v5970 = vpop.permute.xlu0 %5969
        %5971 = vrot.lane.b32.xlu0 %v5932, 107
        %v5972 = vpop.permute.xlu0 %5971
        %5973 = vrot.lane.b32.xlu0 %v5933, 107
        %v5974 = vpop.permute.xlu0 %5973
        %5975 = vrot.lane.b32.xlu0 %v5934, 107
        %v5976 = vpop.permute.xlu0 %5975
        %5977 = vrot.lane.b32.xlu0 %v5935, 107
        %v5978 = vpop.permute.xlu0 %5977
        %5979 = vrot.lane.b32.xlu0 %v5936, 107
        %v5980 = vpop.permute.xlu0 %5979
        %5981 = vrot.lane.b32.xlu0 %v5937, 107
        %v5982 = vpop.permute.xlu0 %5981
        %5983 = vrot.lane.b32.xlu0 %v5938, 107
        %v5984 = vpop.permute.xlu0 %5983
        %5985 = vrot.lane.b32.xlu0 %v5939, 107
        %v5986 = vpop.permute.xlu0 %5985
        %5987 = vrot.lane.b32.xlu0 %v5940, 107
        %v5988 = vpop.permute.xlu0 %5987
        %v5989 = vsel %vm517, %v5958, %v5960
        %v5990 = vsel %vm517, %v5960, %v5962
        %v5991 = vsel %vm517, %v5962, %v5964
        %v5992 = vsel %vm517, %v5966, %v5968
        %v5993 = vsel %vm517, %v5968, %v5970
        %v5994 = vsel %vm517, %v5970, %v5972
        %v5995 = vsel %vm517, %v5974, %v5976
        %v5996 = vsel %vm517, %v5976, %v5978
        %v5997 = vsel %vm517, %v5978, %v5980
        %v5998 = vsel %vm517, %v5982, %v5984
        %v5999 = vsel %vm517, %v5984, %v5986
        %v6000 = vsel %vm517, %v5986, %v5988
        %6017 = vst [vmem:[#allocation2 + $0x300] sm:$0xff] %v5989
        %6018 = vst [vmem:[#allocation2 + $0x308] sm:$0xff] %v5990
        %6019 = vst [vmem:[#allocation2 + $0x310] sm:$0xff] %v5991
        %6020 = vst.msk [vmem:[#allocation2 + $0x318] sm:$0xff] %vm403, %v5964
        %6021 = vst [vmem:[#allocation2 + $0x320] sm:$0xff] %v5992
        %6022 = vst [vmem:[#allocation2 + $0x328] sm:$0xff] %v5993
        %6023 = vst [vmem:[#allocation2 + $0x330] sm:$0xff] %v5994
        %6024 = vst.msk [vmem:[#allocation2 + $0x338] sm:$0xff] %vm403, %v5972
        %6025 = vst [vmem:[#allocation2 + $0x340] sm:$0xff] %v5995
        %6026 = vst [vmem:[#allocation2 + $0x348] sm:$0xff] %v5996
        %6027 = vst [vmem:[#allocation2 + $0x350] sm:$0xff] %v5997
        %6028 = vst.msk [vmem:[#allocation2 + $0x358] sm:$0xff] %vm403, %v5980
        %6029 = vst [vmem:[#allocation2 + $0x360] sm:$0xff] %v5998
        %6030 = vst [vmem:[#allocation2 + $0x368] sm:$0xff] %v5999
        %6031 = vst [vmem:[#allocation2 + $0x370] sm:$0xff] %v6000
        %6032 = vst.msk [vmem:[#allocation2 + $0x378] sm:$0xff] %vm403, %v5988
        %v6033 = vld [vmem:[#allocation3] sm:$0xff]
        %v6034 = vld [vmem:[#allocation3 + $0x8] sm:$0xff]
        %v6035 = vld [vmem:[#allocation3 + $0x10] sm:$0xff]
        %v6036 = vld [vmem:[#allocation3 + $0x18] sm:$0xff]
        %v6037 = vld [vmem:[#allocation3 + $0x20] sm:$0xff]
        %v6038 = vld [vmem:[#allocation3 + $0x28] sm:$0xff]
        %v6039 = vld [vmem:[#allocation3 + $0x30] sm:$0xff]
        %v6040 = vld [vmem:[#allocation3 + $0x38] sm:$0xff]
        %v6041 = vld [vmem:[#allocation3 + $0x40] sm:$0xff]
        %v6042 = vld [vmem:[#allocation3 + $0x48] sm:$0xff]
        %v6043 = vld [vmem:[#allocation3 + $0x50] sm:$0xff]
        %v6044 = vld [vmem:[#allocation3 + $0x58] sm:$0xff]
        %v6045 = vld [vmem:[#allocation3 + $0x60] sm:$0xff]
        %v6046 = vld [vmem:[#allocation3 + $0x68] sm:$0xff]
        %v6047 = vld [vmem:[#allocation3 + $0x70] sm:$0xff]
        %v6048 = vld [vmem:[#allocation3 + $0x78] sm:$0xff]
        %6065 = vrot.lane.b32.xlu0 %v6033, 106
        %v6066 = vpop.permute.xlu0 %6065
        %6067 = vrot.lane.b32.xlu0 %v6034, 106
        %v6068 = vpop.permute.xlu0 %6067
        %6069 = vrot.lane.b32.xlu0 %v6035, 106
        %v6070 = vpop.permute.xlu0 %6069
        %6071 = vrot.lane.b32.xlu0 %v6036, 106
        %v6072 = vpop.permute.xlu0 %6071
        %6073 = vrot.lane.b32.xlu0 %v6037, 106
        %v6074 = vpop.permute.xlu0 %6073
        %6075 = vrot.lane.b32.xlu0 %v6038, 106
        %v6076 = vpop.permute.xlu0 %6075
        %6077 = vrot.lane.b32.xlu0 %v6039, 106
        %v6078 = vpop.permute.xlu0 %6077
        %6079 = vrot.lane.b32.xlu0 %v6040, 106
        %v6080 = vpop.permute.xlu0 %6079
        %6081 = vrot.lane.b32.xlu0 %v6041, 106
        %v6082 = vpop.permute.xlu0 %6081
        %6083 = vrot.lane.b32.xlu0 %v6042, 106
        %v6084 = vpop.permute.xlu0 %6083
        %6085 = vrot.lane.b32.xlu0 %v6043, 106
        %v6086 = vpop.permute.xlu0 %6085
        %6087 = vrot.lane.b32.xlu0 %v6044, 106
        %v6088 = vpop.permute.xlu0 %6087
        %6089 = vrot.lane.b32.xlu0 %v6045, 106
        %v6090 = vpop.permute.xlu0 %6089
        %6091 = vrot.lane.b32.xlu0 %v6046, 106
        %v6092 = vpop.permute.xlu0 %6091
        %6093 = vrot.lane.b32.xlu0 %v6047, 106
        %v6094 = vpop.permute.xlu0 %6093
        %6095 = vrot.lane.b32.xlu0 %v6048, 106
        %v6096 = vpop.permute.xlu0 %6095
        %v6097 = vsel %vm537, %v6066, %v6068
        %v6098 = vsel %vm537, %v6068, %v6070
        %v6099 = vsel %vm537, %v6070, %v6072
        %v6100 = vsel %vm537, %v6074, %v6076
        %v6101 = vsel %vm537, %v6076, %v6078
        %v6102 = vsel %vm537, %v6078, %v6080
        %v6103 = vsel %vm537, %v6082, %v6084
        %v6104 = vsel %vm537, %v6084, %v6086
        %v6105 = vsel %vm537, %v6086, %v6088
        %v6106 = vsel %vm537, %v6090, %v6092
        %v6107 = vsel %vm537, %v6092, %v6094
        %v6108 = vsel %vm537, %v6094, %v6096
        %6125 = vst [vmem:[#allocation2 + $0x380] sm:$0xff] %v6097
        %6126 = vst [vmem:[#allocation2 + $0x388] sm:$0xff] %v6098
        %6127 = vst [vmem:[#allocation2 + $0x390] sm:$0xff] %v6099
        %6128 = vst.msk [vmem:[#allocation2 + $0x398] sm:$0xff] %vm403, %v6072
        %6129 = vst [vmem:[#allocation2 + $0x3a0] sm:$0xff] %v6100
        %6130 = vst [vmem:[#allocation2 + $0x3a8] sm:$0xff] %v6101
        %6131 = vst [vmem:[#allocation2 + $0x3b0] sm:$0xff] %v6102
        %6132 = vst.msk [vmem:[#allocation2 + $0x3b8] sm:$0xff] %vm403, %v6080
        %6133 = vst [vmem:[#allocation2 + $0x3c0] sm:$0xff] %v6103
        %6134 = vst [vmem:[#allocation2 + $0x3c8] sm:$0xff] %v6104
        %6135 = vst [vmem:[#allocation2 + $0x3d0] sm:$0xff] %v6105
        %6136 = vst.msk [vmem:[#allocation2 + $0x3d8] sm:$0xff] %vm403, %v6088
        %6137 = vst [vmem:[#allocation2 + $0x3e0] sm:$0xff] %v6106
        %6138 = vst [vmem:[#allocation2 + $0x3e8] sm:$0xff] %v6107
        %6139 = vst [vmem:[#allocation2 + $0x3f0] sm:$0xff] %v6108
        %6140 = vst.msk [vmem:[#allocation2 + $0x3f8] sm:$0xff] %vm403, %v6096
        %v6141 = vld [vmem:[#allocation3] sm:$0xff]
        %v6142 = vld [vmem:[#allocation3 + $0x8] sm:$0xff]
        %v6143 = vld [vmem:[#allocation3 + $0x10] sm:$0xff]
        %v6144 = vld [vmem:[#allocation3 + $0x18] sm:$0xff]
        %v6145 = vld [vmem:[#allocation3 + $0x20] sm:$0xff]
        %v6146 = vld [vmem:[#allocation3 + $0x28] sm:$0xff]
        %v6147 = vld [vmem:[#allocation3 + $0x30] sm:$0xff]
        %v6148 = vld [vmem:[#allocation3 + $0x38] sm:$0xff]
        %v6149 = vld [vmem:[#allocation3 + $0x40] sm:$0xff]
        %v6150 = vld [vmem:[#allocation3 + $0x48] sm:$0xff]
        %v6151 = vld [vmem:[#allocation3 + $0x50] sm:$0xff]
        %v6152 = vld [vmem:[#allocation3 + $0x58] sm:$0xff]
        %v6153 = vld [vmem:[#allocation3 + $0x60] sm:$0xff]
        %v6154 = vld [vmem:[#allocation3 + $0x68] sm:$0xff]
        %v6155 = vld [vmem:[#allocation3 + $0x70] sm:$0xff]
        %v6156 = vld [vmem:[#allocation3 + $0x78] sm:$0xff]
        %6173 = vrot.lane.b32.xlu0 %v6141, 105
        %v6174 = vpop.permute.xlu0 %6173
        %6175 = vrot.lane.b32.xlu0 %v6142, 105
        %v6176 = vpop.permute.xlu0 %6175
        %6177 = vrot.lane.b32.xlu0 %v6143, 105
        %v6178 = vpop.permute.xlu0 %6177
        %6179 = vrot.lane.b32.xlu0 %v6144, 105
        %v6180 = vpop.permute.xlu0 %6179
        %6181 = vrot.lane.b32.xlu0 %v6145, 105
        %v6182 = vpop.permute.xlu0 %6181
        %6183 = vrot.lane.b32.xlu0 %v6146, 105
        %v6184 = vpop.permute.xlu0 %6183
        %6185 = vrot.lane.b32.xlu0 %v6147, 105
        %v6186 = vpop.permute.xlu0 %6185
        %6187 = vrot.lane.b32.xlu0 %v6148, 105
        %v6188 = vpop.permute.xlu0 %6187
        %6189 = vrot.lane.b32.xlu0 %v6149, 105
        %v6190 = vpop.permute.xlu0 %6189
        %6191 = vrot.lane.b32.xlu0 %v6150, 105
        %v6192 = vpop.permute.xlu0 %6191
        %6193 = vrot.lane.b32.xlu0 %v6151, 105
        %v6194 = vpop.permute.xlu0 %6193
        %6195 = vrot.lane.b32.xlu0 %v6152, 105
        %v6196 = vpop.permute.xlu0 %6195
        %6197 = vrot.lane.b32.xlu0 %v6153, 105
        %v6198 = vpop.permute.xlu0 %6197
        %6199 = vrot.lane.b32.xlu0 %v6154, 105
        %v6200 = vpop.permute.xlu0 %6199
        %6201 = vrot.lane.b32.xlu0 %v6155, 105
        %v6202 = vpop.permute.xlu0 %6201
        %6203 = vrot.lane.b32.xlu0 %v6156, 105
        %v6204 = vpop.permute.xlu0 %6203
        %v6205 = vsel %vm557, %v6174, %v6176
        %v6206 = vsel %vm557, %v6176, %v6178
        %v6207 = vsel %vm557, %v6178, %v6180
        %v6208 = vsel %vm557, %v6182, %v6184
        %v6209 = vsel %vm557, %v6184, %v6186
        %v6210 = vsel %vm557, %v6186, %v6188
        %v6211 = vsel %vm557, %v6190, %v6192
        %v6212 = vsel %vm557, %v6192, %v6194
        %v6213 = vsel %vm557, %v6194, %v6196
        %v6214 = vsel %vm557, %v6198, %v6200
        %v6215 = vsel %vm557, %v6200, %v6202
        %v6216 = vsel %vm557, %v6202, %v6204
        %6233 = vst [vmem:[#allocation2 + $0x400] sm:$0xff] %v6205
        %6234 = vst [vmem:[#allocation2 + $0x408] sm:$0xff] %v6206
        %6235 = vst [vmem:[#allocation2 + $0x410] sm:$0xff] %v6207
        %6236 = vst.msk [vmem:[#allocation2 + $0x418] sm:$0xff] %vm403, %v6180
        %6237 = vst [vmem:[#allocation2 + $0x420] sm:$0xff] %v6208
        %6238 = vst [vmem:[#allocation2 + $0x428] sm:$0xff] %v6209
        %6239 = vst [vmem:[#allocation2 + $0x430] sm:$0xff] %v6210
        %6240 = vst.msk [vmem:[#allocation2 + $0x438] sm:$0xff] %vm403, %v6188
        %6241 = vst [vmem:[#allocation2 + $0x440] sm:$0xff] %v6211
        %6242 = vst [vmem:[#allocation2 + $0x448] sm:$0xff] %v6212
        %6243 = vst [vmem:[#allocation2 + $0x450] sm:$0xff] %v6213
        %6244 = vst.msk [vmem:[#allocation2 + $0x458] sm:$0xff] %vm403, %v6196
        %6245 = vst [vmem:[#allocation2 + $0x460] sm:$0xff] %v6214
        %6246 = vst [vmem:[#allocation2 + $0x468] sm:$0xff] %v6215
        %6247 = vst [vmem:[#allocation2 + $0x470] sm:$0xff] %v6216
        %6248 = vst.msk [vmem:[#allocation2 + $0x478] sm:$0xff] %vm403, %v6204
        %v6249 = vld [vmem:[#allocation3] sm:$0xff]
        %v6250 = vld [vmem:[#allocation3 + $0x8] sm:$0xff]
        %v6251 = vld [vmem:[#allocation3 + $0x10] sm:$0xff]
        %v6252 = vld [vmem:[#allocation3 + $0x18] sm:$0xff]
        %v6253 = vld [vmem:[#allocation3 + $0x20] sm:$0xff]
        %v6254 = vld [vmem:[#allocation3 + $0x28] sm:$0xff]
        %v6255 = vld [vmem:[#allocation3 + $0x30] sm:$0xff]
        %v6256 = vld [vmem:[#allocation3 + $0x38] sm:$0xff]
        %v6257 = vld [vmem:[#allocation3 + $0x40] sm:$0xff]
        %v6258 = vld [vmem:[#allocation3 + $0x48] sm:$0xff]
        %v6259 = vld [vmem:[#allocation3 + $0x50] sm:$0xff]
        %v6260 = vld [vmem:[#allocation3 + $0x58] sm:$0xff]
        %v6261 = vld [vmem:[#allocation3 + $0x60] sm:$0xff]
        %v6262 = vld [vmem:[#allocation3 + $0x68] sm:$0xff]
        %v6263 = vld [vmem:[#allocation3 + $0x70] sm:$0xff]
        %v6264 = vld [vmem:[#allocation3 + $0x78] sm:$0xff]
        %6281 = vrot.lane.b32.xlu0 %v6249, 104
        %v6282 = vpop.permute.xlu0 %6281
        %6283 = vrot.lane.b32.xlu0 %v6250, 104
        %v6284 = vpop.permute.xlu0 %6283
        %6285 = vrot.lane.b32.xlu0 %v6251, 104
        %v6286 = vpop.permute.xlu0 %6285
        %6287 = vrot.lane.b32.xlu0 %v6252, 104
        %v6288 = vpop.permute.xlu0 %6287
        %6289 = vrot.lane.b32.xlu0 %v6253, 104
        %v6290 = vpop.permute.xlu0 %6289
        %6291 = vrot.lane.b32.xlu0 %v6254, 104
        %v6292 = vpop.permute.xlu0 %6291
        %6293 = vrot.lane.b32.xlu0 %v6255, 104
        %v6294 = vpop.permute.xlu0 %6293
        %6295 = vrot.lane.b32.xlu0 %v6256, 104
        %v6296 = vpop.permute.xlu0 %6295
        %6297 = vrot.lane.b32.xlu0 %v6257, 104
        %v6298 = vpop.permute.xlu0 %6297
        %6299 = vrot.lane.b32.xlu0 %v6258, 104
        %v6300 = vpop.permute.xlu0 %6299
        %6301 = vrot.lane.b32.xlu0 %v6259, 104
        %v6302 = vpop.permute.xlu0 %6301
        %6303 = vrot.lane.b32.xlu0 %v6260, 104
        %v6304 = vpop.permute.xlu0 %6303
        %6305 = vrot.lane.b32.xlu0 %v6261, 104
        %v6306 = vpop.permute.xlu0 %6305
        %6307 = vrot.lane.b32.xlu0 %v6262, 104
        %v6308 = vpop.permute.xlu0 %6307
        %6309 = vrot.lane.b32.xlu0 %v6263, 104
        %v6310 = vpop.permute.xlu0 %6309
        %6311 = vrot.lane.b32.xlu0 %v6264, 104
        %v6312 = vpop.permute.xlu0 %6311
        %v6313 = vsel %vm577, %v6282, %v6284
        %v6314 = vsel %vm577, %v6284, %v6286
        %v6315 = vsel %vm577, %v6286, %v6288
        %v6316 = vsel %vm577, %v6290, %v6292
        %v6317 = vsel %vm577, %v6292, %v6294
        %v6318 = vsel %vm577, %v6294, %v6296
        %v6319 = vsel %vm577, %v6298, %v6300
        %v6320 = vsel %vm577, %v6300, %v6302
        %v6321 = vsel %vm577, %v6302, %v6304
        %v6322 = vsel %vm577, %v6306, %v6308
        %v6323 = vsel %vm577, %v6308, %v6310
        %v6324 = vsel %vm577, %v6310, %v6312
        %6341 = vst [vmem:[#allocation2 + $0x480] sm:$0xff] %v6313
        %6342 = vst [vmem:[#allocation2 + $0x488] sm:$0xff] %v6314
        %6343 = vst [vmem:[#allocation2 + $0x490] sm:$0xff] %v6315
        %6344 = vst.msk [vmem:[#allocation2 + $0x498] sm:$0xff] %vm403, %v6288
        %6345 = vst [vmem:[#allocation2 + $0x4a0] sm:$0xff] %v6316
        %6346 = vst [vmem:[#allocation2 + $0x4a8] sm:$0xff] %v6317
        %6347 = vst [vmem:[#allocation2 + $0x4b0] sm:$0xff] %v6318
        %6348 = vst.msk [vmem:[#allocation2 + $0x4b8] sm:$0xff] %vm403, %v6296
        %6349 = vst [vmem:[#allocation2 + $0x4c0] sm:$0xff] %v6319
        %6350 = vst [vmem:[#allocation2 + $0x4c8] sm:$0xff] %v6320
        %6351 = vst [vmem:[#allocation2 + $0x4d0] sm:$0xff] %v6321
        %6352 = vst.msk [vmem:[#allocation2 + $0x4d8] sm:$0xff] %vm403, %v6304
        %6353 = vst [vmem:[#allocation2 + $0x4e0] sm:$0xff] %v6322
        %6354 = vst [vmem:[#allocation2 + $0x4e8] sm:$0xff] %v6323
        %6355 = vst [vmem:[#allocation2 + $0x4f0] sm:$0xff] %v6324
        %6356 = vst.msk [vmem:[#allocation2 + $0x4f8] sm:$0xff] %vm403, %v6312
        %v6357 = vld [vmem:[#allocation3] sm:$0xff]
        %v6358 = vld [vmem:[#allocation3 + $0x8] sm:$0xff]
        %v6359 = vld [vmem:[#allocation3 + $0x10] sm:$0xff]
        %v6360 = vld [vmem:[#allocation3 + $0x18] sm:$0xff]
        %v6361 = vld [vmem:[#allocation3 + $0x20] sm:$0xff]
        %v6362 = vld [vmem:[#allocation3 + $0x28] sm:$0xff]
        %v6363 = vld [vmem:[#allocation3 + $0x30] sm:$0xff]
        %v6364 = vld [vmem:[#allocation3 + $0x38] sm:$0xff]
        %v6365 = vld [vmem:[#allocation3 + $0x40] sm:$0xff]
        %v6366 = vld [vmem:[#allocation3 + $0x48] sm:$0xff]
        %v6367 = vld [vmem:[#allocation3 + $0x50] sm:$0xff]
        %v6368 = vld [vmem:[#allocation3 + $0x58] sm:$0xff]
        %v6369 = vld [vmem:[#allocation3 + $0x60] sm:$0xff]
        %v6370 = vld [vmem:[#allocation3 + $0x68] sm:$0xff]
        %v6371 = vld [vmem:[#allocation3 + $0x70] sm:$0xff]
        %v6372 = vld [vmem:[#allocation3 + $0x78] sm:$0xff]
        %6389 = vrot.lane.b32.xlu0 %v6357, 88
        %v6390 = vpop.permute.xlu0 %6389
        %6391 = vrot.lane.b32.xlu0 %v6358, 88
        %v6392 = vpop.permute.xlu0 %6391
        %6393 = vrot.lane.b32.xlu0 %v6359, 88
        %v6394 = vpop.permute.xlu0 %6393
        %6395 = vrot.lane.b32.xlu0 %v6360, 88
        %v6396 = vpop.permute.xlu0 %6395
        %6397 = vrot.lane.b32.xlu0 %v6361, 88
        %v6398 = vpop.permute.xlu0 %6397
        %6399 = vrot.lane.b32.xlu0 %v6362, 88
        %v6400 = vpop.permute.xlu0 %6399
        %6401 = vrot.lane.b32.xlu0 %v6363, 88
        %v6402 = vpop.permute.xlu0 %6401
        %6403 = vrot.lane.b32.xlu0 %v6364, 88
        %v6404 = vpop.permute.xlu0 %6403
        %6405 = vrot.lane.b32.xlu0 %v6365, 88
        %v6406 = vpop.permute.xlu0 %6405
        %6407 = vrot.lane.b32.xlu0 %v6366, 88
        %v6408 = vpop.permute.xlu0 %6407
        %6409 = vrot.lane.b32.xlu0 %v6367, 88
        %v6410 = vpop.permute.xlu0 %6409
        %6411 = vrot.lane.b32.xlu0 %v6368, 88
        %v6412 = vpop.permute.xlu0 %6411
        %6413 = vrot.lane.b32.xlu0 %v6369, 88
        %v6414 = vpop.permute.xlu0 %6413
        %6415 = vrot.lane.b32.xlu0 %v6370, 88
        %v6416 = vpop.permute.xlu0 %6415
        %6417 = vrot.lane.b32.xlu0 %v6371, 88
        %v6418 = vpop.permute.xlu0 %6417
        %6419 = vrot.lane.b32.xlu0 %v6372, 88
        %v6420 = vpop.permute.xlu0 %6419
        %v6421 = vsel %vm597, %v6390, %v6392
        %v6422 = vsel %vm597, %v6392, %v6394
        %v6423 = vsel %vm597, %v6394, %v6396
        %v6424 = vsel %vm597, %v6398, %v6400
        %v6425 = vsel %vm597, %v6400, %v6402
        %v6426 = vsel %vm597, %v6402, %v6404
        %v6427 = vsel %vm597, %v6406, %v6408
        %v6428 = vsel %vm597, %v6408, %v6410
        %v6429 = vsel %vm597, %v6410, %v6412
        %v6430 = vsel %vm597, %v6414, %v6416
        %v6431 = vsel %vm597, %v6416, %v6418
        %v6432 = vsel %vm597, %v6418, %v6420
        %6449 = vst [vmem:[#allocation2 + $0x500] sm:$0xff] %v6421
        %6450 = vst [vmem:[#allocation2 + $0x508] sm:$0xff] %v6422
        %6451 = vst [vmem:[#allocation2 + $0x510] sm:$0xff] %v6423
        %6452 = vst.msk [vmem:[#allocation2 + $0x518] sm:$0xff] %vm403, %v6396
        %6453 = vst [vmem:[#allocation2 + $0x520] sm:$0xff] %v6424
        %6454 = vst [vmem:[#allocation2 + $0x528] sm:$0xff] %v6425
        %6455 = vst [vmem:[#allocation2 + $0x530] sm:$0xff] %v6426
        %6456 = vst.msk [vmem:[#allocation2 + $0x538] sm:$0xff] %vm403, %v6404
        %6457 = vst [vmem:[#allocation2 + $0x540] sm:$0xff] %v6427
        %6458 = vst [vmem:[#allocation2 + $0x548] sm:$0xff] %v6428
        %6459 = vst [vmem:[#allocation2 + $0x550] sm:$0xff] %v6429
        %6460 = vst.msk [vmem:[#allocation2 + $0x558] sm:$0xff] %vm403, %v6412
        %6461 = vst [vmem:[#allocation2 + $0x560] sm:$0xff] %v6430
        %6462 = vst [vmem:[#allocation2 + $0x568] sm:$0xff] %v6431
        %6463 = vst [vmem:[#allocation2 + $0x570] sm:$0xff] %v6432
        %6464 = vst.msk [vmem:[#allocation2 + $0x578] sm:$0xff] %vm403, %v6420
        %v6465 = vld [vmem:[#allocation3] sm:$0xff]
        %v6466 = vld [vmem:[#allocation3 + $0x8] sm:$0xff]
        %v6467 = vld [vmem:[#allocation3 + $0x10] sm:$0xff]
        %v6468 = vld [vmem:[#allocation3 + $0x18] sm:$0xff]
        %v6469 = vld [vmem:[#allocation3 + $0x20] sm:$0xff]
        %v6470 = vld [vmem:[#allocation3 + $0x28] sm:$0xff]
        %v6471 = vld [vmem:[#allocation3 + $0x30] sm:$0xff]
        %v6472 = vld [vmem:[#allocation3 + $0x38] sm:$0xff]
        %v6473 = vld [vmem:[#allocation3 + $0x40] sm:$0xff]
        %v6474 = vld [vmem:[#allocation3 + $0x48] sm:$0xff]
        %v6475 = vld [vmem:[#allocation3 + $0x50] sm:$0xff]
        %v6476 = vld [vmem:[#allocation3 + $0x58] sm:$0xff]
        %v6477 = vld [vmem:[#allocation3 + $0x60] sm:$0xff]
        %v6478 = vld [vmem:[#allocation3 + $0x68] sm:$0xff]
        %v6479 = vld [vmem:[#allocation3 + $0x70] sm:$0xff]
        %v6480 = vld [vmem:[#allocation3 + $0x78] sm:$0xff]
        %6497 = vrot.lane.b32.xlu0 %v6465, 87
        %v6498 = vpop.permute.xlu0 %6497
        %6499 = vrot.lane.b32.xlu0 %v6466, 87
        %v6500 = vpop.permute.xlu0 %6499
        %6501 = vrot.lane.b32.xlu0 %v6467, 87
        %v6502 = vpop.permute.xlu0 %6501
        %6503 = vrot.lane.b32.xlu0 %v6468, 87
        %v6504 = vpop.permute.xlu0 %6503
        %6505 = vrot.lane.b32.xlu0 %v6469, 87
        %v6506 = vpop.permute.xlu0 %6505
        %6507 = vrot.lane.b32.xlu0 %v6470, 87
        %v6508 = vpop.permute.xlu0 %6507
        %6509 = vrot.lane.b32.xlu0 %v6471, 87
        %v6510 = vpop.permute.xlu0 %6509
        %6511 = vrot.lane.b32.xlu0 %v6472, 87
        %v6512 = vpop.permute.xlu0 %6511
        %6513 = vrot.lane.b32.xlu0 %v6473, 87
        %v6514 = vpop.permute.xlu0 %6513
        %6515 = vrot.lane.b32.xlu0 %v6474, 87
        %v6516 = vpop.permute.xlu0 %6515
        %6517 = vrot.lane.b32.xlu0 %v6475, 87
        %v6518 = vpop.permute.xlu0 %6517
        %6519 = vrot.lane.b32.xlu0 %v6476, 87
        %v6520 = vpop.permute.xlu0 %6519
        %6521 = vrot.lane.b32.xlu0 %v6477, 87
        %v6522 = vpop.permute.xlu0 %6521
        %6523 = vrot.lane.b32.xlu0 %v6478, 87
        %v6524 = vpop.permute.xlu0 %6523
        %6525 = vrot.lane.b32.xlu0 %v6479, 87
        %v6526 = vpop.permute.xlu0 %6525
        %6527 = vrot.lane.b32.xlu0 %v6480, 87
        %v6528 = vpop.permute.xlu0 %6527
        %v6529 = vsel %vm617, %v6498, %v6500
        %v6530 = vsel %vm617, %v6500, %v6502
        %v6531 = vsel %vm617, %v6502, %v6504
        %v6532 = vsel %vm617, %v6506, %v6508
        %v6533 = vsel %vm617, %v6508, %v6510
        %v6534 = vsel %vm617, %v6510, %v6512
        %v6535 = vsel %vm617, %v6514, %v6516
        %v6536 = vsel %vm617, %v6516, %v6518
        %v6537 = vsel %vm617, %v6518, %v6520
        %v6538 = vsel %vm617, %v6522, %v6524
        %v6539 = vsel %vm617, %v6524, %v6526
        %v6540 = vsel %vm617, %v6526, %v6528
        %6557 = vst [vmem:[#allocation2 + $0x580] sm:$0xff] %v6529
        %6558 = vst [vmem:[#allocation2 + $0x588] sm:$0xff] %v6530
        %6559 = vst [vmem:[#allocation2 + $0x590] sm:$0xff] %v6531
        %6560 = vst.msk [vmem:[#allocation2 + $0x598] sm:$0xff] %vm403, %v6504
        %6561 = vst [vmem:[#allocation2 + $0x5a0] sm:$0xff] %v6532
        %6562 = vst [vmem:[#allocation2 + $0x5a8] sm:$0xff] %v6533
        %6563 = vst [vmem:[#allocation2 + $0x5b0] sm:$0xff] %v6534
        %6564 = vst.msk [vmem:[#allocation2 + $0x5b8] sm:$0xff] %vm403, %v6512
        %6565 = vst [vmem:[#allocation2 + $0x5c0] sm:$0xff] %v6535
        %6566 = vst [vmem:[#allocation2 + $0x5c8] sm:$0xff] %v6536
        %6567 = vst [vmem:[#allocation2 + $0x5d0] sm:$0xff] %v6537
        %6568 = vst.msk [vmem:[#allocation2 + $0x5d8] sm:$0xff] %vm403, %v6520
        %6569 = vst [vmem:[#allocation2 + $0x5e0] sm:$0xff] %v6538
        %6570 = vst [vmem:[#allocation2 + $0x5e8] sm:$0xff] %v6539
        %6571 = vst [vmem:[#allocation2 + $0x5f0] sm:$0xff] %v6540
        %6572 = vst.msk [vmem:[#allocation2 + $0x5f8] sm:$0xff] %vm403, %v6528
        %v6573 = vld [vmem:[#allocation3] sm:$0xff]
        %v6574 = vld [vmem:[#allocation3 + $0x8] sm:$0xff]
        %v6575 = vld [vmem:[#allocation3 + $0x10] sm:$0xff]
        %v6576 = vld [vmem:[#allocation3 + $0x18] sm:$0xff]
        %v6577 = vld [vmem:[#allocation3 + $0x20] sm:$0xff]
        %v6578 = vld [vmem:[#allocation3 + $0x28] sm:$0xff]
        %v6579 = vld [vmem:[#allocation3 + $0x30] sm:$0xff]
        %v6580 = vld [vmem:[#allocation3 + $0x38] sm:$0xff]
        %v6581 = vld [vmem:[#allocation3 + $0x40] sm:$0xff]
        %v6582 = vld [vmem:[#allocation3 + $0x48] sm:$0xff]
        %v6583 = vld [vmem:[#allocation3 + $0x50] sm:$0xff]
        %v6584 = vld [vmem:[#allocation3 + $0x58] sm:$0xff]
        %v6585 = vld [vmem:[#allocation3 + $0x60] sm:$0xff]
        %v6586 = vld [vmem:[#allocation3 + $0x68] sm:$0xff]
        %v6587 = vld [vmem:[#allocation3 + $0x70] sm:$0xff]
        %v6588 = vld [vmem:[#allocation3 + $0x78] sm:$0xff]
        %6605 = vrot.lane.b32.xlu0 %v6573, 86
        %v6606 = vpop.permute.xlu0 %6605
        %6607 = vrot.lane.b32.xlu0 %v6574, 86
        %v6608 = vpop.permute.xlu0 %6607
        %6609 = vrot.lane.b32.xlu0 %v6575, 86
        %v6610 = vpop.permute.xlu0 %6609
        %6611 = vrot.lane.b32.xlu0 %v6576, 86
        %v6612 = vpop.permute.xlu0 %6611
        %6613 = vrot.lane.b32.xlu0 %v6577, 86
        %v6614 = vpop.permute.xlu0 %6613
        %6615 = vrot.lane.b32.xlu0 %v6578, 86
        %v6616 = vpop.permute.xlu0 %6615
        %6617 = vrot.lane.b32.xlu0 %v6579, 86
        %v6618 = vpop.permute.xlu0 %6617
        %6619 = vrot.lane.b32.xlu0 %v6580, 86
        %v6620 = vpop.permute.xlu0 %6619
        %6621 = vrot.lane.b32.xlu0 %v6581, 86
        %v6622 = vpop.permute.xlu0 %6621
        %6623 = vrot.lane.b32.xlu0 %v6582, 86
        %v6624 = vpop.permute.xlu0 %6623
        %6625 = vrot.lane.b32.xlu0 %v6583, 86
        %v6626 = vpop.permute.xlu0 %6625
        %6627 = vrot.lane.b32.xlu0 %v6584, 86
        %v6628 = vpop.permute.xlu0 %6627
        %6629 = vrot.lane.b32.xlu0 %v6585, 86
        %v6630 = vpop.permute.xlu0 %6629
        %6631 = vrot.lane.b32.xlu0 %v6586, 86
        %v6632 = vpop.permute.xlu0 %6631
        %6633 = vrot.lane.b32.xlu0 %v6587, 86
        %v6634 = vpop.permute.xlu0 %6633
        %6635 = vrot.lane.b32.xlu0 %v6588, 86
        %v6636 = vpop.permute.xlu0 %6635
        %v6637 = vsel %vm637, %v6606, %v6608
        %v6638 = vsel %vm637, %v6608, %v6610
        %v6639 = vsel %vm637, %v6610, %v6612
        %v6640 = vsel %vm637, %v6614, %v6616
        %v6641 = vsel %vm637, %v6616, %v6618
        %v6642 = vsel %vm637, %v6618, %v6620
        %v6643 = vsel %vm637, %v6622, %v6624
        %v6644 = vsel %vm637, %v6624, %v6626
        %v6645 = vsel %vm637, %v6626, %v6628
        %v6646 = vsel %vm637, %v6630, %v6632
        %v6647 = vsel %vm637, %v6632, %v6634
        %v6648 = vsel %vm637, %v6634, %v6636
        %6665 = vst [vmem:[#allocation2 + $0x600] sm:$0xff] %v6637
        %6666 = vst [vmem:[#allocation2 + $0x608] sm:$0xff] %v6638
        %6667 = vst [vmem:[#allocation2 + $0x610] sm:$0xff] %v6639
        %6668 = vst.msk [vmem:[#allocation2 + $0x618] sm:$0xff] %vm403, %v6612
        %6669 = vst [vmem:[#allocation2 + $0x620] sm:$0xff] %v6640
        %6670 = vst [vmem:[#allocation2 + $0x628] sm:$0xff] %v6641
        %6671 = vst [vmem:[#allocation2 + $0x630] sm:$0xff] %v6642
        %6672 = vst.msk [vmem:[#allocation2 + $0x638] sm:$0xff] %vm403, %v6620
        %6673 = vst [vmem:[#allocation2 + $0x640] sm:$0xff] %v6643
        %6674 = vst [vmem:[#allocation2 + $0x648] sm:$0xff] %v6644
        %6675 = vst [vmem:[#allocation2 + $0x650] sm:$0xff] %v6645
        %6676 = vst.msk [vmem:[#allocation2 + $0x658] sm:$0xff] %vm403, %v6628
        %6677 = vst [vmem:[#allocation2 + $0x660] sm:$0xff] %v6646
        %6678 = vst [vmem:[#allocation2 + $0x668] sm:$0xff] %v6647
        %6679 = vst [vmem:[#allocation2 + $0x670] sm:$0xff] %v6648
        %6680 = vst.msk [vmem:[#allocation2 + $0x678] sm:$0xff] %vm403, %v6636
        %v6681 = vld [vmem:[#allocation3] sm:$0xff]
        %v6682 = vld [vmem:[#allocation3 + $0x8] sm:$0xff]
        %v6683 = vld [vmem:[#allocation3 + $0x10] sm:$0xff]
        %v6684 = vld [vmem:[#allocation3 + $0x18] sm:$0xff]
        %v6685 = vld [vmem:[#allocation3 + $0x20] sm:$0xff]
        %v6686 = vld [vmem:[#allocation3 + $0x28] sm:$0xff]
        %v6687 = vld [vmem:[#allocation3 + $0x30] sm:$0xff]
        %v6688 = vld [vmem:[#allocation3 + $0x38] sm:$0xff]
        %v6689 = vld [vmem:[#allocation3 + $0x40] sm:$0xff]
        %v6690 = vld [vmem:[#allocation3 + $0x48] sm:$0xff]
        %v6691 = vld [vmem:[#allocation3 + $0x50] sm:$0xff]
        %v6692 = vld [vmem:[#allocation3 + $0x58] sm:$0xff]
        %v6693 = vld [vmem:[#allocation3 + $0x60] sm:$0xff]
        %v6694 = vld [vmem:[#allocation3 + $0x68] sm:$0xff]
        %v6695 = vld [vmem:[#allocation3 + $0x70] sm:$0xff]
        %v6696 = vld [vmem:[#allocation3 + $0x78] sm:$0xff]
        %6713 = vrot.lane.b32.xlu0 %v6681, 85
        %v6714 = vpop.permute.xlu0 %6713
        %6715 = vrot.lane.b32.xlu0 %v6682, 85
        %v6716 = vpop.permute.xlu0 %6715
        %6717 = vrot.lane.b32.xlu0 %v6683, 85
        %v6718 = vpop.permute.xlu0 %6717
        %6719 = vrot.lane.b32.xlu0 %v6684, 85
        %v6720 = vpop.permute.xlu0 %6719
        %6721 = vrot.lane.b32.xlu0 %v6685, 85
        %v6722 = vpop.permute.xlu0 %6721
        %6723 = vrot.lane.b32.xlu0 %v6686, 85
        %v6724 = vpop.permute.xlu0 %6723
        %6725 = vrot.lane.b32.xlu0 %v6687, 85
        %v6726 = vpop.permute.xlu0 %6725
        %6727 = vrot.lane.b32.xlu0 %v6688, 85
        %v6728 = vpop.permute.xlu0 %6727
        %6729 = vrot.lane.b32.xlu0 %v6689, 85
        %v6730 = vpop.permute.xlu0 %6729
        %6731 = vrot.lane.b32.xlu0 %v6690, 85
        %v6732 = vpop.permute.xlu0 %6731
        %6733 = vrot.lane.b32.xlu0 %v6691, 85
        %v6734 = vpop.permute.xlu0 %6733
        %6735 = vrot.lane.b32.xlu0 %v6692, 85
        %v6736 = vpop.permute.xlu0 %6735
        %6737 = vrot.lane.b32.xlu0 %v6693, 85
        %v6738 = vpop.permute.xlu0 %6737
        %6739 = vrot.lane.b32.xlu0 %v6694, 85
        %v6740 = vpop.permute.xlu0 %6739
        %6741 = vrot.lane.b32.xlu0 %v6695, 85
        %v6742 = vpop.permute.xlu0 %6741
        %6743 = vrot.lane.b32.xlu0 %v6696, 85
        %v6744 = vpop.permute.xlu0 %6743
        %v6745 = vsel %vm657, %v6714, %v6716
        %v6746 = vsel %vm657, %v6716, %v6718
        %v6747 = vsel %vm657, %v6718, %v6720
        %v6748 = vsel %vm657, %v6722, %v6724
        %v6749 = vsel %vm657, %v6724, %v6726
        %v6750 = vsel %vm657, %v6726, %v6728
        %v6751 = vsel %vm657, %v6730, %v6732
        %v6752 = vsel %vm657, %v6732, %v6734
        %v6753 = vsel %vm657, %v6734, %v6736
        %v6754 = vsel %vm657, %v6738, %v6740
        %v6755 = vsel %vm657, %v6740, %v6742
        %v6756 = vsel %vm657, %v6742, %v6744
        %6773 = vst [vmem:[#allocation2 + $0x680] sm:$0xff] %v6745
        %6774 = vst [vmem:[#allocation2 + $0x688] sm:$0xff] %v6746
        %6775 = vst [vmem:[#allocation2 + $0x690] sm:$0xff] %v6747
        %6776 = vst.msk [vmem:[#allocation2 + $0x698] sm:$0xff] %vm403, %v6720
        %6777 = vst [vmem:[#allocation2 + $0x6a0] sm:$0xff] %v6748
        %6778 = vst [vmem:[#allocation2 + $0x6a8] sm:$0xff] %v6749
        %6779 = vst [vmem:[#allocation2 + $0x6b0] sm:$0xff] %v6750
        %6780 = vst.msk [vmem:[#allocation2 + $0x6b8] sm:$0xff] %vm403, %v6728
        %6781 = vst [vmem:[#allocation2 + $0x6c0] sm:$0xff] %v6751
        %6782 = vst [vmem:[#allocation2 + $0x6c8] sm:$0xff] %v6752
        %6783 = vst [vmem:[#allocation2 + $0x6d0] sm:$0xff] %v6753
        %6784 = vst.msk [vmem:[#allocation2 + $0x6d8] sm:$0xff] %vm403, %v6736
        %6785 = vst [vmem:[#allocation2 + $0x6e0] sm:$0xff] %v6754
        %6786 = vst [vmem:[#allocation2 + $0x6e8] sm:$0xff] %v6755
        %6787 = vst [vmem:[#allocation2 + $0x6f0] sm:$0xff] %v6756
        %6788 = vst.msk [vmem:[#allocation2 + $0x6f8] sm:$0xff] %vm403, %v6744
        %v6789 = vld [vmem:[#allocation3] sm:$0xff]
        %v6790 = vld [vmem:[#allocation3 + $0x8] sm:$0xff]
        %v6791 = vld [vmem:[#allocation3 + $0x10] sm:$0xff]
        %v6792 = vld [vmem:[#allocation3 + $0x18] sm:$0xff]
        %v6793 = vld [vmem:[#allocation3 + $0x20] sm:$0xff]
        %v6794 = vld [vmem:[#allocation3 + $0x28] sm:$0xff]
        %v6795 = vld [vmem:[#allocation3 + $0x30] sm:$0xff]
        %v6796 = vld [vmem:[#allocation3 + $0x38] sm:$0xff]
        %v6797 = vld [vmem:[#allocation3 + $0x40] sm:$0xff]
        %v6798 = vld [vmem:[#allocation3 + $0x48] sm:$0xff]
        %v6799 = vld [vmem:[#allocation3 + $0x50] sm:$0xff]
        %v6800 = vld [vmem:[#allocation3 + $0x58] sm:$0xff]
        %v6801 = vld [vmem:[#allocation3 + $0x60] sm:$0xff]
        %v6802 = vld [vmem:[#allocation3 + $0x68] sm:$0xff]
        %v6803 = vld [vmem:[#allocation3 + $0x70] sm:$0xff]
        %v6804 = vld [vmem:[#allocation3 + $0x78] sm:$0xff]
        %6821 = vrot.lane.b32.xlu0 %v6789, 84
        %v6822 = vpop.permute.xlu0 %6821
        %6823 = vrot.lane.b32.xlu0 %v6790, 84
        %v6824 = vpop.permute.xlu0 %6823
        %6825 = vrot.lane.b32.xlu0 %v6791, 84
        %v6826 = vpop.permute.xlu0 %6825
        %6827 = vrot.lane.b32.xlu0 %v6792, 84
        %v6828 = vpop.permute.xlu0 %6827
        %6829 = vrot.lane.b32.xlu0 %v6793, 84
        %v6830 = vpop.permute.xlu0 %6829
        %6831 = vrot.lane.b32.xlu0 %v6794, 84
        %v6832 = vpop.permute.xlu0 %6831
        %6833 = vrot.lane.b32.xlu0 %v6795, 84
        %v6834 = vpop.permute.xlu0 %6833
        %6835 = vrot.lane.b32.xlu0 %v6796, 84
        %v6836 = vpop.permute.xlu0 %6835
        %6837 = vrot.lane.b32.xlu0 %v6797, 84
        %v6838 = vpop.permute.xlu0 %6837
        %6839 = vrot.lane.b32.xlu0 %v6798, 84
        %v6840 = vpop.permute.xlu0 %6839
        %6841 = vrot.lane.b32.xlu0 %v6799, 84
        %v6842 = vpop.permute.xlu0 %6841
        %6843 = vrot.lane.b32.xlu0 %v6800, 84
        %v6844 = vpop.permute.xlu0 %6843
        %6845 = vrot.lane.b32.xlu0 %v6801, 84
        %v6846 = vpop.permute.xlu0 %6845
        %6847 = vrot.lane.b32.xlu0 %v6802, 84
        %v6848 = vpop.permute.xlu0 %6847
        %6849 = vrot.lane.b32.xlu0 %v6803, 84
        %v6850 = vpop.permute.xlu0 %6849
        %6851 = vrot.lane.b32.xlu0 %v6804, 84
        %v6852 = vpop.permute.xlu0 %6851
        %v6853 = vsel %vm677, %v6822, %v6824
        %v6854 = vsel %vm677, %v6824, %v6826
        %v6855 = vsel %vm677, %v6826, %v6828
        %v6856 = vsel %vm677, %v6830, %v6832
        %v6857 = vsel %vm677, %v6832, %v6834
        %v6858 = vsel %vm677, %v6834, %v6836
        %v6859 = vsel %vm677, %v6838, %v6840
        %v6860 = vsel %vm677, %v6840, %v6842
        %v6861 = vsel %vm677, %v6842, %v6844
        %v6862 = vsel %vm677, %v6846, %v6848
        %v6863 = vsel %vm677, %v6848, %v6850
        %v6864 = vsel %vm677, %v6850, %v6852
        %6881 = vst [vmem:[#allocation2 + $0x700] sm:$0xff] %v6853
        %6882 = vst [vmem:[#allocation2 + $0x708] sm:$0xff] %v6854
        %6883 = vst [vmem:[#allocation2 + $0x710] sm:$0xff] %v6855
        %6884 = vst.msk [vmem:[#allocation2 + $0x718] sm:$0xff] %vm403, %v6828
        %6885 = vst [vmem:[#allocation2 + $0x720] sm:$0xff] %v6856
        %6886 = vst [vmem:[#allocation2 + $0x728] sm:$0xff] %v6857
        %6887 = vst [vmem:[#allocation2 + $0x730] sm:$0xff] %v6858
        %6888 = vst.msk [vmem:[#allocation2 + $0x738] sm:$0xff] %vm403, %v6836
        %6889 = vst [vmem:[#allocation2 + $0x740] sm:$0xff] %v6859
        %6890 = vst [vmem:[#allocation2 + $0x748] sm:$0xff] %v6860
        %6891 = vst [vmem:[#allocation2 + $0x750] sm:$0xff] %v6861
        %6892 = vst.msk [vmem:[#allocation2 + $0x758] sm:$0xff] %vm403, %v6844
        %6893 = vst [vmem:[#allocation2 + $0x760] sm:$0xff] %v6862
        %6894 = vst [vmem:[#allocation2 + $0x768] sm:$0xff] %v6863
        %6895 = vst [vmem:[#allocation2 + $0x770] sm:$0xff] %v6864
        %6896 = vst.msk [vmem:[#allocation2 + $0x778] sm:$0xff] %vm403, %v6852
        %v6897 = vld [vmem:[#allocation3] sm:$0xff]
        %v6898 = vld [vmem:[#allocation3 + $0x8] sm:$0xff]
        %v6899 = vld [vmem:[#allocation3 + $0x10] sm:$0xff]
        %v6900 = vld [vmem:[#allocation3 + $0x18] sm:$0xff]
        %v6901 = vld [vmem:[#allocation3 + $0x20] sm:$0xff]
        %v6902 = vld [vmem:[#allocation3 + $0x28] sm:$0xff]
        %v6903 = vld [vmem:[#allocation3 + $0x30] sm:$0xff]
        %v6904 = vld [vmem:[#allocation3 + $0x38] sm:$0xff]
        %v6905 = vld [vmem:[#allocation3 + $0x40] sm:$0xff]
        %v6906 = vld [vmem:[#allocation3 + $0x48] sm:$0xff]
        %v6907 = vld [vmem:[#allocation3 + $0x50] sm:$0xff]
        %v6908 = vld [vmem:[#allocation3 + $0x58] sm:$0xff]
        %v6909 = vld [vmem:[#allocation3 + $0x60] sm:$0xff]
        %v6910 = vld [vmem:[#allocation3 + $0x68] sm:$0xff]
        %v6911 = vld [vmem:[#allocation3 + $0x70] sm:$0xff]
        %v6912 = vld [vmem:[#allocation3 + $0x78] sm:$0xff]
        %6929 = vrot.lane.b32.xlu0 %v6897, 68
        %v6930 = vpop.permute.xlu0 %6929
        %6931 = vrot.lane.b32.xlu0 %v6898, 68
        %v6932 = vpop.permute.xlu0 %6931
        %6933 = vrot.lane.b32.xlu0 %v6899, 68
        %v6934 = vpop.permute.xlu0 %6933
        %6935 = vrot.lane.b32.xlu0 %v6900, 68
        %v6936 = vpop.permute.xlu0 %6935
        %6937 = vrot.lane.b32.xlu0 %v6901, 68
        %v6938 = vpop.permute.xlu0 %6937
        %6939 = vrot.lane.b32.xlu0 %v6902, 68
        %v6940 = vpop.permute.xlu0 %6939
        %6941 = vrot.lane.b32.xlu0 %v6903, 68
        %v6942 = vpop.permute.xlu0 %6941
        %6943 = vrot.lane.b32.xlu0 %v6904, 68
        %v6944 = vpop.permute.xlu0 %6943
        %6945 = vrot.lane.b32.xlu0 %v6905, 68
        %v6946 = vpop.permute.xlu0 %6945
        %6947 = vrot.lane.b32.xlu0 %v6906, 68
        %v6948 = vpop.permute.xlu0 %6947
        %6949 = vrot.lane.b32.xlu0 %v6907, 68
        %v6950 = vpop.permute.xlu0 %6949
        %6951 = vrot.lane.b32.xlu0 %v6908, 68
        %v6952 = vpop.permute.xlu0 %6951
        %6953 = vrot.lane.b32.xlu0 %v6909, 68
        %v6954 = vpop.permute.xlu0 %6953
        %6955 = vrot.lane.b32.xlu0 %v6910, 68
        %v6956 = vpop.permute.xlu0 %6955
        %6957 = vrot.lane.b32.xlu0 %v6911, 68
        %v6958 = vpop.permute.xlu0 %6957
        %6959 = vrot.lane.b32.xlu0 %v6912, 68
        %v6960 = vpop.permute.xlu0 %6959
        %v6961 = vsel %vm697, %v6930, %v6932
        %v6962 = vsel %vm697, %v6932, %v6934
        %v6963 = vsel %vm697, %v6934, %v6936
        %v6964 = vsel %vm697, %v6938, %v6940
        %v6965 = vsel %vm697, %v6940, %v6942
        %v6966 = vsel %vm697, %v6942, %v6944
        %v6967 = vsel %vm697, %v6946, %v6948
        %v6968 = vsel %vm697, %v6948, %v6950
        %v6969 = vsel %vm697, %v6950, %v6952
        %v6970 = vsel %vm697, %v6954, %v6956
        %v6971 = vsel %vm697, %v6956, %v6958
        %v6972 = vsel %vm697, %v6958, %v6960
        %6989 = vst [vmem:[#allocation2 + $0x780] sm:$0xff] %v6961
        %6990 = vst [vmem:[#allocation2 + $0x788] sm:$0xff] %v6962
        %6991 = vst [vmem:[#allocation2 + $0x790] sm:$0xff] %v6963
        %6992 = vst.msk [vmem:[#allocation2 + $0x798] sm:$0xff] %vm403, %v6936
        %6993 = vst [vmem:[#allocation2 + $0x7a0] sm:$0xff] %v6964
        %6994 = vst [vmem:[#allocation2 + $0x7a8] sm:$0xff] %v6965
        %6995 = vst [vmem:[#allocation2 + $0x7b0] sm:$0xff] %v6966
        %6996 = vst.msk [vmem:[#allocation2 + $0x7b8] sm:$0xff] %vm403, %v6944
        %6997 = vst [vmem:[#allocation2 + $0x7c0] sm:$0xff] %v6967
        %6998 = vst [vmem:[#allocation2 + $0x7c8] sm:$0xff] %v6968
        %6999 = vst [vmem:[#allocation2 + $0x7d0] sm:$0xff] %v6969
        %7000 = vst.msk [vmem:[#allocation2 + $0x7d8] sm:$0xff] %vm403, %v6952
        %7001 = vst [vmem:[#allocation2 + $0x7e0] sm:$0xff] %v6970
        %7002 = vst [vmem:[#allocation2 + $0x7e8] sm:$0xff] %v6971
        %7003 = vst [vmem:[#allocation2 + $0x7f0] sm:$0xff] %v6972
        %7004 = vst.msk [vmem:[#allocation2 + $0x7f8] sm:$0xff] %vm403, %v6960
        %v7005 = vld [vmem:[#allocation3] sm:$0xff]
        %v7006 = vld [vmem:[#allocation3 + $0x8] sm:$0xff]
        %v7007 = vld [vmem:[#allocation3 + $0x10] sm:$0xff]
        %v7008 = vld [vmem:[#allocation3 + $0x18] sm:$0xff]
        %v7009 = vld [vmem:[#allocation3 + $0x20] sm:$0xff]
        %v7010 = vld [vmem:[#allocation3 + $0x28] sm:$0xff]
        %v7011 = vld [vmem:[#allocation3 + $0x30] sm:$0xff]
        %v7012 = vld [vmem:[#allocation3 + $0x38] sm:$0xff]
        %v7013 = vld [vmem:[#allocation3 + $0x40] sm:$0xff]
        %v7014 = vld [vmem:[#allocation3 + $0x48] sm:$0xff]
        %v7015 = vld [vmem:[#allocation3 + $0x50] sm:$0xff]
        %v7016 = vld [vmem:[#allocation3 + $0x58] sm:$0xff]
        %v7017 = vld [vmem:[#allocation3 + $0x60] sm:$0xff]
        %v7018 = vld [vmem:[#allocation3 + $0x68] sm:$0xff]
        %v7019 = vld [vmem:[#allocation3 + $0x70] sm:$0xff]
        %v7020 = vld [vmem:[#allocation3 + $0x78] sm:$0xff]
        %7037 = vrot.lane.b32.xlu0 %v7005, 67
        %v7038 = vpop.permute.xlu0 %7037
        %7039 = vrot.lane.b32.xlu0 %v7006, 67
        %v7040 = vpop.permute.xlu0 %7039
        %7041 = vrot.lane.b32.xlu0 %v7007, 67
        %v7042 = vpop.permute.xlu0 %7041
        %7043 = vrot.lane.b32.xlu0 %v7008, 67
        %v7044 = vpop.permute.xlu0 %7043
        %7045 = vrot.lane.b32.xlu0 %v7009, 67
        %v7046 = vpop.permute.xlu0 %7045
        %7047 = vrot.lane.b32.xlu0 %v7010, 67
        %v7048 = vpop.permute.xlu0 %7047
        %7049 = vrot.lane.b32.xlu0 %v7011, 67
        %v7050 = vpop.permute.xlu0 %7049
        %7051 = vrot.lane.b32.xlu0 %v7012, 67
        %v7052 = vpop.permute.xlu0 %7051
        %7053 = vrot.lane.b32.xlu0 %v7013, 67
        %v7054 = vpop.permute.xlu0 %7053
        %7055 = vrot.lane.b32.xlu0 %v7014, 67
        %v7056 = vpop.permute.xlu0 %7055
        %7057 = vrot.lane.b32.xlu0 %v7015, 67
        %v7058 = vpop.permute.xlu0 %7057
        %7059 = vrot.lane.b32.xlu0 %v7016, 67
        %v7060 = vpop.permute.xlu0 %7059
        %7061 = vrot.lane.b32.xlu0 %v7017, 67
        %v7062 = vpop.permute.xlu0 %7061
        %7063 = vrot.lane.b32.xlu0 %v7018, 67
        %v7064 = vpop.permute.xlu0 %7063
        %7065 = vrot.lane.b32.xlu0 %v7019, 67
        %v7066 = vpop.permute.xlu0 %7065
        %7067 = vrot.lane.b32.xlu0 %v7020, 67
        %v7068 = vpop.permute.xlu0 %7067
        %v7069 = vsel %vm717, %v7038, %v7040
        %v7070 = vsel %vm717, %v7040, %v7042
        %v7071 = vsel %vm717, %v7042, %v7044
        %v7072 = vsel %vm717, %v7046, %v7048
        %v7073 = vsel %vm717, %v7048, %v7050
        %v7074 = vsel %vm717, %v7050, %v7052
        %v7075 = vsel %vm717, %v7054, %v7056
        %v7076 = vsel %vm717, %v7056, %v7058
        %v7077 = vsel %vm717, %v7058, %v7060
        %v7078 = vsel %vm717, %v7062, %v7064
        %v7079 = vsel %vm717, %v7064, %v7066
        %v7080 = vsel %vm717, %v7066, %v7068
        %7097 = vst [vmem:[#allocation2 + $0x800] sm:$0xff] %v7069
        %7098 = vst [vmem:[#allocation2 + $0x808] sm:$0xff] %v7070
        %7099 = vst [vmem:[#allocation2 + $0x810] sm:$0xff] %v7071
        %7100 = vst.msk [vmem:[#allocation2 + $0x818] sm:$0xff] %vm403, %v7044
        %7101 = vst [vmem:[#allocation2 + $0x820] sm:$0xff] %v7072
        %7102 = vst [vmem:[#allocation2 + $0x828] sm:$0xff] %v7073
        %7103 = vst [vmem:[#allocation2 + $0x830] sm:$0xff] %v7074
        %7104 = vst.msk [vmem:[#allocation2 + $0x838] sm:$0xff] %vm403, %v7052
        %7105 = vst [vmem:[#allocation2 + $0x840] sm:$0xff] %v7075
        %7106 = vst [vmem:[#allocation2 + $0x848] sm:$0xff] %v7076
        %7107 = vst [vmem:[#allocation2 + $0x850] sm:$0xff] %v7077
        %7108 = vst.msk [vmem:[#allocation2 + $0x858] sm:$0xff] %vm403, %v7060
        %7109 = vst [vmem:[#allocation2 + $0x860] sm:$0xff] %v7078
        %7110 = vst [vmem:[#allocation2 + $0x868] sm:$0xff] %v7079
        %7111 = vst [vmem:[#allocation2 + $0x870] sm:$0xff] %v7080
        %7112 = vst.msk [vmem:[#allocation2 + $0x878] sm:$0xff] %vm403, %v7068
        %v7113 = vld [vmem:[#allocation3] sm:$0xff]
        %v7114 = vld [vmem:[#allocation3 + $0x8] sm:$0xff]
        %v7115 = vld [vmem:[#allocation3 + $0x10] sm:$0xff]
        %v7116 = vld [vmem:[#allocation3 + $0x18] sm:$0xff]
        %v7117 = vld [vmem:[#allocation3 + $0x20] sm:$0xff]
        %v7118 = vld [vmem:[#allocation3 + $0x28] sm:$0xff]
        %v7119 = vld [vmem:[#allocation3 + $0x30] sm:$0xff]
        %v7120 = vld [vmem:[#allocation3 + $0x38] sm:$0xff]
        %v7121 = vld [vmem:[#allocation3 + $0x40] sm:$0xff]
        %v7122 = vld [vmem:[#allocation3 + $0x48] sm:$0xff]
        %v7123 = vld [vmem:[#allocation3 + $0x50] sm:$0xff]
        %v7124 = vld [vmem:[#allocation3 + $0x58] sm:$0xff]
        %v7125 = vld [vmem:[#allocation3 + $0x60] sm:$0xff]
        %v7126 = vld [vmem:[#allocation3 + $0x68] sm:$0xff]
        %v7127 = vld [vmem:[#allocation3 + $0x70] sm:$0xff]
        %v7128 = vld [vmem:[#allocation3 + $0x78] sm:$0xff]
        %7145 = vrot.lane.b32.xlu0 %v7113, 66
        %v7146 = vpop.permute.xlu0 %7145
        %7147 = vrot.lane.b32.xlu0 %v7114, 66
        %v7148 = vpop.permute.xlu0 %7147
        %7149 = vrot.lane.b32.xlu0 %v7115, 66
        %v7150 = vpop.permute.xlu0 %7149
        %7151 = vrot.lane.b32.xlu0 %v7116, 66
        %v7152 = vpop.permute.xlu0 %7151
        %7153 = vrot.lane.b32.xlu0 %v7117, 66
        %v7154 = vpop.permute.xlu0 %7153
        %7155 = vrot.lane.b32.xlu0 %v7118, 66
        %v7156 = vpop.permute.xlu0 %7155
        %7157 = vrot.lane.b32.xlu0 %v7119, 66
        %v7158 = vpop.permute.xlu0 %7157
        %7159 = vrot.lane.b32.xlu0 %v7120, 66
        %v7160 = vpop.permute.xlu0 %7159
        %7161 = vrot.lane.b32.xlu0 %v7121, 66
        %v7162 = vpop.permute.xlu0 %7161
        %7163 = vrot.lane.b32.xlu0 %v7122, 66
        %v7164 = vpop.permute.xlu0 %7163
        %7165 = vrot.lane.b32.xlu0 %v7123, 66
        %v7166 = vpop.permute.xlu0 %7165
        %7167 = vrot.lane.b32.xlu0 %v7124, 66
        %v7168 = vpop.permute.xlu0 %7167
        %7169 = vrot.lane.b32.xlu0 %v7125, 66
        %v7170 = vpop.permute.xlu0 %7169
        %7171 = vrot.lane.b32.xlu0 %v7126, 66
        %v7172 = vpop.permute.xlu0 %7171
        %7173 = vrot.lane.b32.xlu0 %v7127, 66
        %v7174 = vpop.permute.xlu0 %7173
        %7175 = vrot.lane.b32.xlu0 %v7128, 66
        %v7176 = vpop.permute.xlu0 %7175
        %v7177 = vsel %vm737, %v7146, %v7148
        %v7178 = vsel %vm737, %v7148, %v7150
        %v7179 = vsel %vm737, %v7150, %v7152
        %v7180 = vsel %vm737, %v7154, %v7156
        %v7181 = vsel %vm737, %v7156, %v7158
        %v7182 = vsel %vm737, %v7158, %v7160
        %v7183 = vsel %vm737, %v7162, %v7164
        %v7184 = vsel %vm737, %v7164, %v7166
        %v7185 = vsel %vm737, %v7166, %v7168
        %v7186 = vsel %vm737, %v7170, %v7172
        %v7187 = vsel %vm737, %v7172, %v7174
        %v7188 = vsel %vm737, %v7174, %v7176
        %7205 = vst [vmem:[#allocation2 + $0x880] sm:$0xff] %v7177
        %7206 = vst [vmem:[#allocation2 + $0x888] sm:$0xff] %v7178
        %7207 = vst [vmem:[#allocation2 + $0x890] sm:$0xff] %v7179
        %7208 = vst.msk [vmem:[#allocation2 + $0x898] sm:$0xff] %vm403, %v7152
        %7209 = vst [vmem:[#allocation2 + $0x8a0] sm:$0xff] %v7180
        %7210 = vst [vmem:[#allocation2 + $0x8a8] sm:$0xff] %v7181
        %7211 = vst [vmem:[#allocation2 + $0x8b0] sm:$0xff] %v7182
        %7212 = vst.msk [vmem:[#allocation2 + $0x8b8] sm:$0xff] %vm403, %v7160
        %7213 = vst [vmem:[#allocation2 + $0x8c0] sm:$0xff] %v7183
        %7214 = vst [vmem:[#allocation2 + $0x8c8] sm:$0xff] %v7184
        %7215 = vst [vmem:[#allocation2 + $0x8d0] sm:$0xff] %v7185
        %7216 = vst.msk [vmem:[#allocation2 + $0x8d8] sm:$0xff] %vm403, %v7168
        %7217 = vst [vmem:[#allocation2 + $0x8e0] sm:$0xff] %v7186
        %7218 = vst [vmem:[#allocation2 + $0x8e8] sm:$0xff] %v7187
        %7219 = vst [vmem:[#allocation2 + $0x8f0] sm:$0xff] %v7188
        %7220 = vst.msk [vmem:[#allocation2 + $0x8f8] sm:$0xff] %vm403, %v7176
        %v7221 = vld [vmem:[#allocation3] sm:$0xff]
        %v7222 = vld [vmem:[#allocation3 + $0x8] sm:$0xff]
        %v7223 = vld [vmem:[#allocation3 + $0x10] sm:$0xff]
        %v7224 = vld [vmem:[#allocation3 + $0x18] sm:$0xff]
        %v7225 = vld [vmem:[#allocation3 + $0x20] sm:$0xff]
        %v7226 = vld [vmem:[#allocation3 + $0x28] sm:$0xff]
        %v7227 = vld [vmem:[#allocation3 + $0x30] sm:$0xff]
        %v7228 = vld [vmem:[#allocation3 + $0x38] sm:$0xff]
        %v7229 = vld [vmem:[#allocation3 + $0x40] sm:$0xff]
        %v7230 = vld [vmem:[#allocation3 + $0x48] sm:$0xff]
        %v7231 = vld [vmem:[#allocation3 + $0x50] sm:$0xff]
        %v7232 = vld [vmem:[#allocation3 + $0x58] sm:$0xff]
        %v7233 = vld [vmem:[#allocation3 + $0x60] sm:$0xff]
        %v7234 = vld [vmem:[#allocation3 + $0x68] sm:$0xff]
        %v7235 = vld [vmem:[#allocation3 + $0x70] sm:$0xff]
        %v7236 = vld [vmem:[#allocation3 + $0x78] sm:$0xff]
        %7253 = vrot.lane.b32.xlu0 %v7221, 65
        %v7254 = vpop.permute.xlu0 %7253
        %7255 = vrot.lane.b32.xlu0 %v7222, 65
        %v7256 = vpop.permute.xlu0 %7255
        %7257 = vrot.lane.b32.xlu0 %v7223, 65
        %v7258 = vpop.permute.xlu0 %7257
        %7259 = vrot.lane.b32.xlu0 %v7224, 65
        %v7260 = vpop.permute.xlu0 %7259
        %7261 = vrot.lane.b32.xlu0 %v7225, 65
        %v7262 = vpop.permute.xlu0 %7261
        %7263 = vrot.lane.b32.xlu0 %v7226, 65
        %v7264 = vpop.permute.xlu0 %7263
        %7265 = vrot.lane.b32.xlu0 %v7227, 65
        %v7266 = vpop.permute.xlu0 %7265
        %7267 = vrot.lane.b32.xlu0 %v7228, 65
        %v7268 = vpop.permute.xlu0 %7267
        %7269 = vrot.lane.b32.xlu0 %v7229, 65
        %v7270 = vpop.permute.xlu0 %7269
        %7271 = vrot.lane.b32.xlu0 %v7230, 65
        %v7272 = vpop.permute.xlu0 %7271
        %7273 = vrot.lane.b32.xlu0 %v7231, 65
        %v7274 = vpop.permute.xlu0 %7273
        %7275 = vrot.lane.b32.xlu0 %v7232, 65
        %v7276 = vpop.permute.xlu0 %7275
        %7277 = vrot.lane.b32.xlu0 %v7233, 65
        %v7278 = vpop.permute.xlu0 %7277
        %7279 = vrot.lane.b32.xlu0 %v7234, 65
        %v7280 = vpop.permute.xlu0 %7279
        %7281 = vrot.lane.b32.xlu0 %v7235, 65
        %v7282 = vpop.permute.xlu0 %7281
        %7283 = vrot.lane.b32.xlu0 %v7236, 65
        %v7284 = vpop.permute.xlu0 %7283
        %v7285 = vsel %vm757, %v7254, %v7256
        %v7286 = vsel %vm757, %v7256, %v7258
        %v7287 = vsel %vm757, %v7258, %v7260
        %v7288 = vsel %vm757, %v7262, %v7264
        %v7289 = vsel %vm757, %v7264, %v7266
        %v7290 = vsel %vm757, %v7266, %v7268
        %v7291 = vsel %vm757, %v7270, %v7272
        %v7292 = vsel %vm757, %v7272, %v7274
        %v7293 = vsel %vm757, %v7274, %v7276
        %v7294 = vsel %vm757, %v7278, %v7280
        %v7295 = vsel %vm757, %v7280, %v7282
        %v7296 = vsel %vm757, %v7282, %v7284
        %7313 = vst [vmem:[#allocation2 + $0x900] sm:$0xff] %v7285
        %7314 = vst [vmem:[#allocation2 + $0x908] sm:$0xff] %v7286
        %7315 = vst [vmem:[#allocation2 + $0x910] sm:$0xff] %v7287
        %7316 = vst.msk [vmem:[#allocation2 + $0x918] sm:$0xff] %vm403, %v7260
        %7317 = vst [vmem:[#allocation2 + $0x920] sm:$0xff] %v7288
        %7318 = vst [vmem:[#allocation2 + $0x928] sm:$0xff] %v7289
        %7319 = vst [vmem:[#allocation2 + $0x930] sm:$0xff] %v7290
        %7320 = vst.msk [vmem:[#allocation2 + $0x938] sm:$0xff] %vm403, %v7268
        %7321 = vst [vmem:[#allocation2 + $0x940] sm:$0xff] %v7291
        %7322 = vst [vmem:[#allocation2 + $0x948] sm:$0xff] %v7292
        %7323 = vst [vmem:[#allocation2 + $0x950] sm:$0xff] %v7293
        %7324 = vst.msk [vmem:[#allocation2 + $0x958] sm:$0xff] %vm403, %v7276
        %7325 = vst [vmem:[#allocation2 + $0x960] sm:$0xff] %v7294
        %7326 = vst [vmem:[#allocation2 + $0x968] sm:$0xff] %v7295
        %7327 = vst [vmem:[#allocation2 + $0x970] sm:$0xff] %v7296
        %7328 = vst.msk [vmem:[#allocation2 + $0x978] sm:$0xff] %vm403, %v7284
        %v7329 = vld [vmem:[#allocation3] sm:$0xff]
        %v7330 = vld [vmem:[#allocation3 + $0x8] sm:$0xff]
        %v7331 = vld [vmem:[#allocation3 + $0x10] sm:$0xff]
        %v7332 = vld [vmem:[#allocation3 + $0x18] sm:$0xff]
        %v7333 = vld [vmem:[#allocation3 + $0x20] sm:$0xff]
        %v7334 = vld [vmem:[#allocation3 + $0x28] sm:$0xff]
        %v7335 = vld [vmem:[#allocation3 + $0x30] sm:$0xff]
        %v7336 = vld [vmem:[#allocation3 + $0x38] sm:$0xff]
        %v7337 = vld [vmem:[#allocation3 + $0x40] sm:$0xff]
        %v7338 = vld [vmem:[#allocation3 + $0x48] sm:$0xff]
        %v7339 = vld [vmem:[#allocation3 + $0x50] sm:$0xff]
        %v7340 = vld [vmem:[#allocation3 + $0x58] sm:$0xff]
        %v7341 = vld [vmem:[#allocation3 + $0x60] sm:$0xff]
        %v7342 = vld [vmem:[#allocation3 + $0x68] sm:$0xff]
        %v7343 = vld [vmem:[#allocation3 + $0x70] sm:$0xff]
        %v7344 = vld [vmem:[#allocation3 + $0x78] sm:$0xff]
        %7361 = vrot.lane.b32.xlu0 %v7329, 64
        %v7362 = vpop.permute.xlu0 %7361
        %7363 = vrot.lane.b32.xlu0 %v7330, 64
        %v7364 = vpop.permute.xlu0 %7363
        %7365 = vrot.lane.b32.xlu0 %v7331, 64
        %v7366 = vpop.permute.xlu0 %7365
        %7367 = vrot.lane.b32.xlu0 %v7332, 64
        %v7368 = vpop.permute.xlu0 %7367
        %7369 = vrot.lane.b32.xlu0 %v7333, 64
        %v7370 = vpop.permute.xlu0 %7369
        %7371 = vrot.lane.b32.xlu0 %v7334, 64
        %v7372 = vpop.permute.xlu0 %7371
        %7373 = vrot.lane.b32.xlu0 %v7335, 64
        %v7374 = vpop.permute.xlu0 %7373
        %7375 = vrot.lane.b32.xlu0 %v7336, 64
        %v7376 = vpop.permute.xlu0 %7375
        %7377 = vrot.lane.b32.xlu0 %v7337, 64
        %v7378 = vpop.permute.xlu0 %7377
        %7379 = vrot.lane.b32.xlu0 %v7338, 64
        %v7380 = vpop.permute.xlu0 %7379
        %7381 = vrot.lane.b32.xlu0 %v7339, 64
        %v7382 = vpop.permute.xlu0 %7381
        %7383 = vrot.lane.b32.xlu0 %v7340, 64
        %v7384 = vpop.permute.xlu0 %7383
        %7385 = vrot.lane.b32.xlu0 %v7341, 64
        %v7386 = vpop.permute.xlu0 %7385
        %7387 = vrot.lane.b32.xlu0 %v7342, 64
        %v7388 = vpop.permute.xlu0 %7387
        %7389 = vrot.lane.b32.xlu0 %v7343, 64
        %v7390 = vpop.permute.xlu0 %7389
        %7391 = vrot.lane.b32.xlu0 %v7344, 64
        %v7392 = vpop.permute.xlu0 %7391
        %v7393 = vsel %vm777, %v7362, %v7364
        %v7394 = vsel %vm777, %v7364, %v7366
        %v7395 = vsel %vm777, %v7366, %v7368
        %v7396 = vsel %vm777, %v7370, %v7372
        %v7397 = vsel %vm777, %v7372, %v7374
        %v7398 = vsel %vm777, %v7374, %v7376
        %v7399 = vsel %vm777, %v7378, %v7380
        %v7400 = vsel %vm777, %v7380, %v7382
        %v7401 = vsel %vm777, %v7382, %v7384
        %v7402 = vsel %vm777, %v7386, %v7388
        %v7403 = vsel %vm777, %v7388, %v7390
        %v7404 = vsel %vm777, %v7390, %v7392
        %7421 = vst [vmem:[#allocation2 + $0x980] sm:$0xff] %v7393
        %7422 = vst [vmem:[#allocation2 + $0x988] sm:$0xff] %v7394
        %7423 = vst [vmem:[#allocation2 + $0x990] sm:$0xff] %v7395
        %7424 = vst.msk [vmem:[#allocation2 + $0x998] sm:$0xff] %vm403, %v7368
        %7425 = vst [vmem:[#allocation2 + $0x9a0] sm:$0xff] %v7396
        %7426 = vst [vmem:[#allocation2 + $0x9a8] sm:$0xff] %v7397
        %7427 = vst [vmem:[#allocation2 + $0x9b0] sm:$0xff] %v7398
        %7428 = vst.msk [vmem:[#allocation2 + $0x9b8] sm:$0xff] %vm403, %v7376
        %7429 = vst [vmem:[#allocation2 + $0x9c0] sm:$0xff] %v7399
        %7430 = vst [vmem:[#allocation2 + $0x9c8] sm:$0xff] %v7400
        %7431 = vst [vmem:[#allocation2 + $0x9d0] sm:$0xff] %v7401
        %7432 = vst.msk [vmem:[#allocation2 + $0x9d8] sm:$0xff] %vm403, %v7384
        %7433 = vst [vmem:[#allocation2 + $0x9e0] sm:$0xff] %v7402
        %7434 = vst [vmem:[#allocation2 + $0x9e8] sm:$0xff] %v7403
        %7435 = vst [vmem:[#allocation2 + $0x9f0] sm:$0xff] %v7404
        %7436 = vst.msk [vmem:[#allocation2 + $0x9f8] sm:$0xff] %vm403, %v7392
        %v7437 = vld [vmem:[#allocation3] sm:$0xff]
        %v7438 = vld [vmem:[#allocation3 + $0x8] sm:$0xff]
        %v7439 = vld [vmem:[#allocation3 + $0x10] sm:$0xff]
        %v7440 = vld [vmem:[#allocation3 + $0x18] sm:$0xff]
        %v7441 = vld [vmem:[#allocation3 + $0x20] sm:$0xff]
        %v7442 = vld [vmem:[#allocation3 + $0x28] sm:$0xff]
        %v7443 = vld [vmem:[#allocation3 + $0x30] sm:$0xff]
        %v7444 = vld [vmem:[#allocation3 + $0x38] sm:$0xff]
        %v7445 = vld [vmem:[#allocation3 + $0x40] sm:$0xff]
        %v7446 = vld [vmem:[#allocation3 + $0x48] sm:$0xff]
        %v7447 = vld [vmem:[#allocation3 + $0x50] sm:$0xff]
        %v7448 = vld [vmem:[#allocation3 + $0x58] sm:$0xff]
        %v7449 = vld [vmem:[#allocation3 + $0x60] sm:$0xff]
        %v7450 = vld [vmem:[#allocation3 + $0x68] sm:$0xff]
        %v7451 = vld [vmem:[#allocation3 + $0x70] sm:$0xff]
        %v7452 = vld [vmem:[#allocation3 + $0x78] sm:$0xff]
        %7469 = vrot.lane.b32.xlu0 %v7437, 48
        %v7470 = vpop.permute.xlu0 %7469
        %7471 = vrot.lane.b32.xlu0 %v7438, 48
        %v7472 = vpop.permute.xlu0 %7471
        %7473 = vrot.lane.b32.xlu0 %v7439, 48
        %v7474 = vpop.permute.xlu0 %7473
        %7475 = vrot.lane.b32.xlu0 %v7440, 48
        %v7476 = vpop.permute.xlu0 %7475
        %7477 = vrot.lane.b32.xlu0 %v7441, 48
        %v7478 = vpop.permute.xlu0 %7477
        %7479 = vrot.lane.b32.xlu0 %v7442, 48
        %v7480 = vpop.permute.xlu0 %7479
        %7481 = vrot.lane.b32.xlu0 %v7443, 48
        %v7482 = vpop.permute.xlu0 %7481
        %7483 = vrot.lane.b32.xlu0 %v7444, 48
        %v7484 = vpop.permute.xlu0 %7483
        %7485 = vrot.lane.b32.xlu0 %v7445, 48
        %v7486 = vpop.permute.xlu0 %7485
        %7487 = vrot.lane.b32.xlu0 %v7446, 48
        %v7488 = vpop.permute.xlu0 %7487
        %7489 = vrot.lane.b32.xlu0 %v7447, 48
        %v7490 = vpop.permute.xlu0 %7489
        %7491 = vrot.lane.b32.xlu0 %v7448, 48
        %v7492 = vpop.permute.xlu0 %7491
        %7493 = vrot.lane.b32.xlu0 %v7449, 48
        %v7494 = vpop.permute.xlu0 %7493
        %7495 = vrot.lane.b32.xlu0 %v7450, 48
        %v7496 = vpop.permute.xlu0 %7495
        %7497 = vrot.lane.b32.xlu0 %v7451, 48
        %v7498 = vpop.permute.xlu0 %7497
        %7499 = vrot.lane.b32.xlu0 %v7452, 48
        %v7500 = vpop.permute.xlu0 %7499
        %v7501 = vsel %vm797, %v7470, %v7472
        %v7502 = vsel %vm797, %v7472, %v7474
        %v7503 = vsel %vm797, %v7474, %v7476
        %v7504 = vsel %vm797, %v7478, %v7480
        %v7505 = vsel %vm797, %v7480, %v7482
        %v7506 = vsel %vm797, %v7482, %v7484
        %v7507 = vsel %vm797, %v7486, %v7488
        %v7508 = vsel %vm797, %v7488, %v7490
        %v7509 = vsel %vm797, %v7490, %v7492
        %v7510 = vsel %vm797, %v7494, %v7496
        %v7511 = vsel %vm797, %v7496, %v7498
        %v7512 = vsel %vm797, %v7498, %v7500
        %7529 = vst [vmem:[#allocation2 + $0xa00] sm:$0xff] %v7501
        %7530 = vst [vmem:[#allocation2 + $0xa08] sm:$0xff] %v7502
        %7531 = vst [vmem:[#allocation2 + $0xa10] sm:$0xff] %v7503
        %7532 = vst.msk [vmem:[#allocation2 + $0xa18] sm:$0xff] %vm403, %v7476
        %7533 = vst [vmem:[#allocation2 + $0xa20] sm:$0xff] %v7504
        %7534 = vst [vmem:[#allocation2 + $0xa28] sm:$0xff] %v7505
        %7535 = vst [vmem:[#allocation2 + $0xa30] sm:$0xff] %v7506
        %7536 = vst.msk [vmem:[#allocation2 + $0xa38] sm:$0xff] %vm403, %v7484
        %7537 = vst [vmem:[#allocation2 + $0xa40] sm:$0xff] %v7507
        %7538 = vst [vmem:[#allocation2 + $0xa48] sm:$0xff] %v7508
        %7539 = vst [vmem:[#allocation2 + $0xa50] sm:$0xff] %v7509
        %7540 = vst.msk [vmem:[#allocation2 + $0xa58] sm:$0xff] %vm403, %v7492
        %7541 = vst [vmem:[#allocation2 + $0xa60] sm:$0xff] %v7510
        %7542 = vst [vmem:[#allocation2 + $0xa68] sm:$0xff] %v7511
        %7543 = vst [vmem:[#allocation2 + $0xa70] sm:$0xff] %v7512
        %7544 = vst.msk [vmem:[#allocation2 + $0xa78] sm:$0xff] %vm403, %v7500
        %v7545 = vld [vmem:[#allocation3] sm:$0xff]
        %v7546 = vld [vmem:[#allocation3 + $0x8] sm:$0xff]
        %v7547 = vld [vmem:[#allocation3 + $0x10] sm:$0xff]
        %v7548 = vld [vmem:[#allocation3 + $0x18] sm:$0xff]
        %v7549 = vld [vmem:[#allocation3 + $0x20] sm:$0xff]
        %v7550 = vld [vmem:[#allocation3 + $0x28] sm:$0xff]
        %v7551 = vld [vmem:[#allocation3 + $0x30] sm:$0xff]
        %v7552 = vld [vmem:[#allocation3 + $0x38] sm:$0xff]
        %v7553 = vld [vmem:[#allocation3 + $0x40] sm:$0xff]
        %v7554 = vld [vmem:[#allocation3 + $0x48] sm:$0xff]
        %v7555 = vld [vmem:[#allocation3 + $0x50] sm:$0xff]
        %v7556 = vld [vmem:[#allocation3 + $0x58] sm:$0xff]
        %v7557 = vld [vmem:[#allocation3 + $0x60] sm:$0xff]
        %v7558 = vld [vmem:[#allocation3 + $0x68] sm:$0xff]
        %v7559 = vld [vmem:[#allocation3 + $0x70] sm:$0xff]
        %v7560 = vld [vmem:[#allocation3 + $0x78] sm:$0xff]
        %7577 = vrot.lane.b32.xlu0 %v7545, 47
        %v7578 = vpop.permute.xlu0 %7577
        %7579 = vrot.lane.b32.xlu0 %v7546, 47
        %v7580 = vpop.permute.xlu0 %7579
        %7581 = vrot.lane.b32.xlu0 %v7547, 47
        %v7582 = vpop.permute.xlu0 %7581
        %7583 = vrot.lane.b32.xlu0 %v7548, 47
        %v7584 = vpop.permute.xlu0 %7583
        %7585 = vrot.lane.b32.xlu0 %v7549, 47
        %v7586 = vpop.permute.xlu0 %7585
        %7587 = vrot.lane.b32.xlu0 %v7550, 47
        %v7588 = vpop.permute.xlu0 %7587
        %7589 = vrot.lane.b32.xlu0 %v7551, 47
        %v7590 = vpop.permute.xlu0 %7589
        %7591 = vrot.lane.b32.xlu0 %v7552, 47
        %v7592 = vpop.permute.xlu0 %7591
        %7593 = vrot.lane.b32.xlu0 %v7553, 47
        %v7594 = vpop.permute.xlu0 %7593
        %7595 = vrot.lane.b32.xlu0 %v7554, 47
        %v7596 = vpop.permute.xlu0 %7595
        %7597 = vrot.lane.b32.xlu0 %v7555, 47
        %v7598 = vpop.permute.xlu0 %7597
        %7599 = vrot.lane.b32.xlu0 %v7556, 47
        %v7600 = vpop.permute.xlu0 %7599
        %7601 = vrot.lane.b32.xlu0 %v7557, 47
        %v7602 = vpop.permute.xlu0 %7601
        %7603 = vrot.lane.b32.xlu0 %v7558, 47
        %v7604 = vpop.permute.xlu0 %7603
        %7605 = vrot.lane.b32.xlu0 %v7559, 47
        %v7606 = vpop.permute.xlu0 %7605
        %7607 = vrot.lane.b32.xlu0 %v7560, 47
        %v7608 = vpop.permute.xlu0 %7607
        %v7609 = vsel %vm817, %v7578, %v7580
        %v7610 = vsel %vm817, %v7580, %v7582
        %v7611 = vsel %vm817, %v7582, %v7584
        %v7612 = vsel %vm817, %v7586, %v7588
        %v7613 = vsel %vm817, %v7588, %v7590
        %v7614 = vsel %vm817, %v7590, %v7592
        %v7615 = vsel %vm817, %v7594, %v7596
        %v7616 = vsel %vm817, %v7596, %v7598
        %v7617 = vsel %vm817, %v7598, %v7600
        %v7618 = vsel %vm817, %v7602, %v7604
        %v7619 = vsel %vm817, %v7604, %v7606
        %v7620 = vsel %vm817, %v7606, %v7608
        %7637 = vst [vmem:[#allocation2 + $0xa80] sm:$0xff] %v7609
        %7638 = vst [vmem:[#allocation2 + $0xa88] sm:$0xff] %v7610
        %7639 = vst [vmem:[#allocation2 + $0xa90] sm:$0xff] %v7611
        %7640 = vst.msk [vmem:[#allocation2 + $0xa98] sm:$0xff] %vm403, %v7584
        %7641 = vst [vmem:[#allocation2 + $0xaa0] sm:$0xff] %v7612
        %7642 = vst [vmem:[#allocation2 + $0xaa8] sm:$0xff] %v7613
        %7643 = vst [vmem:[#allocation2 + $0xab0] sm:$0xff] %v7614
        %7644 = vst.msk [vmem:[#allocation2 + $0xab8] sm:$0xff] %vm403, %v7592
        %7645 = vst [vmem:[#allocation2 + $0xac0] sm:$0xff] %v7615
        %7646 = vst [vmem:[#allocation2 + $0xac8] sm:$0xff] %v7616
        %7647 = vst [vmem:[#allocation2 + $0xad0] sm:$0xff] %v7617
        %7648 = vst.msk [vmem:[#allocation2 + $0xad8] sm:$0xff] %vm403, %v7600
        %7649 = vst [vmem:[#allocation2 + $0xae0] sm:$0xff] %v7618
        %7650 = vst [vmem:[#allocation2 + $0xae8] sm:$0xff] %v7619
        %7651 = vst [vmem:[#allocation2 + $0xaf0] sm:$0xff] %v7620
        %7652 = vst.msk [vmem:[#allocation2 + $0xaf8] sm:$0xff] %vm403, %v7608
        %v7653 = vld [vmem:[#allocation3] sm:$0xff]
        %v7654 = vld [vmem:[#allocation3 + $0x8] sm:$0xff]
        %v7655 = vld [vmem:[#allocation3 + $0x10] sm:$0xff]
        %v7656 = vld [vmem:[#allocation3 + $0x18] sm:$0xff]
        %v7657 = vld [vmem:[#allocation3 + $0x20] sm:$0xff]
        %v7658 = vld [vmem:[#allocation3 + $0x28] sm:$0xff]
        %v7659 = vld [vmem:[#allocation3 + $0x30] sm:$0xff]
        %v7660 = vld [vmem:[#allocation3 + $0x38] sm:$0xff]
        %v7661 = vld [vmem:[#allocation3 + $0x40] sm:$0xff]
        %v7662 = vld [vmem:[#allocation3 + $0x48] sm:$0xff]
        %v7663 = vld [vmem:[#allocation3 + $0x50] sm:$0xff]
        %v7664 = vld [vmem:[#allocation3 + $0x58] sm:$0xff]
        %v7665 = vld [vmem:[#allocation3 + $0x60] sm:$0xff]
        %v7666 = vld [vmem:[#allocation3 + $0x68] sm:$0xff]
        %v7667 = vld [vmem:[#allocation3 + $0x70] sm:$0xff]
        %v7668 = vld [vmem:[#allocation3 + $0x78] sm:$0xff]
        %7685 = vrot.lane.b32.xlu0 %v7653, 46
        %v7686 = vpop.permute.xlu0 %7685
        %7687 = vrot.lane.b32.xlu0 %v7654, 46
        %v7688 = vpop.permute.xlu0 %7687
        %7689 = vrot.lane.b32.xlu0 %v7655, 46
        %v7690 = vpop.permute.xlu0 %7689
        %7691 = vrot.lane.b32.xlu0 %v7656, 46
        %v7692 = vpop.permute.xlu0 %7691
        %7693 = vrot.lane.b32.xlu0 %v7657, 46
        %v7694 = vpop.permute.xlu0 %7693
        %7695 = vrot.lane.b32.xlu0 %v7658, 46
        %v7696 = vpop.permute.xlu0 %7695
        %7697 = vrot.lane.b32.xlu0 %v7659, 46
        %v7698 = vpop.permute.xlu0 %7697
        %7699 = vrot.lane.b32.xlu0 %v7660, 46
        %v7700 = vpop.permute.xlu0 %7699
        %7701 = vrot.lane.b32.xlu0 %v7661, 46
        %v7702 = vpop.permute.xlu0 %7701
        %7703 = vrot.lane.b32.xlu0 %v7662, 46
        %v7704 = vpop.permute.xlu0 %7703
        %7705 = vrot.lane.b32.xlu0 %v7663, 46
        %v7706 = vpop.permute.xlu0 %7705
        %7707 = vrot.lane.b32.xlu0 %v7664, 46
        %v7708 = vpop.permute.xlu0 %7707
        %7709 = vrot.lane.b32.xlu0 %v7665, 46
        %v7710 = vpop.permute.xlu0 %7709
        %7711 = vrot.lane.b32.xlu0 %v7666, 46
        %v7712 = vpop.permute.xlu0 %7711
        %7713 = vrot.lane.b32.xlu0 %v7667, 46
        %v7714 = vpop.permute.xlu0 %7713
        %7715 = vrot.lane.b32.xlu0 %v7668, 46
        %v7716 = vpop.permute.xlu0 %7715
        %v7717 = vsel %vm837, %v7686, %v7688
        %v7718 = vsel %vm837, %v7688, %v7690
        %v7719 = vsel %vm837, %v7690, %v7692
        %v7720 = vsel %vm837, %v7694, %v7696
        %v7721 = vsel %vm837, %v7696, %v7698
        %v7722 = vsel %vm837, %v7698, %v7700
        %v7723 = vsel %vm837, %v7702, %v7704
        %v7724 = vsel %vm837, %v7704, %v7706
        %v7725 = vsel %vm837, %v7706, %v7708
        %v7726 = vsel %vm837, %v7710, %v7712
        %v7727 = vsel %vm837, %v7712, %v7714
        %v7728 = vsel %vm837, %v7714, %v7716
        %7745 = vst [vmem:[#allocation2 + $0xb00] sm:$0xff] %v7717
        %7746 = vst [vmem:[#allocation2 + $0xb08] sm:$0xff] %v7718
        %7747 = vst [vmem:[#allocation2 + $0xb10] sm:$0xff] %v7719
        %7748 = vst.msk [vmem:[#allocation2 + $0xb18] sm:$0xff] %vm403, %v7692
        %7749 = vst [vmem:[#allocation2 + $0xb20] sm:$0xff] %v7720
        %7750 = vst [vmem:[#allocation2 + $0xb28] sm:$0xff] %v7721
        %7751 = vst [vmem:[#allocation2 + $0xb30] sm:$0xff] %v7722
        %7752 = vst.msk [vmem:[#allocation2 + $0xb38] sm:$0xff] %vm403, %v7700
        %7753 = vst [vmem:[#allocation2 + $0xb40] sm:$0xff] %v7723
        %7754 = vst [vmem:[#allocation2 + $0xb48] sm:$0xff] %v7724
        %7755 = vst [vmem:[#allocation2 + $0xb50] sm:$0xff] %v7725
        %7756 = vst.msk [vmem:[#allocation2 + $0xb58] sm:$0xff] %vm403, %v7708
        %7757 = vst [vmem:[#allocation2 + $0xb60] sm:$0xff] %v7726
        %7758 = vst [vmem:[#allocation2 + $0xb68] sm:$0xff] %v7727
        %7759 = vst [vmem:[#allocation2 + $0xb70] sm:$0xff] %v7728
        %7760 = vst.msk [vmem:[#allocation2 + $0xb78] sm:$0xff] %vm403, %v7716
        %v7761 = vld [vmem:[#allocation3] sm:$0xff]
        %v7762 = vld [vmem:[#allocation3 + $0x8] sm:$0xff]
        %v7763 = vld [vmem:[#allocation3 + $0x10] sm:$0xff]
        %v7764 = vld [vmem:[#allocation3 + $0x18] sm:$0xff]
        %v7765 = vld [vmem:[#allocation3 + $0x20] sm:$0xff]
        %v7766 = vld [vmem:[#allocation3 + $0x28] sm:$0xff]
        %v7767 = vld [vmem:[#allocation3 + $0x30] sm:$0xff]
        %v7768 = vld [vmem:[#allocation3 + $0x38] sm:$0xff]
        %v7769 = vld [vmem:[#allocation3 + $0x40] sm:$0xff]
        %v7770 = vld [vmem:[#allocation3 + $0x48] sm:$0xff]
        %v7771 = vld [vmem:[#allocation3 + $0x50] sm:$0xff]
        %v7772 = vld [vmem:[#allocation3 + $0x58] sm:$0xff]
        %v7773 = vld [vmem:[#allocation3 + $0x60] sm:$0xff]
        %v7774 = vld [vmem:[#allocation3 + $0x68] sm:$0xff]
        %v7775 = vld [vmem:[#allocation3 + $0x70] sm:$0xff]
        %v7776 = vld [vmem:[#allocation3 + $0x78] sm:$0xff]
        %7793 = vrot.lane.b32.xlu0 %v7761, 45
        %v7794 = vpop.permute.xlu0 %7793
        %7795 = vrot.lane.b32.xlu0 %v7762, 45
        %v7796 = vpop.permute.xlu0 %7795
        %7797 = vrot.lane.b32.xlu0 %v7763, 45
        %v7798 = vpop.permute.xlu0 %7797
        %7799 = vrot.lane.b32.xlu0 %v7764, 45
        %v7800 = vpop.permute.xlu0 %7799
        %7801 = vrot.lane.b32.xlu0 %v7765, 45
        %v7802 = vpop.permute.xlu0 %7801
        %7803 = vrot.lane.b32.xlu0 %v7766, 45
        %v7804 = vpop.permute.xlu0 %7803
        %7805 = vrot.lane.b32.xlu0 %v7767, 45
        %v7806 = vpop.permute.xlu0 %7805
        %7807 = vrot.lane.b32.xlu0 %v7768, 45
        %v7808 = vpop.permute.xlu0 %7807
        %7809 = vrot.lane.b32.xlu0 %v7769, 45
        %v7810 = vpop.permute.xlu0 %7809
        %7811 = vrot.lane.b32.xlu0 %v7770, 45
        %v7812 = vpop.permute.xlu0 %7811
        %7813 = vrot.lane.b32.xlu0 %v7771, 45
        %v7814 = vpop.permute.xlu0 %7813
        %7815 = vrot.lane.b32.xlu0 %v7772, 45
        %v7816 = vpop.permute.xlu0 %7815
        %7817 = vrot.lane.b32.xlu0 %v7773, 45
        %v7818 = vpop.permute.xlu0 %7817
        %7819 = vrot.lane.b32.xlu0 %v7774, 45
        %v7820 = vpop.permute.xlu0 %7819
        %7821 = vrot.lane.b32.xlu0 %v7775, 45
        %v7822 = vpop.permute.xlu0 %7821
        %7823 = vrot.lane.b32.xlu0 %v7776, 45
        %v7824 = vpop.permute.xlu0 %7823
        %v7825 = vsel %vm857, %v7794, %v7796
        %v7826 = vsel %vm857, %v7796, %v7798
        %v7827 = vsel %vm857, %v7798, %v7800
        %v7828 = vsel %vm857, %v7802, %v7804
        %v7829 = vsel %vm857, %v7804, %v7806
        %v7830 = vsel %vm857, %v7806, %v7808
        %v7831 = vsel %vm857, %v7810, %v7812
        %v7832 = vsel %vm857, %v7812, %v7814
        %v7833 = vsel %vm857, %v7814, %v7816
        %v7834 = vsel %vm857, %v7818, %v7820
        %v7835 = vsel %vm857, %v7820, %v7822
        %v7836 = vsel %vm857, %v7822, %v7824
        %7853 = vst [vmem:[#allocation2 + $0xb80] sm:$0xff] %v7825
        %7854 = vst [vmem:[#allocation2 + $0xb88] sm:$0xff] %v7826
        %7855 = vst [vmem:[#allocation2 + $0xb90] sm:$0xff] %v7827
        %7856 = vst.msk [vmem:[#allocation2 + $0xb98] sm:$0xff] %vm403, %v7800
        %7857 = vst [vmem:[#allocation2 + $0xba0] sm:$0xff] %v7828
        %7858 = vst [vmem:[#allocation2 + $0xba8] sm:$0xff] %v7829
        %7859 = vst [vmem:[#allocation2 + $0xbb0] sm:$0xff] %v7830
        %7860 = vst.msk [vmem:[#allocation2 + $0xbb8] sm:$0xff] %vm403, %v7808
        %7861 = vst [vmem:[#allocation2 + $0xbc0] sm:$0xff] %v7831
        %7862 = vst [vmem:[#allocation2 + $0xbc8] sm:$0xff] %v7832
        %7863 = vst [vmem:[#allocation2 + $0xbd0] sm:$0xff] %v7833
        %7864 = vst.msk [vmem:[#allocation2 + $0xbd8] sm:$0xff] %vm403, %v7816
        %7865 = vst [vmem:[#allocation2 + $0xbe0] sm:$0xff] %v7834
        %7866 = vst [vmem:[#allocation2 + $0xbe8] sm:$0xff] %v7835
        %7867 = vst [vmem:[#allocation2 + $0xbf0] sm:$0xff] %v7836
        %7868 = vst.msk [vmem:[#allocation2 + $0xbf8] sm:$0xff] %vm403, %v7824
        %v7869 = vld [vmem:[#allocation3] sm:$0xff]
        %v7870 = vld [vmem:[#allocation3 + $0x8] sm:$0xff]
        %v7871 = vld [vmem:[#allocation3 + $0x10] sm:$0xff]
        %v7872 = vld [vmem:[#allocation3 + $0x18] sm:$0xff]
        %v7873 = vld [vmem:[#allocation3 + $0x20] sm:$0xff]
        %v7874 = vld [vmem:[#allocation3 + $0x28] sm:$0xff]
        %v7875 = vld [vmem:[#allocation3 + $0x30] sm:$0xff]
        %v7876 = vld [vmem:[#allocation3 + $0x38] sm:$0xff]
        %v7877 = vld [vmem:[#allocation3 + $0x40] sm:$0xff]
        %v7878 = vld [vmem:[#allocation3 + $0x48] sm:$0xff]
        %v7879 = vld [vmem:[#allocation3 + $0x50] sm:$0xff]
        %v7880 = vld [vmem:[#allocation3 + $0x58] sm:$0xff]
        %v7881 = vld [vmem:[#allocation3 + $0x60] sm:$0xff]
        %v7882 = vld [vmem:[#allocation3 + $0x68] sm:$0xff]
        %v7883 = vld [vmem:[#allocation3 + $0x70] sm:$0xff]
        %v7884 = vld [vmem:[#allocation3 + $0x78] sm:$0xff]
        %7901 = vrot.lane.b32.xlu0 %v7869, 44
        %v7902 = vpop.permute.xlu0 %7901
        %7903 = vrot.lane.b32.xlu0 %v7870, 44
        %v7904 = vpop.permute.xlu0 %7903
        %7905 = vrot.lane.b32.xlu0 %v7871, 44
        %v7906 = vpop.permute.xlu0 %7905
        %7907 = vrot.lane.b32.xlu0 %v7872, 44
        %v7908 = vpop.permute.xlu0 %7907
        %7909 = vrot.lane.b32.xlu0 %v7873, 44
        %v7910 = vpop.permute.xlu0 %7909
        %7911 = vrot.lane.b32.xlu0 %v7874, 44
        %v7912 = vpop.permute.xlu0 %7911
        %7913 = vrot.lane.b32.xlu0 %v7875, 44
        %v7914 = vpop.permute.xlu0 %7913
        %7915 = vrot.lane.b32.xlu0 %v7876, 44
        %v7916 = vpop.permute.xlu0 %7915
        %7917 = vrot.lane.b32.xlu0 %v7877, 44
        %v7918 = vpop.permute.xlu0 %7917
        %7919 = vrot.lane.b32.xlu0 %v7878, 44
        %v7920 = vpop.permute.xlu0 %7919
        %7921 = vrot.lane.b32.xlu0 %v7879, 44
        %v7922 = vpop.permute.xlu0 %7921
        %7923 = vrot.lane.b32.xlu0 %v7880, 44
        %v7924 = vpop.permute.xlu0 %7923
        %7925 = vrot.lane.b32.xlu0 %v7881, 44
        %v7926 = vpop.permute.xlu0 %7925
        %7927 = vrot.lane.b32.xlu0 %v7882, 44
        %v7928 = vpop.permute.xlu0 %7927
        %7929 = vrot.lane.b32.xlu0 %v7883, 44
        %v7930 = vpop.permute.xlu0 %7929
        %7931 = vrot.lane.b32.xlu0 %v7884, 44
        %v7932 = vpop.permute.xlu0 %7931
        %v7933 = vsel %vm877, %v7902, %v7904
        %v7934 = vsel %vm877, %v7904, %v7906
        %v7935 = vsel %vm877, %v7906, %v7908
        %v7936 = vsel %vm877, %v7910, %v7912
        %v7937 = vsel %vm877, %v7912, %v7914
        %v7938 = vsel %vm877, %v7914, %v7916
        %v7939 = vsel %vm877, %v7918, %v7920
        %v7940 = vsel %vm877, %v7920, %v7922
        %v7941 = vsel %vm877, %v7922, %v7924
        %v7942 = vsel %vm877, %v7926, %v7928
        %v7943 = vsel %vm877, %v7928, %v7930
        %v7944 = vsel %vm877, %v7930, %v7932
        %7961 = vst [vmem:[#allocation2 + $0xc00] sm:$0xff] %v7933
        %7962 = vst [vmem:[#allocation2 + $0xc08] sm:$0xff] %v7934
        %7963 = vst [vmem:[#allocation2 + $0xc10] sm:$0xff] %v7935
        %7964 = vst.msk [vmem:[#allocation2 + $0xc18] sm:$0xff] %vm403, %v7908
        %7965 = vst [vmem:[#allocation2 + $0xc20] sm:$0xff] %v7936
        %7966 = vst [vmem:[#allocation2 + $0xc28] sm:$0xff] %v7937
        %7967 = vst [vmem:[#allocation2 + $0xc30] sm:$0xff] %v7938
        %7968 = vst.msk [vmem:[#allocation2 + $0xc38] sm:$0xff] %vm403, %v7916
        %7969 = vst [vmem:[#allocation2 + $0xc40] sm:$0xff] %v7939
        %7970 = vst [vmem:[#allocation2 + $0xc48] sm:$0xff] %v7940
        %7971 = vst [vmem:[#allocation2 + $0xc50] sm:$0xff] %v7941
        %7972 = vst.msk [vmem:[#allocation2 + $0xc58] sm:$0xff] %vm403, %v7924
        %7973 = vst [vmem:[#allocation2 + $0xc60] sm:$0xff] %v7942
        %7974 = vst [vmem:[#allocation2 + $0xc68] sm:$0xff] %v7943
        %7975 = vst [vmem:[#allocation2 + $0xc70] sm:$0xff] %v7944
        %7976 = vst.msk [vmem:[#allocation2 + $0xc78] sm:$0xff] %vm403, %v7932
        %v7977 = vld [vmem:[%s3] sm:$0x7f]
        %v7978 = vld [vmem:[#allocation2] sm:$0xff]
        %v7979 = vld [vmem:[#allocation2 + $0x8] sm:$0xff]
        %v7980 = vld [vmem:[#allocation2 + $0x10] sm:$0xff]
        %v7981 = vld [vmem:[#allocation2 + $0x18] sm:$0xff]
        %v7982 = vld [vmem:[#allocation2 + $0x20] sm:$0xff]
        %v7983 = vld [vmem:[#allocation2 + $0x28] sm:$0xff]
        %v7984 = vld [vmem:[#allocation2 + $0x30] sm:$0xff]
        %v7985 = vld [vmem:[#allocation2 + $0x38] sm:$0xff]
        %v7986 = vld [vmem:[#allocation2 + $0x40] sm:$0xff]
        %v7987 = vld [vmem:[#allocation2 + $0x48] sm:$0xff]
        %v7988 = vld [vmem:[#allocation2 + $0x50] sm:$0xff]
        %v7989 = vld [vmem:[#allocation2 + $0x58] sm:$0xff]
        %v7990 = vld [vmem:[#allocation2 + $0x60] sm:$0xff]
        %v7991 = vld [vmem:[#allocation2 + $0x68] sm:$0xff]
        %v7992 = vld [vmem:[#allocation2 + $0x70] sm:$0xff]
        %v7993 = vld [vmem:[#allocation2 + $0x78] sm:$0xff]
        %v7994 = vld [vmem:[#allocation2 + $0x80] sm:$0xff]
        %v7995 = vld [vmem:[#allocation2 + $0x88] sm:$0xff]
        %v7996 = vld [vmem:[#allocation2 + $0x90] sm:$0xff]
        %v7997 = vld [vmem:[#allocation2 + $0x98] sm:$0xff]
        %v7998 = vld [vmem:[#allocation2 + $0xa0] sm:$0xff]
        %v7999 = vld [vmem:[#allocation2 + $0xa8] sm:$0xff]
        %v8000 = vld [vmem:[#allocation2 + $0xb0] sm:$0xff]
        %v8001 = vld [vmem:[#allocation2 + $0xb8] sm:$0xff]
        %v8002 = vld [vmem:[#allocation2 + $0xc0] sm:$0xff]
        %v8003 = vld [vmem:[#allocation2 + $0xc8] sm:$0xff]
        %v8004 = vld [vmem:[#allocation2 + $0xd0] sm:$0xff]
        %v8005 = vld [vmem:[#allocation2 + $0xd8] sm:$0xff]
        %v8006 = vld [vmem:[#allocation2 + $0xe0] sm:$0xff]
        %v8007 = vld [vmem:[#allocation2 + $0xe8] sm:$0xff]
        %v8008 = vld [vmem:[#allocation2 + $0xf0] sm:$0xff]
        %v8009 = vld [vmem:[#allocation2 + $0xf8] sm:$0xff]
        %v8010 = vld [vmem:[#allocation2 + $0x100] sm:$0xff]
        %v8011 = vld [vmem:[#allocation2 + $0x108] sm:$0xff]
        %v8012 = vld [vmem:[#allocation2 + $0x110] sm:$0xff]
        %v8013 = vld [vmem:[#allocation2 + $0x118] sm:$0xff]
        %v8014 = vld [vmem:[#allocation2 + $0x120] sm:$0xff]
        %v8015 = vld [vmem:[#allocation2 + $0x128] sm:$0xff]
        %v8016 = vld [vmem:[#allocation2 + $0x130] sm:$0xff]
        %v8017 = vld [vmem:[#allocation2 + $0x138] sm:$0xff]
        %v8018 = vld [vmem:[#allocation2 + $0x140] sm:$0xff]
        %v8019 = vld [vmem:[#allocation2 + $0x148] sm:$0xff]
        %v8020 = vld [vmem:[#allocation2 + $0x150] sm:$0xff]
        %v8021 = vld [vmem:[#allocation2 + $0x158] sm:$0xff]
        %v8022 = vld [vmem:[#allocation2 + $0x160] sm:$0xff]
        %v8023 = vld [vmem:[#allocation2 + $0x168] sm:$0xff]
        %v8024 = vld [vmem:[#allocation2 + $0x170] sm:$0xff]
        %v8025 = vld [vmem:[#allocation2 + $0x178] sm:$0xff]
        %v8026 = vld [vmem:[#allocation2 + $0x180] sm:$0xff]
        %v8027 = vld [vmem:[#allocation2 + $0x188] sm:$0xff]
        %v8028 = vld [vmem:[#allocation2 + $0x190] sm:$0xff]
        %v8029 = vld [vmem:[#allocation2 + $0x198] sm:$0xff]
        %v8030 = vld [vmem:[#allocation2 + $0x1a0] sm:$0xff]
        %v8031 = vld [vmem:[#allocation2 + $0x1a8] sm:$0xff]
        %v8032 = vld [vmem:[#allocation2 + $0x1b0] sm:$0xff]
        %v8033 = vld [vmem:[#allocation2 + $0x1b8] sm:$0xff]
        %v8034 = vld [vmem:[#allocation2 + $0x1c0] sm:$0xff]
        %v8035 = vld [vmem:[#allocation2 + $0x1c8] sm:$0xff]
        %v8036 = vld [vmem:[#allocation2 + $0x1d0] sm:$0xff]
        %v8037 = vld [vmem:[#allocation2 + $0x1d8] sm:$0xff]
        %v8038 = vld [vmem:[#allocation2 + $0x1e0] sm:$0xff]
        %v8039 = vld [vmem:[#allocation2 + $0x1e8] sm:$0xff]
        %v8040 = vld [vmem:[#allocation2 + $0x1f0] sm:$0xff]
        %v8041 = vld [vmem:[#allocation2 + $0x1f8] sm:$0xff]
        %v8042 = vld [vmem:[#allocation2 + $0x200] sm:$0xff]
        %v8043 = vld [vmem:[#allocation2 + $0x208] sm:$0xff]
        %v8044 = vld [vmem:[#allocation2 + $0x210] sm:$0xff]
        %v8045 = vld [vmem:[#allocation2 + $0x218] sm:$0xff]
        %v8046 = vld [vmem:[#allocation2 + $0x220] sm:$0xff]
        %v8047 = vld [vmem:[#allocation2 + $0x228] sm:$0xff]
        %v8048 = vld [vmem:[#allocation2 + $0x230] sm:$0xff]
        %v8049 = vld [vmem:[#allocation2 + $0x238] sm:$0xff]
        %v8050 = vld [vmem:[#allocation2 + $0x240] sm:$0xff]
        %v8051 = vld [vmem:[#allocation2 + $0x248] sm:$0xff]
        %v8052 = vld [vmem:[#allocation2 + $0x250] sm:$0xff]
        %v8053 = vld [vmem:[#allocation2 + $0x258] sm:$0xff]
        %v8054 = vld [vmem:[#allocation2 + $0x260] sm:$0xff]
        %v8055 = vld [vmem:[#allocation2 + $0x268] sm:$0xff]
        %v8056 = vld [vmem:[#allocation2 + $0x270] sm:$0xff]
        %v8057 = vld [vmem:[#allocation2 + $0x278] sm:$0xff]
        %v8058 = vld [vmem:[#allocation2 + $0x280] sm:$0xff]
        %v8059 = vld [vmem:[#allocation2 + $0x288] sm:$0xff]
        %v8060 = vld [vmem:[#allocation2 + $0x290] sm:$0xff]
        %v8061 = vld [vmem:[#allocation2 + $0x298] sm:$0xff]
        %v8062 = vld [vmem:[#allocation2 + $0x2a0] sm:$0xff]
        %v8063 = vld [vmem:[#allocation2 + $0x2a8] sm:$0xff]
        %v8064 = vld [vmem:[#allocation2 + $0x2b0] sm:$0xff]
        %v8065 = vld [vmem:[#allocation2 + $0x2b8] sm:$0xff]
        %v8066 = vld [vmem:[#allocation2 + $0x2c0] sm:$0xff]
        %v8067 = vld [vmem:[#allocation2 + $0x2c8] sm:$0xff]
        %v8068 = vld [vmem:[#allocation2 + $0x2d0] sm:$0xff]
        %v8069 = vld [vmem:[#allocation2 + $0x2d8] sm:$0xff]
        %v8070 = vld [vmem:[#allocation2 + $0x2e0] sm:$0xff]
        %v8071 = vld [vmem:[#allocation2 + $0x2e8] sm:$0xff]
        %v8072 = vld [vmem:[#allocation2 + $0x2f0] sm:$0xff]
        %v8073 = vld [vmem:[#allocation2 + $0x2f8] sm:$0xff]
        %v8074 = vld [vmem:[#allocation2 + $0x300] sm:$0xff]
        %v8075 = vld [vmem:[#allocation2 + $0x308] sm:$0xff]
        %v8076 = vld [vmem:[#allocation2 + $0x310] sm:$0xff]
        %v8077 = vld [vmem:[#allocation2 + $0x318] sm:$0xff]
        %v8078 = vld [vmem:[#allocation2 + $0x320] sm:$0xff]
        %v8079 = vld [vmem:[#allocation2 + $0x328] sm:$0xff]
        %v8080 = vld [vmem:[#allocation2 + $0x330] sm:$0xff]
        %v8081 = vld [vmem:[#allocation2 + $0x338] sm:$0xff]
        %v8082 = vld [vmem:[#allocation2 + $0x340] sm:$0xff]
        %v8083 = vld [vmem:[#allocation2 + $0x348] sm:$0xff]
        %v8084 = vld [vmem:[#allocation2 + $0x350] sm:$0xff]
        %v8085 = vld [vmem:[#allocation2 + $0x358] sm:$0xff]
        %v8086 = vld [vmem:[#allocation2 + $0x360] sm:$0xff]
        %v8087 = vld [vmem:[#allocation2 + $0x368] sm:$0xff]
        %v8088 = vld [vmem:[#allocation2 + $0x370] sm:$0xff]
        %v8089 = vld [vmem:[#allocation2 + $0x378] sm:$0xff]
        %v8090 = vld [vmem:[#allocation2 + $0x380] sm:$0xff]
        %v8091 = vld [vmem:[#allocation2 + $0x388] sm:$0xff]
        %v8092 = vld [vmem:[#allocation2 + $0x390] sm:$0xff]
        %v8093 = vld [vmem:[#allocation2 + $0x398] sm:$0xff]
        %v8094 = vld [vmem:[#allocation2 + $0x3a0] sm:$0xff]
        %v8095 = vld [vmem:[#allocation2 + $0x3a8] sm:$0xff]
        %v8096 = vld [vmem:[#allocation2 + $0x3b0] sm:$0xff]
        %v8097 = vld [vmem:[#allocation2 + $0x3b8] sm:$0xff]
        %v8098 = vld [vmem:[#allocation2 + $0x3c0] sm:$0xff]
        %v8099 = vld [vmem:[#allocation2 + $0x3c8] sm:$0xff]
        %v8100 = vld [vmem:[#allocation2 + $0x3d0] sm:$0xff]
        %v8101 = vld [vmem:[#allocation2 + $0x3d8] sm:$0xff]
        %v8102 = vld [vmem:[#allocation2 + $0x3e0] sm:$0xff]
        %v8103 = vld [vmem:[#allocation2 + $0x3e8] sm:$0xff]
        %v8104 = vld [vmem:[#allocation2 + $0x3f0] sm:$0xff]
        %v8105 = vld [vmem:[#allocation2 + $0x3f8] sm:$0xff]
        %v8106 = vld [vmem:[#allocation2 + $0x400] sm:$0xff]
        %v8107 = vld [vmem:[#allocation2 + $0x408] sm:$0xff]
        %v8108 = vld [vmem:[#allocation2 + $0x410] sm:$0xff]
        %v8109 = vld [vmem:[#allocation2 + $0x418] sm:$0xff]
        %v8110 = vld [vmem:[#allocation2 + $0x420] sm:$0xff]
        %v8111 = vld [vmem:[#allocation2 + $0x428] sm:$0xff]
        %v8112 = vld [vmem:[#allocation2 + $0x430] sm:$0xff]
        %v8113 = vld [vmem:[#allocation2 + $0x438] sm:$0xff]
        %v8114 = vld [vmem:[#allocation2 + $0x440] sm:$0xff]
        %v8115 = vld [vmem:[#allocation2 + $0x448] sm:$0xff]
        %v8116 = vld [vmem:[#allocation2 + $0x450] sm:$0xff]
        %v8117 = vld [vmem:[#allocation2 + $0x458] sm:$0xff]
        %v8118 = vld [vmem:[#allocation2 + $0x460] sm:$0xff]
        %v8119 = vld [vmem:[#allocation2 + $0x468] sm:$0xff]
        %v8120 = vld [vmem:[#allocation2 + $0x470] sm:$0xff]
        %v8121 = vld [vmem:[#allocation2 + $0x478] sm:$0xff]
        %v8122 = vld [vmem:[#allocation2 + $0x480] sm:$0xff]
        %v8123 = vld [vmem:[#allocation2 + $0x488] sm:$0xff]
        %v8124 = vld [vmem:[#allocation2 + $0x490] sm:$0xff]
        %v8125 = vld [vmem:[#allocation2 + $0x498] sm:$0xff]
        %v8126 = vld [vmem:[#allocation2 + $0x4a0] sm:$0xff]
        %v8127 = vld [vmem:[#allocation2 + $0x4a8] sm:$0xff]
        %v8128 = vld [vmem:[#allocation2 + $0x4b0] sm:$0xff]
        %v8129 = vld [vmem:[#allocation2 + $0x4b8] sm:$0xff]
        %v8130 = vld [vmem:[#allocation2 + $0x4c0] sm:$0xff]
        %v8131 = vld [vmem:[#allocation2 + $0x4c8] sm:$0xff]
        %v8132 = vld [vmem:[#allocation2 + $0x4d0] sm:$0xff]
        %v8133 = vld [vmem:[#allocation2 + $0x4d8] sm:$0xff]
        %v8134 = vld [vmem:[#allocation2 + $0x4e0] sm:$0xff]
        %v8135 = vld [vmem:[#allocation2 + $0x4e8] sm:$0xff]
        %v8136 = vld [vmem:[#allocation2 + $0x4f0] sm:$0xff]
        %v8137 = vld [vmem:[#allocation2 + $0x4f8] sm:$0xff]
        %v8138 = vld [vmem:[#allocation2 + $0x500] sm:$0xff]
        %v8139 = vld [vmem:[#allocation2 + $0x508] sm:$0xff]
        %v8140 = vld [vmem:[#allocation2 + $0x510] sm:$0xff]
        %v8141 = vld [vmem:[#allocation2 + $0x518] sm:$0xff]
        %v8142 = vld [vmem:[#allocation2 + $0x520] sm:$0xff]
        %v8143 = vld [vmem:[#allocation2 + $0x528] sm:$0xff]
        %v8144 = vld [vmem:[#allocation2 + $0x530] sm:$0xff]
        %v8145 = vld [vmem:[#allocation2 + $0x538] sm:$0xff]
        %v8146 = vld [vmem:[#allocation2 + $0x540] sm:$0xff]
        %v8147 = vld [vmem:[#allocation2 + $0x548] sm:$0xff]
        %v8148 = vld [vmem:[#allocation2 + $0x550] sm:$0xff]
        %v8149 = vld [vmem:[#allocation2 + $0x558] sm:$0xff]
        %v8150 = vld [vmem:[#allocation2 + $0x560] sm:$0xff]
        %v8151 = vld [vmem:[#allocation2 + $0x568] sm:$0xff]
        %v8152 = vld [vmem:[#allocation2 + $0x570] sm:$0xff]
        %v8153 = vld [vmem:[#allocation2 + $0x578] sm:$0xff]
        %v8154 = vld [vmem:[#allocation2 + $0x580] sm:$0xff]
        %v8155 = vld [vmem:[#allocation2 + $0x588] sm:$0xff]
        %v8156 = vld [vmem:[#allocation2 + $0x590] sm:$0xff]
        %v8157 = vld [vmem:[#allocation2 + $0x598] sm:$0xff]
        %v8158 = vld [vmem:[#allocation2 + $0x5a0] sm:$0xff]
        %v8159 = vld [vmem:[#allocation2 + $0x5a8] sm:$0xff]
        %v8160 = vld [vmem:[#allocation2 + $0x5b0] sm:$0xff]
        %v8161 = vld [vmem:[#allocation2 + $0x5b8] sm:$0xff]
        %v8162 = vld [vmem:[#allocation2 + $0x5c0] sm:$0xff]
        %v8163 = vld [vmem:[#allocation2 + $0x5c8] sm:$0xff]
        %v8164 = vld [vmem:[#allocation2 + $0x5d0] sm:$0xff]
        %v8165 = vld [vmem:[#allocation2 + $0x5d8] sm:$0xff]
        %v8166 = vld [vmem:[#allocation2 + $0x5e0] sm:$0xff]
        %v8167 = vld [vmem:[#allocation2 + $0x5e8] sm:$0xff]
        %v8168 = vld [vmem:[#allocation2 + $0x5f0] sm:$0xff]
        %v8169 = vld [vmem:[#allocation2 + $0x5f8] sm:$0xff]
        %v8170 = vld [vmem:[#allocation2 + $0x600] sm:$0xff]
        %v8171 = vld [vmem:[#allocation2 + $0x608] sm:$0xff]
        %v8172 = vld [vmem:[#allocation2 + $0x610] sm:$0xff]
        %v8173 = vld [vmem:[#allocation2 + $0x618] sm:$0xff]
        %v8174 = vld [vmem:[#allocation2 + $0x620] sm:$0xff]
        %v8175 = vld [vmem:[#allocation2 + $0x628] sm:$0xff]
        %v8176 = vld [vmem:[#allocation2 + $0x630] sm:$0xff]
        %v8177 = vld [vmem:[#allocation2 + $0x638] sm:$0xff]
        %v8178 = vld [vmem:[#allocation2 + $0x640] sm:$0xff]
        %v8179 = vld [vmem:[#allocation2 + $0x648] sm:$0xff]
        %v8180 = vld [vmem:[#allocation2 + $0x650] sm:$0xff]
        %v8181 = vld [vmem:[#allocation2 + $0x658] sm:$0xff]
        %v8182 = vld [vmem:[#allocation2 + $0x660] sm:$0xff]
        %v8183 = vld [vmem:[#allocation2 + $0x668] sm:$0xff]
        %v8184 = vld [vmem:[#allocation2 + $0x670] sm:$0xff]
        %v8185 = vld [vmem:[#allocation2 + $0x678] sm:$0xff]
        %v8186 = vld [vmem:[#allocation2 + $0x680] sm:$0xff]
        %v8187 = vld [vmem:[#allocation2 + $0x688] sm:$0xff]
        %v8188 = vld [vmem:[#allocation2 + $0x690] sm:$0xff]
        %v8189 = vld [vmem:[#allocation2 + $0x698] sm:$0xff]
        %v8190 = vld [vmem:[#allocation2 + $0x6a0] sm:$0xff]
        %v8191 = vld [vmem:[#allocation2 + $0x6a8] sm:$0xff]
        %v8192 = vld [vmem:[#allocation2 + $0x6b0] sm:$0xff]
        %v8193 = vld [vmem:[#allocation2 + $0x6b8] sm:$0xff]
        %v8194 = vld [vmem:[#allocation2 + $0x6c0] sm:$0xff]
        %v8195 = vld [vmem:[#allocation2 + $0x6c8] sm:$0xff]
        %v8196 = vld [vmem:[#allocation2 + $0x6d0] sm:$0xff]
        %v8197 = vld [vmem:[#allocation2 + $0x6d8] sm:$0xff]
        %v8198 = vld [vmem:[#allocation2 + $0x6e0] sm:$0xff]
        %v8199 = vld [vmem:[#allocation2 + $0x6e8] sm:$0xff]
        %v8200 = vld [vmem:[#allocation2 + $0x6f0] sm:$0xff]
        %v8201 = vld [vmem:[#allocation2 + $0x6f8] sm:$0xff]
        %v8202 = vld [vmem:[#allocation2 + $0x700] sm:$0xff]
        %v8203 = vld [vmem:[#allocation2 + $0x708] sm:$0xff]
        %v8204 = vld [vmem:[#allocation2 + $0x710] sm:$0xff]
        %v8205 = vld [vmem:[#allocation2 + $0x718] sm:$0xff]
        %v8206 = vld [vmem:[#allocation2 + $0x720] sm:$0xff]
        %v8207 = vld [vmem:[#allocation2 + $0x728] sm:$0xff]
        %v8208 = vld [vmem:[#allocation2 + $0x730] sm:$0xff]
        %v8209 = vld [vmem:[#allocation2 + $0x738] sm:$0xff]
        %v8210 = vld [vmem:[#allocation2 + $0x740] sm:$0xff]
        %v8211 = vld [vmem:[#allocation2 + $0x748] sm:$0xff]
        %v8212 = vld [vmem:[#allocation2 + $0x750] sm:$0xff]
        %v8213 = vld [vmem:[#allocation2 + $0x758] sm:$0xff]
        %v8214 = vld [vmem:[#allocation2 + $0x760] sm:$0xff]
        %v8215 = vld [vmem:[#allocation2 + $0x768] sm:$0xff]
        %v8216 = vld [vmem:[#allocation2 + $0x770] sm:$0xff]
        %v8217 = vld [vmem:[#allocation2 + $0x778] sm:$0xff]
        %v8218 = vld [vmem:[#allocation2 + $0x780] sm:$0xff]
        %v8219 = vld [vmem:[#allocation2 + $0x788] sm:$0xff]
        %v8220 = vld [vmem:[#allocation2 + $0x790] sm:$0xff]
        %v8221 = vld [vmem:[#allocation2 + $0x798] sm:$0xff]
        %v8222 = vld [vmem:[#allocation2 + $0x7a0] sm:$0xff]
        %v8223 = vld [vmem:[#allocation2 + $0x7a8] sm:$0xff]
        %v8224 = vld [vmem:[#allocation2 + $0x7b0] sm:$0xff]
        %v8225 = vld [vmem:[#allocation2 + $0x7b8] sm:$0xff]
        %v8226 = vld [vmem:[#allocation2 + $0x7c0] sm:$0xff]
        %v8227 = vld [vmem:[#allocation2 + $0x7c8] sm:$0xff]
        %v8228 = vld [vmem:[#allocation2 + $0x7d0] sm:$0xff]
        %v8229 = vld [vmem:[#allocation2 + $0x7d8] sm:$0xff]
        %v8230 = vld [vmem:[#allocation2 + $0x7e0] sm:$0xff]
        %v8231 = vld [vmem:[#allocation2 + $0x7e8] sm:$0xff]
        %v8232 = vld [vmem:[#allocation2 + $0x7f0] sm:$0xff]
        %v8233 = vld [vmem:[#allocation2 + $0x7f8] sm:$0xff]
        %v8234 = vld [vmem:[#allocation2 + $0x800] sm:$0xff]
        %v8235 = vld [vmem:[#allocation2 + $0x808] sm:$0xff]
        %v8236 = vld [vmem:[#allocation2 + $0x810] sm:$0xff]
        %v8237 = vld [vmem:[#allocation2 + $0x818] sm:$0xff]
        %v8238 = vld [vmem:[#allocation2 + $0x820] sm:$0xff]
        %v8239 = vld [vmem:[#allocation2 + $0x828] sm:$0xff]
        %v8240 = vld [vmem:[#allocation2 + $0x830] sm:$0xff]
        %v8241 = vld [vmem:[#allocation2 + $0x838] sm:$0xff]
        %v8242 = vld [vmem:[#allocation2 + $0x840] sm:$0xff]
        %v8243 = vld [vmem:[#allocation2 + $0x848] sm:$0xff]
        %v8244 = vld [vmem:[#allocation2 + $0x850] sm:$0xff]
        %v8245 = vld [vmem:[#allocation2 + $0x858] sm:$0xff]
        %v8246 = vld [vmem:[#allocation2 + $0x860] sm:$0xff]
        %v8247 = vld [vmem:[#allocation2 + $0x868] sm:$0xff]
        %v8248 = vld [vmem:[#allocation2 + $0x870] sm:$0xff]
        %v8249 = vld [vmem:[#allocation2 + $0x878] sm:$0xff]
        %v8250 = vld [vmem:[#allocation2 + $0x880] sm:$0xff]
        %v8251 = vld [vmem:[#allocation2 + $0x888] sm:$0xff]
        %v8252 = vld [vmem:[#allocation2 + $0x890] sm:$0xff]
        %v8253 = vld [vmem:[#allocation2 + $0x898] sm:$0xff]
        %v8254 = vld [vmem:[#allocation2 + $0x8a0] sm:$0xff]
        %v8255 = vld [vmem:[#allocation2 + $0x8a8] sm:$0xff]
        %v8256 = vld [vmem:[#allocation2 + $0x8b0] sm:$0xff]
        %v8257 = vld [vmem:[#allocation2 + $0x8b8] sm:$0xff]
        %v8258 = vld [vmem:[#allocation2 + $0x8c0] sm:$0xff]
        %v8259 = vld [vmem:[#allocation2 + $0x8c8] sm:$0xff]
        %v8260 = vld [vmem:[#allocation2 + $0x8d0] sm:$0xff]
        %v8261 = vld [vmem:[#allocation2 + $0x8d8] sm:$0xff]
        %v8262 = vld [vmem:[#allocation2 + $0x8e0] sm:$0xff]
        %v8263 = vld [vmem:[#allocation2 + $0x8e8] sm:$0xff]
        %v8264 = vld [vmem:[#allocation2 + $0x8f0] sm:$0xff]
        %v8265 = vld [vmem:[#allocation2 + $0x8f8] sm:$0xff]
        %v8266 = vld [vmem:[#allocation2 + $0x900] sm:$0xff]
        %v8267 = vld [vmem:[#allocation2 + $0x908] sm:$0xff]
        %v8268 = vld [vmem:[#allocation2 + $0x910] sm:$0xff]
        %v8269 = vld [vmem:[#allocation2 + $0x918] sm:$0xff]
        %v8270 = vld [vmem:[#allocation2 + $0x920] sm:$0xff]
        %v8271 = vld [vmem:[#allocation2 + $0x928] sm:$0xff]
        %v8272 = vld [vmem:[#allocation2 + $0x930] sm:$0xff]
        %v8273 = vld [vmem:[#allocation2 + $0x938] sm:$0xff]
        %v8274 = vld [vmem:[#allocation2 + $0x940] sm:$0xff]
        %v8275 = vld [vmem:[#allocation2 + $0x948] sm:$0xff]
        %v8276 = vld [vmem:[#allocation2 + $0x950] sm:$0xff]
        %v8277 = vld [vmem:[#allocation2 + $0x958] sm:$0xff]
        %v8278 = vld [vmem:[#allocation2 + $0x960] sm:$0xff]
        %v8279 = vld [vmem:[#allocation2 + $0x968] sm:$0xff]
        %v8280 = vld [vmem:[#allocation2 + $0x970] sm:$0xff]
        %v8281 = vld [vmem:[#allocation2 + $0x978] sm:$0xff]
        %v8282 = vld [vmem:[#allocation2 + $0x980] sm:$0xff]
        %v8283 = vld [vmem:[#allocation2 + $0x988] sm:$0xff]
        %v8284 = vld [vmem:[#allocation2 + $0x990] sm:$0xff]
        %v8285 = vld [vmem:[#allocation2 + $0x998] sm:$0xff]
        %v8286 = vld [vmem:[#allocation2 + $0x9a0] sm:$0xff]
        %v8287 = vld [vmem:[#allocation2 + $0x9a8] sm:$0xff]
        %v8288 = vld [vmem:[#allocation2 + $0x9b0] sm:$0xff]
        %v8289 = vld [vmem:[#allocation2 + $0x9b8] sm:$0xff]
        %v8290 = vld [vmem:[#allocation2 + $0x9c0] sm:$0xff]
        %v8291 = vld [vmem:[#allocation2 + $0x9c8] sm:$0xff]
        %v8292 = vld [vmem:[#allocation2 + $0x9d0] sm:$0xff]
        %v8293 = vld [vmem:[#allocation2 + $0x9d8] sm:$0xff]
        %v8294 = vld [vmem:[#allocation2 + $0x9e0] sm:$0xff]
        %v8295 = vld [vmem:[#allocation2 + $0x9e8] sm:$0xff]
        %v8296 = vld [vmem:[#allocation2 + $0x9f0] sm:$0xff]
        %v8297 = vld [vmem:[#allocation2 + $0x9f8] sm:$0xff]
        %v8298 = vld [vmem:[#allocation2 + $0xa00] sm:$0xff]
        %v8299 = vld [vmem:[#allocation2 + $0xa08] sm:$0xff]
        %v8300 = vld [vmem:[#allocation2 + $0xa10] sm:$0xff]
        %v8301 = vld [vmem:[#allocation2 + $0xa18] sm:$0xff]
        %v8302 = vld [vmem:[#allocation2 + $0xa20] sm:$0xff]
        %v8303 = vld [vmem:[#allocation2 + $0xa28] sm:$0xff]
        %v8304 = vld [vmem:[#allocation2 + $0xa30] sm:$0xff]
        %v8305 = vld [vmem:[#allocation2 + $0xa38] sm:$0xff]
        %v8306 = vld [vmem:[#allocation2 + $0xa40] sm:$0xff]
        %v8307 = vld [vmem:[#allocation2 + $0xa48] sm:$0xff]
        %v8308 = vld [vmem:[#allocation2 + $0xa50] sm:$0xff]
        %v8309 = vld [vmem:[#allocation2 + $0xa58] sm:$0xff]
        %v8310 = vld [vmem:[#allocation2 + $0xa60] sm:$0xff]
        %v8311 = vld [vmem:[#allocation2 + $0xa68] sm:$0xff]
        %v8312 = vld [vmem:[#allocation2 + $0xa70] sm:$0xff]
        %v8313 = vld [vmem:[#allocation2 + $0xa78] sm:$0xff]
        %v8314 = vld [vmem:[#allocation2 + $0xa80] sm:$0xff]
        %v8315 = vld [vmem:[#allocation2 + $0xa88] sm:$0xff]
        %v8316 = vld [vmem:[#allocation2 + $0xa90] sm:$0xff]
        %v8317 = vld [vmem:[#allocation2 + $0xa98] sm:$0xff]
        %v8318 = vld [vmem:[#allocation2 + $0xaa0] sm:$0xff]
        %v8319 = vld [vmem:[#allocation2 + $0xaa8] sm:$0xff]
        %v8320 = vld [vmem:[#allocation2 + $0xab0] sm:$0xff]
        %v8321 = vld [vmem:[#allocation2 + $0xab8] sm:$0xff]
        %v8322 = vld [vmem:[#allocation2 + $0xac0] sm:$0xff]
        %v8323 = vld [vmem:[#allocation2 + $0xac8] sm:$0xff]
        %v8324 = vld [vmem:[#allocation2 + $0xad0] sm:$0xff]
        %v8325 = vld [vmem:[#allocation2 + $0xad8] sm:$0xff]
        %v8326 = vld [vmem:[#allocation2 + $0xae0] sm:$0xff]
        %v8327 = vld [vmem:[#allocation2 + $0xae8] sm:$0xff]
        %v8328 = vld [vmem:[#allocation2 + $0xaf0] sm:$0xff]
        %v8329 = vld [vmem:[#allocation2 + $0xaf8] sm:$0xff]
        %v8330 = vld [vmem:[#allocation2 + $0xb00] sm:$0xff]
        %v8331 = vld [vmem:[#allocation2 + $0xb08] sm:$0xff]
        %v8332 = vld [vmem:[#allocation2 + $0xb10] sm:$0xff]
        %v8333 = vld [vmem:[#allocation2 + $0xb18] sm:$0xff]
        %v8334 = vld [vmem:[#allocation2 + $0xb20] sm:$0xff]
        %v8335 = vld [vmem:[#allocation2 + $0xb28] sm:$0xff]
        %v8336 = vld [vmem:[#allocation2 + $0xb30] sm:$0xff]
        %v8337 = vld [vmem:[#allocation2 + $0xb38] sm:$0xff]
        %v8338 = vld [vmem:[#allocation2 + $0xb40] sm:$0xff]
        %v8339 = vld [vmem:[#allocation2 + $0xb48] sm:$0xff]
        %v8340 = vld [vmem:[#allocation2 + $0xb50] sm:$0xff]
        %v8341 = vld [vmem:[#allocation2 + $0xb58] sm:$0xff]
        %v8342 = vld [vmem:[#allocation2 + $0xb60] sm:$0xff]
        %v8343 = vld [vmem:[#allocation2 + $0xb68] sm:$0xff]
        %v8344 = vld [vmem:[#allocation2 + $0xb70] sm:$0xff]
        %v8345 = vld [vmem:[#allocation2 + $0xb78] sm:$0xff]
        %v8346 = vld [vmem:[#allocation2 + $0xb80] sm:$0xff]
        %v8347 = vld [vmem:[#allocation2 + $0xb88] sm:$0xff]
        %v8348 = vld [vmem:[#allocation2 + $0xb90] sm:$0xff]
        %v8349 = vld [vmem:[#allocation2 + $0xb98] sm:$0xff]
        %v8350 = vld [vmem:[#allocation2 + $0xba0] sm:$0xff]
        %v8351 = vld [vmem:[#allocation2 + $0xba8] sm:$0xff]
        %v8352 = vld [vmem:[#allocation2 + $0xbb0] sm:$0xff]
        %v8353 = vld [vmem:[#allocation2 + $0xbb8] sm:$0xff]
        %v8354 = vld [vmem:[#allocation2 + $0xbc0] sm:$0xff]
        %v8355 = vld [vmem:[#allocation2 + $0xbc8] sm:$0xff]
        %v8356 = vld [vmem:[#allocation2 + $0xbd0] sm:$0xff]
        %v8357 = vld [vmem:[#allocation2 + $0xbd8] sm:$0xff]
        %v8358 = vld [vmem:[#allocation2 + $0xbe0] sm:$0xff]
        %v8359 = vld [vmem:[#allocation2 + $0xbe8] sm:$0xff]
        %v8360 = vld [vmem:[#allocation2 + $0xbf0] sm:$0xff]
        %v8361 = vld [vmem:[#allocation2 + $0xbf8] sm:$0xff]
        %v8362 = vld [vmem:[#allocation2 + $0xc00] sm:$0xff]
        %v8363 = vld [vmem:[#allocation2 + $0xc08] sm:$0xff]
        %v8364 = vld [vmem:[#allocation2 + $0xc10] sm:$0xff]
        %v8365 = vld [vmem:[#allocation2 + $0xc18] sm:$0xff]
        %v8366 = vld [vmem:[#allocation2 + $0xc20] sm:$0xff]
        %v8367 = vld [vmem:[#allocation2 + $0xc28] sm:$0xff]
        %v8368 = vld [vmem:[#allocation2 + $0xc30] sm:$0xff]
        %v8369 = vld [vmem:[#allocation2 + $0xc38] sm:$0xff]
        %v8370 = vld [vmem:[#allocation2 + $0xc40] sm:$0xff]
        %v8371 = vld [vmem:[#allocation2 + $0xc48] sm:$0xff]
        %v8372 = vld [vmem:[#allocation2 + $0xc50] sm:$0xff]
        %v8373 = vld [vmem:[#allocation2 + $0xc58] sm:$0xff]
        %v8374 = vld [vmem:[#allocation2 + $0xc60] sm:$0xff]
        %v8375 = vld [vmem:[#allocation2 + $0xc68] sm:$0xff]
        %v8376 = vld [vmem:[#allocation2 + $0xc70] sm:$0xff]
        %v8377 = vld [vmem:[#allocation2 + $0xc78] sm:$0xff]
        %v8378 = vld [vmem:[#allocation4] sm:$0x1]
        %8380 = vset.pattern.permute.xlu0 0
        %8381 = vperm.xlu0 %8380, %v8378
        %v8382 = vpop.permute.xlu0 %8381
        %v8384 = vlaneseq
        %v8385 = vshrl.u32 %v8384, 7
        %v8386 = vsub.s32 0, %v8385
        %v8387 = vrot.slane %v8382, %v8386
        %v8389 = vlaneseq
        %v8390 = vshrl.u32 %v8389, 7
        %v8391 = vsub.s32 0, %v8390
        %v8392 = vrot.slane %v7977, %v8391
        %v8393 = vlaneseq
        %v8394 = vshrl.u32 %v8393, 7
        %v8395 = vsub.s32 1, %v8394
        %v8396 = vrot.slane %v7977, %v8395
        %v8397 = vlaneseq
        %v8398 = vshrl.u32 %v8397, 7
        %v8399 = vsub.s32 2, %v8398
        %v8400 = vrot.slane %v7977, %v8399
        %v8401 = vlaneseq
        %v8402 = vshrl.u32 %v8401, 7
        %v8403 = vsub.s32 3, %v8402
        %v8404 = vrot.slane %v7977, %v8403
        %v8405 = vlaneseq
        %v8406 = vshrl.u32 %v8405, 7
        %v8407 = vsub.s32 4, %v8406
        %v8408 = vrot.slane %v7977, %v8407
        %v8409 = vlaneseq
        %v8410 = vshrl.u32 %v8409, 7
        %v8411 = vsub.s32 5, %v8410
        %v8412 = vrot.slane %v7977, %v8411
        %v8413 = vlaneseq
        %v8414 = vshrl.u32 %v8413, 7
        %v8415 = vsub.s32 6, %v8414
        %v8416 = vrot.slane %v7977, %v8415
        %v8423 = vsel %vm4470, %v8416, 0
        %8425 = vmatprep.subr.mxu0 %v7979
        %8426 = vmatpush1.msra.mxu0 %v7978
        %8427 = vmatprep.subr.mxu0 %v7983
        %8428 = vmatpush1.msra.mxu0 %v7982
        %8429 = vmatprep.subr.mxu0 %v7987
        %8430 = vmatpush1.msra.mxu0 %v7986
        %8431 = vmatprep.subr.mxu0 %v7991
        %8432 = vmatpush1.msra.mxu0 %v7990
        %8433 = vmatprep.subr.mxu0 %v7995
        %8434 = vmatpush1.msra.mxu0 %v7994
        %8435 = vmatprep.subr.mxu0 %v7999
        %8436 = vmatpush1.msra.mxu0 %v7998
        %8437 = vmatprep.subr.mxu0 %v8003
        %8438 = vmatpush1.msra.mxu0 %v8002
        %8439 = vmatprep.subr.mxu0 %v8007
        %8440 = vmatpush1.msra.mxu0 %v8006
        %8441 = vmatprep.subr.mxu0 %v8011
        %8442 = vmatpush1.msra.mxu0 %v8010
        %8443 = vmatprep.subr.mxu0 %v8015
        %8444 = vmatpush1.msra.mxu0 %v8014
        %8445 = vmatprep.subr.mxu0 %v8019
        %8446 = vmatpush1.msra.mxu0 %v8018
        %8447 = vmatprep.subr.mxu0 %v8023
        %8448 = vmatpush1.msra.mxu0 %v8022
        %8449 = vmatprep.subr.mxu0 %v8027
        %8450 = vmatpush1.msra.mxu0 %v8026
        %8451 = vmatprep.subr.mxu0 %v8031
        %8452 = vmatpush1.msra.mxu0 %v8030
        %8453 = vmatprep.subr.mxu0 %v8035
        %8454 = vmatpush1.msra.mxu0 %v8034
        %8455 = vmatprep.subr.mxu0 %v8039
        %8456 = vmatpush1.msra.mxu0 %v8038
        %8457 = vmatprep.subr.mxu0 %v8043
        %8458 = vmatpush1.msra.mxu0 %v8042
        %8459 = vmatprep.subr.mxu0 %v8047
        %8460 = vmatpush1.msra.mxu0 %v8046
        %8461 = vmatprep.subr.mxu0 %v8051
        %8462 = vmatpush1.msra.mxu0 %v8050
        %8463 = vmatprep.subr.mxu0 %v8055
        %8464 = vmatpush1.msra.mxu0 %v8054
        %8465 = vmatprep.subr.mxu0 %v8059
        %8466 = vmatpush1.msra.mxu0 %v8058
        %8467 = vmatprep.subr.mxu0 %v8063
        %8468 = vmatpush1.msra.mxu0 %v8062
        %8469 = vmatprep.subr.mxu0 %v8067
        %8470 = vmatpush1.msra.mxu0 %v8066
        %8471 = vmatprep.subr.mxu0 %v8071
        %8472 = vmatpush1.msra.mxu0 %v8070
        %8473 = vmatprep.subr.mxu0 %v8075
        %8474 = vmatpush1.msra.mxu0 %v8074
        %8475 = vmatprep.subr.mxu0 %v8079
        %8476 = vmatpush1.msra.mxu0 %v8078
        %8477 = vmatprep.subr.mxu0 %v8083
        %8478 = vmatpush1.msra.mxu0 %v8082
        %8479 = vmatprep.subr.mxu0 %v8087
        %8480 = vmatpush1.msra.mxu0 %v8086
        %8481 = vmatprep.subr.mxu0 %v8091
        %8482 = vmatpush1.msra.mxu0 %v8090
        %8483 = vmatprep.subr.mxu0 %v8095
        %8484 = vmatpush1.msra.mxu0 %v8094
        %8485 = vmatprep.subr.mxu0 %v8099
        %8486 = vmatpush1.msra.mxu0 %v8098
        %8487 = vmatprep.subr.mxu0 %v8103
        %8488 = vmatpush1.msra.mxu0 %v8102
        %8489 = vmatprep.mubr.f32.mxu0 %v8396
        %8490 = vmatmul.mubr.f32.gmra.mrb[0].mxu0 %v8392
        %v8491 = vpop.f32.mrb[0].mxu0
        %v8492 = vadd.f32 %v8387, %v8491
        %v8493 = vpop.f32.mrb[0].mxu0
        %v8494 = vadd.f32 %v8387, %v8493
        %8495 = vdwg.mxu0
        %8496 = vmatprep.subr.mxu0 %v8107
        %8497 = vmatpush1.msra.mxu0 %v8106
        %8498 = vmatprep.subr.mxu0 %v8111
        %8499 = vmatpush1.msra.mxu0 %v8110
        %8500 = vmatprep.subr.mxu0 %v8115
        %8501 = vmatpush1.msra.mxu0 %v8114
        %8502 = vmatprep.subr.mxu0 %v8119
        %8503 = vmatpush1.msra.mxu0 %v8118
        %8504 = vmatprep.subr.mxu0 %v8123
        %8505 = vmatpush1.msra.mxu0 %v8122
        %8506 = vmatprep.subr.mxu0 %v8127
        %8507 = vmatpush1.msra.mxu0 %v8126
        %8508 = vmatprep.subr.mxu0 %v8131
        %8509 = vmatpush1.msra.mxu0 %v8130
        %8510 = vmatprep.subr.mxu0 %v8135
        %8511 = vmatpush1.msra.mxu0 %v8134
        %8512 = vmatprep.subr.mxu0 %v8139
        %8513 = vmatpush1.msra.mxu0 %v8138
        %8514 = vmatprep.subr.mxu0 %v8143
        %8515 = vmatpush1.msra.mxu0 %v8142
        %8516 = vmatprep.subr.mxu0 %v8147
        %8517 = vmatpush1.msra.mxu0 %v8146
        %8518 = vmatprep.subr.mxu0 %v8151
        %8519 = vmatpush1.msra.mxu0 %v8150
        %8520 = vmatprep.subr.mxu0 %v8155
        %8521 = vmatpush1.msra.mxu0 %v8154
        %8522 = vmatprep.subr.mxu0 %v8159
        %8523 = vmatpush1.msra.mxu0 %v8158
        %8524 = vmatprep.subr.mxu0 %v8163
        %8525 = vmatpush1.msra.mxu0 %v8162
        %8526 = vmatprep.subr.mxu0 %v8167
        %8527 = vmatpush1.msra.mxu0 %v8166
        %8528 = vmatprep.subr.mxu0 %v8171
        %8529 = vmatpush1.msra.mxu0 %v8170
        %8530 = vmatprep.subr.mxu0 %v8175
        %8531 = vmatpush1.msra.mxu0 %v8174
        %8532 = vmatprep.subr.mxu0 %v8179
        %8533 = vmatpush1.msra.mxu0 %v8178
        %8534 = vmatprep.subr.mxu0 %v8183
        %8535 = vmatpush1.msra.mxu0 %v8182
        %8536 = vmatprep.subr.mxu0 %v8187
        %8537 = vmatpush1.msra.mxu0 %v8186
        %8538 = vmatprep.subr.mxu0 %v8191
        %8539 = vmatpush1.msra.mxu0 %v8190
        %8540 = vmatprep.subr.mxu0 %v8195
        %8541 = vmatpush1.msra.mxu0 %v8194
        %8542 = vmatprep.subr.mxu0 %v8199
        %8543 = vmatpush1.msra.mxu0 %v8198
        %8544 = vmatprep.subr.mxu0 %v8203
        %8545 = vmatpush1.msra.mxu0 %v8202
        %8546 = vmatprep.subr.mxu0 %v8207
        %8547 = vmatpush1.msra.mxu0 %v8206
        %8548 = vmatprep.subr.mxu0 %v8211
        %8549 = vmatpush1.msra.mxu0 %v8210
        %8550 = vmatprep.subr.mxu0 %v8215
        %8551 = vmatpush1.msra.mxu0 %v8214
        %8552 = vmatprep.subr.mxu0 %v8219
        %8553 = vmatpush1.msra.mxu0 %v8218
        %8554 = vmatprep.subr.mxu0 %v8223
        %8555 = vmatpush1.msra.mxu0 %v8222
        %8556 = vmatprep.subr.mxu0 %v8227
        %8557 = vmatpush1.msra.mxu0 %v8226
        %8558 = vmatprep.subr.mxu0 %v8231
        %8559 = vmatpush1.msra.mxu0 %v8230
        %8560 = vmatprep.mubr.f32.mxu0 %v8404
        %8561 = vmatmul.mubr.f32.gmra.mrb[0].mxu0 %v8400
        %v8562 = vpop.f32.mrb[0].mxu0
        %v8563 = vadd.f32 %v8492, %v8562
        %v8564 = vpop.f32.mrb[0].mxu0
        %v8565 = vadd.f32 %v8494, %v8564
        %8566 = vdwg.mxu0
        %8567 = vmatprep.subr.mxu0 %v8235
        %8568 = vmatpush1.msra.mxu0 %v8234
        %8569 = vmatprep.subr.mxu0 %v8239
        %8570 = vmatpush1.msra.mxu0 %v8238
        %8571 = vmatprep.subr.mxu0 %v8243
        %8572 = vmatpush1.msra.mxu0 %v8242
        %8573 = vmatprep.subr.mxu0 %v8247
        %8574 = vmatpush1.msra.mxu0 %v8246
        %8575 = vmatprep.subr.mxu0 %v8251
        %8576 = vmatpush1.msra.mxu0 %v8250
        %8577 = vmatprep.subr.mxu0 %v8255
        %8578 = vmatpush1.msra.mxu0 %v8254
        %8579 = vmatprep.subr.mxu0 %v8259
        %8580 = vmatpush1.msra.mxu0 %v8258
        %8581 = vmatprep.subr.mxu0 %v8263
        %8582 = vmatpush1.msra.mxu0 %v8262
        %8583 = vmatprep.subr.mxu0 %v8267
        %8584 = vmatpush1.msra.mxu0 %v8266
        %8585 = vmatprep.subr.mxu0 %v8271
        %8586 = vmatpush1.msra.mxu0 %v8270
        %8587 = vmatprep.subr.mxu0 %v8275
        %8588 = vmatpush1.msra.mxu0 %v8274
        %8589 = vmatprep.subr.mxu0 %v8279
        %8590 = vmatpush1.msra.mxu0 %v8278
        %8591 = vmatprep.subr.mxu0 %v8283
        %8592 = vmatpush1.msra.mxu0 %v8282
        %8593 = vmatprep.subr.mxu0 %v8287
        %8594 = vmatpush1.msra.mxu0 %v8286
        %8595 = vmatprep.subr.mxu0 %v8291
        %8596 = vmatpush1.msra.mxu0 %v8290
        %8597 = vmatprep.subr.mxu0 %v8295
        %8598 = vmatpush1.msra.mxu0 %v8294
        %8599 = vmatprep.subr.mxu0 %v8299
        %8600 = vmatpush1.msra.mxu0 %v8298
        %8601 = vmatprep.subr.mxu0 %v8303
        %8602 = vmatpush1.msra.mxu0 %v8302
        %8603 = vmatprep.subr.mxu0 %v8307
        %8604 = vmatpush1.msra.mxu0 %v8306
        %8605 = vmatprep.subr.mxu0 %v8311
        %8606 = vmatpush1.msra.mxu0 %v8310
        %8607 = vmatprep.subr.mxu0 %v8315
        %8608 = vmatpush1.msra.mxu0 %v8314
        %8609 = vmatprep.subr.mxu0 %v8319
        %8610 = vmatpush1.msra.mxu0 %v8318
        %8611 = vmatprep.subr.mxu0 %v8323
        %8612 = vmatpush1.msra.mxu0 %v8322
        %8613 = vmatprep.subr.mxu0 %v8327
        %8614 = vmatpush1.msra.mxu0 %v8326
        %8615 = vmatprep.subr.mxu0 %v8331
        %8616 = vmatpush1.msra.mxu0 %v8330
        %8617 = vmatprep.subr.mxu0 %v8335
        %8618 = vmatpush1.msra.mxu0 %v8334
        %8619 = vmatprep.subr.mxu0 %v8339
        %8620 = vmatpush1.msra.mxu0 %v8338
        %8621 = vmatprep.subr.mxu0 %v8343
        %8622 = vmatpush1.msra.mxu0 %v8342
        %8623 = vmatprep.subr.mxu0 %v8347
        %8624 = vmatpush1.msra.mxu0 %v8346
        %8625 = vmatprep.subr.mxu0 %v8351
        %8626 = vmatpush1.msra.mxu0 %v8350
        %8627 = vmatprep.subr.mxu0 %v8355
        %8628 = vmatpush1.msra.mxu0 %v8354
        %8629 = vmatprep.subr.mxu0 %v8359
        %8630 = vmatpush1.msra.mxu0 %v8358
        %8631 = vmatprep.mubr.f32.mxu0 %v8412
        %8632 = vmatmul.mubr.f32.gmra.mrb[0].mxu0 %v8408
        %v8633 = vpop.f32.mrb[0].mxu0
        %v8634 = vadd.f32 %v8563, %v8633
        %v8635 = vpop.f32.mrb[0].mxu0
        %v8636 = vadd.f32 %v8565, %v8635
        %8637 = vdwg.mxu0
        %8638 = vmatprep.subr.mxu0 %v8363
        %8639 = vmatpush1.msra.mxu0 %v8362
        %8640 = vmatprep.subr.mxu0 %v8367
        %8641 = vmatpush1.msra.mxu0 %v8366
        %8642 = vmatprep.subr.mxu0 %v8371
        %8643 = vmatpush1.msra.mxu0 %v8370
        %8644 = vmatprep.subr.mxu0 %v8375
        %8645 = vmatpush1.msra.mxu0 %v8374
        %8646 = vmatprep.subr.mxu0 0.0
        %8647 = vmatpush1.msra.mxu0 0.0
        %8648 = vmatprep.subr.mxu0 0.0
        %8649 = vmatpush1.msra.mxu0 0.0
        %8650 = vmatprep.subr.mxu0 0.0
        %8651 = vmatpush1.msra.mxu0 0.0
        %8652 = vmatprep.subr.mxu0 0.0
        %8653 = vmatpush1.msra.mxu0 0.0
        %8654 = vmatprep.subr.mxu0 0.0
        %8655 = vmatpush1.msra.mxu0 0.0
        %8656 = vmatprep.subr.mxu0 0.0
        %8657 = vmatpush1.msra.mxu0 0.0
        %8658 = vmatprep.subr.mxu0 0.0
        %8659 = vmatpush1.msra.mxu0 0.0
        %8660 = vmatprep.subr.mxu0 0.0
        %8661 = vmatpush1.msra.mxu0 0.0
        %8662 = vmatprep.subr.mxu0 0.0
        %8663 = vmatpush1.msra.mxu0 0.0
        %8664 = vmatprep.subr.mxu0 0.0
        %8665 = vmatpush1.msra.mxu0 0.0
        %8666 = vmatprep.subr.mxu0 0.0
        %8667 = vmatpush1.msra.mxu0 0.0
        %8668 = vmatprep.subr.mxu0 0.0
        %8669 = vmatpush1.msra.mxu0 0.0
        %8670 = vmatprep.subr.mxu0 0.0
        %8671 = vmatpush1.msra.mxu0 0.0
        %8672 = vmatprep.subr.mxu0 0.0
        %8673 = vmatpush1.msra.mxu0 0.0
        %8674 = vmatprep.subr.mxu0 0.0
        %8675 = vmatpush1.msra.mxu0 0.0
        %8676 = vmatprep.subr.mxu0 0.0
        %8677 = vmatpush1.msra.mxu0 0.0
        %8678 = vmatprep.subr.mxu0 0.0
        %8679 = vmatpush1.msra.mxu0 0.0
        %8680 = vmatprep.subr.mxu0 0.0
        %8681 = vmatpush1.msra.mxu0 0.0
        %8682 = vmatprep.subr.mxu0 0.0
        %8683 = vmatpush1.msra.mxu0 0.0
        %8684 = vmatprep.subr.mxu0 0.0
        %8685 = vmatpush1.msra.mxu0 0.0
        %8686 = vmatprep.subr.mxu0 0.0
        %8687 = vmatpush1.msra.mxu0 0.0
        %8688 = vmatprep.subr.mxu0 0.0
        %8689 = vmatpush1.msra.mxu0 0.0
        %8690 = vmatprep.subr.mxu0 0.0
        %8691 = vmatpush1.msra.mxu0 0.0
        %8692 = vmatprep.subr.mxu0 0.0
        %8693 = vmatpush1.msra.mxu0 0.0
        %8694 = vmatprep.subr.mxu0 0.0
        %8695 = vmatpush1.msra.mxu0 0.0
        %8696 = vmatprep.subr.mxu0 0.0
        %8697 = vmatpush1.msra.mxu0 0.0
        %8698 = vmatprep.subr.mxu0 0.0
        %8699 = vmatpush1.msra.mxu0 0.0
        %8700 = vmatprep.subr.mxu0 0.0
        %8701 = vmatpush1.msra.mxu0 0.0
        %8702 = vmatprep.mubr.f32.mxu0 0.0
        %8703 = vmatmul.mubr.f32.gmra.mrb[0].mxu0 %v8423
        %v8704 = vpop.f32.mrb[0].mxu0
        %v8705 = vadd.f32 %v8634, %v8704
        %v8706 = vpop.f32.mrb[0].mxu0
        %v8707 = vadd.f32 %v8636, %v8706
        %8708 = vdwg.mxu0
        %8709 = vmatprep.subr.mxu0 %v7981
        %8710 = vmatpush1.msra.mxu0 %v7980
        %8711 = vmatprep.subr.mxu0 %v7985
        %8712 = vmatpush1.msra.mxu0 %v7984
        %8713 = vmatprep.subr.mxu0 %v7989
        %8714 = vmatpush1.msra.mxu0 %v7988
        %8715 = vmatprep.subr.mxu0 %v7993
        %8716 = vmatpush1.msra.mxu0 %v7992
        %8717 = vmatprep.subr.mxu0 %v7997
        %8718 = vmatpush1.msra.mxu0 %v7996
        %8719 = vmatprep.subr.mxu0 %v8001
        %8720 = vmatpush1.msra.mxu0 %v8000
        %8721 = vmatprep.subr.mxu0 %v8005
        %8722 = vmatpush1.msra.mxu0 %v8004
        %8723 = vmatprep.subr.mxu0 %v8009
        %8724 = vmatpush1.msra.mxu0 %v8008
        %8725 = vmatprep.subr.mxu0 %v8013
        %8726 = vmatpush1.msra.mxu0 %v8012
        %8727 = vmatprep.subr.mxu0 %v8017
        %8728 = vmatpush1.msra.mxu0 %v8016
        %8729 = vmatprep.subr.mxu0 %v8021
        %8730 = vmatpush1.msra.mxu0 %v8020
        %8731 = vmatprep.subr.mxu0 %v8025
        %8732 = vmatpush1.msra.mxu0 %v8024
        %8733 = vmatprep.subr.mxu0 %v8029
        %8734 = vmatpush1.msra.mxu0 %v8028
        %8735 = vmatprep.subr.mxu0 %v8033
        %8736 = vmatpush1.msra.mxu0 %v8032
        %8737 = vmatprep.subr.mxu0 %v8037
        %8738 = vmatpush1.msra.mxu0 %v8036
        %8739 = vmatprep.subr.mxu0 %v8041
        %8740 = vmatpush1.msra.mxu0 %v8040
        %8741 = vmatprep.subr.mxu0 %v8045
        %8742 = vmatpush1.msra.mxu0 %v8044
        %8743 = vmatprep.subr.mxu0 %v8049
        %8744 = vmatpush1.msra.mxu0 %v8048
        %8745 = vmatprep.subr.mxu0 %v8053
        %8746 = vmatpush1.msra.mxu0 %v8052
        %8747 = vmatprep.subr.mxu0 %v8057
        %8748 = vmatpush1.msra.mxu0 %v8056
        %8749 = vmatprep.subr.mxu0 %v8061
        %8750 = vmatpush1.msra.mxu0 %v8060
        %8751 = vmatprep.subr.mxu0 %v8065
        %8752 = vmatpush1.msra.mxu0 %v8064
        %8753 = vmatprep.subr.mxu0 %v8069
        %8754 = vmatpush1.msra.mxu0 %v8068
        %8755 = vmatprep.subr.mxu0 %v8073
        %8756 = vmatpush1.msra.mxu0 %v8072
        %8757 = vmatprep.subr.mxu0 %v8077
        %8758 = vmatpush1.msra.mxu0 %v8076
        %8759 = vmatprep.subr.mxu0 %v8081
        %8760 = vmatpush1.msra.mxu0 %v8080
        %8761 = vmatprep.subr.mxu0 %v8085
        %8762 = vmatpush1.msra.mxu0 %v8084
        %8763 = vmatprep.subr.mxu0 %v8089
        %8764 = vmatpush1.msra.mxu0 %v8088
        %8765 = vmatprep.subr.mxu0 %v8093
        %8766 = vmatpush1.msra.mxu0 %v8092
        %8767 = vmatprep.subr.mxu0 %v8097
        %8768 = vmatpush1.msra.mxu0 %v8096
        %8769 = vmatprep.subr.mxu0 %v8101
        %8770 = vmatpush1.msra.mxu0 %v8100
        %8771 = vmatprep.subr.mxu0 %v8105
        %8772 = vmatpush1.msra.mxu0 %v8104
        %8773 = vmatprep.mubr.f32.mxu0 %v8396
        %8774 = vmatmul.mubr.f32.gmra.mrb[0].mxu0 %v8392
        %v8775 = vpop.f32.mrb[0].mxu0
        %v8776 = vadd.f32 %v8387, %v8775
        %v8777 = vpop.f32.mrb[0].mxu0
        %v8778 = vadd.f32 %v8387, %v8777
        %8779 = vdwg.mxu0
        %8780 = vmatprep.subr.mxu0 %v8109
        %8781 = vmatpush1.msra.mxu0 %v8108
        %8782 = vmatprep.subr.mxu0 %v8113
        %8783 = vmatpush1.msra.mxu0 %v8112
        %8784 = vmatprep.subr.mxu0 %v8117
        %8785 = vmatpush1.msra.mxu0 %v8116
        %8786 = vmatprep.subr.mxu0 %v8121
        %8787 = vmatpush1.msra.mxu0 %v8120
        %8788 = vmatprep.subr.mxu0 %v8125
        %8789 = vmatpush1.msra.mxu0 %v8124
        %8790 = vmatprep.subr.mxu0 %v8129
        %8791 = vmatpush1.msra.mxu0 %v8128
        %8792 = vmatprep.subr.mxu0 %v8133
        %8793 = vmatpush1.msra.mxu0 %v8132
        %8794 = vmatprep.subr.mxu0 %v8137
        %8795 = vmatpush1.msra.mxu0 %v8136
        %8796 = vmatprep.subr.mxu0 %v8141
        %8797 = vmatpush1.msra.mxu0 %v8140
        %8798 = vmatprep.subr.mxu0 %v8145
        %8799 = vmatpush1.msra.mxu0 %v8144
        %8800 = vmatprep.subr.mxu0 %v8149
        %8801 = vmatpush1.msra.mxu0 %v8148
        %8802 = vmatprep.subr.mxu0 %v8153
        %8803 = vmatpush1.msra.mxu0 %v8152
        %8804 = vmatprep.subr.mxu0 %v8157
        %8805 = vmatpush1.msra.mxu0 %v8156
        %8806 = vmatprep.subr.mxu0 %v8161
        %8807 = vmatpush1.msra.mxu0 %v8160
        %8808 = vmatprep.subr.mxu0 %v8165
        %8809 = vmatpush1.msra.mxu0 %v8164
        %8810 = vmatprep.subr.mxu0 %v8169
        %8811 = vmatpush1.msra.mxu0 %v8168
        %8812 = vmatprep.subr.mxu0 %v8173
        %8813 = vmatpush1.msra.mxu0 %v8172
        %8814 = vmatprep.subr.mxu0 %v8177
        %8815 = vmatpush1.msra.mxu0 %v8176
        %8816 = vmatprep.subr.mxu0 %v8181
        %8817 = vmatpush1.msra.mxu0 %v8180
        %8818 = vmatprep.subr.mxu0 %v8185
        %8819 = vmatpush1.msra.mxu0 %v8184
        %8820 = vmatprep.subr.mxu0 %v8189
        %8821 = vmatpush1.msra.mxu0 %v8188
        %8822 = vmatprep.subr.mxu0 %v8193
        %8823 = vmatpush1.msra.mxu0 %v8192
        %8824 = vmatprep.subr.mxu0 %v8197
        %8825 = vmatpush1.msra.mxu0 %v8196
        %8826 = vmatprep.subr.mxu0 %v8201
        %8827 = vmatpush1.msra.mxu0 %v8200
        %8828 = vmatprep.subr.mxu0 %v8205
        %8829 = vmatpush1.msra.mxu0 %v8204
        %8830 = vmatprep.subr.mxu0 %v8209
        %8831 = vmatpush1.msra.mxu0 %v8208
        %8832 = vmatprep.subr.mxu0 %v8213
        %8833 = vmatpush1.msra.mxu0 %v8212
        %8834 = vmatprep.subr.mxu0 %v8217
        %8835 = vmatpush1.msra.mxu0 %v8216
        %8836 = vmatprep.subr.mxu0 %v8221
        %8837 = vmatpush1.msra.mxu0 %v8220
        %8838 = vmatprep.subr.mxu0 %v8225
        %8839 = vmatpush1.msra.mxu0 %v8224
        %8840 = vmatprep.subr.mxu0 %v8229
        %8841 = vmatpush1.msra.mxu0 %v8228
        %8842 = vmatprep.subr.mxu0 %v8233
        %8843 = vmatpush1.msra.mxu0 %v8232
        %8844 = vmatprep.mubr.f32.mxu0 %v8404
        %8845 = vmatmul.mubr.f32.gmra.mrb[0].mxu0 %v8400
        %v8846 = vpop.f32.mrb[0].mxu0
        %v8847 = vadd.f32 %v8776, %v8846
        %v8848 = vpop.f32.mrb[0].mxu0
        %v8849 = vadd.f32 %v8778, %v8848
        %8850 = vdwg.mxu0
        %8851 = vmatprep.subr.mxu0 %v8237
        %8852 = vmatpush1.msra.mxu0 %v8236
        %8853 = vmatprep.subr.mxu0 %v8241
        %8854 = vmatpush1.msra.mxu0 %v8240
        %8855 = vmatprep.subr.mxu0 %v8245
        %8856 = vmatpush1.msra.mxu0 %v8244
        %8857 = vmatprep.subr.mxu0 %v8249
        %8858 = vmatpush1.msra.mxu0 %v8248
        %8859 = vmatprep.subr.mxu0 %v8253
        %8860 = vmatpush1.msra.mxu0 %v8252
        %8861 = vmatprep.subr.mxu0 %v8257
        %8862 = vmatpush1.msra.mxu0 %v8256
        %8863 = vmatprep.subr.mxu0 %v8261
        %8864 = vmatpush1.msra.mxu0 %v8260
        %8865 = vmatprep.subr.mxu0 %v8265
        %8866 = vmatpush1.msra.mxu0 %v8264
        %8867 = vmatprep.subr.mxu0 %v8269
        %8868 = vmatpush1.msra.mxu0 %v8268
        %8869 = vmatprep.subr.mxu0 %v8273
        %8870 = vmatpush1.msra.mxu0 %v8272
        %8871 = vmatprep.subr.mxu0 %v8277
        %8872 = vmatpush1.msra.mxu0 %v8276
        %8873 = vmatprep.subr.mxu0 %v8281
        %8874 = vmatpush1.msra.mxu0 %v8280
        %8875 = vmatprep.subr.mxu0 %v8285
        %8876 = vmatpush1.msra.mxu0 %v8284
        %8877 = vmatprep.subr.mxu0 %v8289
        %8878 = vmatpush1.msra.mxu0 %v8288
        %8879 = vmatprep.subr.mxu0 %v8293
        %8880 = vmatpush1.msra.mxu0 %v8292
        %8881 = vmatprep.subr.mxu0 %v8297
        %8882 = vmatpush1.msra.mxu0 %v8296
        %8883 = vmatprep.subr.mxu0 %v8301
        %8884 = vmatpush1.msra.mxu0 %v8300
        %8885 = vmatprep.subr.mxu0 %v8305
        %8886 = vmatpush1.msra.mxu0 %v8304
        %8887 = vmatprep.subr.mxu0 %v8309
        %8888 = vmatpush1.msra.mxu0 %v8308
        %8889 = vmatprep.subr.mxu0 %v8313
        %8890 = vmatpush1.msra.mxu0 %v8312
        %8891 = vmatprep.subr.mxu0 %v8317
        %8892 = vmatpush1.msra.mxu0 %v8316
        %8893 = vmatprep.subr.mxu0 %v8321
        %8894 = vmatpush1.msra.mxu0 %v8320
        %8895 = vmatprep.subr.mxu0 %v8325
        %8896 = vmatpush1.msra.mxu0 %v8324
        %8897 = vmatprep.subr.mxu0 %v8329
        %8898 = vmatpush1.msra.mxu0 %v8328
        %8899 = vmatprep.subr.mxu0 %v8333
        %8900 = vmatpush1.msra.mxu0 %v8332
        %8901 = vmatprep.subr.mxu0 %v8337
        %8902 = vmatpush1.msra.mxu0 %v8336
        %8903 = vmatprep.subr.mxu0 %v8341
        %8904 = vmatpush1.msra.mxu0 %v8340
        %8905 = vmatprep.subr.mxu0 %v8345
        %8906 = vmatpush1.msra.mxu0 %v8344
        %8907 = vmatprep.subr.mxu0 %v8349
        %8908 = vmatpush1.msra.mxu0 %v8348
        %8909 = vmatprep.subr.mxu0 %v8353
        %8910 = vmatpush1.msra.mxu0 %v8352
        %8911 = vmatprep.subr.mxu0 %v8357
        %8912 = vmatpush1.msra.mxu0 %v8356
        %8913 = vmatprep.subr.mxu0 %v8361
        %8914 = vmatpush1.msra.mxu0 %v8360
        %8915 = vmatprep.mubr.f32.mxu0 %v8412
        %8916 = vmatmul.mubr.f32.gmra.mrb[0].mxu0 %v8408
        %v8917 = vpop.f32.mrb[0].mxu0
        %v8918 = vadd.f32 %v8847, %v8917
        %v8919 = vpop.f32.mrb[0].mxu0
        %v8920 = vadd.f32 %v8849, %v8919
        %8921 = vdwg.mxu0
        %8922 = vmatprep.subr.mxu0 %v8365
        %8923 = vmatpush1.msra.mxu0 %v8364
        %8924 = vmatprep.subr.mxu0 %v8369
        %8925 = vmatpush1.msra.mxu0 %v8368
        %8926 = vmatprep.subr.mxu0 %v8373
        %8927 = vmatpush1.msra.mxu0 %v8372
        %8928 = vmatprep.subr.mxu0 %v8377
        %8929 = vmatpush1.msra.mxu0 %v8376
        %8930 = vmatprep.subr.mxu0 0.0
        %8931 = vmatpush1.msra.mxu0 0.0
        %8932 = vmatprep.subr.mxu0 0.0
        %8933 = vmatpush1.msra.mxu0 0.0
        %8934 = vmatprep.subr.mxu0 0.0
        %8935 = vmatpush1.msra.mxu0 0.0
        %8936 = vmatprep.subr.mxu0 0.0
        %8937 = vmatpush1.msra.mxu0 0.0
        %8938 = vmatprep.subr.mxu0 0.0
        %8939 = vmatpush1.msra.mxu0 0.0
        %8940 = vmatprep.subr.mxu0 0.0
        %8941 = vmatpush1.msra.mxu0 0.0
        %8942 = vmatprep.subr.mxu0 0.0
        %8943 = vmatpush1.msra.mxu0 0.0
        %8944 = vmatprep.subr.mxu0 0.0
        %8945 = vmatpush1.msra.mxu0 0.0
        %8946 = vmatprep.subr.mxu0 0.0
        %8947 = vmatpush1.msra.mxu0 0.0
        %8948 = vmatprep.subr.mxu0 0.0
        %8949 = vmatpush1.msra.mxu0 0.0
        %8950 = vmatprep.subr.mxu0 0.0
        %8951 = vmatpush1.msra.mxu0 0.0
        %8952 = vmatprep.subr.mxu0 0.0
        %8953 = vmatpush1.msra.mxu0 0.0
        %8954 = vmatprep.subr.mxu0 0.0
        %8955 = vmatpush1.msra.mxu0 0.0
        %8956 = vmatprep.subr.mxu0 0.0
        %8957 = vmatpush1.msra.mxu0 0.0
        %8958 = vmatprep.subr.mxu0 0.0
        %8959 = vmatpush1.msra.mxu0 0.0
        %8960 = vmatprep.subr.mxu0 0.0
        %8961 = vmatpush1.msra.mxu0 0.0
        %8962 = vmatprep.subr.mxu0 0.0
        %8963 = vmatpush1.msra.mxu0 0.0
        %8964 = vmatprep.subr.mxu0 0.0
        %8965 = vmatpush1.msra.mxu0 0.0
        %8966 = vmatprep.subr.mxu0 0.0
        %8967 = vmatpush1.msra.mxu0 0.0
        %8968 = vmatprep.subr.mxu0 0.0
        %8969 = vmatpush1.msra.mxu0 0.0
        %8970 = vmatprep.subr.mxu0 0.0
        %8971 = vmatpush1.msra.mxu0 0.0
        %8972 = vmatprep.subr.mxu0 0.0
        %8973 = vmatpush1.msra.mxu0 0.0
        %8974 = vmatprep.subr.mxu0 0.0
        %8975 = vmatpush1.msra.mxu0 0.0
        %8976 = vmatprep.subr.mxu0 0.0
        %8977 = vmatpush1.msra.mxu0 0.0
        %8978 = vmatprep.subr.mxu0 0.0
        %8979 = vmatpush1.msra.mxu0 0.0
        %8980 = vmatprep.subr.mxu0 0.0
        %8981 = vmatpush1.msra.mxu0 0.0
        %8982 = vmatprep.subr.mxu0 0.0
        %8983 = vmatpush1.msra.mxu0 0.0
        %8984 = vmatprep.subr.mxu0 0.0
        %8985 = vmatpush1.msra.mxu0 0.0
        %8986 = vmatprep.mubr.f32.mxu0 0.0
        %8987 = vmatmul.mubr.f32.gmra.mrb[0].mxu0 %v8423
        %v8988 = vpop.f32.mrb[0].mxu0
        %v8989 = vadd.f32 %v8918, %v8988
        %v8990 = vpop.f32.mrb[0].mxu0
        %v8991 = vadd.f32 %v8920, %v8990
        %8992 = vdwg.mxu0
        %v8993 = vadd.f32 %v8705, %v638
        %v8994 = vadd.f32 %v8707, %v639
        %v8995 = vadd.f32 %v8989, %v640
        %v8996 = vadd.f32 %v8991, %v636
        %v9001 = vcombine.low %v8993, %v8994
        %v9002 = vcombine.low %v8995, %v8996
        %v9004 = vunpack.c.l.s4 1966171168
        %v9005 = vunpack.c.0.s8 %v9004
        %v9006 = vlaneseq
        %v9007 = vshrl.u32 %v9006, 7
        %v9008 = vsub.s32 %v9005, %v9007
        %v9009 = vrot.slane %v9001, %v9008
        %v9011 = vunpack.c.l.s4 1966171168
        %v9012 = vunpack.c.0.s8 %v9011
        %v9013 = vlaneseq
        %v9014 = vshrl.u32 %v9013, 7
        %v9015 = vsub.s32 %v9012, %v9014
        %v9016 = vrot.slane %v9002, %v9015
        %v9017 = vcombine.low %v9009, %v9016
        %v9019 = vunpack.c.l.s4 1966171168
        %v9020 = vunpack.c.0.s8 %v9019
        %v9021 = vlaneseq
        %v9022 = vshrl.u32 %v9021, 7
        %v9023 = vsub.s32 %v9020, %v9022
        %v9024 = vrot.slane %v9017, %v9023
        %v9026 = vsel %vm378, %v9024, 0.0
        %v9027 = vlaneseq
        %vm9028 = vcmp.ge.s32.totalorder %v9027, 0
        %vm9029 = vcmp.lt.s32.totalorder %v9027, 400
        %vm9030 = vmand %vm9028, %vm9029
        %9031 = vst.msk [vmem:[%s371] sm:$0xf] %vm9030, %v9026
        %s9032 = sand.u32 %s230, 1
        %s9033 = scalar_lea.sflag [#allocation7], %s9032
        %s9034 = sand.u32 %s230, 1
        %s9035 = smul.addr %s9034, 4
        %s9036 = scalar_lea.vmem [#allocation12], %s9035
        // Predicated region
        $region69: #{tpu_custom_call.1} parent=55 // pred_check
          %p9037 = pneg %p240
        $region70: #{tpu_custom_call.1} parent=55 // pred_check_branch
          %9039 = sbr.rel (%p9037) target = $region72
        $region71: #{tpu_custom_call.1} parent=55 // pred_region
          %s9041 = ssub.s32 64, 64
          %9042 = vsyncadd %s9033, %s9041
          %s9043 = smul.addr %s28, 4
          %s9044 = smul.addr %s9043, 16
          %s9045 = scalar_lea.hbm %s9, %s9044
          %s9047 = sshll.u32 %s9036, 4
          %s9048 = int_to_ptr.vmem [resolvable:$true] %s9047
          %9050 = dma.vmem_to_hbm [thread:$0]  %s9048, 64, %s9045, %s9033
        $region72: #{tpu_custom_call.1} parent=55 // pred_fallthru
          _
      $region56: #{tpu_custom_call.1} parent=5 // pred_fallthru
        _
      %p9051 = scmp.le.s32.totalorder 2, %s23
      // Predicated region
      $region73: #{tpu_custom_call.1} parent=5 // pred_check
        %p9052 = pneg %p9051
      $region74: #{tpu_custom_call.1} parent=5 // pred_check_branch
        %9054 = sbr.rel (%p9052) target = $region76
      $region75: #{tpu_custom_call.1} parent=5 // pred_region
        %s9055 = ssub.s32 %s23, 2
        // Predicated region
        $region77: #{tpu_custom_call.1} parent=75 // pred_check
          %p9056 = pneg %p246
        $region78: #{tpu_custom_call.1} parent=75 // pred_check_branch
          %9058 = sbr.rel (%p9056) target = $region80
        $region79: #{tpu_custom_call.1} parent=75 // pred_region
          %s9059 = sand.u32 %s231, 1
          %s9060 = scalar_lea.sflag [#allocation7], %s9059
          %s9061 = sand.u32 %s231, 1
          %s9062 = smul.addr %s9061, 4
          %s9063 = scalar_lea.vmem [#allocation12], %s9062
          %9064 = dma.done %s9060, 64
        $region80: #{tpu_custom_call.1} parent=75 // pred_fallthru
          _
      $region76: #{tpu_custom_call.1} parent=5 // pred_fallthru
        _
    $region6: #{tpu_custom_call.1} parent=1 // loop_footer
      %s27 = sadd.s32 1, %s23
    $region7: #{tpu_custom_call.1} parent=1 // loop_footer_branch
      %22 = sbr.rel target = $region3
    $region8: #{tpu_custom_call.1} parent=1 // loop_exit
      _
    %9065 = vsyncpa [#allocation6], 1
    %s9066 = scalar_lea.sflag [#allocation6], 1
    %9067 = vsyncpa %s9066, 1
    %9068 = vsyncpa [#allocation10], 1
    %9069 = vsyncpa [#allocation7], 1
    %s9070 = scalar_lea.sflag [#allocation7], 1
    %9071 = vsyncpa %s9070, 1
    %9072 = vsyncpa [#allocation8], 1
    %s9073 = scalar_lea.sflag [#allocation8], 1
    %9074 = vsyncpa %s9073, 1

</llo_original>
